<compile_context>
chip_gen: v6e
topology: v6e:2x2x1
jax: 0.10.0
libtpu: 0.0.40
codegen_flags: <defaults>
</compile_context>

<pallas_src>
import jax
import jax.numpy as jnp
from jax import lax
from jax.experimental import pallas as pl
from jax.experimental.pallas import tpu as pltpu


# ----------------------------------------------------------------------------
# Kernel 1: fused bidirectional LSTM, chunked over (batch, time).
# ----------------------------------------------------------------------------
def bilstm_kernel(x_f_ref, x_b_ref, len_ref, wih_ref, whh_ref, b_ref,
                  yf_ref, yb_ref, gx_scr, h_scr, c_scr):
    Tc, Bc, _ = x_f_ref.shape
    H = whh_ref.shape[0] // 2           # hidden size per direction
    G = 4 * H                           # gate width per direction

    t_chunk = pl.program_id(1)
    T_total = pl.num_programs(1) * Tc

    # Fresh h/c at the start of every sequence (time-chunk 0 of this B-chunk).
    @pl.when(t_chunk == 0)
    def _():
        h_scr[...] = jnp.zeros_like(h_scr)
        c_scr[...] = jnp.zeros_like(c_scr)

    # Per-chunk input projection for both directions (bf16 MXU, f32 acc).
    # Pipelines against the previous chunk's recurrence instead of running as
    # one whole-sequence phase up front.
    gx_scr[:, :, :G] = (
        jnp.einsum('tbd,dg->tbg', x_f_ref[...], wih_ref[:, :G],
                   preferred_element_type=jnp.float32) + b_ref[:, :G])
    gx_scr[:, :, G:] = (
        jnp.einsum('tbd,dg->tbg', x_b_ref[...], wih_ref[:, G:],
                   preferred_element_type=jnp.float32) + b_ref[:, G:])

    lens = len_ref[...]                                     # (Bc, 1) int32

    def gate_math(g, c_prev):           # PyTorch gate order i, f, g, o
        i = jax.nn.sigmoid(g[:, 0 * H:1 * H])
        f = jax.nn.sigmoid(g[:, 1 * H:2 * H])
        gg = jnp.tanh(g[:, 2 * H:3 * H])
        o = jax.nn.sigmoid(g[:, 3 * H:4 * H])
        c_new = f * c_prev + i * gg
        return o * jnp.tanh(c_new), c_new

    def step(s, carry):
        s_b = Tc - 1 - s                # backward walks its chunk in reverse
        t_f = t_chunk * Tc + s          # global forward time
        t_b = T_total - 1 - t_f         # global backward time

        gx_f = gx_scr[s]                # (Bc, 8H)
        gx_b = gx_scr[s_b]

        h = h_scr[...]                  # (Bc, 2H) f32
        c = c_scr[...]

        # One block-diagonal recurrent matmul for both directions (bf16 MXU).
        # TODO(synk): on v5e split into two (Bc,H)@(H,4H) matmuls (K=128
        # already fills its 4x128x128 MXU; the fused K=256 form is half zeros).
        hh = jnp.dot(h.astype(jnp.bfloat16), whh_ref[...],
                     preferred_element_type=jnp.float32)        # (Bc, 8H)

        hf, cf = gate_math(gx_f[:, :G] + hh[:, :G], c[:, :H])
        hb, cb = gate_math(gx_b[:, G:] + hh[:, G:], c[:, H:])

        # pack_padded_sequence semantics: freeze state and zero outputs past
        # each sequence's length (valid because h0/c0 are zero).
        m_f = lens > t_f                # (Bc, 1) bool
        m_b = lens > t_b

        h_scr[:, :H] = jnp.where(m_f, hf, h[:, :H])
        h_scr[:, H:] = jnp.where(m_b, hb, h[:, H:])
        c_scr[:, :H] = jnp.where(m_f, cf, c[:, :H])
        c_scr[:, H:] = jnp.where(m_b, cb, c[:, H:])

        yf_ref[s] = jnp.where(m_f, hf, 0.0)      # lane-dense (H=128) stores
        yb_ref[s_b] = jnp.where(m_b, hb, 0.0)
        return carry

    # Tc is a small chunk (<= 16): unrolled window with bounded live ranges.
    lax.fori_loop(0, Tc, step, 0, unroll=True)


def run_bilstm(x_tm, lens2d, wih_cat, whh_bd, b_cat, *, t_chunk=None,
               b_chunk=None):
    T, B, D = x_tm.shape
    H2, G2 = whh_bd.shape               # (2H, 8H)
    H = H2 // 2

    if b_chunk is None:
        b_chunk = B                      # production: a multiple of 8 dividing B
    if t_chunk is None:
        # Production: pick the largest Tc whose x/y blocks + (Tc,Bc,8H) gate
        # scratch (plus double buffers) fit the scoped VMEM limit below.
        t_chunk = min(T, 16)
        while T % t_chunk:
            t_chunk -= 1
        if t_chunk == T and T >= 2:      # keep >=2 chunks so the gx matmul /
            t_chunk = T // 2             # x DMA pipelines against the recurrence
            while T % t_chunk:
                t_chunk -= 1
    assert T % t_chunk == 0 and B % b_chunk == 0
    n_t = T // t_chunk
    n_b = B // b_chunk

    cost = pl.CostEstimate(
        flops=2 * T * B * D * G2 + 2 * T * B * H2 * G2,
        transcendentals=10 * T * B * H,
        bytes_accessed=(4 * T * B * D * x_tm.dtype.itemsize     # x read twice
                        + 2 * T * B * H * 4                     # y_f, y_b
                        + (D + H2) * G2 * 2 + G2 * 4 + B * 4))

    return pl.pallas_call(
        bilstm_kernel,
        out_shape=(jax.ShapeDtypeStruct((T, B, H), jnp.float32),
                   jax.ShapeDtypeStruct((T, B, H), jnp.float32)),
        grid_spec=pltpu.PrefetchScalarGridSpec(
            num_scalar_prefetch=0,
            grid=(n_b, n_t),
            in_specs=[
                # forward-order x chunk
                pl.BlockSpec((t_chunk, b_chunk, D), lambda b, t: (t, b, 0)),
                # reverse-order x chunk for the backward direction
                pl.BlockSpec((t_chunk, b_chunk, D),
                             lambda b, t: (n_t - 1 - t, b, 0)),
                pl.BlockSpec((b_chunk, 1), lambda b, t: (b, 0)),
                pl.BlockSpec((D, G2), lambda b, t: (0, 0)),
                pl.BlockSpec((H2, G2), lambda b, t: (0, 0)),
                pl.BlockSpec((1, G2), lambda b, t: (0, 0)),
            ],
            out_specs=[
                pl.BlockSpec((t_chunk, b_chunk, H), lambda b, t: (t, b, 0)),
                pl.BlockSpec((t_chunk, b_chunk, H),
                             lambda b, t: (n_t - 1 - t, b, 0)),
            ],
            scratch_shapes=[
                pltpu.VMEM((t_chunk, b_chunk, G2), jnp.float32),  # gate chunk
                pltpu.VMEM((b_chunk, H2), jnp.float32),           # h (fwd|bwd)
                pltpu.VMEM((b_chunk, H2), jnp.float32),           # c (fwd|bwd)
            ]),
        compiler_params=pltpu.CompilerParams(
            dimension_semantics=("parallel", "arbitrary"),   # megacore over B
            vmem_limit_bytes=32 * 1024 * 1024),
        cost_estimate=cost,
    )(x_tm, x_tm, lens2d, wih_cat, whh_bd, b_cat)


# ----------------------------------------------------------------------------
# Kernel 2: time-major self-attention + penalization + FC head, gridded over B.
# ----------------------------------------------------------------------------
def attn_fc_kernel(yf_ref, yb_ref, w1f_ref, w1b_ref, w2_ref,
                   fc1wf_ref, fc1wb_ref, fc1b_ref, fc2w_ref, fc2b_ref,
                   logits_ref, loss_ref):
    b_idx = pl.program_id(0)
    n_b = pl.num_programs(0)

    yf = yf_ref[...]                     # (T, Bc, H) f32, fwd outputs
    yb = yb_ref[...]                     # (T, Bc, H) f32, bwd outputs
    _, Bc, _ = yf.shape
    r = w2_ref.shape[1]
    Hf = fc1wf_ref.shape[2]

    # NOTE: like the PyTorch reference, attention runs over padded positions
    # too (their LSTM outputs are zero but still receive softmax mass).
    tanh_v1 = jnp.tanh(
        jnp.einsum('tbh,ha->tba', yf, w1f_ref[...],
                   preferred_element_type=jnp.float32)
        + jnp.einsum('tbh,ha->tba', yb, w1b_ref[...],
                     preferred_element_type=jnp.float32))        # (T, Bc, da)
    score = jnp.einsum('tba,ar->tbr', tanh_v1, w2_ref[...],
                       preferred_element_type=jnp.float32)       # (T, Bc, r)
    # softmax over time (axis 0) == PyTorch softmax(score.transpose(1,2), dim=2)
    A = jax.nn.softmax(score, axis=0)                            # (T, Bc, r)

    # Penalization term + M @ fc1, decomposed over the tiny static r axis:
    # reductions are over the leading time axis (vreg-cheap) and there is no
    # (B,r,2H)->(B,r*2H) reshape copy or batched-transpose relayout.
    # TODO(synk): optionally pad r=5 -> 8 (with post-softmax row masking) to
    # fill all 8 sublanes of the A/AA^T tiles.
    sumsq = jnp.zeros((Bc, 1), jnp.float32)
    acc = jnp.zeros((Bc, Hf), jnp.float32)
    for rr in range(r):                   # r == 5, static unroll
        a_r = A[:, :, rr:rr + 1]                         # (T, Bc, 1)
        aat_row = jnp.sum(a_r * A, axis=0)               # (Bc, r) row rr of AA^T
        e_row = (jax.lax.broadcasted_iota(jnp.int32, (1, r), 1) == rr
                 ).astype(jnp.float32)
        d = aat_row - e_row
        sumsq = sumsq + jnp.sum(d * d, axis=1, keepdims=True)

        m_f = jnp.sum(a_r * yf, axis=0)                  # (Bc, H) == M[:, rr, :H]
        m_b = jnp.sum(a_r * yb, axis=0)                  #          == M[:, rr, H:]
        acc = acc + jnp.dot(m_f, fc1wf_ref[rr],
                            preferred_element_type=jnp.float32)
        acc = acc + jnp.dot(m_b, fc1wb_ref[rr],
                            preferred_element_type=jnp.float32)

    h1 = jnp.maximum(acc + fc1b_ref[...], 0.0)
    # TODO(synk): nn.Dropout(0.5) is identity here (eval-mode semantics).
    logits_ref[...] = (jnp.dot(h1, fc2w_ref[...],
                               preferred_element_type=jnp.float32)
                       + fc2b_ref[...])

    # mean_b sqrt(||A A^T - I||_F^2 + 1e-10), accumulated across B chunks.
    @pl.when(b_idx == 0)
    def _():
        loss_ref[...] = jnp.zeros_like(loss_ref)
    loss_ref[...] += jnp.sum(jnp.sqrt(sumsq + 1e-10), keepdims=True)

    @pl.when(b_idx == n_b - 1)
    def _():
        loss_ref[...] = loss_ref[...] / (Bc * n_b)


def run_attn_fc(y_f, y_b, w1f, w1b, w2, fc1wf, fc1wb, fc1b, fc2w, fc2b, *,
                b_chunk=None):
    T, B, H = y_f.shape
    da = w1f.shape[1]
    r = w2.shape[1]
    H_f = fc1wf.shape[2]
    C = fc2w.shape[1]
    if b_chunk is None:
        b_chunk = B          # production: multiple of 8 sized so blocks+weights
                             # stay ~8-16 MiB (v7x 64 MiB VMEM hard wall)
    assert B % b_chunk == 0
    n_b = B // b_chunk

    logits, loss = pl.pallas_call(
        attn_fc_kernel,
        out_shape=(jax.ShapeDtypeStruct((B, C), jnp.float32),
                   jax.ShapeDtypeStruct((1, 1), jnp.float32)),
        grid_spec=pltpu.PrefetchScalarGridSpec(
            num_scalar_prefetch=0,
            grid=(n_b,),
            in_specs=[
                pl.BlockSpec((T, b_chunk, H), lambda b: (0, b, 0)),
                pl.BlockSpec((T, b_chunk, H), lambda b: (0, b, 0)),
                pl.BlockSpec((H, da), lambda b: (0, 0)),
                pl.BlockSpec((H, da), lambda b: (0, 0)),
                pl.BlockSpec((da, r), lambda b: (0, 0)),
                pl.BlockSpec((r, H, H_f), lambda b: (0, 0, 0)),
                pl.BlockSpec((r, H, H_f), lambda b: (0, 0, 0)),
                pl.BlockSpec((1, H_f), lambda b: (0, 0)),
                pl.BlockSpec((H_f, C), lambda b: (0, 0)),
                pl.BlockSpec((1, C), lambda b: (0, 0)),
            ],
            out_specs=(
                pl.BlockSpec((b_chunk, C), lambda b: (b, 0)),
                pl.BlockSpec((1, 1), lambda b: (0, 0)),     # loss accumulator
            )),
        compiler_params=pltpu.CompilerParams(
            # loss is a batch reduction -> "arbitrary".  TODO(synk): emit
            # per-chunk partial losses instead to allow "parallel" on v7x.
            dimension_semantics=("arbitrary",),
            vmem_limit_bytes=32 * 1024 * 1024),
    )(y_f, y_b, w1f, w1b, w2, fc1wf, fc1wb, fc1b, fc2w, fc2b)
    return logits, loss[0, 0]


# ----------------------------------------------------------------------------
# Full forward pass (glue + Pallas kernels)
# ----------------------------------------------------------------------------
@jax.jit
def bidirec_lstm_forward(params, inputs, lengths):
    # Time-major gather straight from the embedding table: no (B,T,D)->(T,B,D)
    # HBM transpose.  Matmul operands in bf16, accumulation/gates f32.
    x_tm = params['emb'][inputs.T].astype(jnp.bfloat16)        # (T, B, D)
    lens2d = lengths.astype(jnp.int32)[:, None]                # (B, 1)

    y_f, y_b = run_bilstm(x_tm, lens2d, params['wih_cat'],
                          params['whh_bd'], params['b_cat'])   # 2 x (T, B, H)

    logits, loss_p = run_attn_fc(
        y_f, y_b, params['w1f_t'], params['w1b_t'], params['w2_t'],
        params['fc1wf'], params['fc1wb'], params['fc1_b'],
        params['fc2w_t'], params['fc2_b'])
    return logits, loss_p


# ----------------------------------------------------------------------------
# Deterministic parameter construction
# ----------------------------------------------------------------------------
def init_params(key, V, dim, H, H_f, num_classes, da, r):
    ks = jax.random.split(key, 13)
    s = 1.0 / jnp.sqrt(jnp.float32(H))

    def u(k, shape, scale):
        return jax.random.uniform(k, shape, jnp.float32, -scale, scale)

    # raw PyTorch-layout LSTM weights (gate order i, f, g, o)
    wih_f = u(ks[1], (4 * H, dim), s)
    whh_f = u(ks[2], (4 * H, H), s)
    b_f = u(ks[3], (4 * H,), s) + u(ks[4], (4 * H,), s)     # b_ih + b_hh
    wih_b = u(ks[5], (4 * H, dim), s)
    whh_b = u(ks[6], (4 * H, H), s)
    b_b = u(ks[7], (4 * H,), s) + u(ks[8], (4 * H,), s)

    # fused layouts consumed by the kernel (matmul operands in bf16)
    wih_cat = jnp.concatenate([wih_f.T, wih_b.T], axis=1).astype(jnp.bfloat16)
    whh_bd = jnp.zeros((2 * H, 8 * H), jnp.float32)
    whh_bd = whh_bd.at[:H, :4 * H].set(whh_f.T)
    whh_bd = whh_bd.at[H:, 4 * H:].set(whh_b.T)              # block-diagonal
    whh_bd = whh_bd.astype(jnp.bfloat16)
    b_cat = jnp.concatenate([b_f, b_b])[None, :]             # (1, 8H) f32

    # attention / FC weights, pre-split by direction so the kernels never
    # need a fwd|bwd concat of the LSTM outputs.
    w1_t = u(ks[9], (da, 2 * H), 0.1).T                      # (2H, da)
    fc1_w_t = u(ks[11], (H_f, r * 2 * H), 0.05).T            # (r*2H, H_f)
    fc1w_r = fc1_w_t.reshape(r, 2 * H, H_f)                  # row-major view

    params = {
        'emb': u(ks[0], (V, dim), 0.1),
        'wih_cat': wih_cat, 'whh_bd': whh_bd, 'b_cat': b_cat,
        'w1f_t': w1_t[:H], 'w1b_t': w1_t[H:],                # (H, da) each
        'w2_t': u(ks[10], (r, da), 0.1).T,                   # (da, r)
        'fc1wf': fc1w_r[:, :H, :], 'fc1wb': fc1w_r[:, H:, :],  # (r, H, H_f)
        'fc1_b': jnp.zeros((1, H_f), jnp.float32),
        'fc2w_t': u(ks[12], (num_classes, H_f), 0.05).T,     # (H_f, C)
        'fc2_b': jnp.zeros((1, num_classes), jnp.float32),
    }
    return params


if __name__ == "__main__":
    # small shapes consistent with the module (H=128, r=5, 7 classes, bidirec)
    B, T = 4, 8
    V, dim, H = 50, 64, 128
    da, r, H_f, num_classes = 64, 5, 128, 7

    key = jax.random.PRNGKey(0)
    k_param, k_tok = jax.random.split(key)
    params = init_params(k_param, V, dim, H, H_f, num_classes, da, r)

    inputs = jax.random.randint(k_tok, (B, T), 0, V, dtype=jnp.int32)
    lengths = jnp.array([8, 6, 5, 3], dtype=jnp.int32)   # descending (pack_padded)

    logits, loss_p = bidirec_lstm_forward(params, inputs, lengths)
    jax.block_until_ready((logits, loss_p))
    assert logits.shape == (B, num_classes)
    assert loss_p.shape == ()
    print("KERNEL_OK")
</pallas_src>

<mosaic_0001>
module attributes {stable_mosaic.version = 11 : i64} {
  func.func @attn_fc_kernel(%arg0: i32, %arg1: memref<8x4x128xf32, #tpu.memory_space<vmem>>, %arg2: memref<8x4x128xf32, #tpu.memory_space<vmem>>, %arg3: memref<128x64xf32, #tpu.memory_space<vmem>>, %arg4: memref<128x64xf32, #tpu.memory_space<vmem>>, %arg5: memref<64x5xf32, #tpu.memory_space<vmem>>, %arg6: memref<5x128x128xf32, #tpu.memory_space<vmem>>, %arg7: memref<5x128x128xf32, #tpu.memory_space<vmem>>, %arg8: memref<1x128xf32, #tpu.memory_space<vmem>>, %arg9: memref<128x7xf32, #tpu.memory_space<vmem>>, %arg10: memref<1x7xf32, #tpu.memory_space<vmem>>, %arg11: memref<4x7xf32, #tpu.memory_space<vmem>>, %arg12: memref<1x1xf32, #tpu.memory_space<vmem>>) attributes {dimension_semantics = [#tpu.dimension_semantics<arbitrary>], iteration_bounds = array<i64: 1>, scalar_prefetch = 0 : i64, scratch_operands = 0 : i64, tpu.core_type = #tpu.core_type<tc>, window_params = [{transform_indices = @transform_0, window_bounds = array<i64: 8, 4, 128>}, {transform_indices = @transform_1, window_bounds = array<i64: 8, 4, 128>}, {pipeline_mode = #tpu.pipeline_mode<synchronous>, transform_indices = @transform_2, window_bounds = array<i64: 128, 64>}, {pipeline_mode = #tpu.pipeline_mode<synchronous>, transform_indices = @transform_3, window_bounds = array<i64: 128, 64>}, {pipeline_mode = #tpu.pipeline_mode<synchronous>, transform_indices = @transform_4, window_bounds = array<i64: 64, 5>}, {pipeline_mode = #tpu.pipeline_mode<synchronous>, transform_indices = @transform_5, window_bounds = array<i64: 5, 128, 128>}, {pipeline_mode = #tpu.pipeline_mode<synchronous>, transform_indices = @transform_6, window_bounds = array<i64: 5, 128, 128>}, {pipeline_mode = #tpu.pipeline_mode<synchronous>, transform_indices = @transform_7, window_bounds = array<i64: 1, 128>}, {pipeline_mode = #tpu.pipeline_mode<synchronous>, transform_indices = @transform_8, window_bounds = array<i64: 128, 7>}, {pipeline_mode = #tpu.pipeline_mode<synchronous>, transform_indices = @transform_9, window_bounds = array<i64: 1, 7>}, {transform_indices = @transform_10, window_bounds = array<i64: 4, 7>}, {pipeline_mode = #tpu.pipeline_mode<synchronous>, transform_indices = @transform_11, window_bounds = array<i64: 1, 1>}]} {
    %c0 = arith.constant 0 : index
    %c0_0 = arith.constant 0 : index
    %c0_1 = arith.constant 0 : index
    %0 = vector.load %arg1[%c0, %c0_0, %c0_1] : memref<8x4x128xf32, #tpu.memory_space<vmem>>, vector<8x4x128xf32>
    %c0_2 = arith.constant 0 : index
    %c0_3 = arith.constant 0 : index
    %c0_4 = arith.constant 0 : index
    %1 = vector.load %arg2[%c0_2, %c0_3, %c0_4] : memref<8x4x128xf32, #tpu.memory_space<vmem>>, vector<8x4x128xf32>
    %c0_5 = arith.constant 0 : index
    %c0_6 = arith.constant 0 : index
    %2 = vector.load %arg3[%c0_5, %c0_6] : memref<128x64xf32, #tpu.memory_space<vmem>>, vector<128x64xf32>
    "tpu.trace_start"() <{level = 10 : i32, message = "tbh,ha->tba"}> : () -> ()
    %cst = arith.constant dense<0.000000e+00> : vector<8x4x64xf32>
    %3 = tpu.matmul %0, %2, %cst {dimension_numbers = #tpu.dot_dimension_numbers<[2], [0], [0, 1], [1], [0, 0, 0, 1, 1, 1], [], []>} : vector<8x4x128xf32>, vector<128x64xf32>, vector<8x4x64xf32> -> vector<8x4x64xf32>
    "tpu.trace_stop"() : () -> ()
    %c0_7 = arith.constant 0 : index
    %c0_8 = arith.constant 0 : index
    %4 = vector.load %arg4[%c0_7, %c0_8] : memref<128x64xf32, #tpu.memory_space<vmem>>, vector<128x64xf32>
    "tpu.trace_start"() <{level = 10 : i32, message = "tbh,ha->tba"}> : () -> ()
    %cst_9 = arith.constant dense<0.000000e+00> : vector<8x4x64xf32>
    %5 = tpu.matmul %1, %4, %cst_9 {dimension_numbers = #tpu.dot_dimension_numbers<[2], [0], [0, 1], [1], [0, 0, 0, 1, 1, 1], [], []>} : vector<8x4x128xf32>, vector<128x64xf32>, vector<8x4x64xf32> -> vector<8x4x64xf32>
    "tpu.trace_stop"() : () -> ()
    %6 = arith.addf %3, %5 : vector<8x4x64xf32>
    %7 = math.tanh %6 : vector<8x4x64xf32>
    %c0_10 = arith.constant 0 : index
    %c0_11 = arith.constant 0 : index
    %8 = vector.load %arg5[%c0_10, %c0_11] : memref<64x5xf32, #tpu.memory_space<vmem>>, vector<64x5xf32>
    "tpu.trace_start"() <{level = 10 : i32, message = "tba,ar->tbr"}> : () -> ()
    %cst_12 = arith.constant dense<0.000000e+00> : vector<8x4x5xf32>
    %9 = tpu.matmul %7, %8, %cst_12 {dimension_numbers = #tpu.dot_dimension_numbers<[2], [0], [0, 1], [1], [0, 0, 0, 1, 1, 1], [], []>} : vector<8x4x64xf32>, vector<64x5xf32>, vector<8x4x5xf32> -> vector<8x4x5xf32>
    "tpu.trace_stop"() : () -> ()
    %cst_13 = arith.constant dense<0xFF800000> : vector<4x5xf32>
    %10 = vector.multi_reduction <maximumf>, %9, %cst_13 [0] : vector<8x4x5xf32> to vector<4x5xf32>
    %cst_14 = arith.constant 0xFF800000 : f32
    %11 = vector.broadcast %cst_14 : f32 to vector<4x5xf32>
    %12 = arith.maximumf %11, %10 : vector<4x5xf32>
    %13 = vector.shape_cast %12 : vector<4x5xf32> to vector<1x4x5xf32>
    %14 = vector.broadcast %13 : vector<1x4x5xf32> to vector<8x4x5xf32>
    %15 = arith.subf %9, %14 : vector<8x4x5xf32>
    %16 = math.exp %15 : vector<8x4x5xf32>
    %cst_15 = arith.constant dense<0.000000e+00> : vector<4x5xf32>
    %17 = vector.multi_reduction <add>, %16, %cst_15 [0] : vector<8x4x5xf32> to vector<4x5xf32>
    %18 = vector.shape_cast %17 : vector<4x5xf32> to vector<1x4x5xf32>
    %19 = vector.broadcast %18 : vector<1x4x5xf32> to vector<8x4x5xf32>
    %20 = arith.divf %16, %19 : vector<8x4x5xf32>
    %cst_16 = arith.constant 0.000000e+00 : f32
    %21 = vector.broadcast %cst_16 : f32 to vector<4x1xf32>
    %cst_17 = arith.constant 0.000000e+00 : f32
    %22 = vector.broadcast %cst_17 : f32 to vector<4x128xf32>
    %23 = vector.extract_strided_slice %20 {offsets = [0, 0, 0], sizes = [8, 4, 1], strides = [1, 1, 1]} : vector<8x4x5xf32> to vector<8x4x1xf32>
    %24 = vector.broadcast %23 : vector<8x4x1xf32> to vector<8x4x5xf32>
    %25 = arith.mulf %24, %20 : vector<8x4x5xf32>
    %cst_18 = arith.constant dense<0.000000e+00> : vector<4x5xf32>
    %26 = vector.multi_reduction <add>, %25, %cst_18 [0] : vector<8x4x5xf32> to vector<4x5xf32>
    %27 = tpu.iota {dimensions = array<i32: 1>} : vector<1x5xi32>
    %c0_i32 = arith.constant 0 : i32
    %28 = vector.broadcast %c0_i32 : i32 to vector<1x5xi32>
    %29 = arith.cmpi eq, %27, %28 : vector<1x5xi32>
    %30 = arith.extui %29 : vector<1x5xi1> to vector<1x5xi32>
    %31 = arith.sitofp %30 : vector<1x5xi32> to vector<1x5xf32>
    %32 = vector.broadcast %31 : vector<1x5xf32> to vector<4x5xf32>
    %33 = arith.subf %26, %32 : vector<4x5xf32>
    %34 = arith.mulf %33, %33 : vector<4x5xf32>
    %cst_19 = arith.constant dense<0.000000e+00> : vector<4xf32>
    %35 = vector.multi_reduction <add>, %34, %cst_19 [1] : vector<4x5xf32> to vector<4xf32>
    %36 = vector.shape_cast %35 : vector<4xf32> to vector<4x1xf32>
    %37 = arith.addf %21, %36 : vector<4x1xf32>
    %38 = vector.broadcast %23 : vector<8x4x1xf32> to vector<8x4x128xf32>
    %39 = arith.mulf %38, %0 : vector<8x4x128xf32>
    %cst_20 = arith.constant dense<0.000000e+00> : vector<4x128xf32>
    %40 = vector.multi_reduction <add>, %39, %cst_20 [0] : vector<8x4x128xf32> to vector<4x128xf32>
    %41 = vector.broadcast %23 : vector<8x4x1xf32> to vector<8x4x128xf32>
    %42 = arith.mulf %41, %1 : vector<8x4x128xf32>
    %cst_21 = arith.constant dense<0.000000e+00> : vector<4x128xf32>
    %43 = vector.multi_reduction <add>, %42, %cst_21 [0] : vector<8x4x128xf32> to vector<4x128xf32>
    %c0_22 = arith.constant 0 : index
    %c0_23 = arith.constant 0 : index
    %c0_24 = arith.constant 0 : index
    %44 = vector.load %arg6[%c0_22, %c0_23, %c0_24] : memref<5x128x128xf32, #tpu.memory_space<vmem>>, vector<1x128x128xf32>
    %45 = vector.shape_cast %44 : vector<1x128x128xf32> to vector<128x128xf32>
    %cst_25 = arith.constant dense<0.000000e+00> : vector<4x128xf32>
    %46 = tpu.matmul %40, %45, %cst_25 {dimension_numbers = #tpu.dot_dimension_numbers<[1], [0], [0], [1], [0, 0, 1, 1], [], []>} : vector<4x128xf32>, vector<128x128xf32>, vector<4x128xf32> -> vector<4x128xf32>
    %47 = arith.addf %22, %46 : vector<4x128xf32>
    %c0_26 = arith.constant 0 : index
    %c0_27 = arith.constant 0 : index
    %c0_28 = arith.constant 0 : index
    %48 = vector.load %arg7[%c0_26, %c0_27, %c0_28] : memref<5x128x128xf32, #tpu.memory_space<vmem>>, vector<1x128x128xf32>
    %49 = vector.shape_cast %48 : vector<1x128x128xf32> to vector<128x128xf32>
    %cst_29 = arith.constant dense<0.000000e+00> : vector<4x128xf32>
    %50 = tpu.matmul %43, %49, %cst_29 {dimension_numbers = #tpu.dot_dimension_numbers<[1], [0], [0], [1], [0, 0, 1, 1], [], []>} : vector<4x128xf32>, vector<128x128xf32>, vector<4x128xf32> -> vector<4x128xf32>
    %51 = arith.addf %47, %50 : vector<4x128xf32>
    %52 = vector.extract_strided_slice %20 {offsets = [0, 0, 1], sizes = [8, 4, 1], strides = [1, 1, 1]} : vector<8x4x5xf32> to vector<8x4x1xf32>
    %53 = vector.broadcast %52 : vector<8x4x1xf32> to vector<8x4x5xf32>
    %54 = arith.mulf %53, %20 : vector<8x4x5xf32>
    %cst_30 = arith.constant dense<0.000000e+00> : vector<4x5xf32>
    %55 = vector.multi_reduction <add>, %54, %cst_30 [0] : vector<8x4x5xf32> to vector<4x5xf32>
    %56 = tpu.iota {dimensions = array<i32: 1>} : vector<1x5xi32>
    %c1_i32 = arith.constant 1 : i32
    %57 = vector.broadcast %c1_i32 : i32 to vector<1x5xi32>
    %58 = arith.cmpi eq, %56, %57 : vector<1x5xi32>
    %59 = arith.extui %58 : vector<1x5xi1> to vector<1x5xi32>
    %60 = arith.sitofp %59 : vector<1x5xi32> to vector<1x5xf32>
    %61 = vector.broadcast %60 : vector<1x5xf32> to vector<4x5xf32>
    %62 = arith.subf %55, %61 : vector<4x5xf32>
    %63 = arith.mulf %62, %62 : vector<4x5xf32>
    %cst_31 = arith.constant dense<0.000000e+00> : vector<4xf32>
    %64 = vector.multi_reduction <add>, %63, %cst_31 [1] : vector<4x5xf32> to vector<4xf32>
    %65 = vector.shape_cast %64 : vector<4xf32> to vector<4x1xf32>
    %66 = arith.addf %37, %65 : vector<4x1xf32>
    %67 = vector.broadcast %52 : vector<8x4x1xf32> to vector<8x4x128xf32>
    %68 = arith.mulf %67, %0 : vector<8x4x128xf32>
    %cst_32 = arith.constant dense<0.000000e+00> : vector<4x128xf32>
    %69 = vector.multi_reduction <add>, %68, %cst_32 [0] : vector<8x4x128xf32> to vector<4x128xf32>
    %70 = vector.broadcast %52 : vector<8x4x1xf32> to vector<8x4x128xf32>
    %71 = arith.mulf %70, %1 : vector<8x4x128xf32>
    %cst_33 = arith.constant dense<0.000000e+00> : vector<4x128xf32>
    %72 = vector.multi_reduction <add>, %71, %cst_33 [0] : vector<8x4x128xf32> to vector<4x128xf32>
    %c1 = arith.constant 1 : index
    %c0_34 = arith.constant 0 : index
    %c0_35 = arith.constant 0 : index
    %73 = vector.load %arg6[%c1, %c0_34, %c0_35] : memref<5x128x128xf32, #tpu.memory_space<vmem>>, vector<1x128x128xf32>
    %74 = vector.shape_cast %73 : vector<1x128x128xf32> to vector<128x128xf32>
    %cst_36 = arith.constant dense<0.000000e+00> : vector<4x128xf32>
    %75 = tpu.matmul %69, %74, %cst_36 {dimension_numbers = #tpu.dot_dimension_numbers<[1], [0], [0], [1], [0, 0, 1, 1], [], []>} : vector<4x128xf32>, vector<128x128xf32>, vector<4x128xf32> -> vector<4x128xf32>
    %76 = arith.addf %51, %75 : vector<4x128xf32>
    %c1_37 = arith.constant 1 : index
    %c0_38 = arith.constant 0 : index
    %c0_39 = arith.constant 0 : index
    %77 = vector.load %arg7[%c1_37, %c0_38, %c0_39] : memref<5x128x128xf32, #tpu.memory_space<vmem>>, vector<1x128x128xf32>
    %78 = vector.shape_cast %77 : vector<1x128x128xf32> to vector<128x128xf32>
    %cst_40 = arith.constant dense<0.000000e+00> : vector<4x128xf32>
    %79 = tpu.matmul %72, %78, %cst_40 {dimension_numbers = #tpu.dot_dimension_numbers<[1], [0], [0], [1], [0, 0, 1, 1], [], []>} : vector<4x128xf32>, vector<128x128xf32>, vector<4x128xf32> -> vector<4x128xf32>
    %80 = arith.addf %76, %79 : vector<4x128xf32>
    %81 = vector.extract_strided_slice %20 {offsets = [0, 0, 2], sizes = [8, 4, 1], strides = [1, 1, 1]} : vector<8x4x5xf32> to vector<8x4x1xf32>
    %82 = vector.broadcast %81 : vector<8x4x1xf32> to vector<8x4x5xf32>
    %83 = arith.mulf %82, %20 : vector<8x4x5xf32>
    %cst_41 = arith.constant dense<0.000000e+00> : vector<4x5xf32>
    %84 = vector.multi_reduction <add>, %83, %cst_41 [0] : vector<8x4x5xf32> to vector<4x5xf32>
    %85 = tpu.iota {dimensions = array<i32: 1>} : vector<1x5xi32>
    %c2_i32 = arith.constant 2 : i32
    %86 = vector.broadcast %c2_i32 : i32 to vector<1x5xi32>
    %87 = arith.cmpi eq, %85, %86 : vector<1x5xi32>
    %88 = arith.extui %87 : vector<1x5xi1> to vector<1x5xi32>
    %89 = arith.sitofp %88 : vector<1x5xi32> to vector<1x5xf32>
    %90 = vector.broadcast %89 : vector<1x5xf32> to vector<4x5xf32>
    %91 = arith.subf %84, %90 : vector<4x5xf32>
    %92 = arith.mulf %91, %91 : vector<4x5xf32>
    %cst_42 = arith.constant dense<0.000000e+00> : vector<4xf32>
    %93 = vector.multi_reduction <add>, %92, %cst_42 [1] : vector<4x5xf32> to vector<4xf32>
    %94 = vector.shape_cast %93 : vector<4xf32> to vector<4x1xf32>
    %95 = arith.addf %66, %94 : vector<4x1xf32>
    %96 = vector.broadcast %81 : vector<8x4x1xf32> to vector<8x4x128xf32>
    %97 = arith.mulf %96, %0 : vector<8x4x128xf32>
    %cst_43 = arith.constant dense<0.000000e+00> : vector<4x128xf32>
    %98 = vector.multi_reduction <add>, %97, %cst_43 [0] : vector<8x4x128xf32> to vector<4x128xf32>
    %99 = vector.broadcast %81 : vector<8x4x1xf32> to vector<8x4x128xf32>
    %100 = arith.mulf %99, %1 : vector<8x4x128xf32>
    %cst_44 = arith.constant dense<0.000000e+00> : vector<4x128xf32>
    %101 = vector.multi_reduction <add>, %100, %cst_44 [0] : vector<8x4x128xf32> to vector<4x128xf32>
    %c2 = arith.constant 2 : index
    %c0_45 = arith.constant 0 : index
    %c0_46 = arith.constant 0 : index
    %102 = vector.load %arg6[%c2, %c0_45, %c0_46] : memref<5x128x128xf32, #tpu.memory_space<vmem>>, vector<1x128x128xf32>
    %103 = vector.shape_cast %102 : vector<1x128x128xf32> to vector<128x128xf32>
    %cst_47 = arith.constant dense<0.000000e+00> : vector<4x128xf32>
    %104 = tpu.matmul %98, %103, %cst_47 {dimension_numbers = #tpu.dot_dimension_numbers<[1], [0], [0], [1], [0, 0, 1, 1], [], []>} : vector<4x128xf32>, vector<128x128xf32>, vector<4x128xf32> -> vector<4x128xf32>
    %105 = arith.addf %80, %104 : vector<4x128xf32>
    %c2_48 = arith.constant 2 : index
    %c0_49 = arith.constant 0 : index
    %c0_50 = arith.constant 0 : index
    %106 = vector.load %arg7[%c2_48, %c0_49, %c0_50] : memref<5x128x128xf32, #tpu.memory_space<vmem>>, vector<1x128x128xf32>
    %107 = vector.shape_cast %106 : vector<1x128x128xf32> to vector<128x128xf32>
    %cst_51 = arith.constant dense<0.000000e+00> : vector<4x128xf32>
    %108 = tpu.matmul %101, %107, %cst_51 {dimension_numbers = #tpu.dot_dimension_numbers<[1], [0], [0], [1], [0, 0, 1, 1], [], []>} : vector<4x128xf32>, vector<128x128xf32>, vector<4x128xf32> -> vector<4x128xf32>
    %109 = arith.addf %105, %108 : vector<4x128xf32>
    %110 = vector.extract_strided_slice %20 {offsets = [0, 0, 3], sizes = [8, 4, 1], strides = [1, 1, 1]} : vector<8x4x5xf32> to vector<8x4x1xf32>
    %111 = vector.broadcast %110 : vector<8x4x1xf32> to vector<8x4x5xf32>
    %112 = arith.mulf %111, %20 : vector<8x4x5xf32>
    %cst_52 = arith.constant dense<0.000000e+00> : vector<4x5xf32>
    %113 = vector.multi_reduction <add>, %112, %cst_52 [0] : vector<8x4x5xf32> to vector<4x5xf32>
    %114 = tpu.iota {dimensions = array<i32: 1>} : vector<1x5xi32>
    %c3_i32 = arith.constant 3 : i32
    %115 = vector.broadcast %c3_i32 : i32 to vector<1x5xi32>
    %116 = arith.cmpi eq, %114, %115 : vector<1x5xi32>
    %117 = arith.extui %116 : vector<1x5xi1> to vector<1x5xi32>
    %118 = arith.sitofp %117 : vector<1x5xi32> to vector<1x5xf32>
    %119 = vector.broadcast %118 : vector<1x5xf32> to vector<4x5xf32>
    %120 = arith.subf %113, %119 : vector<4x5xf32>
    %121 = arith.mulf %120, %120 : vector<4x5xf32>
    %cst_53 = arith.constant dense<0.000000e+00> : vector<4xf32>
    %122 = vector.multi_reduction <add>, %121, %cst_53 [1] : vector<4x5xf32> to vector<4xf32>
    %123 = vector.shape_cast %122 : vector<4xf32> to vector<4x1xf32>
    %124 = arith.addf %95, %123 : vector<4x1xf32>
    %125 = vector.broadcast %110 : vector<8x4x1xf32> to vector<8x4x128xf32>
    %126 = arith.mulf %125, %0 : vector<8x4x128xf32>
    %cst_54 = arith.constant dense<0.000000e+00> : vector<4x128xf32>
    %127 = vector.multi_reduction <add>, %126, %cst_54 [0] : vector<8x4x128xf32> to vector<4x128xf32>
    %128 = vector.broadcast %110 : vector<8x4x1xf32> to vector<8x4x128xf32>
    %129 = arith.mulf %128, %1 : vector<8x4x128xf32>
    %cst_55 = arith.constant dense<0.000000e+00> : vector<4x128xf32>
    %130 = vector.multi_reduction <add>, %129, %cst_55 [0] : vector<8x4x128xf32> to vector<4x128xf32>
    %c3 = arith.constant 3 : index
    %c0_56 = arith.constant 0 : index
    %c0_57 = arith.constant 0 : index
    %131 = vector.load %arg6[%c3, %c0_56, %c0_57] : memref<5x128x128xf32, #tpu.memory_space<vmem>>, vector<1x128x128xf32>
    %132 = vector.shape_cast %131 : vector<1x128x128xf32> to vector<128x128xf32>
    %cst_58 = arith.constant dense<0.000000e+00> : vector<4x128xf32>
    %133 = tpu.matmul %127, %132, %cst_58 {dimension_numbers = #tpu.dot_dimension_numbers<[1], [0], [0], [1], [0, 0, 1, 1], [], []>} : vector<4x128xf32>, vector<128x128xf32>, vector<4x128xf32> -> vector<4x128xf32>
    %134 = arith.addf %109, %133 : vector<4x128xf32>
    %c3_59 = arith.constant 3 : index
    %c0_60 = arith.constant 0 : index
    %c0_61 = arith.constant 0 : index
    %135 = vector.load %arg7[%c3_59, %c0_60, %c0_61] : memref<5x128x128xf32, #tpu.memory_space<vmem>>, vector<1x128x128xf32>
    %136 = vector.shape_cast %135 : vector<1x128x128xf32> to vector<128x128xf32>
    %cst_62 = arith.constant dense<0.000000e+00> : vector<4x128xf32>
    %137 = tpu.matmul %130, %136, %cst_62 {dimension_numbers = #tpu.dot_dimension_numbers<[1], [0], [0], [1], [0, 0, 1, 1], [], []>} : vector<4x128xf32>, vector<128x128xf32>, vector<4x128xf32> -> vector<4x128xf32>
    %138 = arith.addf %134, %137 : vector<4x128xf32>
    %139 = vector.extract_strided_slice %20 {offsets = [0, 0, 4], sizes = [8, 4, 1], strides = [1, 1, 1]} : vector<8x4x5xf32> to vector<8x4x1xf32>
    %140 = vector.broadcast %139 : vector<8x4x1xf32> to vector<8x4x5xf32>
    %141 = arith.mulf %140, %20 : vector<8x4x5xf32>
    %cst_63 = arith.constant dense<0.000000e+00> : vector<4x5xf32>
    %142 = vector.multi_reduction <add>, %141, %cst_63 [0] : vector<8x4x5xf32> to vector<4x5xf32>
    %143 = tpu.iota {dimensions = array<i32: 1>} : vector<1x5xi32>
    %c4_i32 = arith.constant 4 : i32
    %144 = vector.broadcast %c4_i32 : i32 to vector<1x5xi32>
    %145 = arith.cmpi eq, %143, %144 : vector<1x5xi32>
    %146 = arith.extui %145 : vector<1x5xi1> to vector<1x5xi32>
    %147 = arith.sitofp %146 : vector<1x5xi32> to vector<1x5xf32>
    %148 = vector.broadcast %147 : vector<1x5xf32> to vector<4x5xf32>
    %149 = arith.subf %142, %148 : vector<4x5xf32>
    %150 = arith.mulf %149, %149 : vector<4x5xf32>
    %cst_64 = arith.constant dense<0.000000e+00> : vector<4xf32>
    %151 = vector.multi_reduction <add>, %150, %cst_64 [1] : vector<4x5xf32> to vector<4xf32>
    %152 = vector.shape_cast %151 : vector<4xf32> to vector<4x1xf32>
    %153 = arith.addf %124, %152 : vector<4x1xf32>
    %154 = vector.broadcast %139 : vector<8x4x1xf32> to vector<8x4x128xf32>
    %155 = arith.mulf %154, %0 : vector<8x4x128xf32>
    %cst_65 = arith.constant dense<0.000000e+00> : vector<4x128xf32>
    %156 = vector.multi_reduction <add>, %155, %cst_65 [0] : vector<8x4x128xf32> to vector<4x128xf32>
    %157 = vector.broadcast %139 : vector<8x4x1xf32> to vector<8x4x128xf32>
    %158 = arith.mulf %157, %1 : vector<8x4x128xf32>
    %cst_66 = arith.constant dense<0.000000e+00> : vector<4x128xf32>
    %159 = vector.multi_reduction <add>, %158, %cst_66 [0] : vector<8x4x128xf32> to vector<4x128xf32>
    %c4 = arith.constant 4 : index
    %c0_67 = arith.constant 0 : index
    %c0_68 = arith.constant 0 : index
    %160 = vector.load %arg6[%c4, %c0_67, %c0_68] : memref<5x128x128xf32, #tpu.memory_space<vmem>>, vector<1x128x128xf32>
    %161 = vector.shape_cast %160 : vector<1x128x128xf32> to vector<128x128xf32>
    %cst_69 = arith.constant dense<0.000000e+00> : vector<4x128xf32>
    %162 = tpu.matmul %156, %161, %cst_69 {dimension_numbers = #tpu.dot_dimension_numbers<[1], [0], [0], [1], [0, 0, 1, 1], [], []>} : vector<4x128xf32>, vector<128x128xf32>, vector<4x128xf32> -> vector<4x128xf32>
    %163 = arith.addf %138, %162 : vector<4x128xf32>
    %c4_70 = arith.constant 4 : index
    %c0_71 = arith.constant 0 : index
    %c0_72 = arith.constant 0 : index
    %164 = vector.load %arg7[%c4_70, %c0_71, %c0_72] : memref<5x128x128xf32, #tpu.memory_space<vmem>>, vector<1x128x128xf32>
    %165 = vector.shape_cast %164 : vector<1x128x128xf32> to vector<128x128xf32>
    %cst_73 = arith.constant dense<0.000000e+00> : vector<4x128xf32>
    %166 = tpu.matmul %159, %165, %cst_73 {dimension_numbers = #tpu.dot_dimension_numbers<[1], [0], [0], [1], [0, 0, 1, 1], [], []>} : vector<4x128xf32>, vector<128x128xf32>, vector<4x128xf32> -> vector<4x128xf32>
    %167 = arith.addf %163, %166 : vector<4x128xf32>
    %c0_74 = arith.constant 0 : index
    %c0_75 = arith.constant 0 : index
    %168 = vector.load %arg8[%c0_74, %c0_75] : memref<1x128xf32, #tpu.memory_space<vmem>>, vector<1x128xf32>
    %169 = vector.broadcast %168 : vector<1x128xf32> to vector<4x128xf32>
    %170 = arith.addf %167, %169 : vector<4x128xf32>
    %cst_76 = arith.constant 0.000000e+00 : f32
    %171 = vector.broadcast %cst_76 : f32 to vector<4x128xf32>
    %172 = arith.maximumf %170, %171 : vector<4x128xf32>
    %c0_77 = arith.constant 0 : index
    %c0_78 = arith.constant 0 : index
    %173 = vector.load %arg9[%c0_77, %c0_78] : memref<128x7xf32, #tpu.memory_space<vmem>>, vector<128x7xf32>
    %cst_79 = arith.constant dense<0.000000e+00> : vector<4x7xf32>
    %174 = tpu.matmul %172, %173, %cst_79 {dimension_numbers = #tpu.dot_dimension_numbers<[1], [0], [0], [1], [0, 0, 1, 1], [], []>} : vector<4x128xf32>, vector<128x7xf32>, vector<4x7xf32> -> vector<4x7xf32>
    %c0_80 = arith.constant 0 : index
    %c0_81 = arith.constant 0 : index
    %175 = vector.load %arg10[%c0_80, %c0_81] : memref<1x7xf32, #tpu.memory_space<vmem>>, vector<1x7xf32>
    %176 = vector.broadcast %175 : vector<1x7xf32> to vector<4x7xf32>
    %177 = arith.addf %174, %176 : vector<4x7xf32>
    %c0_82 = arith.constant 0 : index
    %c0_83 = arith.constant 0 : index
    %178 = vector.load %arg11[%c0_82, %c0_83] : memref<4x7xf32, #tpu.memory_space<vmem>>, vector<4x7xf32>
    tpu.vector_store %arg11[%c0_82, %c0_83], %177 {strides = array<i32>} : memref<4x7xf32, #tpu.memory_space<vmem>>, vector<4x7xf32>,
    %c0_i32_84 = arith.constant 0 : i32
    %179 = arith.cmpi eq, %arg0, %c0_i32_84 : i32
    %180 = arith.extui %179 : i1 to i32
    %c0_i32_85 = arith.constant 0 : i32
    %181 = arith.cmpi ne, %180, %c0_i32_85 : i32
    scf.if %181 {
      %cst_94 = arith.constant 0.000000e+00 : f32
      %196 = vector.broadcast %cst_94 : f32 to vector<1x1xf32>
      %c0_95 = arith.constant 0 : index
      %c0_96 = arith.constant 0 : index
      %197 = vector.load %arg12[%c0_95, %c0_96] : memref<1x1xf32, #tpu.memory_space<vmem>>, vector<1x1xf32>
      tpu.vector_store %arg12[%c0_95, %c0_96], %196 {strides = array<i32>} : memref<1x1xf32, #tpu.memory_space<vmem>>, vector<1x1xf32>,
    } else {
    }
    %c0_86 = arith.constant 0 : index
    %c0_87 = arith.constant 0 : index
    %182 = vector.load %arg12[%c0_86, %c0_87] : memref<1x1xf32, #tpu.memory_space<vmem>>, vector<1x1xf32>
    %cst_88 = arith.constant 1.000000e-10 : f32
    %183 = vector.broadcast %cst_88 : f32 to vector<4x1xf32>
    %184 = arith.addf %153, %183 : vector<4x1xf32>
    %185 = math.sqrt %184 : vector<4x1xf32>
    %186 = vector.shape_cast %185 : vector<4x1xf32> to vector<1x4x1xf32>
    %cst_89 = arith.constant dense<0.000000e+00> : vector<1xf32>
    %187 = vector.multi_reduction <add>, %186, %cst_89 [1, 2] : vector<1x4x1xf32> to vector<1xf32>
    %188 = vector.shape_cast %187 : vector<1xf32> to vector<1x1x1xf32>
    %189 = vector.extract %188[0, 0, 0] : f32 from vector<1x1x1xf32>
    %190 = vector.broadcast %189 : f32 to vector<1x1xf32>
    %191 = arith.addf %182, %190 : vector<1x1xf32>
    %c0_90 = arith.constant 0 : index
    %c0_91 = arith.constant 0 : index
    %192 = vector.load %arg12[%c0_90, %c0_91] : memref<1x1xf32, #tpu.memory_space<vmem>>, vector<1x1xf32>
    tpu.vector_store %arg12[%c0_90, %c0_91], %191 {strides = array<i32>} : memref<1x1xf32, #tpu.memory_space<vmem>>, vector<1x1xf32>,
    %c0_i32_92 = arith.constant 0 : i32
    %193 = arith.cmpi eq, %arg0, %c0_i32_92 : i32
    %194 = arith.extui %193 : i1 to i32
    %c0_i32_93 = arith.constant 0 : i32
    %195 = arith.cmpi ne, %194, %c0_i32_93 : i32
    scf.if %195 {
      %c0_94 = arith.constant 0 : index
      %c0_95 = arith.constant 0 : index
      %196 = vector.load %arg12[%c0_94, %c0_95] : memref<1x1xf32, #tpu.memory_space<vmem>>, vector<1x1xf32>
      %cst_96 = arith.constant 4.000000e+00 : f32
      %197 = vector.broadcast %cst_96 : f32 to vector<1x1xf32>
      %198 = arith.divf %196, %197 : vector<1x1xf32>
      %c0_97 = arith.constant 0 : index
      %c0_98 = arith.constant 0 : index
      %199 = vector.load %arg12[%c0_97, %c0_98] : memref<1x1xf32, #tpu.memory_space<vmem>>, vector<1x1xf32>
      tpu.vector_store %arg12[%c0_97, %c0_98], %198 {strides = array<i32>} : memref<1x1xf32, #tpu.memory_space<vmem>>, vector<1x1xf32>,
    } else {
    }
    return
  }
  func.func @transform_0(%arg0: i32) -> (i32, i32, i32) {
    %c0_i32 = arith.constant 0 : i32
    %c0_i32_0 = arith.constant 0 : i32
    %c0_i32_1 = arith.constant 0 : i32
    return %c0_i32, %arg0, %c0_i32_0 : i32, i32, i32
  }
  func.func @transform_1(%arg0: i32) -> (i32, i32, i32) {
    %c0_i32 = arith.constant 0 : i32
    %c0_i32_0 = arith.constant 0 : i32
    %c0_i32_1 = arith.constant 0 : i32
    return %c0_i32, %arg0, %c0_i32_0 : i32, i32, i32
  }
  func.func @transform_2(%arg0: i32) -> (i32, i32) {
    %c0_i32 = arith.constant 0 : i32
    %c0_i32_0 = arith.constant 0 : i32
    %c0_i32_1 = arith.constant 0 : i32
    return %c0_i32, %c0_i32_0 : i32, i32
  }
  func.func @transform_3(%arg0: i32) -> (i32, i32) {
    %c0_i32 = arith.constant 0 : i32
    %c0_i32_0 = arith.constant 0 : i32
    %c0_i32_1 = arith.constant 0 : i32
    return %c0_i32, %c0_i32_0 : i32, i32
  }
  func.func @transform_4(%arg0: i32) -> (i32, i32) {
    %c0_i32 = arith.constant 0 : i32
    %c0_i32_0 = arith.constant 0 : i32
    %c0_i32_1 = arith.constant 0 : i32
    return %c0_i32, %c0_i32_0 : i32, i32
  }
  func.func @transform_5(%arg0: i32) -> (i32, i32, i32) {
    %c0_i32 = arith.constant 0 : i32
    %c0_i32_0 = arith.constant 0 : i32
    %c0_i32_1 = arith.constant 0 : i32
    %c0_i32_2 = arith.constant 0 : i32
    return %c0_i32, %c0_i32_0, %c0_i32_1 : i32, i32, i32
  }
  func.func @transform_6(%arg0: i32) -> (i32, i32, i32) {
    %c0_i32 = arith.constant 0 : i32
    %c0_i32_0 = arith.constant 0 : i32
    %c0_i32_1 = arith.constant 0 : i32
    %c0_i32_2 = arith.constant 0 : i32
    return %c0_i32, %c0_i32_0, %c0_i32_1 : i32, i32, i32
  }
  func.func @transform_7(%arg0: i32) -> (i32, i32) {
    %c0_i32 = arith.constant 0 : i32
    %c0_i32_0 = arith.constant 0 : i32
    %c0_i32_1 = arith.constant 0 : i32
    return %c0_i32, %c0_i32_0 : i32, i32
  }
  func.func @transform_8(%arg0: i32) -> (i32, i32) {
    %c0_i32 = arith.constant 0 : i32
    %c0_i32_0 = arith.constant 0 : i32
    %c0_i32_1 = arith.constant 0 : i32
    return %c0_i32, %c0_i32_0 : i32, i32
  }
  func.func @transform_9(%arg0: i32) -> (i32, i32) {
    %c0_i32 = arith.constant 0 : i32
    %c0_i32_0 = arith.constant 0 : i32
    %c0_i32_1 = arith.constant 0 : i32
    return %c0_i32, %c0_i32_0 : i32, i32
  }
  func.func @transform_10(%arg0: i32) -> (i32, i32) {
    %c0_i32 = arith.constant 0 : i32
    %c0_i32_0 = arith.constant 0 : i32
    return %arg0, %c0_i32 : i32, i32
  }
  func.func @transform_11(%arg0: i32) -> (i32, i32) {
    %c0_i32 = arith.constant 0 : i32
    %c0_i32_0 = arith.constant 0 : i32
    %c0_i32_1 = arith.constant 0 : i32
    return %c0_i32, %c0_i32_0 : i32, i32
  }
}

module attributes {stable_mosaic.version = 11 : i64} {
  func.func @bilstm_kernel(%arg0: i32, %arg1: i32, %arg2: memref<4x4x64xbf16, #tpu.memory_space<vmem>>, %arg3: memref<4x4x64xbf16, #tpu.memory_space<vmem>>, %arg4: memref<4x1xi32, #tpu.memory_space<vmem>>, %arg5: memref<64x1024xbf16, #tpu.memory_space<vmem>>, %arg6: memref<256x1024xbf16, #tpu.memory_space<vmem>>, %arg7: memref<1x1024xf32, #tpu.memory_space<vmem>>, %arg8: memref<4x4x128xf32, #tpu.memory_space<vmem>>, %arg9: memref<4x4x128xf32, #tpu.memory_space<vmem>>, %arg10: memref<4x4x1024xf32, #tpu.memory_space<vmem>>, %arg11: memref<4x256xf32, #tpu.memory_space<vmem>>, %arg12: memref<4x256xf32, #tpu.memory_space<vmem>>) attributes {dimension_semantics = [#tpu.dimension_semantics<parallel>, #tpu.dimension_semantics<arbitrary>], iteration_bounds = array<i64: 1, 2>, scalar_prefetch = 0 : i64, scratch_operands = 3 : i64, tpu.core_type = #tpu.core_type<tc>, window_params = [{transform_indices = @transform_0, window_bounds = array<i64: 4, 4, 64>}, {transform_indices = @transform_1, window_bounds = array<i64: 4, 4, 64>}, {transform_indices = @transform_2, window_bounds = array<i64: 4, 1>}, {pipeline_mode = #tpu.pipeline_mode<synchronous>, transform_indices = @transform_3, window_bounds = array<i64: 64, 1024>}, {pipeline_mode = #tpu.pipeline_mode<synchronous>, transform_indices = @transform_4, window_bounds = array<i64: 256, 1024>}, {pipeline_mode = #tpu.pipeline_mode<synchronous>, transform_indices = @transform_5, window_bounds = array<i64: 1, 1024>}, {transform_indices = @transform_6, window_bounds = array<i64: 4, 4, 128>}, {transform_indices = @transform_7, window_bounds = array<i64: 4, 4, 128>}]} {
    %c0_i32 = arith.constant 0 : i32
    %0 = arith.cmpi eq, %arg1, %c0_i32 : i32
    %1 = arith.extui %0 : i1 to i32
    %c0_i32_0 = arith.constant 0 : i32
    %2 = arith.cmpi ne, %1, %c0_i32_0 : i32
    scf.if %2 {
      %cst_157 = arith.constant 0.000000e+00 : f32
      %472 = vector.broadcast %cst_157 : f32 to vector<4x256xf32>
      %c0_158 = arith.constant 0 : index
      %c0_159 = arith.constant 0 : index
      %473 = vector.load %arg11[%c0_158, %c0_159] : memref<4x256xf32, #tpu.memory_space<vmem>>, vector<4x256xf32>
      tpu.vector_store %arg11[%c0_158, %c0_159], %472 {strides = array<i32>} : memref<4x256xf32, #tpu.memory_space<vmem>>, vector<4x256xf32>,
      %cst_160 = arith.constant 0.000000e+00 : f32
      %474 = vector.broadcast %cst_160 : f32 to vector<4x256xf32>
      %c0_161 = arith.constant 0 : index
      %c0_162 = arith.constant 0 : index
      %475 = vector.load %arg12[%c0_161, %c0_162] : memref<4x256xf32, #tpu.memory_space<vmem>>, vector<4x256xf32>
      tpu.vector_store %arg12[%c0_161, %c0_162], %474 {strides = array<i32>} : memref<4x256xf32, #tpu.memory_space<vmem>>, vector<4x256xf32>,
    } else {
    }
    %c0 = arith.constant 0 : index
    %c0_1 = arith.constant 0 : index
    %c0_2 = arith.constant 0 : index
    %3 = vector.load %arg2[%c0, %c0_1, %c0_2] : memref<4x4x64xbf16, #tpu.memory_space<vmem>>, vector<4x4x64xbf16>
    %c0_3 = arith.constant 0 : index
    %c0_4 = arith.constant 0 : index
    %4 = vector.load %arg5[%c0_3, %c0_4] : memref<64x1024xbf16, #tpu.memory_space<vmem>>, vector<64x512xbf16>
    "tpu.trace_start"() <{level = 10 : i32, message = "tbd,dg->tbg"}> : () -> ()
    %cst = arith.constant dense<0.000000e+00> : vector<4x4x512xf32>
    %5 = tpu.matmul %3, %4, %cst {dimension_numbers = #tpu.dot_dimension_numbers<[2], [0], [0, 1], [1], [0, 0, 0, 1, 1, 1], [], []>} : vector<4x4x64xbf16>, vector<64x512xbf16>, vector<4x4x512xf32> -> vector<4x4x512xf32>
    "tpu.trace_stop"() : () -> ()
    %c0_5 = arith.constant 0 : index
    %c0_6 = arith.constant 0 : index
    %6 = vector.load %arg7[%c0_5, %c0_6] : memref<1x1024xf32, #tpu.memory_space<vmem>>, vector<1x512xf32>
    %7 = vector.shape_cast %6 : vector<1x512xf32> to vector<1x1x512xf32>
    %8 = vector.broadcast %7 : vector<1x1x512xf32> to vector<4x4x512xf32>
    %9 = arith.addf %5, %8 : vector<4x4x512xf32>
    %c0_7 = arith.constant 0 : index
    %c0_8 = arith.constant 0 : index
    %c0_9 = arith.constant 0 : index
    %10 = vector.load %arg10[%c0_7, %c0_8, %c0_9] : memref<4x4x1024xf32, #tpu.memory_space<vmem>>, vector<4x4x512xf32>
    tpu.vector_store %arg10[%c0_7, %c0_8, %c0_9], %9 {strides = array<i32>} : memref<4x4x1024xf32, #tpu.memory_space<vmem>>, vector<4x4x512xf32>,
    %c0_10 = arith.constant 0 : index
    %c0_11 = arith.constant 0 : index
    %c0_12 = arith.constant 0 : index
    %11 = vector.load %arg3[%c0_10, %c0_11, %c0_12] : memref<4x4x64xbf16, #tpu.memory_space<vmem>>, vector<4x4x64xbf16>
    %c0_13 = arith.constant 0 : index
    %c512 = arith.constant 512 : index
    %12 = vector.load %arg5[%c0_13, %c512] : memref<64x1024xbf16, #tpu.memory_space<vmem>>, vector<64x512xbf16>
    "tpu.trace_start"() <{level = 10 : i32, message = "tbd,dg->tbg"}> : () -> ()
    %cst_14 = arith.constant dense<0.000000e+00> : vector<4x4x512xf32>
    %13 = tpu.matmul %11, %12, %cst_14 {dimension_numbers = #tpu.dot_dimension_numbers<[2], [0], [0, 1], [1], [0, 0, 0, 1, 1, 1], [], []>} : vector<4x4x64xbf16>, vector<64x512xbf16>, vector<4x4x512xf32> -> vector<4x4x512xf32>
    "tpu.trace_stop"() : () -> ()
    %c0_15 = arith.constant 0 : index
    %c512_16 = arith.constant 512 : index
    %14 = vector.load %arg7[%c0_15, %c512_16] : memref<1x1024xf32, #tpu.memory_space<vmem>>, vector<1x512xf32>
    %15 = vector.shape_cast %14 : vector<1x512xf32> to vector<1x1x512xf32>
    %16 = vector.broadcast %15 : vector<1x1x512xf32> to vector<4x4x512xf32>
    %17 = arith.addf %13, %16 : vector<4x4x512xf32>
    %c0_17 = arith.constant 0 : index
    %c0_18 = arith.constant 0 : index
    %c512_19 = arith.constant 512 : index
    %18 = vector.load %arg10[%c0_17, %c0_18, %c512_19] : memref<4x4x1024xf32, #tpu.memory_space<vmem>>, vector<4x4x512xf32>
    tpu.vector_store %arg10[%c0_17, %c0_18, %c512_19], %17 {strides = array<i32>} : memref<4x4x1024xf32, #tpu.memory_space<vmem>>, vector<4x4x512xf32>,
    %c0_20 = arith.constant 0 : index
    %c0_21 = arith.constant 0 : index
    %19 = vector.load %arg4[%c0_20, %c0_21] : memref<4x1xi32, #tpu.memory_space<vmem>>, vector<4x1xi32>
    %c0_i32_22 = arith.constant 0 : i32
    %c3_i32 = arith.constant 3 : i32
    %20 = arith.subi %c3_i32, %c0_i32_22 : i32
    %c4_i32 = arith.constant 4 : i32
    %21 = arith.muli %arg1, %c4_i32 : i32
    %22 = arith.addi %21, %c0_i32_22 : i32
    %c7_i32 = arith.constant 7 : i32
    %23 = arith.subi %c7_i32, %22 : i32
    %24 = arith.index_cast %c0_i32_22 : i32 to index
    %c0_23 = arith.constant 0 : index
    %c0_24 = arith.constant 0 : index
    %25 = vector.load %arg10[%24, %c0_23, %c0_24] : memref<4x4x1024xf32, #tpu.memory_space<vmem>>, vector<1x4x1024xf32>
    %26 = vector.shape_cast %25 : vector<1x4x1024xf32> to vector<4x1024xf32>
    %27 = arith.index_cast %20 : i32 to index
    %c0_25 = arith.constant 0 : index
    %c0_26 = arith.constant 0 : index
    %28 = vector.load %arg10[%27, %c0_25, %c0_26] : memref<4x4x1024xf32, #tpu.memory_space<vmem>>, vector<1x4x1024xf32>
    %29 = vector.shape_cast %28 : vector<1x4x1024xf32> to vector<4x1024xf32>
    %c0_27 = arith.constant 0 : index
    %c0_28 = arith.constant 0 : index
    %30 = vector.load %arg11[%c0_27, %c0_28] : memref<4x256xf32, #tpu.memory_space<vmem>>, vector<4x256xf32>
    %c0_29 = arith.constant 0 : index
    %c0_30 = arith.constant 0 : index
    %31 = vector.load %arg12[%c0_29, %c0_30] : memref<4x256xf32, #tpu.memory_space<vmem>>, vector<4x256xf32>
    %32 = arith.truncf %30 : vector<4x256xf32> to vector<4x256xbf16>
    %c0_31 = arith.constant 0 : index
    %c0_32 = arith.constant 0 : index
    %33 = vector.load %arg6[%c0_31, %c0_32] : memref<256x1024xbf16, #tpu.memory_space<vmem>>, vector<256x1024xbf16>
    %cst_33 = arith.constant dense<0.000000e+00> : vector<4x1024xf32>
    %34 = tpu.matmul %32, %33, %cst_33 {dimension_numbers = #tpu.dot_dimension_numbers<[1], [0], [0], [1], [0, 0, 1, 1], [], []>} : vector<4x256xbf16>, vector<256x1024xbf16>, vector<4x1024xf32> -> vector<4x1024xf32>
    %35 = vector.extract_strided_slice %26 {offsets = [0, 0], sizes = [4, 512], strides = [1, 1]} : vector<4x1024xf32> to vector<4x512xf32>
    %36 = vector.extract_strided_slice %34 {offsets = [0, 0], sizes = [4, 512], strides = [1, 1]} : vector<4x1024xf32> to vector<4x512xf32>
    %37 = arith.addf %35, %36 : vector<4x512xf32>
    %38 = vector.extract_strided_slice %31 {offsets = [0, 0], sizes = [4, 128], strides = [1, 1]} : vector<4x256xf32> to vector<4x128xf32>
    %39 = vector.extract_strided_slice %37 {offsets = [0, 0], sizes = [4, 128], strides = [1, 1]} : vector<4x512xf32> to vector<4x128xf32>
    %40 = arith.negf %39 : vector<4x128xf32>
    %41 = math.exp %40 : vector<4x128xf32>
    %cst_34 = arith.constant 1.000000e+00 : f32
    %42 = vector.broadcast %cst_34 : f32 to vector<4x128xf32>
    %43 = arith.addf %42, %41 : vector<4x128xf32>
    %44 = arith.divf %42, %43 : vector<4x128xf32>
    %45 = vector.extract_strided_slice %37 {offsets = [0, 128], sizes = [4, 128], strides = [1, 1]} : vector<4x512xf32> to vector<4x128xf32>
    %46 = arith.negf %45 : vector<4x128xf32>
    %47 = math.exp %46 : vector<4x128xf32>
    %cst_35 = arith.constant 1.000000e+00 : f32
    %48 = vector.broadcast %cst_35 : f32 to vector<4x128xf32>
    %49 = arith.addf %48, %47 : vector<4x128xf32>
    %50 = arith.divf %48, %49 : vector<4x128xf32>
    %51 = vector.extract_strided_slice %37 {offsets = [0, 256], sizes = [4, 128], strides = [1, 1]} : vector<4x512xf32> to vector<4x128xf32>
    %52 = math.tanh %51 : vector<4x128xf32>
    %53 = vector.extract_strided_slice %37 {offsets = [0, 384], sizes = [4, 128], strides = [1, 1]} : vector<4x512xf32> to vector<4x128xf32>
    %54 = arith.negf %53 : vector<4x128xf32>
    %55 = math.exp %54 : vector<4x128xf32>
    %cst_36 = arith.constant 1.000000e+00 : f32
    %56 = vector.broadcast %cst_36 : f32 to vector<4x128xf32>
    %57 = arith.addf %56, %55 : vector<4x128xf32>
    %58 = arith.divf %56, %57 : vector<4x128xf32>
    %59 = arith.mulf %50, %38 : vector<4x128xf32>
    %60 = arith.mulf %44, %52 : vector<4x128xf32>
    %61 = arith.addf %59, %60 : vector<4x128xf32>
    %62 = math.tanh %61 : vector<4x128xf32>
    %63 = arith.mulf %58, %62 : vector<4x128xf32>
    %64 = vector.extract_strided_slice %29 {offsets = [0, 512], sizes = [4, 512], strides = [1, 1]} : vector<4x1024xf32> to vector<4x512xf32>
    %65 = vector.extract_strided_slice %34 {offsets = [0, 512], sizes = [4, 512], strides = [1, 1]} : vector<4x1024xf32> to vector<4x512xf32>
    %66 = arith.addf %64, %65 : vector<4x512xf32>
    %67 = vector.extract_strided_slice %31 {offsets = [0, 128], sizes = [4, 128], strides = [1, 1]} : vector<4x256xf32> to vector<4x128xf32>
    %68 = vector.extract_strided_slice %66 {offsets = [0, 0], sizes = [4, 128], strides = [1, 1]} : vector<4x512xf32> to vector<4x128xf32>
    %69 = arith.negf %68 : vector<4x128xf32>
    %70 = math.exp %69 : vector<4x128xf32>
    %cst_37 = arith.constant 1.000000e+00 : f32
    %71 = vector.broadcast %cst_37 : f32 to vector<4x128xf32>
    %72 = arith.addf %71, %70 : vector<4x128xf32>
    %73 = arith.divf %71, %72 : vector<4x128xf32>
    %74 = vector.extract_strided_slice %66 {offsets = [0, 128], sizes = [4, 128], strides = [1, 1]} : vector<4x512xf32> to vector<4x128xf32>
    %75 = arith.negf %74 : vector<4x128xf32>
    %76 = math.exp %75 : vector<4x128xf32>
    %cst_38 = arith.constant 1.000000e+00 : f32
    %77 = vector.broadcast %cst_38 : f32 to vector<4x128xf32>
    %78 = arith.addf %77, %76 : vector<4x128xf32>
    %79 = arith.divf %77, %78 : vector<4x128xf32>
    %80 = vector.extract_strided_slice %66 {offsets = [0, 256], sizes = [4, 128], strides = [1, 1]} : vector<4x512xf32> to vector<4x128xf32>
    %81 = math.tanh %80 : vector<4x128xf32>
    %82 = vector.extract_strided_slice %66 {offsets = [0, 384], sizes = [4, 128], strides = [1, 1]} : vector<4x512xf32> to vector<4x128xf32>
    %83 = arith.negf %82 : vector<4x128xf32>
    %84 = math.exp %83 : vector<4x128xf32>
    %cst_39 = arith.constant 1.000000e+00 : f32
    %85 = vector.broadcast %cst_39 : f32 to vector<4x128xf32>
    %86 = arith.addf %85, %84 : vector<4x128xf32>
    %87 = arith.divf %85, %86 : vector<4x128xf32>
    %88 = arith.mulf %79, %67 : vector<4x128xf32>
    %89 = arith.mulf %73, %81 : vector<4x128xf32>
    %90 = arith.addf %88, %89 : vector<4x128xf32>
    %91 = math.tanh %90 : vector<4x128xf32>
    %92 = arith.mulf %87, %91 : vector<4x128xf32>
    %93 = vector.broadcast %22 : i32 to vector<4x1xi32>
    %94 = arith.cmpi sgt, %19, %93 : vector<4x1xi32>
    %95 = vector.broadcast %23 : i32 to vector<4x1xi32>
    %96 = arith.cmpi sgt, %19, %95 : vector<4x1xi32>
    %97 = vector.extract_strided_slice %30 {offsets = [0, 0], sizes = [4, 128], strides = [1, 1]} : vector<4x256xf32> to vector<4x128xf32>
    %98 = vector.shape_cast %94 : vector<4x1xi1> to vector<4x1xi1>
    %99 = vector.broadcast %98 : vector<4x1xi1> to vector<4x128xi1>
    %100 = arith.select %99, %63, %97 : vector<4x128xi1>, vector<4x128xf32>
    %c0_40 = arith.constant 0 : index
    %c0_41 = arith.constant 0 : index
    %101 = vector.load %arg11[%c0_40, %c0_41] : memref<4x256xf32, #tpu.memory_space<vmem>>, vector<4x128xf32>
    tpu.vector_store %arg11[%c0_40, %c0_41], %100 {strides = array<i32>} : memref<4x256xf32, #tpu.memory_space<vmem>>, vector<4x128xf32>,
    %102 = vector.extract_strided_slice %30 {offsets = [0, 128], sizes = [4, 128], strides = [1, 1]} : vector<4x256xf32> to vector<4x128xf32>
    %103 = vector.shape_cast %96 : vector<4x1xi1> to vector<4x1xi1>
    %104 = vector.broadcast %103 : vector<4x1xi1> to vector<4x128xi1>
    %105 = arith.select %104, %92, %102 : vector<4x128xi1>, vector<4x128xf32>
    %c0_42 = arith.constant 0 : index
    %c128 = arith.constant 128 : index
    %106 = vector.load %arg11[%c0_42, %c128] : memref<4x256xf32, #tpu.memory_space<vmem>>, vector<4x128xf32>
    tpu.vector_store %arg11[%c0_42, %c128], %105 {strides = array<i32>} : memref<4x256xf32, #tpu.memory_space<vmem>>, vector<4x128xf32>,
    %107 = vector.extract_strided_slice %31 {offsets = [0, 0], sizes = [4, 128], strides = [1, 1]} : vector<4x256xf32> to vector<4x128xf32>
    %108 = vector.shape_cast %94 : vector<4x1xi1> to vector<4x1xi1>
    %109 = vector.broadcast %108 : vector<4x1xi1> to vector<4x128xi1>
    %110 = arith.select %109, %61, %107 : vector<4x128xi1>, vector<4x128xf32>
    %c0_43 = arith.constant 0 : index
    %c0_44 = arith.constant 0 : index
    %111 = vector.load %arg12[%c0_43, %c0_44] : memref<4x256xf32, #tpu.memory_space<vmem>>, vector<4x128xf32>
    tpu.vector_store %arg12[%c0_43, %c0_44], %110 {strides = array<i32>} : memref<4x256xf32, #tpu.memory_space<vmem>>, vector<4x128xf32>,
    %112 = vector.extract_strided_slice %31 {offsets = [0, 128], sizes = [4, 128], strides = [1, 1]} : vector<4x256xf32> to vector<4x128xf32>
    %113 = vector.shape_cast %96 : vector<4x1xi1> to vector<4x1xi1>
    %114 = vector.broadcast %113 : vector<4x1xi1> to vector<4x128xi1>
    %115 = arith.select %114, %90, %112 : vector<4x128xi1>, vector<4x128xf32>
    %c0_45 = arith.constant 0 : index
    %c128_46 = arith.constant 128 : index
    %116 = vector.load %arg12[%c0_45, %c128_46] : memref<4x256xf32, #tpu.memory_space<vmem>>, vector<4x128xf32>
    tpu.vector_store %arg12[%c0_45, %c128_46], %115 {strides = array<i32>} : memref<4x256xf32, #tpu.memory_space<vmem>>, vector<4x128xf32>,
    %cst_47 = arith.constant 0.000000e+00 : f32
    %117 = vector.shape_cast %94 : vector<4x1xi1> to vector<4x1xi1>
    %118 = vector.broadcast %117 : vector<4x1xi1> to vector<4x128xi1>
    %119 = vector.broadcast %cst_47 : f32 to vector<4x128xf32>
    %120 = arith.select %118, %63, %119 : vector<4x128xi1>, vector<4x128xf32>
    %121 = arith.index_cast %c0_i32_22 : i32 to index
    %c0_48 = arith.constant 0 : index
    %c0_49 = arith.constant 0 : index
    %122 = vector.load %arg8[%121, %c0_48, %c0_49] : memref<4x4x128xf32, #tpu.memory_space<vmem>>, vector<1x4x128xf32>
    %123 = vector.shape_cast %122 : vector<1x4x128xf32> to vector<4x128xf32>
    %124 = vector.shape_cast %120 : vector<4x128xf32> to vector<1x4x128xf32>
    tpu.vector_store %arg8[%121, %c0_48, %c0_49], %124 {strides = array<i32>} : memref<4x4x128xf32, #tpu.memory_space<vmem>>, vector<1x4x128xf32>,
    %cst_50 = arith.constant 0.000000e+00 : f32
    %125 = vector.shape_cast %96 : vector<4x1xi1> to vector<4x1xi1>
    %126 = vector.broadcast %125 : vector<4x1xi1> to vector<4x128xi1>
    %127 = vector.broadcast %cst_50 : f32 to vector<4x128xf32>
    %128 = arith.select %126, %92, %127 : vector<4x128xi1>, vector<4x128xf32>
    %129 = arith.index_cast %20 : i32 to index
    %c0_51 = arith.constant 0 : index
    %c0_52 = arith.constant 0 : index
    %130 = vector.load %arg9[%129, %c0_51, %c0_52] : memref<4x4x128xf32, #tpu.memory_space<vmem>>, vector<1x4x128xf32>
    %131 = vector.shape_cast %130 : vector<1x4x128xf32> to vector<4x128xf32>
    %132 = vector.shape_cast %128 : vector<4x128xf32> to vector<1x4x128xf32>
    tpu.vector_store %arg9[%129, %c0_51, %c0_52], %132 {strides = array<i32>} : memref<4x4x128xf32, #tpu.memory_space<vmem>>, vector<1x4x128xf32>,
    %c1_i32 = arith.constant 1 : i32
    %c3_i32_53 = arith.constant 3 : i32
    %133 = arith.subi %c3_i32_53, %c1_i32 : i32
    %c4_i32_54 = arith.constant 4 : i32
    %134 = arith.muli %arg1, %c4_i32_54 : i32
    %135 = arith.addi %134, %c1_i32 : i32
    %c7_i32_55 = arith.constant 7 : i32
    %136 = arith.subi %c7_i32_55, %135 : i32
    %137 = arith.index_cast %c1_i32 : i32 to index
    %c0_56 = arith.constant 0 : index
    %c0_57 = arith.constant 0 : index
    %138 = vector.load %arg10[%137, %c0_56, %c0_57] : memref<4x4x1024xf32, #tpu.memory_space<vmem>>, vector<1x4x1024xf32>
    %139 = vector.shape_cast %138 : vector<1x4x1024xf32> to vector<4x1024xf32>
    %140 = arith.index_cast %133 : i32 to index
    %c0_58 = arith.constant 0 : index
    %c0_59 = arith.constant 0 : index
    %141 = vector.load %arg10[%140, %c0_58, %c0_59] : memref<4x4x1024xf32, #tpu.memory_space<vmem>>, vector<1x4x1024xf32>
    %142 = vector.shape_cast %141 : vector<1x4x1024xf32> to vector<4x1024xf32>
    %c0_60 = arith.constant 0 : index
    %c0_61 = arith.constant 0 : index
    %143 = vector.load %arg11[%c0_60, %c0_61] : memref<4x256xf32, #tpu.memory_space<vmem>>, vector<4x256xf32>
    %c0_62 = arith.constant 0 : index
    %c0_63 = arith.constant 0 : index
    %144 = vector.load %arg12[%c0_62, %c0_63] : memref<4x256xf32, #tpu.memory_space<vmem>>, vector<4x256xf32>
    %145 = arith.truncf %143 : vector<4x256xf32> to vector<4x256xbf16>
    %c0_64 = arith.constant 0 : index
    %c0_65 = arith.constant 0 : index
    %146 = vector.load %arg6[%c0_64, %c0_65] : memref<256x1024xbf16, #tpu.memory_space<vmem>>, vector<256x1024xbf16>
    %cst_66 = arith.constant dense<0.000000e+00> : vector<4x1024xf32>
    %147 = tpu.matmul %145, %146, %cst_66 {dimension_numbers = #tpu.dot_dimension_numbers<[1], [0], [0], [1], [0, 0, 1, 1], [], []>} : vector<4x256xbf16>, vector<256x1024xbf16>, vector<4x1024xf32> -> vector<4x1024xf32>
    %148 = vector.extract_strided_slice %139 {offsets = [0, 0], sizes = [4, 512], strides = [1, 1]} : vector<4x1024xf32> to vector<4x512xf32>
    %149 = vector.extract_strided_slice %147 {offsets = [0, 0], sizes = [4, 512], strides = [1, 1]} : vector<4x1024xf32> to vector<4x512xf32>
    %150 = arith.addf %148, %149 : vector<4x512xf32>
    %151 = vector.extract_strided_slice %144 {offsets = [0, 0], sizes = [4, 128], strides = [1, 1]} : vector<4x256xf32> to vector<4x128xf32>
    %152 = vector.extract_strided_slice %150 {offsets = [0, 0], sizes = [4, 128], strides = [1, 1]} : vector<4x512xf32> to vector<4x128xf32>
    %153 = arith.negf %152 : vector<4x128xf32>
    %154 = math.exp %153 : vector<4x128xf32>
    %cst_67 = arith.constant 1.000000e+00 : f32
    %155 = vector.broadcast %cst_67 : f32 to vector<4x128xf32>
    %156 = arith.addf %155, %154 : vector<4x128xf32>
    %157 = arith.divf %155, %156 : vector<4x128xf32>
    %158 = vector.extract_strided_slice %150 {offsets = [0, 128], sizes = [4, 128], strides = [1, 1]} : vector<4x512xf32> to vector<4x128xf32>
    %159 = arith.negf %158 : vector<4x128xf32>
    %160 = math.exp %159 : vector<4x128xf32>
    %cst_68 = arith.constant 1.000000e+00 : f32
    %161 = vector.broadcast %cst_68 : f32 to vector<4x128xf32>
    %162 = arith.addf %161, %160 : vector<4x128xf32>
    %163 = arith.divf %161, %162 : vector<4x128xf32>
    %164 = vector.extract_strided_slice %150 {offsets = [0, 256], sizes = [4, 128], strides = [1, 1]} : vector<4x512xf32> to vector<4x128xf32>
    %165 = math.tanh %164 : vector<4x128xf32>
    %166 = vector.extract_strided_slice %150 {offsets = [0, 384], sizes = [4, 128], strides = [1, 1]} : vector<4x512xf32> to vector<4x128xf32>
    %167 = arith.negf %166 : vector<4x128xf32>
    %168 = math.exp %167 : vector<4x128xf32>
    %cst_69 = arith.constant 1.000000e+00 : f32
    %169 = vector.broadcast %cst_69 : f32 to vector<4x128xf32>
    %170 = arith.addf %169, %168 : vector<4x128xf32>
    %171 = arith.divf %169, %170 : vector<4x128xf32>
    %172 = arith.mulf %163, %151 : vector<4x128xf32>
    %173 = arith.mulf %157, %165 : vector<4x128xf32>
    %174 = arith.addf %172, %173 : vector<4x128xf32>
    %175 = math.tanh %174 : vector<4x128xf32>
    %176 = arith.mulf %171, %175 : vector<4x128xf32>
    %177 = vector.extract_strided_slice %142 {offsets = [0, 512], sizes = [4, 512], strides = [1, 1]} : vector<4x1024xf32> to vector<4x512xf32>
    %178 = vector.extract_strided_slice %147 {offsets = [0, 512], sizes = [4, 512], strides = [1, 1]} : vector<4x1024xf32> to vector<4x512xf32>
    %179 = arith.addf %177, %178 : vector<4x512xf32>
    %180 = vector.extract_strided_slice %144 {offsets = [0, 128], sizes = [4, 128], strides = [1, 1]} : vector<4x256xf32> to vector<4x128xf32>
    %181 = vector.extract_strided_slice %179 {offsets = [0, 0], sizes = [4, 128], strides = [1, 1]} : vector<4x512xf32> to vector<4x128xf32>
    %182 = arith.negf %181 : vector<4x128xf32>
    %183 = math.exp %182 : vector<4x128xf32>
    %cst_70 = arith.constant 1.000000e+00 : f32
    %184 = vector.broadcast %cst_70 : f32 to vector<4x128xf32>
    %185 = arith.addf %184, %183 : vector<4x128xf32>
    %186 = arith.divf %184, %185 : vector<4x128xf32>
    %187 = vector.extract_strided_slice %179 {offsets = [0, 128], sizes = [4, 128], strides = [1, 1]} : vector<4x512xf32> to vector<4x128xf32>
    %188 = arith.negf %187 : vector<4x128xf32>
    %189 = math.exp %188 : vector<4x128xf32>
    %cst_71 = arith.constant 1.000000e+00 : f32
    %190 = vector.broadcast %cst_71 : f32 to vector<4x128xf32>
    %191 = arith.addf %190, %189 : vector<4x128xf32>
    %192 = arith.divf %190, %191 : vector<4x128xf32>
    %193 = vector.extract_strided_slice %179 {offsets = [0, 256], sizes = [4, 128], strides = [1, 1]} : vector<4x512xf32> to vector<4x128xf32>
    %194 = math.tanh %193 : vector<4x128xf32>
    %195 = vector.extract_strided_slice %179 {offsets = [0, 384], sizes = [4, 128], strides = [1, 1]} : vector<4x512xf32> to vector<4x128xf32>
    %196 = arith.negf %195 : vector<4x128xf32>
    %197 = math.exp %196 : vector<4x128xf32>
    %cst_72 = arith.constant 1.000000e+00 : f32
    %198 = vector.broadcast %cst_72 : f32 to vector<4x128xf32>
    %199 = arith.addf %198, %197 : vector<4x128xf32>
    %200 = arith.divf %198, %199 : vector<4x128xf32>
    %201 = arith.mulf %192, %180 : vector<4x128xf32>
    %202 = arith.mulf %186, %194 : vector<4x128xf32>
    %203 = arith.addf %201, %202 : vector<4x128xf32>
    %204 = math.tanh %203 : vector<4x128xf32>
    %205 = arith.mulf %200, %204 : vector<4x128xf32>
    %206 = vector.broadcast %135 : i32 to vector<4x1xi32>
    %207 = arith.cmpi sgt, %19, %206 : vector<4x1xi32>
    %208 = vector.broadcast %136 : i32 to vector<4x1xi32>
    %209 = arith.cmpi sgt, %19, %208 : vector<4x1xi32>
    %210 = vector.extract_strided_slice %143 {offsets = [0, 0], sizes = [4, 128], strides = [1, 1]} : vector<4x256xf32> to vector<4x128xf32>
    %211 = vector.shape_cast %207 : vector<4x1xi1> to vector<4x1xi1>
    %212 = vector.broadcast %211 : vector<4x1xi1> to vector<4x128xi1>
    %213 = arith.select %212, %176, %210 : vector<4x128xi1>, vector<4x128xf32>
    %c0_73 = arith.constant 0 : index
    %c0_74 = arith.constant 0 : index
    %214 = vector.load %arg11[%c0_73, %c0_74] : memref<4x256xf32, #tpu.memory_space<vmem>>, vector<4x128xf32>
    tpu.vector_store %arg11[%c0_73, %c0_74], %213 {strides = array<i32>} : memref<4x256xf32, #tpu.memory_space<vmem>>, vector<4x128xf32>,
    %215 = vector.extract_strided_slice %143 {offsets = [0, 128], sizes = [4, 128], strides = [1, 1]} : vector<4x256xf32> to vector<4x128xf32>
    %216 = vector.shape_cast %209 : vector<4x1xi1> to vector<4x1xi1>
    %217 = vector.broadcast %216 : vector<4x1xi1> to vector<4x128xi1>
    %218 = arith.select %217, %205, %215 : vector<4x128xi1>, vector<4x128xf32>
    %c0_75 = arith.constant 0 : index
    %c128_76 = arith.constant 128 : index
    %219 = vector.load %arg11[%c0_75, %c128_76] : memref<4x256xf32, #tpu.memory_space<vmem>>, vector<4x128xf32>
    tpu.vector_store %arg11[%c0_75, %c128_76], %218 {strides = array<i32>} : memref<4x256xf32, #tpu.memory_space<vmem>>, vector<4x128xf32>,
    %220 = vector.extract_strided_slice %144 {offsets = [0, 0], sizes = [4, 128], strides = [1, 1]} : vector<4x256xf32> to vector<4x128xf32>
    %221 = vector.shape_cast %207 : vector<4x1xi1> to vector<4x1xi1>
    %222 = vector.broadcast %221 : vector<4x1xi1> to vector<4x128xi1>
    %223 = arith.select %222, %174, %220 : vector<4x128xi1>, vector<4x128xf32>
    %c0_77 = arith.constant 0 : index
    %c0_78 = arith.constant 0 : index
    %224 = vector.load %arg12[%c0_77, %c0_78] : memref<4x256xf32, #tpu.memory_space<vmem>>, vector<4x128xf32>
    tpu.vector_store %arg12[%c0_77, %c0_78], %223 {strides = array<i32>} : memref<4x256xf32, #tpu.memory_space<vmem>>, vector<4x128xf32>,
    %225 = vector.extract_strided_slice %144 {offsets = [0, 128], sizes = [4, 128], strides = [1, 1]} : vector<4x256xf32> to vector<4x128xf32>
    %226 = vector.shape_cast %209 : vector<4x1xi1> to vector<4x1xi1>
    %227 = vector.broadcast %226 : vector<4x1xi1> to vector<4x128xi1>
    %228 = arith.select %227, %203, %225 : vector<4x128xi1>, vector<4x128xf32>
    %c0_79 = arith.constant 0 : index
    %c128_80 = arith.constant 128 : index
    %229 = vector.load %arg12[%c0_79, %c128_80] : memref<4x256xf32, #tpu.memory_space<vmem>>, vector<4x128xf32>
    tpu.vector_store %arg12[%c0_79, %c128_80], %228 {strides = array<i32>} : memref<4x256xf32, #tpu.memory_space<vmem>>, vector<4x128xf32>,
    %cst_81 = arith.constant 0.000000e+00 : f32
    %230 = vector.shape_cast %207 : vector<4x1xi1> to vector<4x1xi1>
    %231 = vector.broadcast %230 : vector<4x1xi1> to vector<4x128xi1>
    %232 = vector.broadcast %cst_81 : f32 to vector<4x128xf32>
    %233 = arith.select %231, %176, %232 : vector<4x128xi1>, vector<4x128xf32>
    %234 = arith.index_cast %c1_i32 : i32 to index
    %c0_82 = arith.constant 0 : index
    %c0_83 = arith.constant 0 : index
    %235 = vector.load %arg8[%234, %c0_82, %c0_83] : memref<4x4x128xf32, #tpu.memory_space<vmem>>, vector<1x4x128xf32>
    %236 = vector.shape_cast %235 : vector<1x4x128xf32> to vector<4x128xf32>
    %237 = vector.shape_cast %233 : vector<4x128xf32> to vector<1x4x128xf32>
    tpu.vector_store %arg8[%234, %c0_82, %c0_83], %237 {strides = array<i32>} : memref<4x4x128xf32, #tpu.memory_space<vmem>>, vector<1x4x128xf32>,
    %cst_84 = arith.constant 0.000000e+00 : f32
    %238 = vector.shape_cast %209 : vector<4x1xi1> to vector<4x1xi1>
    %239 = vector.broadcast %238 : vector<4x1xi1> to vector<4x128xi1>
    %240 = vector.broadcast %cst_84 : f32 to vector<4x128xf32>
    %241 = arith.select %239, %205, %240 : vector<4x128xi1>, vector<4x128xf32>
    %242 = arith.index_cast %133 : i32 to index
    %c0_85 = arith.constant 0 : index
    %c0_86 = arith.constant 0 : index
    %243 = vector.load %arg9[%242, %c0_85, %c0_86] : memref<4x4x128xf32, #tpu.memory_space<vmem>>, vector<1x4x128xf32>
    %244 = vector.shape_cast %243 : vector<1x4x128xf32> to vector<4x128xf32>
    %245 = vector.shape_cast %241 : vector<4x128xf32> to vector<1x4x128xf32>
    tpu.vector_store %arg9[%242, %c0_85, %c0_86], %245 {strides = array<i32>} : memref<4x4x128xf32, #tpu.memory_space<vmem>>, vector<1x4x128xf32>,
    %c2_i32 = arith.constant 2 : i32
    %c3_i32_87 = arith.constant 3 : i32
    %246 = arith.subi %c3_i32_87, %c2_i32 : i32
    %c4_i32_88 = arith.constant 4 : i32
    %247 = arith.muli %arg1, %c4_i32_88 : i32
    %248 = arith.addi %247, %c2_i32 : i32
    %c7_i32_89 = arith.constant 7 : i32
    %249 = arith.subi %c7_i32_89, %248 : i32
    %250 = arith.index_cast %c2_i32 : i32 to index
    %c0_90 = arith.constant 0 : index
    %c0_91 = arith.constant 0 : index
    %251 = vector.load %arg10[%250, %c0_90, %c0_91] : memref<4x4x1024xf32, #tpu.memory_space<vmem>>, vector<1x4x1024xf32>
    %252 = vector.shape_cast %251 : vector<1x4x1024xf32> to vector<4x1024xf32>
    %253 = arith.index_cast %246 : i32 to index
    %c0_92 = arith.constant 0 : index
    %c0_93 = arith.constant 0 : index
    %254 = vector.load %arg10[%253, %c0_92, %c0_93] : memref<4x4x1024xf32, #tpu.memory_space<vmem>>, vector<1x4x1024xf32>
    %255 = vector.shape_cast %254 : vector<1x4x1024xf32> to vector<4x1024xf32>
    %c0_94 = arith.constant 0 : index
    %c0_95 = arith.constant 0 : index
    %256 = vector.load %arg11[%c0_94, %c0_95] : memref<4x256xf32, #tpu.memory_space<vmem>>, vector<4x256xf32>
    %c0_96 = arith.constant 0 : index
    %c0_97 = arith.constant 0 : index
    %257 = vector.load %arg12[%c0_96, %c0_97] : memref<4x256xf32, #tpu.memory_space<vmem>>, vector<4x256xf32>
    %258 = arith.truncf %256 : vector<4x256xf32> to vector<4x256xbf16>
    %c0_98 = arith.constant 0 : index
    %c0_99 = arith.constant 0 : index
    %259 = vector.load %arg6[%c0_98, %c0_99] : memref<256x1024xbf16, #tpu.memory_space<vmem>>, vector<256x1024xbf16>
    %cst_100 = arith.constant dense<0.000000e+00> : vector<4x1024xf32>
    %260 = tpu.matmul %258, %259, %cst_100 {dimension_numbers = #tpu.dot_dimension_numbers<[1], [0], [0], [1], [0, 0, 1, 1], [], []>} : vector<4x256xbf16>, vector<256x1024xbf16>, vector<4x1024xf32> -> vector<4x1024xf32>
    %261 = vector.extract_strided_slice %252 {offsets = [0, 0], sizes = [4, 512], strides = [1, 1]} : vector<4x1024xf32> to vector<4x512xf32>
    %262 = vector.extract_strided_slice %260 {offsets = [0, 0], sizes = [4, 512], strides = [1, 1]} : vector<4x1024xf32> to vector<4x512xf32>
    %263 = arith.addf %261, %262 : vector<4x512xf32>
    %264 = vector.extract_strided_slice %257 {offsets = [0, 0], sizes = [4, 128], strides = [1, 1]} : vector<4x256xf32> to vector<4x128xf32>
    %265 = vector.extract_strided_slice %263 {offsets = [0, 0], sizes = [4, 128], strides = [1, 1]} : vector<4x512xf32> to vector<4x128xf32>
    %266 = arith.negf %265 : vector<4x128xf32>
    %267 = math.exp %266 : vector<4x128xf32>
    %cst_101 = arith.constant 1.000000e+00 : f32
    %268 = vector.broadcast %cst_101 : f32 to vector<4x128xf32>
    %269 = arith.addf %268, %267 : vector<4x128xf32>
    %270 = arith.divf %268, %269 : vector<4x128xf32>
    %271 = vector.extract_strided_slice %263 {offsets = [0, 128], sizes = [4, 128], strides = [1, 1]} : vector<4x512xf32> to vector<4x128xf32>
    %272 = arith.negf %271 : vector<4x128xf32>
    %273 = math.exp %272 : vector<4x128xf32>
    %cst_102 = arith.constant 1.000000e+00 : f32
    %274 = vector.broadcast %cst_102 : f32 to vector<4x128xf32>
    %275 = arith.addf %274, %273 : vector<4x128xf32>
    %276 = arith.divf %274, %275 : vector<4x128xf32>
    %277 = vector.extract_strided_slice %263 {offsets = [0, 256], sizes = [4, 128], strides = [1, 1]} : vector<4x512xf32> to vector<4x128xf32>
    %278 = math.tanh %277 : vector<4x128xf32>
    %279 = vector.extract_strided_slice %263 {offsets = [0, 384], sizes = [4, 128], strides = [1, 1]} : vector<4x512xf32> to vector<4x128xf32>
    %280 = arith.negf %279 : vector<4x128xf32>
    %281 = math.exp %280 : vector<4x128xf32>
    %cst_103 = arith.constant 1.000000e+00 : f32
    %282 = vector.broadcast %cst_103 : f32 to vector<4x128xf32>
    %283 = arith.addf %282, %281 : vector<4x128xf32>
    %284 = arith.divf %282, %283 : vector<4x128xf32>
    %285 = arith.mulf %276, %264 : vector<4x128xf32>
    %286 = arith.mulf %270, %278 : vector<4x128xf32>
    %287 = arith.addf %285, %286 : vector<4x128xf32>
    %288 = math.tanh %287 : vector<4x128xf32>
    %289 = arith.mulf %284, %288 : vector<4x128xf32>
    %290 = vector.extract_strided_slice %255 {offsets = [0, 512], sizes = [4, 512], strides = [1, 1]} : vector<4x1024xf32> to vector<4x512xf32>
    %291 = vector.extract_strided_slice %260 {offsets = [0, 512], sizes = [4, 512], strides = [1, 1]} : vector<4x1024xf32> to vector<4x512xf32>
    %292 = arith.addf %290, %291 : vector<4x512xf32>
    %293 = vector.extract_strided_slice %257 {offsets = [0, 128], sizes = [4, 128], strides = [1, 1]} : vector<4x256xf32> to vector<4x128xf32>
    %294 = vector.extract_strided_slice %292 {offsets = [0, 0], sizes = [4, 128], strides = [1, 1]} : vector<4x512xf32> to vector<4x128xf32>
    %295 = arith.negf %294 : vector<4x128xf32>
    %296 = math.exp %295 : vector<4x128xf32>
    %cst_104 = arith.constant 1.000000e+00 : f32
    %297 = vector.broadcast %cst_104 : f32 to vector<4x128xf32>
    %298 = arith.addf %297, %296 : vector<4x128xf32>
    %299 = arith.divf %297, %298 : vector<4x128xf32>
    %300 = vector.extract_strided_slice %292 {offsets = [0, 128], sizes = [4, 128], strides = [1, 1]} : vector<4x512xf32> to vector<4x128xf32>
    %301 = arith.negf %300 : vector<4x128xf32>
    %302 = math.exp %301 : vector<4x128xf32>
    %cst_105 = arith.constant 1.000000e+00 : f32
    %303 = vector.broadcast %cst_105 : f32 to vector<4x128xf32>
    %304 = arith.addf %303, %302 : vector<4x128xf32>
    %305 = arith.divf %303, %304 : vector<4x128xf32>
    %306 = vector.extract_strided_slice %292 {offsets = [0, 256], sizes = [4, 128], strides = [1, 1]} : vector<4x512xf32> to vector<4x128xf32>
    %307 = math.tanh %306 : vector<4x128xf32>
    %308 = vector.extract_strided_slice %292 {offsets = [0, 384], sizes = [4, 128], strides = [1, 1]} : vector<4x512xf32> to vector<4x128xf32>
    %309 = arith.negf %308 : vector<4x128xf32>
    %310 = math.exp %309 : vector<4x128xf32>
    %cst_106 = arith.constant 1.000000e+00 : f32
    %311 = vector.broadcast %cst_106 : f32 to vector<4x128xf32>
    %312 = arith.addf %311, %310 : vector<4x128xf32>
    %313 = arith.divf %311, %312 : vector<4x128xf32>
    %314 = arith.mulf %305, %293 : vector<4x128xf32>
    %315 = arith.mulf %299, %307 : vector<4x128xf32>
    %316 = arith.addf %314, %315 : vector<4x128xf32>
    %317 = math.tanh %316 : vector<4x128xf32>
    %318 = arith.mulf %313, %317 : vector<4x128xf32>
    %319 = vector.broadcast %248 : i32 to vector<4x1xi32>
    %320 = arith.cmpi sgt, %19, %319 : vector<4x1xi32>
    %321 = vector.broadcast %249 : i32 to vector<4x1xi32>
    %322 = arith.cmpi sgt, %19, %321 : vector<4x1xi32>
    %323 = vector.extract_strided_slice %256 {offsets = [0, 0], sizes = [4, 128], strides = [1, 1]} : vector<4x256xf32> to vector<4x128xf32>
    %324 = vector.shape_cast %320 : vector<4x1xi1> to vector<4x1xi1>
    %325 = vector.broadcast %324 : vector<4x1xi1> to vector<4x128xi1>
    %326 = arith.select %325, %289, %323 : vector<4x128xi1>, vector<4x128xf32>
    %c0_107 = arith.constant 0 : index
    %c0_108 = arith.constant 0 : index
    %327 = vector.load %arg11[%c0_107, %c0_108] : memref<4x256xf32, #tpu.memory_space<vmem>>, vector<4x128xf32>
    tpu.vector_store %arg11[%c0_107, %c0_108], %326 {strides = array<i32>} : memref<4x256xf32, #tpu.memory_space<vmem>>, vector<4x128xf32>,
    %328 = vector.extract_strided_slice %256 {offsets = [0, 128], sizes = [4, 128], strides = [1, 1]} : vector<4x256xf32> to vector<4x128xf32>
    %329 = vector.shape_cast %322 : vector<4x1xi1> to vector<4x1xi1>
    %330 = vector.broadcast %329 : vector<4x1xi1> to vector<4x128xi1>
    %331 = arith.select %330, %318, %328 : vector<4x128xi1>, vector<4x128xf32>
    %c0_109 = arith.constant 0 : index
    %c128_110 = arith.constant 128 : index
    %332 = vector.load %arg11[%c0_109, %c128_110] : memref<4x256xf32, #tpu.memory_space<vmem>>, vector<4x128xf32>
    tpu.vector_store %arg11[%c0_109, %c128_110], %331 {strides = array<i32>} : memref<4x256xf32, #tpu.memory_space<vmem>>, vector<4x128xf32>,
    %333 = vector.extract_strided_slice %257 {offsets = [0, 0], sizes = [4, 128], strides = [1, 1]} : vector<4x256xf32> to vector<4x128xf32>
    %334 = vector.shape_cast %320 : vector<4x1xi1> to vector<4x1xi1>
    %335 = vector.broadcast %334 : vector<4x1xi1> to vector<4x128xi1>
    %336 = arith.select %335, %287, %333 : vector<4x128xi1>, vector<4x128xf32>
    %c0_111 = arith.constant 0 : index
    %c0_112 = arith.constant 0 : index
    %337 = vector.load %arg12[%c0_111, %c0_112] : memref<4x256xf32, #tpu.memory_space<vmem>>, vector<4x128xf32>
    tpu.vector_store %arg12[%c0_111, %c0_112], %336 {strides = array<i32>} : memref<4x256xf32, #tpu.memory_space<vmem>>, vector<4x128xf32>,
    %338 = vector.extract_strided_slice %257 {offsets = [0, 128], sizes = [4, 128], strides = [1, 1]} : vector<4x256xf32> to vector<4x128xf32>
    %339 = vector.shape_cast %322 : vector<4x1xi1> to vector<4x1xi1>
    %340 = vector.broadcast %339 : vector<4x1xi1> to vector<4x128xi1>
    %341 = arith.select %340, %316, %338 : vector<4x128xi1>, vector<4x128xf32>
    %c0_113 = arith.constant 0 : index
    %c128_114 = arith.constant 128 : index
    %342 = vector.load %arg12[%c0_113, %c128_114] : memref<4x256xf32, #tpu.memory_space<vmem>>, vector<4x128xf32>
    tpu.vector_store %arg12[%c0_113, %c128_114], %341 {strides = array<i32>} : memref<4x256xf32, #tpu.memory_space<vmem>>, vector<4x128xf32>,
    %cst_115 = arith.constant 0.000000e+00 : f32
    %343 = vector.shape_cast %320 : vector<4x1xi1> to vector<4x1xi1>
    %344 = vector.broadcast %343 : vector<4x1xi1> to vector<4x128xi1>
    %345 = vector.broadcast %cst_115 : f32 to vector<4x128xf32>
    %346 = arith.select %344, %289, %345 : vector<4x128xi1>, vector<4x128xf32>
    %347 = arith.index_cast %c2_i32 : i32 to index
    %c0_116 = arith.constant 0 : index
    %c0_117 = arith.constant 0 : index
    %348 = vector.load %arg8[%347, %c0_116, %c0_117] : memref<4x4x128xf32, #tpu.memory_space<vmem>>, vector<1x4x128xf32>
    %349 = vector.shape_cast %348 : vector<1x4x128xf32> to vector<4x128xf32>
    %350 = vector.shape_cast %346 : vector<4x128xf32> to vector<1x4x128xf32>
    tpu.vector_store %arg8[%347, %c0_116, %c0_117], %350 {strides = array<i32>} : memref<4x4x128xf32, #tpu.memory_space<vmem>>, vector<1x4x128xf32>,
    %cst_118 = arith.constant 0.000000e+00 : f32
    %351 = vector.shape_cast %322 : vector<4x1xi1> to vector<4x1xi1>
    %352 = vector.broadcast %351 : vector<4x1xi1> to vector<4x128xi1>
    %353 = vector.broadcast %cst_118 : f32 to vector<4x128xf32>
    %354 = arith.select %352, %318, %353 : vector<4x128xi1>, vector<4x128xf32>
    %355 = arith.index_cast %246 : i32 to index
    %c0_119 = arith.constant 0 : index
    %c0_120 = arith.constant 0 : index
    %356 = vector.load %arg9[%355, %c0_119, %c0_120] : memref<4x4x128xf32, #tpu.memory_space<vmem>>, vector<1x4x128xf32>
    %357 = vector.shape_cast %356 : vector<1x4x128xf32> to vector<4x128xf32>
    %358 = vector.shape_cast %354 : vector<4x128xf32> to vector<1x4x128xf32>
    tpu.vector_store %arg9[%355, %c0_119, %c0_120], %358 {strides = array<i32>} : memref<4x4x128xf32, #tpu.memory_space<vmem>>, vector<1x4x128xf32>,
    %c3_i32_121 = arith.constant 3 : i32
    %c3_i32_122 = arith.constant 3 : i32
    %359 = arith.subi %c3_i32_122, %c3_i32_121 : i32
    %c4_i32_123 = arith.constant 4 : i32
    %360 = arith.muli %arg1, %c4_i32_123 : i32
    %361 = arith.addi %360, %c3_i32_121 : i32
    %c7_i32_124 = arith.constant 7 : i32
    %362 = arith.subi %c7_i32_124, %361 : i32
    %363 = arith.index_cast %c3_i32_121 : i32 to index
    %c0_125 = arith.constant 0 : index
    %c0_126 = arith.constant 0 : index
    %364 = vector.load %arg10[%363, %c0_125, %c0_126] : memref<4x4x1024xf32, #tpu.memory_space<vmem>>, vector<1x4x1024xf32>
    %365 = vector.shape_cast %364 : vector<1x4x1024xf32> to vector<4x1024xf32>
    %366 = arith.index_cast %359 : i32 to index
    %c0_127 = arith.constant 0 : index
    %c0_128 = arith.constant 0 : index
    %367 = vector.load %arg10[%366, %c0_127, %c0_128] : memref<4x4x1024xf32, #tpu.memory_space<vmem>>, vector<1x4x1024xf32>
    %368 = vector.shape_cast %367 : vector<1x4x1024xf32> to vector<4x1024xf32>
    %c0_129 = arith.constant 0 : index
    %c0_130 = arith.constant 0 : index
    %369 = vector.load %arg11[%c0_129, %c0_130] : memref<4x256xf32, #tpu.memory_space<vmem>>, vector<4x256xf32>
    %c0_131 = arith.constant 0 : index
    %c0_132 = arith.constant 0 : index
    %370 = vector.load %arg12[%c0_131, %c0_132] : memref<4x256xf32, #tpu.memory_space<vmem>>, vector<4x256xf32>
    %371 = arith.truncf %369 : vector<4x256xf32> to vector<4x256xbf16>
    %c0_133 = arith.constant 0 : index
    %c0_134 = arith.constant 0 : index
    %372 = vector.load %arg6[%c0_133, %c0_134] : memref<256x1024xbf16, #tpu.memory_space<vmem>>, vector<256x1024xbf16>
    %cst_135 = arith.constant dense<0.000000e+00> : vector<4x1024xf32>
    %373 = tpu.matmul %371, %372, %cst_135 {dimension_numbers = #tpu.dot_dimension_numbers<[1], [0], [0], [1], [0, 0, 1, 1], [], []>} : vector<4x256xbf16>, vector<256x1024xbf16>, vector<4x1024xf32> -> vector<4x1024xf32>
    %374 = vector.extract_strided_slice %365 {offsets = [0, 0], sizes = [4, 512], strides = [1, 1]} : vector<4x1024xf32> to vector<4x512xf32>
    %375 = vector.extract_strided_slice %373 {offsets = [0, 0], sizes = [4, 512], strides = [1, 1]} : vector<4x1024xf32> to vector<4x512xf32>
    %376 = arith.addf %374, %375 : vector<4x512xf32>
    %377 = vector.extract_strided_slice %370 {offsets = [0, 0], sizes = [4, 128], strides = [1, 1]} : vector<4x256xf32> to vector<4x128xf32>
    %378 = vector.extract_strided_slice %376 {offsets = [0, 0], sizes = [4, 128], strides = [1, 1]} : vector<4x512xf32> to vector<4x128xf32>
    %379 = arith.negf %378 : vector<4x128xf32>
    %380 = math.exp %379 : vector<4x128xf32>
    %cst_136 = arith.constant 1.000000e+00 : f32
    %381 = vector.broadcast %cst_136 : f32 to vector<4x128xf32>
    %382 = arith.addf %381, %380 : vector<4x128xf32>
    %383 = arith.divf %381, %382 : vector<4x128xf32>
    %384 = vector.extract_strided_slice %376 {offsets = [0, 128], sizes = [4, 128], strides = [1, 1]} : vector<4x512xf32> to vector<4x128xf32>
    %385 = arith.negf %384 : vector<4x128xf32>
    %386 = math.exp %385 : vector<4x128xf32>
    %cst_137 = arith.constant 1.000000e+00 : f32
    %387 = vector.broadcast %cst_137 : f32 to vector<4x128xf32>
    %388 = arith.addf %387, %386 : vector<4x128xf32>
    %389 = arith.divf %387, %388 : vector<4x128xf32>
    %390 = vector.extract_strided_slice %376 {offsets = [0, 256], sizes = [4, 128], strides = [1, 1]} : vector<4x512xf32> to vector<4x128xf32>
    %391 = math.tanh %390 : vector<4x128xf32>
    %392 = vector.extract_strided_slice %376 {offsets = [0, 384], sizes = [4, 128], strides = [1, 1]} : vector<4x512xf32> to vector<4x128xf32>
    %393 = arith.negf %392 : vector<4x128xf32>
    %394 = math.exp %393 : vector<4x128xf32>
    %cst_138 = arith.constant 1.000000e+00 : f32
    %395 = vector.broadcast %cst_138 : f32 to vector<4x128xf32>
    %396 = arith.addf %395, %394 : vector<4x128xf32>
    %397 = arith.divf %395, %396 : vector<4x128xf32>
    %398 = arith.mulf %389, %377 : vector<4x128xf32>
    %399 = arith.mulf %383, %391 : vector<4x128xf32>
    %400 = arith.addf %398, %399 : vector<4x128xf32>
    %401 = math.tanh %400 : vector<4x128xf32>
    %402 = arith.mulf %397, %401 : vector<4x128xf32>
    %403 = vector.extract_strided_slice %368 {offsets = [0, 512], sizes = [4, 512], strides = [1, 1]} : vector<4x1024xf32> to vector<4x512xf32>
    %404 = vector.extract_strided_slice %373 {offsets = [0, 512], sizes = [4, 512], strides = [1, 1]} : vector<4x1024xf32> to vector<4x512xf32>
    %405 = arith.addf %403, %404 : vector<4x512xf32>
    %406 = vector.extract_strided_slice %370 {offsets = [0, 128], sizes = [4, 128], strides = [1, 1]} : vector<4x256xf32> to vector<4x128xf32>
    %407 = vector.extract_strided_slice %405 {offsets = [0, 0], sizes = [4, 128], strides = [1, 1]} : vector<4x512xf32> to vector<4x128xf32>
    %408 = arith.negf %407 : vector<4x128xf32>
    %409 = math.exp %408 : vector<4x128xf32>
    %cst_139 = arith.constant 1.000000e+00 : f32
    %410 = vector.broadcast %cst_139 : f32 to vector<4x128xf32>
    %411 = arith.addf %410, %409 : vector<4x128xf32>
    %412 = arith.divf %410, %411 : vector<4x128xf32>
    %413 = vector.extract_strided_slice %405 {offsets = [0, 128], sizes = [4, 128], strides = [1, 1]} : vector<4x512xf32> to vector<4x128xf32>
    %414 = arith.negf %413 : vector<4x128xf32>
    %415 = math.exp %414 : vector<4x128xf32>
    %cst_140 = arith.constant 1.000000e+00 : f32
    %416 = vector.broadcast %cst_140 : f32 to vector<4x128xf32>
    %417 = arith.addf %416, %415 : vector<4x128xf32>
    %418 = arith.divf %416, %417 : vector<4x128xf32>
    %419 = vector.extract_strided_slice %405 {offsets = [0, 256], sizes = [4, 128], strides = [1, 1]} : vector<4x512xf32> to vector<4x128xf32>
    %420 = math.tanh %419 : vector<4x128xf32>
    %421 = vector.extract_strided_slice %405 {offsets = [0, 384], sizes = [4, 128], strides = [1, 1]} : vector<4x512xf32> to vector<4x128xf32>
    %422 = arith.negf %421 : vector<4x128xf32>
    %423 = math.exp %422 : vector<4x128xf32>
    %cst_141 = arith.constant 1.000000e+00 : f32
    %424 = vector.broadcast %cst_141 : f32 to vector<4x128xf32>
    %425 = arith.addf %424, %423 : vector<4x128xf32>
    %426 = arith.divf %424, %425 : vector<4x128xf32>
    %427 = arith.mulf %418, %406 : vector<4x128xf32>
    %428 = arith.mulf %412, %420 : vector<4x128xf32>
    %429 = arith.addf %427, %428 : vector<4x128xf32>
    %430 = math.tanh %429 : vector<4x128xf32>
    %431 = arith.mulf %426, %430 : vector<4x128xf32>
    %432 = vector.broadcast %361 : i32 to vector<4x1xi32>
    %433 = arith.cmpi sgt, %19, %432 : vector<4x1xi32>
    %434 = vector.broadcast %362 : i32 to vector<4x1xi32>
    %435 = arith.cmpi sgt, %19, %434 : vector<4x1xi32>
    %436 = vector.extract_strided_slice %369 {offsets = [0, 0], sizes = [4, 128], strides = [1, 1]} : vector<4x256xf32> to vector<4x128xf32>
    %437 = vector.shape_cast %433 : vector<4x1xi1> to vector<4x1xi1>
    %438 = vector.broadcast %437 : vector<4x1xi1> to vector<4x128xi1>
    %439 = arith.select %438, %402, %436 : vector<4x128xi1>, vector<4x128xf32>
    %c0_142 = arith.constant 0 : index
    %c0_143 = arith.constant 0 : index
    %440 = vector.load %arg11[%c0_142, %c0_143] : memref<4x256xf32, #tpu.memory_space<vmem>>, vector<4x128xf32>
    tpu.vector_store %arg11[%c0_142, %c0_143], %439 {strides = array<i32>} : memref<4x256xf32, #tpu.memory_space<vmem>>, vector<4x128xf32>,
    %441 = vector.extract_strided_slice %369 {offsets = [0, 128], sizes = [4, 128], strides = [1, 1]} : vector<4x256xf32> to vector<4x128xf32>
    %442 = vector.shape_cast %435 : vector<4x1xi1> to vector<4x1xi1>
    %443 = vector.broadcast %442 : vector<4x1xi1> to vector<4x128xi1>
    %444 = arith.select %443, %431, %441 : vector<4x128xi1>, vector<4x128xf32>
    %c0_144 = arith.constant 0 : index
    %c128_145 = arith.constant 128 : index
    %445 = vector.load %arg11[%c0_144, %c128_145] : memref<4x256xf32, #tpu.memory_space<vmem>>, vector<4x128xf32>
    tpu.vector_store %arg11[%c0_144, %c128_145], %444 {strides = array<i32>} : memref<4x256xf32, #tpu.memory_space<vmem>>, vector<4x128xf32>,
    %446 = vector.extract_strided_slice %370 {offsets = [0, 0], sizes = [4, 128], strides = [1, 1]} : vector<4x256xf32> to vector<4x128xf32>
    %447 = vector.shape_cast %433 : vector<4x1xi1> to vector<4x1xi1>
    %448 = vector.broadcast %447 : vector<4x1xi1> to vector<4x128xi1>
    %449 = arith.select %448, %400, %446 : vector<4x128xi1>, vector<4x128xf32>
    %c0_146 = arith.constant 0 : index
    %c0_147 = arith.constant 0 : index
    %450 = vector.load %arg12[%c0_146, %c0_147] : memref<4x256xf32, #tpu.memory_space<vmem>>, vector<4x128xf32>
    tpu.vector_store %arg12[%c0_146, %c0_147], %449 {strides = array<i32>} : memref<4x256xf32, #tpu.memory_space<vmem>>, vector<4x128xf32>,
    %451 = vector.extract_strided_slice %370 {offsets = [0, 128], sizes = [4, 128], strides = [1, 1]} : vector<4x256xf32> to vector<4x128xf32>
    %452 = vector.shape_cast %435 : vector<4x1xi1> to vector<4x1xi1>
    %453 = vector.broadcast %452 : vector<4x1xi1> to vector<4x128xi1>
    %454 = arith.select %453, %429, %451 : vector<4x128xi1>, vector<4x128xf32>
    %c0_148 = arith.constant 0 : index
    %c128_149 = arith.constant 128 : index
    %455 = vector.load %arg12[%c0_148, %c128_149] : memref<4x256xf32, #tpu.memory_space<vmem>>, vector<4x128xf32>
    tpu.vector_store %arg12[%c0_148, %c128_149], %454 {strides = array<i32>} : memref<4x256xf32, #tpu.memory_space<vmem>>, vector<4x128xf32>,
    %cst_150 = arith.constant 0.000000e+00 : f32
    %456 = vector.shape_cast %433 : vector<4x1xi1> to vector<4x1xi1>
    %457 = vector.broadcast %456 : vector<4x1xi1> to vector<4x128xi1>
    %458 = vector.broadcast %cst_150 : f32 to vector<4x128xf32>
    %459 = arith.select %457, %402, %458 : vector<4x128xi1>, vector<4x128xf32>
    %460 = arith.index_cast %c3_i32_121 : i32 to index
    %c0_151 = arith.constant 0 : index
    %c0_152 = arith.constant 0 : index
    %461 = vector.load %arg8[%460, %c0_151, %c0_152] : memref<4x4x128xf32, #tpu.memory_space<vmem>>, vector<1x4x128xf32>
    %462 = vector.shape_cast %461 : vector<1x4x128xf32> to vector<4x128xf32>
    %463 = vector.shape_cast %459 : vector<4x128xf32> to vector<1x4x128xf32>
    tpu.vector_store %arg8[%460, %c0_151, %c0_152], %463 {strides = array<i32>} : memref<4x4x128xf32, #tpu.memory_space<vmem>>, vector<1x4x128xf32>,
    %cst_153 = arith.constant 0.000000e+00 : f32
    %464 = vector.shape_cast %435 : vector<4x1xi1> to vector<4x1xi1>
    %465 = vector.broadcast %464 : vector<4x1xi1> to vector<4x128xi1>
    %466 = vector.broadcast %cst_153 : f32 to vector<4x128xf32>
    %467 = arith.select %465, %431, %466 : vector<4x128xi1>, vector<4x128xf32>
    %468 = arith.index_cast %359 : i32 to index
    %c0_154 = arith.constant 0 : index
    %c0_155 = arith.constant 0 : index
    %469 = vector.load %arg9[%468, %c0_154, %c0_155] : memref<4x4x128xf32, #tpu.memory_space<vmem>>, vector<1x4x128xf32>
    %470 = vector.shape_cast %469 : vector<1x4x128xf32> to vector<4x128xf32>
    %471 = vector.shape_cast %467 : vector<4x128xf32> to vector<1x4x128xf32>
    tpu.vector_store %arg9[%468, %c0_154, %c0_155], %471 {strides = array<i32>} : memref<4x4x128xf32, #tpu.memory_space<vmem>>, vector<1x4x128xf32>,
    %c4_i32_156 = arith.constant 4 : i32
    return
  }
  func.func @transform_0(%arg0: i32, %arg1: i32) -> (i32, i32, i32) {
    %c0_i32 = arith.constant 0 : i32
    %c0_i32_0 = arith.constant 0 : i32
    return %arg1, %arg0, %c0_i32 : i32, i32, i32
  }
  func.func @transform_1(%arg0: i32, %arg1: i32) -> (i32, i32, i32) {
    %c1_i32 = arith.constant 1 : i32
    %0 = arith.subi %c1_i32, %arg1 : i32
    %c0_i32 = arith.constant 0 : i32
    %c0_i32_0 = arith.constant 0 : i32
    return %0, %arg0, %c0_i32 : i32, i32, i32
  }
  func.func @transform_2(%arg0: i32, %arg1: i32) -> (i32, i32) {
    %c0_i32 = arith.constant 0 : i32
    %c0_i32_0 = arith.constant 0 : i32
    return %arg0, %c0_i32 : i32, i32
  }
  func.func @transform_3(%arg0: i32, %arg1: i32) -> (i32, i32) {
    %c0_i32 = arith.constant 0 : i32
    %c0_i32_0 = arith.constant 0 : i32
    %c0_i32_1 = arith.constant 0 : i32
    return %c0_i32, %c0_i32_0 : i32, i32
  }
  func.func @transform_4(%arg0: i32, %arg1: i32) -> (i32, i32) {
    %c0_i32 = arith.constant 0 : i32
    %c0_i32_0 = arith.constant 0 : i32
    %c0_i32_1 = arith.constant 0 : i32
    return %c0_i32, %c0_i32_0 : i32, i32
  }
  func.func @transform_5(%arg0: i32, %arg1: i32) -> (i32, i32) {
    %c0_i32 = arith.constant 0 : i32
    %c0_i32_0 = arith.constant 0 : i32
    %c0_i32_1 = arith.constant 0 : i32
    return %c0_i32, %c0_i32_0 : i32, i32
  }
  func.func @transform_6(%arg0: i32, %arg1: i32) -> (i32, i32, i32) {
    %c0_i32 = arith.constant 0 : i32
    %c0_i32_0 = arith.constant 0 : i32
    return %arg1, %arg0, %c0_i32 : i32, i32, i32
  }
  func.func @transform_7(%arg0: i32, %arg1: i32) -> (i32, i32, i32) {
    %c1_i32 = arith.constant 1 : i32
    %0 = arith.subi %c1_i32, %arg1 : i32
    %c0_i32 = arith.constant 0 : i32
    %c0_i32_0 = arith.constant 0 : i32
    return %0, %arg0, %c0_i32 : i32, i32, i32
  }
}

</mosaic_0001>

<llo_original>
// kernel: bidirec_lstm_forward.3
$region0: #{bidirec_lstm_forward.3}
  #allocation0 [shape = 'u32[]', space=smem, size = 0x4, offset = 0x4, fixed_abs, tag = 'smem constant byte address 0x4 - core index']
  #allocation1 [shape = 'u32[144,128]{1,0:T(1,128)}', space=vmem, size = 0x12000, scoped, tag = 'internal scratch']
  %s0 = inlined_call_operand.vmem [shape: f32[8,4,128], index: 0, kind: input, shape index: {}]
  %s1 = inlined_call_operand.vmem [shape: f32[8,4,128], index: 1, kind: input, shape index: {}]
  %s2 = inlined_call_operand.vmem [shape: f32[128,64], index: 2, kind: input, shape index: {}]
  %s3 = inlined_call_operand.vmem [shape: f32[128,64], index: 3, kind: input, shape index: {}]
  %s4 = inlined_call_operand.vmem [shape: f32[64,5], index: 4, kind: input, shape index: {}]
  %s5 = inlined_call_operand.vmem [shape: f32[5,128,128], index: 5, kind: input, shape index: {}]
  %s6 = inlined_call_operand.vmem [shape: f32[5,128,128], index: 6, kind: input, shape index: {}]
  %s7 = inlined_call_operand.vmem [shape: f32[1,128], index: 7, kind: input, shape index: {}]
  %s8 = inlined_call_operand.vmem [shape: f32[128,7], index: 8, kind: input, shape index: {}]
  %s9 = inlined_call_operand.vmem [shape: f32[1,7], index: 9, kind: input, shape index: {}]
  %s10 = inlined_call_operand.hbm [shape: f32[4,7], index: 10, kind: output, shape index: {0}]
  %s11 = inlined_call_operand.hbm [shape: f32[1,1], index: 11, kind: output, shape index: {1}]
  %12 = xla_tuple %s10, %s11
  %s13 = sld [smem:[#allocation0]]
  $region66: #{bidirec_lstm_forward.3} parent=0
    _
  %s15 = ssub.s32 1, %s13
  %s16 = scalar_select 0, %s15, %s13
  $region1: #{bidirec_lstm_forward.3} parent=0
    #allocation2 [shape = 'u8[2048]{0}', space=vmem, size = 0x800, scoped, tag = 'output window, operand 0, single buffered']
    #allocation3 [shape = 's32[1]{0}', space=sflag, size = 0x4, scoped, tag = 'scoped memory for bidirec_lstm_forward.3']
    #allocation4 [shape = 'u8[512]{0}', space=vmem, size = 0x400, scoped, tag = 'output window, operand 1, single buffered']
    #allocation5 [shape = 's32[1]{0}', space=sflag, size = 0x4, scoped, tag = 'scoped memory for bidirec_lstm_forward.3']
    %17 = vsyncpa [#allocation3], 0
    %18 = vsyncpa [#allocation5], 0
    // Predicated region
    $region2: #{bidirec_lstm_forward.3} parent=1 // pred_check
      _
    $region3: #{bidirec_lstm_forward.3} parent=1 // pred_check_branch
      %20 = sbr.rel (0) target = $region5
    $region4: #{bidirec_lstm_forward.3} parent=1 // pred_region
      _
    $region5: #{bidirec_lstm_forward.3} parent=1 // pred_fallthru
      _
    // Predicated region
    $region6: #{bidirec_lstm_forward.3} parent=1 // pred_check
      _
    $region7: #{bidirec_lstm_forward.3} parent=1 // pred_check_branch
      %22 = sbr.rel (0) target = $region9
    $region8: #{bidirec_lstm_forward.3} parent=1 // pred_region
      _
    $region9: #{bidirec_lstm_forward.3} parent=1 // pred_fallthru
      _
    // Predicated region
    $region10: #{bidirec_lstm_forward.3} parent=1 // pred_check
      _
    $region11: #{bidirec_lstm_forward.3} parent=1 // pred_check_branch
      %24 = sbr.rel (0) target = $region13
    $region12: #{bidirec_lstm_forward.3} parent=1 // pred_region
      _
    $region13: #{bidirec_lstm_forward.3} parent=1 // pred_fallthru
      _
    // Predicated region
    $region14: #{bidirec_lstm_forward.3} parent=1 // pred_check
      _
    $region15: #{bidirec_lstm_forward.3} parent=1 // pred_check_branch
      %26 = sbr.rel (0) target = $region17
    $region16: #{bidirec_lstm_forward.3} parent=1 // pred_region
      _
    $region17: #{bidirec_lstm_forward.3} parent=1 // pred_fallthru
      _
    // Predicated region
    $region18: #{bidirec_lstm_forward.3} parent=1 // pred_check
      _
    $region19: #{bidirec_lstm_forward.3} parent=1 // pred_check_branch
      %28 = sbr.rel (0) target = $region21
    $region20: #{bidirec_lstm_forward.3} parent=1 // pred_region
      _
    $region21: #{bidirec_lstm_forward.3} parent=1 // pred_fallthru
      _
    // Predicated region
    $region22: #{bidirec_lstm_forward.3} parent=1 // pred_check
      _
    $region23: #{bidirec_lstm_forward.3} parent=1 // pred_check_branch
      %30 = sbr.rel (0) target = $region25
    $region24: #{bidirec_lstm_forward.3} parent=1 // pred_region
      _
    $region25: #{bidirec_lstm_forward.3} parent=1 // pred_fallthru
      _
    // Predicated region
    $region26: #{bidirec_lstm_forward.3} parent=1 // pred_check
      _
    $region27: #{bidirec_lstm_forward.3} parent=1 // pred_check_branch
      %32 = sbr.rel (0) target = $region29
    $region28: #{bidirec_lstm_forward.3} parent=1 // pred_region
      _
    $region29: #{bidirec_lstm_forward.3} parent=1 // pred_fallthru
      _
    // Predicated region
    $region30: #{bidirec_lstm_forward.3} parent=1 // pred_check
      _
    $region31: #{bidirec_lstm_forward.3} parent=1 // pred_check_branch
      %34 = sbr.rel (0) target = $region33
    $region32: #{bidirec_lstm_forward.3} parent=1 // pred_region
      _
    $region33: #{bidirec_lstm_forward.3} parent=1 // pred_fallthru
      _
    // Predicated region
    $region34: #{bidirec_lstm_forward.3} parent=1 // pred_check
      _
    $region35: #{bidirec_lstm_forward.3} parent=1 // pred_check_branch
      %36 = sbr.rel (0) target = $region37
    $region36: #{bidirec_lstm_forward.3} parent=1 // pred_region
      _
    $region37: #{bidirec_lstm_forward.3} parent=1 // pred_fallthru
      _
    // Predicated region
    $region38: #{bidirec_lstm_forward.3} parent=1 // pred_check
      _
    $region39: #{bidirec_lstm_forward.3} parent=1 // pred_check_branch
      %38 = sbr.rel (0) target = $region41
    $region40: #{bidirec_lstm_forward.3} parent=1 // pred_region
      _
    $region41: #{bidirec_lstm_forward.3} parent=1 // pred_fallthru
      _
    %v39 = vld [vmem:[%s0] sm:$0xf]
    %v40 = vld [vmem:[%s0 + $0x4] sm:$0xf]
    %v41 = vld [vmem:[%s0 + $0x8] sm:$0xf]
    %v42 = vld [vmem:[%s0 + $0xc] sm:$0xf]
    %v43 = vld [vmem:[%s0 + $0x10] sm:$0xf]
    %v44 = vld [vmem:[%s0 + $0x14] sm:$0xf]
    %v45 = vld [vmem:[%s0 + $0x18] sm:$0xf]
    %v46 = vld [vmem:[%s0 + $0x1c] sm:$0xf]
    %v47 = vld [vmem:[%s1] sm:$0xf]
    %v48 = vld [vmem:[%s1 + $0x4] sm:$0xf]
    %v49 = vld [vmem:[%s1 + $0x8] sm:$0xf]
    %v50 = vld [vmem:[%s1 + $0xc] sm:$0xf]
    %v51 = vld [vmem:[%s1 + $0x10] sm:$0xf]
    %v52 = vld [vmem:[%s1 + $0x14] sm:$0xf]
    %v53 = vld [vmem:[%s1 + $0x18] sm:$0xf]
    %v54 = vld [vmem:[%s1 + $0x1c] sm:$0xf]
    %v55 = vld [vmem:[%s2] sm:$0xff]
    %v56 = vld [vmem:[%s2 + $0x8] sm:$0xff]
    %v57 = vld [vmem:[%s2 + $0x10] sm:$0xff]
    %v58 = vld [vmem:[%s2 + $0x18] sm:$0xff]
    %v59 = vld [vmem:[%s2 + $0x20] sm:$0xff]
    %v60 = vld [vmem:[%s2 + $0x28] sm:$0xff]
    %v61 = vld [vmem:[%s2 + $0x30] sm:$0xff]
    %v62 = vld [vmem:[%s2 + $0x38] sm:$0xff]
    %v63 = vld [vmem:[%s2 + $0x40] sm:$0xff]
    %v64 = vld [vmem:[%s2 + $0x48] sm:$0xff]
    %v65 = vld [vmem:[%s2 + $0x50] sm:$0xff]
    %v66 = vld [vmem:[%s2 + $0x58] sm:$0xff]
    %v67 = vld [vmem:[%s2 + $0x60] sm:$0xff]
    %v68 = vld [vmem:[%s2 + $0x68] sm:$0xff]
    %v69 = vld [vmem:[%s2 + $0x70] sm:$0xff]
    %v70 = vld [vmem:[%s2 + $0x78] sm:$0xff]
    %v71 = vld [vmem:[%s3] sm:$0xff]
    %v72 = vld [vmem:[%s3 + $0x8] sm:$0xff]
    %v73 = vld [vmem:[%s3 + $0x10] sm:$0xff]
    %v74 = vld [vmem:[%s3 + $0x18] sm:$0xff]
    %v75 = vld [vmem:[%s3 + $0x20] sm:$0xff]
    %v76 = vld [vmem:[%s3 + $0x28] sm:$0xff]
    %v77 = vld [vmem:[%s3 + $0x30] sm:$0xff]
    %v78 = vld [vmem:[%s3 + $0x38] sm:$0xff]
    %v79 = vld [vmem:[%s3 + $0x40] sm:$0xff]
    %v80 = vld [vmem:[%s3 + $0x48] sm:$0xff]
    %v81 = vld [vmem:[%s3 + $0x50] sm:$0xff]
    %v82 = vld [vmem:[%s3 + $0x58] sm:$0xff]
    %v83 = vld [vmem:[%s3 + $0x60] sm:$0xff]
    %v84 = vld [vmem:[%s3 + $0x68] sm:$0xff]
    %v85 = vld [vmem:[%s3 + $0x70] sm:$0xff]
    %v86 = vld [vmem:[%s3 + $0x78] sm:$0xff]
    %v95 = vcombine.low %v47, %v48
    %v96 = vcombine.low %v49, %v50
    %v97 = vcombine.low %v51, %v52
    %v98 = vcombine.low %v53, %v54
    %103 = vmatprep.subr.mxu0 0.0
    %104 = vmatpush1.msra.mxu0 %v86
    %105 = vmatprep.subr.mxu0 0.0
    %106 = vmatpush1.msra.mxu0 %v85
    %107 = vmatprep.subr.mxu0 0.0
    %108 = vmatpush1.msra.mxu0 %v84
    %109 = vmatprep.subr.mxu0 0.0
    %110 = vmatpush1.msra.mxu0 %v83
    %111 = vmatprep.subr.mxu0 0.0
    %112 = vmatpush1.msra.mxu0 %v82
    %113 = vmatprep.subr.mxu0 0.0
    %114 = vmatpush1.msra.mxu0 %v81
    %115 = vmatprep.subr.mxu0 0.0
    %116 = vmatpush1.msra.mxu0 %v80
    %117 = vmatprep.subr.mxu0 0.0
    %118 = vmatpush1.msra.mxu0 %v79
    %119 = vmatprep.subr.mxu0 0.0
    %120 = vmatpush1.msra.mxu0 %v78
    %121 = vmatprep.subr.mxu0 0.0
    %122 = vmatpush1.msra.mxu0 %v77
    %123 = vmatprep.subr.mxu0 0.0
    %124 = vmatpush1.msra.mxu0 %v76
    %125 = vmatprep.subr.mxu0 0.0
    %126 = vmatpush1.msra.mxu0 %v75
    %127 = vmatprep.subr.mxu0 0.0
    %128 = vmatpush1.msra.mxu0 %v74
    %129 = vmatprep.subr.mxu0 0.0
    %130 = vmatpush1.msra.mxu0 %v73
    %131 = vmatprep.subr.mxu0 0.0
    %132 = vmatpush1.msra.mxu0 %v72
    %133 = vmatprep.subr.mxu0 0.0
    %134 = vmatpush1.msra.mxu0 %v71
    %135 = vmatprep.subr.mxu0 0.0
    %136 = vmatpush2.msra.mxu0 0.0
    %137 = vmatprep.subr.mxu0 0.0
    %138 = vmatpush2.msra.mxu0 0.0
    %139 = vmatprep.subr.mxu0 0.0
    %140 = vmatpush2.msra.mxu0 0.0
    %141 = vmatprep.subr.mxu0 0.0
    %142 = vmatpush2.msra.mxu0 0.0
    %143 = vmatprep.subr.mxu0 0.0
    %144 = vmatpush2.msra.mxu0 0.0
    %145 = vmatprep.subr.mxu0 0.0
    %146 = vmatpush2.msra.mxu0 0.0
    %147 = vmatprep.subr.mxu0 0.0
    %148 = vmatpush2.msra.mxu0 0.0
    %149 = vmatprep.subr.mxu0 0.0
    %150 = vmatpush2.msra.mxu0 0.0
    %151 = vmatprep.subr.mxu0 0.0
    %152 = vmatpush2.msra.mxu0 0.0
    %153 = vmatprep.subr.mxu0 0.0
    %154 = vmatpush2.msra.mxu0 0.0
    %155 = vmatprep.subr.mxu0 0.0
    %156 = vmatpush2.msra.mxu0 0.0
    %157 = vmatprep.subr.mxu0 0.0
    %158 = vmatpush2.msra.mxu0 0.0
    %159 = vmatprep.subr.mxu0 0.0
    %160 = vmatpush2.msra.mxu0 0.0
    %161 = vmatprep.subr.mxu0 0.0
    %162 = vmatpush2.msra.mxu0 0.0
    %163 = vmatprep.subr.mxu0 0.0
    %164 = vmatpush2.msra.mxu0 0.0
    %165 = vmatprep.subr.mxu0 0.0
    %166 = vmatpush2.msra.mxu0 0.0
    %167 = vmatprep.mubr.f32.mxu0 0.0
    %168 = vmatmul.mubr.f32.gmra.mxu0 %v95
    %v169 = vpop.f32.mrf.mxu0
    %v170 = vadd.f32 0.0, %v169
    %v171 = vpop.f32.mrf.mxu0
    %172 = vmatprep.mubr.f32.mxu0 0.0
    %173 = vmatmul.mubr.f32.gmra.mxu0 %v96
    %v174 = vpop.f32.mrf.mxu0
    %v175 = vadd.f32 0.0, %v174
    %v176 = vpop.f32.mrf.mxu0
    %177 = vmatprep.mubr.f32.mxu0 0.0
    %178 = vmatmul.mubr.f32.gmra.mxu0 %v97
    %v179 = vpop.f32.mrf.mxu0
    %v180 = vadd.f32 0.0, %v179
    %v181 = vpop.f32.mrf.mxu0
    %182 = vmatprep.mubr.f32.mxu0 0.0
    %183 = vmatmul.mubr.f32.gmra.mxu0 %v98
    %v184 = vpop.f32.mrf.mxu0
    %v185 = vadd.f32 0.0, %v184
    %v186 = vpop.f32.mrf.mxu0
    %187 = vdwg.mxu0
    %v196 = vcombine.low %v39, %v40
    %v197 = vcombine.low %v41, %v42
    %v198 = vcombine.low %v43, %v44
    %v199 = vcombine.low %v45, %v46
    %204 = vmatprep.subr.mxu0 0.0
    %205 = vmatpush1.msra.mxu0 %v70
    %206 = vmatprep.subr.mxu0 0.0
    %207 = vmatpush1.msra.mxu0 %v69
    %208 = vmatprep.subr.mxu0 0.0
    %209 = vmatpush1.msra.mxu0 %v68
    %210 = vmatprep.subr.mxu0 0.0
    %211 = vmatpush1.msra.mxu0 %v67
    %212 = vmatprep.subr.mxu0 0.0
    %213 = vmatpush1.msra.mxu0 %v66
    %214 = vmatprep.subr.mxu0 0.0
    %215 = vmatpush1.msra.mxu0 %v65
    %216 = vmatprep.subr.mxu0 0.0
    %217 = vmatpush1.msra.mxu0 %v64
    %218 = vmatprep.subr.mxu0 0.0
    %219 = vmatpush1.msra.mxu0 %v63
    %220 = vmatprep.subr.mxu0 0.0
    %221 = vmatpush1.msra.mxu0 %v62
    %222 = vmatprep.subr.mxu0 0.0
    %223 = vmatpush1.msra.mxu0 %v61
    %224 = vmatprep.subr.mxu0 0.0
    %225 = vmatpush1.msra.mxu0 %v60
    %226 = vmatprep.subr.mxu0 0.0
    %227 = vmatpush1.msra.mxu0 %v59
    %228 = vmatprep.subr.mxu0 0.0
    %229 = vmatpush1.msra.mxu0 %v58
    %230 = vmatprep.subr.mxu0 0.0
    %231 = vmatpush1.msra.mxu0 %v57
    %232 = vmatprep.subr.mxu0 0.0
    %233 = vmatpush1.msra.mxu0 %v56
    %234 = vmatprep.subr.mxu0 0.0
    %235 = vmatpush1.msra.mxu0 %v55
    %236 = vmatprep.subr.mxu0 0.0
    %237 = vmatpush2.msra.mxu0 0.0
    %238 = vmatprep.subr.mxu0 0.0
    %239 = vmatpush2.msra.mxu0 0.0
    %240 = vmatprep.subr.mxu0 0.0
    %241 = vmatpush2.msra.mxu0 0.0
    %242 = vmatprep.subr.mxu0 0.0
    %243 = vmatpush2.msra.mxu0 0.0
    %244 = vmatprep.subr.mxu0 0.0
    %245 = vmatpush2.msra.mxu0 0.0
    %246 = vmatprep.subr.mxu0 0.0
    %247 = vmatpush2.msra.mxu0 0.0
    %248 = vmatprep.subr.mxu0 0.0
    %249 = vmatpush2.msra.mxu0 0.0
    %250 = vmatprep.subr.mxu0 0.0
    %251 = vmatpush2.msra.mxu0 0.0
    %252 = vmatprep.subr.mxu0 0.0
    %253 = vmatpush2.msra.mxu0 0.0
    %254 = vmatprep.subr.mxu0 0.0
    %255 = vmatpush2.msra.mxu0 0.0
    %256 = vmatprep.subr.mxu0 0.0
    %257 = vmatpush2.msra.mxu0 0.0
    %258 = vmatprep.subr.mxu0 0.0
    %259 = vmatpush2.msra.mxu0 0.0
    %260 = vmatprep.subr.mxu0 0.0
    %261 = vmatpush2.msra.mxu0 0.0
    %262 = vmatprep.subr.mxu0 0.0
    %263 = vmatpush2.msra.mxu0 0.0
    %264 = vmatprep.subr.mxu0 0.0
    %265 = vmatpush2.msra.mxu0 0.0
    %266 = vmatprep.subr.mxu0 0.0
    %267 = vmatpush2.msra.mxu0 0.0
    %268 = vmatprep.mubr.f32.mxu0 0.0
    %269 = vmatmul.mubr.f32.gmra.mxu0 %v196
    %v270 = vpop.f32.mrf.mxu0
    %v271 = vadd.f32 %v170, %v270
    %v272 = vpop.f32.mrf.mxu0
    %273 = vmatprep.mubr.f32.mxu0 0.0
    %274 = vmatmul.mubr.f32.gmra.mxu0 %v197
    %v275 = vpop.f32.mrf.mxu0
    %v276 = vadd.f32 %v175, %v275
    %v277 = vpop.f32.mrf.mxu0
    %278 = vmatprep.mubr.f32.mxu0 0.0
    %279 = vmatmul.mubr.f32.gmra.mxu0 %v198
    %v280 = vpop.f32.mrf.mxu0
    %v281 = vadd.f32 %v180, %v280
    %v282 = vpop.f32.mrf.mxu0
    %283 = vmatprep.mubr.f32.mxu0 0.0
    %284 = vmatmul.mubr.f32.gmra.mxu0 %v199
    %v285 = vpop.f32.mrf.mxu0
    %v286 = vadd.f32 %v185, %v285
    %v287 = vpop.f32.mrf.mxu0
    %288 = vdwg.mxu0
    %v293 = vcombine.high %v271, %v271
    %v294 = vcombine.high %v276, %v276
    %v295 = vcombine.high %v281, %v281
    %v296 = vcombine.high %v286, %v286
    %v301 = vtanh.pop %v271
    %v302 = vtanh.pop %v293
    %v303 = vtanh.pop %v276
    %v304 = vtanh.pop %v294
    %v305 = vtanh.pop %v281
    %v306 = vtanh.pop %v295
    %v307 = vtanh.pop %v286
    %v308 = vtanh.pop %v296
    %v309 = vld [vmem:[%s4] sm:$0xff]
    %v310 = vld [vmem:[%s4 + $0x8] sm:$0xff]
    %v311 = vld [vmem:[%s4 + $0x10] sm:$0xff]
    %v312 = vld [vmem:[%s4 + $0x18] sm:$0xff]
    %v313 = vld [vmem:[%s4 + $0x20] sm:$0xff]
    %v314 = vld [vmem:[%s4 + $0x28] sm:$0xff]
    %v315 = vld [vmem:[%s4 + $0x30] sm:$0xff]
    %v316 = vld [vmem:[%s4 + $0x38] sm:$0xff]
    %v325 = vcombine.low %v301, %v302
    %v326 = vcombine.low %v303, %v304
    %v327 = vcombine.low %v305, %v306
    %v328 = vcombine.low %v307, %v308
    %vm329 = vcmask 523264
    %v330 = vsel %vm329, %v325, 0
    %v332 = vsel %vm329, %v326, 0
    %v334 = vsel %vm329, %v327, 0
    %v336 = vsel %vm329, %v328, 0
    %338 = vmatprep.subr.mxu0 0.0
    %339 = vmatpush1.msra.mxu0 0.0
    %340 = vmatprep.subr.mxu0 0.0
    %341 = vmatpush1.msra.mxu0 0.0
    %342 = vmatprep.subr.mxu0 0.0
    %343 = vmatpush1.msra.mxu0 0.0
    %344 = vmatprep.subr.mxu0 0.0
    %345 = vmatpush1.msra.mxu0 0.0
    %346 = vmatprep.subr.mxu0 0.0
    %347 = vmatpush1.msra.mxu0 0.0
    %348 = vmatprep.subr.mxu0 0.0
    %349 = vmatpush1.msra.mxu0 0.0
    %350 = vmatprep.subr.mxu0 0.0
    %351 = vmatpush1.msra.mxu0 0.0
    %352 = vmatprep.subr.mxu0 0.0
    %353 = vmatpush1.msra.mxu0 0.0
    %354 = vmatprep.subr.mxu0 0.0
    %355 = vmatpush1.msra.mxu0 %v316
    %356 = vmatprep.subr.mxu0 0.0
    %357 = vmatpush1.msra.mxu0 %v315
    %358 = vmatprep.subr.mxu0 0.0
    %359 = vmatpush1.msra.mxu0 %v314
    %360 = vmatprep.subr.mxu0 0.0
    %361 = vmatpush1.msra.mxu0 %v313
    %362 = vmatprep.subr.mxu0 0.0
    %363 = vmatpush1.msra.mxu0 %v312
    %364 = vmatprep.subr.mxu0 0.0
    %365 = vmatpush1.msra.mxu0 %v311
    %366 = vmatprep.subr.mxu0 0.0
    %367 = vmatpush1.msra.mxu0 %v310
    %368 = vmatprep.subr.mxu0 0.0
    %369 = vmatpush1.msra.mxu0 %v309
    %370 = vmatprep.subr.mxu0 0.0
    %371 = vmatpush2.msra.mxu0 0.0
    %372 = vmatprep.subr.mxu0 0.0
    %373 = vmatpush2.msra.mxu0 0.0
    %374 = vmatprep.subr.mxu0 0.0
    %375 = vmatpush2.msra.mxu0 0.0
    %376 = vmatprep.subr.mxu0 0.0
    %377 = vmatpush2.msra.mxu0 0.0
    %378 = vmatprep.subr.mxu0 0.0
    %379 = vmatpush2.msra.mxu0 0.0
    %380 = vmatprep.subr.mxu0 0.0
    %381 = vmatpush2.msra.mxu0 0.0
    %382 = vmatprep.subr.mxu0 0.0
    %383 = vmatpush2.msra.mxu0 0.0
    %384 = vmatprep.subr.mxu0 0.0
    %385 = vmatpush2.msra.mxu0 0.0
    %386 = vmatprep.subr.mxu0 0.0
    %387 = vmatpush2.msra.mxu0 0.0
    %388 = vmatprep.subr.mxu0 0.0
    %389 = vmatpush2.msra.mxu0 0.0
    %390 = vmatprep.subr.mxu0 0.0
    %391 = vmatpush2.msra.mxu0 0.0
    %392 = vmatprep.subr.mxu0 0.0
    %393 = vmatpush2.msra.mxu0 0.0
    %394 = vmatprep.subr.mxu0 0.0
    %395 = vmatpush2.msra.mxu0 0.0
    %396 = vmatprep.subr.mxu0 0.0
    %397 = vmatpush2.msra.mxu0 0.0
    %398 = vmatprep.subr.mxu0 0.0
    %399 = vmatpush2.msra.mxu0 0.0
    %400 = vmatprep.subr.mxu0 0.0
    %401 = vmatpush2.msra.mxu0 0.0
    %402 = vmatprep.mubr.f32.mxu0 0.0
    %403 = vmatmul.mubr.f32.gmra.mxu0 %v330
    %v404 = vpop.f32.mrf.mxu0
    %v405 = vadd.f32 0.0, %v404
    %v406 = vpop.f32.mrf.mxu0
    %407 = vmatprep.mubr.f32.mxu0 0.0
    %408 = vmatmul.mubr.f32.gmra.mxu0 %v332
    %v409 = vpop.f32.mrf.mxu0
    %v410 = vadd.f32 0.0, %v409
    %v411 = vpop.f32.mrf.mxu0
    %412 = vmatprep.mubr.f32.mxu0 0.0
    %413 = vmatmul.mubr.f32.gmra.mxu0 %v334
    %v414 = vpop.f32.mrf.mxu0
    %v415 = vadd.f32 0.0, %v414
    %v416 = vpop.f32.mrf.mxu0
    %417 = vmatprep.mubr.f32.mxu0 0.0
    %418 = vmatmul.mubr.f32.gmra.mxu0 %v336
    %v419 = vpop.f32.mrf.mxu0
    %v420 = vadd.f32 0.0, %v419
    %v421 = vpop.f32.mrf.mxu0
    %422 = vdwg.mxu0
    %v427 = vcombine.high %v405, %v405
    %v428 = vcombine.high %v410, %v410
    %v429 = vcombine.high %v415, %v415
    %v430 = vcombine.high %v420, %v420
    %vm435 = vcmask 35840
    %v436 = vsel %vm435, %v405, -inf
    %v437 = vsel %vm435, %v427, -inf
    %v438 = vsel %vm435, %v410, -inf
    %v439 = vsel %vm435, %v428, -inf
    %v440 = vsel %vm435, %v415, -inf
    %v441 = vmax.f32 %v436, %v440
    %v442 = vsel %vm435, %v429, -inf
    %v443 = vmax.f32 %v437, %v442
    %v444 = vsel %vm435, %v420, -inf
    %v445 = vmax.f32 %v438, %v444
    %v446 = vsel %vm435, %v430, -inf
    %v447 = vmax.f32 %v439, %v446
    %v448 = vmax.f32 %v441, %v443
    %v449 = vmax.f32 %v445, %v447
    %v450 = vmax.f32 %v448, %v449
    %v451 = vsub.f32 %v405, %v450
    %v452 = vsub.f32 %v427, %v450
    %v453 = vsub.f32 %v410, %v450
    %v454 = vsub.f32 %v428, %v450
    %v455 = vsub.f32 %v415, %v450
    %v456 = vsub.f32 %v429, %v450
    %v457 = vsub.f32 %v420, %v450
    %v458 = vsub.f32 %v430, %v450
    %v459 = vmul.f32 %v451, 1.442695
    %v460 = vpow.pop %v459
    %v461 = vmul.f32 %v452, 1.442695
    %v462 = vpow.pop %v461
    %v463 = vmul.f32 %v453, 1.442695
    %v464 = vpow.pop %v463
    %v465 = vmul.f32 %v454, 1.442695
    %v466 = vpow.pop %v465
    %v467 = vmul.f32 %v455, 1.442695
    %v468 = vpow.pop %v467
    %v469 = vmul.f32 %v456, 1.442695
    %v470 = vpow.pop %v469
    %v471 = vmul.f32 %v457, 1.442695
    %v472 = vpow.pop %v471
    %v473 = vmul.f32 %v458, 1.442695
    %v474 = vpow.pop %v473
    %v475 = vsel %vm435, %v460, 0.0
    %v476 = vsel %vm435, %v462, 0.0
    %v477 = vadd.f32 %v475, %v476
    %v478 = vsel %vm435, %v464, 0.0
    %v479 = vadd.f32 %v477, %v478
    %v480 = vsel %vm435, %v466, 0.0
    %v481 = vadd.f32 %v479, %v480
    %v482 = vsel %vm435, %v468, 0.0
    %v483 = vadd.f32 %v481, %v482
    %v484 = vsel %vm435, %v470, 0.0
    %v485 = vadd.f32 %v483, %v484
    %v486 = vsel %vm435, %v472, 0.0
    %v487 = vadd.f32 %v485, %v486
    %v488 = vsel %vm435, %v474, 0.0
    %v489 = vadd.f32 %v487, %v488
    %v490 = vrcp.pop %v489
    %v491 = vmul.f32 %v460, %v490
    %v492 = vmul.f32 %v462, %v490
    %v493 = vmul.f32 %v464, %v490
    %v494 = vmul.f32 %v466, %v490
    %v495 = vmul.f32 %v468, %v490
    %v496 = vmul.f32 %v470, %v490
    %v497 = vmul.f32 %v472, %v490
    %v498 = vmul.f32 %v474, %v490
    %500 = vset.pattern.permute.xlu0 0
    %501 = vperm.xlu0 %500, %v491
    %v502 = vpop.permute.xlu0 %501
    %v505 = vunpack.c.l.s4 839922192
    %v506 = vunpack.c.0.s8 %v505
    %v507 = vlaneseq
    %v508 = vshrl.u32 %v507, 7
    %v509 = vsub.s32 %v506, %v508
    %v510 = vrot.slane %v502, %v509
    %512 = vset.pattern.permute.xlu0 0
    %513 = vperm.xlu0 %512, %v492
    %v514 = vpop.permute.xlu0 %513
    %v517 = vunpack.c.l.s4 839922192
    %v518 = vunpack.c.0.s8 %v517
    %v519 = vlaneseq
    %v520 = vshrl.u32 %v519, 7
    %v521 = vsub.s32 %v518, %v520
    %v522 = vrot.slane %v514, %v521
    %524 = vset.pattern.permute.xlu0 0
    %525 = vperm.xlu0 %524, %v493
    %v526 = vpop.permute.xlu0 %525
    %v529 = vunpack.c.l.s4 839922192
    %v530 = vunpack.c.0.s8 %v529
    %v531 = vlaneseq
    %v532 = vshrl.u32 %v531, 7
    %v533 = vsub.s32 %v530, %v532
    %v534 = vrot.slane %v526, %v533
    %536 = vset.pattern.permute.xlu0 0
    %537 = vperm.xlu0 %536, %v494
    %v538 = vpop.permute.xlu0 %537
    %v541 = vunpack.c.l.s4 839922192
    %v542 = vunpack.c.0.s8 %v541
    %v543 = vlaneseq
    %v544 = vshrl.u32 %v543, 7
    %v545 = vsub.s32 %v542, %v544
    %v546 = vrot.slane %v538, %v545
    %548 = vset.pattern.permute.xlu0 0
    %549 = vperm.xlu0 %548, %v495
    %v550 = vpop.permute.xlu0 %549
    %v553 = vunpack.c.l.s4 839922192
    %v554 = vunpack.c.0.s8 %v553
    %v555 = vlaneseq
    %v556 = vshrl.u32 %v555, 7
    %v557 = vsub.s32 %v554, %v556
    %v558 = vrot.slane %v550, %v557
    %560 = vset.pattern.permute.xlu0 0
    %561 = vperm.xlu0 %560, %v496
    %v562 = vpop.permute.xlu0 %561
    %v565 = vunpack.c.l.s4 839922192
    %v566 = vunpack.c.0.s8 %v565
    %v567 = vlaneseq
    %v568 = vshrl.u32 %v567, 7
    %v569 = vsub.s32 %v566, %v568
    %v570 = vrot.slane %v562, %v569
    %572 = vset.pattern.permute.xlu0 0
    %573 = vperm.xlu0 %572, %v497
    %v574 = vpop.permute.xlu0 %573
    %v577 = vunpack.c.l.s4 839922192
    %v578 = vunpack.c.0.s8 %v577
    %v579 = vlaneseq
    %v580 = vshrl.u32 %v579, 7
    %v581 = vsub.s32 %v578, %v580
    %v582 = vrot.slane %v574, %v581
    %584 = vset.pattern.permute.xlu0 0
    %585 = vperm.xlu0 %584, %v498
    %v586 = vpop.permute.xlu0 %585
    %v589 = vunpack.c.l.s4 839922192
    %v590 = vunpack.c.0.s8 %v589
    %v591 = vlaneseq
    %v592 = vshrl.u32 %v591, 7
    %v593 = vsub.s32 %v590, %v592
    %v594 = vrot.slane %v586, %v593
    %v595 = vmul.f32 %v510, %v491
    %v596 = vmul.f32 %v522, %v492
    %v597 = vmul.f32 %v534, %v493
    %v598 = vmul.f32 %v546, %v494
    %v599 = vmul.f32 %v558, %v495
    %v600 = vmul.f32 %v570, %v496
    %v601 = vmul.f32 %v582, %v497
    %v602 = vmul.f32 %v594, %v498
    %v603 = vsel %vm435, %v595, 0.0
    %v604 = vsel %vm435, %v596, 0.0
    %v605 = vadd.f32 %v603, %v604
    %v606 = vsel %vm435, %v597, 0.0
    %v607 = vadd.f32 %v605, %v606
    %v608 = vsel %vm435, %v598, 0.0
    %v609 = vadd.f32 %v607, %v608
    %v610 = vsel %vm435, %v599, 0.0
    %v611 = vadd.f32 %v609, %v610
    %v612 = vsel %vm435, %v600, 0.0
    %v613 = vadd.f32 %v611, %v612
    %v614 = vsel %vm435, %v601, 0.0
    %v615 = vadd.f32 %v613, %v614
    %v616 = vsel %vm435, %v602, 0.0
    %v617 = vadd.f32 %v615, %v616
    %v618 = vlaneseq
    %v619 = vand.u32 %v618, 127
    %vm620 = vcmp.eq.s32.totalorder %v619, 0
    %v621 = vsel %vm620, 1, 0
    %v622 = vcvt.s32.f32 %v621
    %v623 = vsub.f32 %v617, %v622
    %v624 = vmul.f32 %v623, %v623
    %v625 = vsel %vm435, %v624, 0.0
    %626 = vadd.xlane.f32.xlu0 %v625
    %v627 = vpop.xlane.xlu0 %626
    %v628 = vadd.f32 %v627, 0.0
    %v629 = vmul.f32 %v510, %v39
    %v630 = vmul.f32 %v522, %v40
    %v631 = vmul.f32 %v534, %v41
    %v632 = vmul.f32 %v546, %v42
    %v633 = vmul.f32 %v558, %v43
    %v634 = vmul.f32 %v570, %v44
    %v635 = vmul.f32 %v582, %v45
    %v636 = vmul.f32 %v594, %v46
    %vm637 = vcmask 1043456
    %v638 = vsel %vm637, %v629, 0.0
    %v639 = vsel %vm637, %v630, 0.0
    %v640 = vadd.f32 %v638, %v639
    %v641 = vsel %vm637, %v631, 0.0
    %v642 = vadd.f32 %v640, %v641
    %v643 = vsel %vm637, %v632, 0.0
    %v644 = vadd.f32 %v642, %v643
    %v645 = vsel %vm637, %v633, 0.0
    %v646 = vadd.f32 %v644, %v645
    %v647 = vsel %vm637, %v634, 0.0
    %v648 = vadd.f32 %v646, %v647
    %v649 = vsel %vm637, %v635, 0.0
    %v650 = vadd.f32 %v648, %v649
    %v651 = vsel %vm637, %v636, 0.0
    %v652 = vadd.f32 %v650, %v651
    %v653 = vmul.f32 %v510, %v47
    %v654 = vmul.f32 %v522, %v48
    %v655 = vmul.f32 %v534, %v49
    %v656 = vmul.f32 %v546, %v50
    %v657 = vmul.f32 %v558, %v51
    %v658 = vmul.f32 %v570, %v52
    %v659 = vmul.f32 %v582, %v53
    %v660 = vmul.f32 %v594, %v54
    %v661 = vsel %vm637, %v653, 0.0
    %v662 = vsel %vm637, %v654, 0.0
    %v663 = vadd.f32 %v661, %v662
    %v664 = vsel %vm637, %v655, 0.0
    %v665 = vadd.f32 %v663, %v664
    %v666 = vsel %vm637, %v656, 0.0
    %v667 = vadd.f32 %v665, %v666
    %v668 = vsel %vm637, %v657, 0.0
    %v669 = vadd.f32 %v667, %v668
    %v670 = vsel %vm637, %v658, 0.0
    %v671 = vadd.f32 %v669, %v670
    %v672 = vsel %vm637, %v659, 0.0
    %v673 = vadd.f32 %v671, %v672
    %v674 = vsel %vm637, %v660, 0.0
    %v675 = vadd.f32 %v673, %v674
    %v676 = vld [vmem:[%s5] sm:$0xff]
    %v677 = vld [vmem:[%s5 + $0x8] sm:$0xff]
    %v678 = vld [vmem:[%s5 + $0x10] sm:$0xff]
    %v679 = vld [vmem:[%s5 + $0x18] sm:$0xff]
    %v680 = vld [vmem:[%s5 + $0x20] sm:$0xff]
    %v681 = vld [vmem:[%s5 + $0x28] sm:$0xff]
    %v682 = vld [vmem:[%s5 + $0x30] sm:$0xff]
    %v683 = vld [vmem:[%s5 + $0x38] sm:$0xff]
    %v684 = vld [vmem:[%s5 + $0x40] sm:$0xff]
    %v685 = vld [vmem:[%s5 + $0x48] sm:$0xff]
    %v686 = vld [vmem:[%s5 + $0x50] sm:$0xff]
    %v687 = vld [vmem:[%s5 + $0x58] sm:$0xff]
    %v688 = vld [vmem:[%s5 + $0x60] sm:$0xff]
    %v689 = vld [vmem:[%s5 + $0x68] sm:$0xff]
    %v690 = vld [vmem:[%s5 + $0x70] sm:$0xff]
    %v691 = vld [vmem:[%s5 + $0x78] sm:$0xff]
    %v692 = vld [vmem:[%s6] sm:$0xff]
    %v693 = vld [vmem:[%s6 + $0x8] sm:$0xff]
    %v694 = vld [vmem:[%s6 + $0x10] sm:$0xff]
    %v695 = vld [vmem:[%s6 + $0x18] sm:$0xff]
    %v696 = vld [vmem:[%s6 + $0x20] sm:$0xff]
    %v697 = vld [vmem:[%s6 + $0x28] sm:$0xff]
    %v698 = vld [vmem:[%s6 + $0x30] sm:$0xff]
    %v699 = vld [vmem:[%s6 + $0x38] sm:$0xff]
    %v700 = vld [vmem:[%s6 + $0x40] sm:$0xff]
    %v701 = vld [vmem:[%s6 + $0x48] sm:$0xff]
    %v702 = vld [vmem:[%s6 + $0x50] sm:$0xff]
    %v703 = vld [vmem:[%s6 + $0x58] sm:$0xff]
    %v704 = vld [vmem:[%s6 + $0x60] sm:$0xff]
    %v705 = vld [vmem:[%s6 + $0x68] sm:$0xff]
    %v706 = vld [vmem:[%s6 + $0x70] sm:$0xff]
    %v707 = vld [vmem:[%s6 + $0x78] sm:$0xff]
    %708 = vmatprep.subr.mxu0 0.0
    %709 = vmatpush1.msra.mxu0 %v707
    %710 = vmatprep.subr.mxu0 0.0
    %711 = vmatpush1.msra.mxu0 %v706
    %712 = vmatprep.subr.mxu0 0.0
    %713 = vmatpush1.msra.mxu0 %v705
    %714 = vmatprep.subr.mxu0 0.0
    %715 = vmatpush1.msra.mxu0 %v704
    %716 = vmatprep.subr.mxu0 0.0
    %717 = vmatpush1.msra.mxu0 %v703
    %718 = vmatprep.subr.mxu0 0.0
    %719 = vmatpush1.msra.mxu0 %v702
    %720 = vmatprep.subr.mxu0 0.0
    %721 = vmatpush1.msra.mxu0 %v701
    %722 = vmatprep.subr.mxu0 0.0
    %723 = vmatpush1.msra.mxu0 %v700
    %724 = vmatprep.subr.mxu0 0.0
    %725 = vmatpush1.msra.mxu0 %v699
    %726 = vmatprep.subr.mxu0 0.0
    %727 = vmatpush1.msra.mxu0 %v698
    %728 = vmatprep.subr.mxu0 0.0
    %729 = vmatpush1.msra.mxu0 %v697
    %730 = vmatprep.subr.mxu0 0.0
    %731 = vmatpush1.msra.mxu0 %v696
    %732 = vmatprep.subr.mxu0 0.0
    %733 = vmatpush1.msra.mxu0 %v695
    %734 = vmatprep.subr.mxu0 0.0
    %735 = vmatpush1.msra.mxu0 %v694
    %736 = vmatprep.subr.mxu0 0.0
    %737 = vmatpush1.msra.mxu0 %v693
    %738 = vmatprep.subr.mxu0 0.0
    %739 = vmatpush1.msra.mxu0 %v692
    %740 = vmatprep.subr.mxu0 0.0
    %741 = vmatpush2.msra.mxu0 0.0
    %742 = vmatprep.subr.mxu0 0.0
    %743 = vmatpush2.msra.mxu0 0.0
    %744 = vmatprep.subr.mxu0 0.0
    %745 = vmatpush2.msra.mxu0 0.0
    %746 = vmatprep.subr.mxu0 0.0
    %747 = vmatpush2.msra.mxu0 0.0
    %748 = vmatprep.subr.mxu0 0.0
    %749 = vmatpush2.msra.mxu0 0.0
    %750 = vmatprep.subr.mxu0 0.0
    %751 = vmatpush2.msra.mxu0 0.0
    %752 = vmatprep.subr.mxu0 0.0
    %753 = vmatpush2.msra.mxu0 0.0
    %754 = vmatprep.subr.mxu0 0.0
    %755 = vmatpush2.msra.mxu0 0.0
    %756 = vmatprep.subr.mxu0 0.0
    %757 = vmatpush2.msra.mxu0 0.0
    %758 = vmatprep.subr.mxu0 0.0
    %759 = vmatpush2.msra.mxu0 0.0
    %760 = vmatprep.subr.mxu0 0.0
    %761 = vmatpush2.msra.mxu0 0.0
    %762 = vmatprep.subr.mxu0 0.0
    %763 = vmatpush2.msra.mxu0 0.0
    %764 = vmatprep.subr.mxu0 0.0
    %765 = vmatpush2.msra.mxu0 0.0
    %766 = vmatprep.subr.mxu0 0.0
    %767 = vmatpush2.msra.mxu0 0.0
    %768 = vmatprep.subr.mxu0 0.0
    %769 = vmatpush2.msra.mxu0 0.0
    %770 = vmatprep.subr.mxu0 0.0
    %771 = vmatpush2.msra.mxu0 0.0
    %772 = vmatprep.mubr.f32.mxu0 0.0
    %773 = vmatmul.mubr.f32.gmra.mxu0 %v675
    %v774 = vpop.f32.mrf.mxu0
    %v775 = vadd.f32 0.0, %v774
    %v776 = vpop.f32.mrf.mxu0
    %777 = vdwg.mxu0
    %778 = vmatprep.subr.mxu0 0.0
    %779 = vmatpush1.msra.mxu0 %v691
    %780 = vmatprep.subr.mxu0 0.0
    %781 = vmatpush1.msra.mxu0 %v690
    %782 = vmatprep.subr.mxu0 0.0
    %783 = vmatpush1.msra.mxu0 %v689
    %784 = vmatprep.subr.mxu0 0.0
    %785 = vmatpush1.msra.mxu0 %v688
    %786 = vmatprep.subr.mxu0 0.0
    %787 = vmatpush1.msra.mxu0 %v687
    %788 = vmatprep.subr.mxu0 0.0
    %789 = vmatpush1.msra.mxu0 %v686
    %790 = vmatprep.subr.mxu0 0.0
    %791 = vmatpush1.msra.mxu0 %v685
    %792 = vmatprep.subr.mxu0 0.0
    %793 = vmatpush1.msra.mxu0 %v684
    %794 = vmatprep.subr.mxu0 0.0
    %795 = vmatpush1.msra.mxu0 %v683
    %796 = vmatprep.subr.mxu0 0.0
    %797 = vmatpush1.msra.mxu0 %v682
    %798 = vmatprep.subr.mxu0 0.0
    %799 = vmatpush1.msra.mxu0 %v681
    %800 = vmatprep.subr.mxu0 0.0
    %801 = vmatpush1.msra.mxu0 %v680
    %802 = vmatprep.subr.mxu0 0.0
    %803 = vmatpush1.msra.mxu0 %v679
    %804 = vmatprep.subr.mxu0 0.0
    %805 = vmatpush1.msra.mxu0 %v678
    %806 = vmatprep.subr.mxu0 0.0
    %807 = vmatpush1.msra.mxu0 %v677
    %808 = vmatprep.subr.mxu0 0.0
    %809 = vmatpush1.msra.mxu0 %v676
    %810 = vmatprep.subr.mxu0 0.0
    %811 = vmatpush2.msra.mxu0 0.0
    %812 = vmatprep.subr.mxu0 0.0
    %813 = vmatpush2.msra.mxu0 0.0
    %814 = vmatprep.subr.mxu0 0.0
    %815 = vmatpush2.msra.mxu0 0.0
    %816 = vmatprep.subr.mxu0 0.0
    %817 = vmatpush2.msra.mxu0 0.0
    %818 = vmatprep.subr.mxu0 0.0
    %819 = vmatpush2.msra.mxu0 0.0
    %820 = vmatprep.subr.mxu0 0.0
    %821 = vmatpush2.msra.mxu0 0.0
    %822 = vmatprep.subr.mxu0 0.0
    %823 = vmatpush2.msra.mxu0 0.0
    %824 = vmatprep.subr.mxu0 0.0
    %825 = vmatpush2.msra.mxu0 0.0
    %826 = vmatprep.subr.mxu0 0.0
    %827 = vmatpush2.msra.mxu0 0.0
    %828 = vmatprep.subr.mxu0 0.0
    %829 = vmatpush2.msra.mxu0 0.0
    %830 = vmatprep.subr.mxu0 0.0
    %831 = vmatpush2.msra.mxu0 0.0
    %832 = vmatprep.subr.mxu0 0.0
    %833 = vmatpush2.msra.mxu0 0.0
    %834 = vmatprep.subr.mxu0 0.0
    %835 = vmatpush2.msra.mxu0 0.0
    %836 = vmatprep.subr.mxu0 0.0
    %837 = vmatpush2.msra.mxu0 0.0
    %838 = vmatprep.subr.mxu0 0.0
    %839 = vmatpush2.msra.mxu0 0.0
    %840 = vmatprep.subr.mxu0 0.0
    %841 = vmatpush2.msra.mxu0 0.0
    %842 = vmatprep.mubr.f32.mxu0 0.0
    %843 = vmatmul.mubr.f32.gmra.mxu0 %v652
    %v844 = vpop.f32.mrf.mxu0
    %v845 = vadd.f32 %v775, %v844
    %v846 = vpop.f32.mrf.mxu0
    %847 = vdwg.mxu0
    %848 = vset.pattern.permute.xlu0 1
    %849 = vperm.xlu0 %848, %v491
    %v850 = vpop.permute.xlu0 %849
    %v853 = vunpack.c.l.s4 839922192
    %v854 = vunpack.c.0.s8 %v853
    %v855 = vlaneseq
    %v856 = vshrl.u32 %v855, 7
    %v857 = vsub.s32 %v854, %v856
    %v858 = vrot.slane %v850, %v857
    %859 = vset.pattern.permute.xlu0 1
    %860 = vperm.xlu0 %859, %v492
    %v861 = vpop.permute.xlu0 %860
    %v864 = vunpack.c.l.s4 839922192
    %v865 = vunpack.c.0.s8 %v864
    %v866 = vlaneseq
    %v867 = vshrl.u32 %v866, 7
    %v868 = vsub.s32 %v865, %v867
    %v869 = vrot.slane %v861, %v868
    %870 = vset.pattern.permute.xlu0 1
    %871 = vperm.xlu0 %870, %v493
    %v872 = vpop.permute.xlu0 %871
    %v875 = vunpack.c.l.s4 839922192
    %v876 = vunpack.c.0.s8 %v875
    %v877 = vlaneseq
    %v878 = vshrl.u32 %v877, 7
    %v879 = vsub.s32 %v876, %v878
    %v880 = vrot.slane %v872, %v879
    %881 = vset.pattern.permute.xlu0 1
    %882 = vperm.xlu0 %881, %v494
    %v883 = vpop.permute.xlu0 %882
    %v886 = vunpack.c.l.s4 839922192
    %v887 = vunpack.c.0.s8 %v886
    %v888 = vlaneseq
    %v889 = vshrl.u32 %v888, 7
    %v890 = vsub.s32 %v887, %v889
    %v891 = vrot.slane %v883, %v890
    %892 = vset.pattern.permute.xlu0 1
    %893 = vperm.xlu0 %892, %v495
    %v894 = vpop.permute.xlu0 %893
    %v897 = vunpack.c.l.s4 839922192
    %v898 = vunpack.c.0.s8 %v897
    %v899 = vlaneseq
    %v900 = vshrl.u32 %v899, 7
    %v901 = vsub.s32 %v898, %v900
    %v902 = vrot.slane %v894, %v901
    %903 = vset.pattern.permute.xlu0 1
    %904 = vperm.xlu0 %903, %v496
    %v905 = vpop.permute.xlu0 %904
    %v908 = vunpack.c.l.s4 839922192
    %v909 = vunpack.c.0.s8 %v908
    %v910 = vlaneseq
    %v911 = vshrl.u32 %v910, 7
    %v912 = vsub.s32 %v909, %v911
    %v913 = vrot.slane %v905, %v912
    %914 = vset.pattern.permute.xlu0 1
    %915 = vperm.xlu0 %914, %v497
    %v916 = vpop.permute.xlu0 %915
    %v919 = vunpack.c.l.s4 839922192
    %v920 = vunpack.c.0.s8 %v919
    %v921 = vlaneseq
    %v922 = vshrl.u32 %v921, 7
    %v923 = vsub.s32 %v920, %v922
    %v924 = vrot.slane %v916, %v923
    %925 = vset.pattern.permute.xlu0 1
    %926 = vperm.xlu0 %925, %v498
    %v927 = vpop.permute.xlu0 %926
    %v930 = vunpack.c.l.s4 839922192
    %v931 = vunpack.c.0.s8 %v930
    %v932 = vlaneseq
    %v933 = vshrl.u32 %v932, 7
    %v934 = vsub.s32 %v931, %v933
    %v935 = vrot.slane %v927, %v934
    %v936 = vmul.f32 %v858, %v491
    %v937 = vmul.f32 %v869, %v492
    %v938 = vmul.f32 %v880, %v493
    %v939 = vmul.f32 %v891, %v494
    %v940 = vmul.f32 %v902, %v495
    %v941 = vmul.f32 %v913, %v496
    %v942 = vmul.f32 %v924, %v497
    %v943 = vmul.f32 %v935, %v498
    %v944 = vsel %vm435, %v936, 0.0
    %v945 = vsel %vm435, %v937, 0.0
    %v946 = vadd.f32 %v944, %v945
    %v947 = vsel %vm435, %v938, 0.0
    %v948 = vadd.f32 %v946, %v947
    %v949 = vsel %vm435, %v939, 0.0
    %v950 = vadd.f32 %v948, %v949
    %v951 = vsel %vm435, %v940, 0.0
    %v952 = vadd.f32 %v950, %v951
    %v953 = vsel %vm435, %v941, 0.0
    %v954 = vadd.f32 %v952, %v953
    %v955 = vsel %vm435, %v942, 0.0
    %v956 = vadd.f32 %v954, %v955
    %v957 = vsel %vm435, %v943, 0.0
    %v958 = vadd.f32 %v956, %v957
    %vm959 = vcmp.eq.s32.totalorder %v619, 1
    %v960 = vsel %vm959, 1, 0
    %v961 = vcvt.s32.f32 %v960
    %v962 = vsub.f32 %v958, %v961
    %v963 = vmul.f32 %v962, %v962
    %v964 = vsel %vm435, %v963, 0.0
    %965 = vadd.xlane.f32.xlu0 %v964
    %v966 = vpop.xlane.xlu0 %965
    %v967 = vadd.f32 %v628, %v966
    %v968 = vmul.f32 %v858, %v39
    %v969 = vmul.f32 %v869, %v40
    %v970 = vmul.f32 %v880, %v41
    %v971 = vmul.f32 %v891, %v42
    %v972 = vmul.f32 %v902, %v43
    %v973 = vmul.f32 %v913, %v44
    %v974 = vmul.f32 %v924, %v45
    %v975 = vmul.f32 %v935, %v46
    %v976 = vsel %vm637, %v968, 0.0
    %v977 = vsel %vm637, %v969, 0.0
    %v978 = vadd.f32 %v976, %v977
    %v979 = vsel %vm637, %v970, 0.0
    %v980 = vadd.f32 %v978, %v979
    %v981 = vsel %vm637, %v971, 0.0
    %v982 = vadd.f32 %v980, %v981
    %v983 = vsel %vm637, %v972, 0.0
    %v984 = vadd.f32 %v982, %v983
    %v985 = vsel %vm637, %v973, 0.0
    %v986 = vadd.f32 %v984, %v985
    %v987 = vsel %vm637, %v974, 0.0
    %v988 = vadd.f32 %v986, %v987
    %v989 = vsel %vm637, %v975, 0.0
    %v990 = vadd.f32 %v988, %v989
    %v991 = vmul.f32 %v858, %v47
    %v992 = vmul.f32 %v869, %v48
    %v993 = vmul.f32 %v880, %v49
    %v994 = vmul.f32 %v891, %v50
    %v995 = vmul.f32 %v902, %v51
    %v996 = vmul.f32 %v913, %v52
    %v997 = vmul.f32 %v924, %v53
    %v998 = vmul.f32 %v935, %v54
    %v999 = vsel %vm637, %v991, 0.0
    %v1000 = vsel %vm637, %v992, 0.0
    %v1001 = vadd.f32 %v999, %v1000
    %v1002 = vsel %vm637, %v993, 0.0
    %v1003 = vadd.f32 %v1001, %v1002
    %v1004 = vsel %vm637, %v994, 0.0
    %v1005 = vadd.f32 %v1003, %v1004
    %v1006 = vsel %vm637, %v995, 0.0
    %v1007 = vadd.f32 %v1005, %v1006
    %v1008 = vsel %vm637, %v996, 0.0
    %v1009 = vadd.f32 %v1007, %v1008
    %v1010 = vsel %vm637, %v997, 0.0
    %v1011 = vadd.f32 %v1009, %v1010
    %v1012 = vsel %vm637, %v998, 0.0
    %v1013 = vadd.f32 %v1011, %v1012
    %s1014 = scalar_lea.vmem %s5, 128
    %v1015 = vld [vmem:[%s1014] sm:$0xff]
    %v1016 = vld [vmem:[%s1014 + $0x8] sm:$0xff]
    %v1017 = vld [vmem:[%s1014 + $0x10] sm:$0xff]
    %v1018 = vld [vmem:[%s1014 + $0x18] sm:$0xff]
    %v1019 = vld [vmem:[%s1014 + $0x20] sm:$0xff]
    %v1020 = vld [vmem:[%s1014 + $0x28] sm:$0xff]
    %v1021 = vld [vmem:[%s1014 + $0x30] sm:$0xff]
    %v1022 = vld [vmem:[%s1014 + $0x38] sm:$0xff]
    %v1023 = vld [vmem:[%s1014 + $0x40] sm:$0xff]
    %v1024 = vld [vmem:[%s1014 + $0x48] sm:$0xff]
    %v1025 = vld [vmem:[%s1014 + $0x50] sm:$0xff]
    %v1026 = vld [vmem:[%s1014 + $0x58] sm:$0xff]
    %v1027 = vld [vmem:[%s1014 + $0x60] sm:$0xff]
    %v1028 = vld [vmem:[%s1014 + $0x68] sm:$0xff]
    %v1029 = vld [vmem:[%s1014 + $0x70] sm:$0xff]
    %v1030 = vld [vmem:[%s1014 + $0x78] sm:$0xff]
    %1031 = vmatprep.subr.mxu0 0.0
    %1032 = vmatpush1.msra.mxu0 %v1030
    %1033 = vmatprep.subr.mxu0 0.0
    %1034 = vmatpush1.msra.mxu0 %v1029
    %1035 = vmatprep.subr.mxu0 0.0
    %1036 = vmatpush1.msra.mxu0 %v1028
    %1037 = vmatprep.subr.mxu0 0.0
    %1038 = vmatpush1.msra.mxu0 %v1027
    %1039 = vmatprep.subr.mxu0 0.0
    %1040 = vmatpush1.msra.mxu0 %v1026
    %1041 = vmatprep.subr.mxu0 0.0
    %1042 = vmatpush1.msra.mxu0 %v1025
    %1043 = vmatprep.subr.mxu0 0.0
    %1044 = vmatpush1.msra.mxu0 %v1024
    %1045 = vmatprep.subr.mxu0 0.0
    %1046 = vmatpush1.msra.mxu0 %v1023
    %1047 = vmatprep.subr.mxu0 0.0
    %1048 = vmatpush1.msra.mxu0 %v1022
    %1049 = vmatprep.subr.mxu0 0.0
    %1050 = vmatpush1.msra.mxu0 %v1021
    %1051 = vmatprep.subr.mxu0 0.0
    %1052 = vmatpush1.msra.mxu0 %v1020
    %1053 = vmatprep.subr.mxu0 0.0
    %1054 = vmatpush1.msra.mxu0 %v1019
    %1055 = vmatprep.subr.mxu0 0.0
    %1056 = vmatpush1.msra.mxu0 %v1018
    %1057 = vmatprep.subr.mxu0 0.0
    %1058 = vmatpush1.msra.mxu0 %v1017
    %1059 = vmatprep.subr.mxu0 0.0
    %1060 = vmatpush1.msra.mxu0 %v1016
    %1061 = vmatprep.subr.mxu0 0.0
    %1062 = vmatpush1.msra.mxu0 %v1015
    %1063 = vmatprep.subr.mxu0 0.0
    %1064 = vmatpush2.msra.mxu0 0.0
    %1065 = vmatprep.subr.mxu0 0.0
    %1066 = vmatpush2.msra.mxu0 0.0
    %1067 = vmatprep.subr.mxu0 0.0
    %1068 = vmatpush2.msra.mxu0 0.0
    %1069 = vmatprep.subr.mxu0 0.0
    %1070 = vmatpush2.msra.mxu0 0.0
    %1071 = vmatprep.subr.mxu0 0.0
    %1072 = vmatpush2.msra.mxu0 0.0
    %1073 = vmatprep.subr.mxu0 0.0
    %1074 = vmatpush2.msra.mxu0 0.0
    %1075 = vmatprep.subr.mxu0 0.0
    %1076 = vmatpush2.msra.mxu0 0.0
    %1077 = vmatprep.subr.mxu0 0.0
    %1078 = vmatpush2.msra.mxu0 0.0
    %1079 = vmatprep.subr.mxu0 0.0
    %1080 = vmatpush2.msra.mxu0 0.0
    %1081 = vmatprep.subr.mxu0 0.0
    %1082 = vmatpush2.msra.mxu0 0.0
    %1083 = vmatprep.subr.mxu0 0.0
    %1084 = vmatpush2.msra.mxu0 0.0
    %1085 = vmatprep.subr.mxu0 0.0
    %1086 = vmatpush2.msra.mxu0 0.0
    %1087 = vmatprep.subr.mxu0 0.0
    %1088 = vmatpush2.msra.mxu0 0.0
    %1089 = vmatprep.subr.mxu0 0.0
    %1090 = vmatpush2.msra.mxu0 0.0
    %1091 = vmatprep.subr.mxu0 0.0
    %1092 = vmatpush2.msra.mxu0 0.0
    %1093 = vmatprep.subr.mxu0 0.0
    %1094 = vmatpush2.msra.mxu0 0.0
    %1095 = vmatprep.mubr.f32.mxu0 0.0
    %1096 = vmatmul.mubr.f32.gmra.mxu0 %v990
    %v1097 = vpop.f32.mrf.mxu0
    %v1098 = vadd.f32 0.0, %v1097
    %v1099 = vpop.f32.mrf.mxu0
    %1100 = vdwg.mxu0
    %v1101 = vadd.f32 %v845, %v1098
    %s1102 = scalar_lea.vmem %s6, 128
    %v1103 = vld [vmem:[%s1102] sm:$0xff]
    %v1104 = vld [vmem:[%s1102 + $0x8] sm:$0xff]
    %v1105 = vld [vmem:[%s1102 + $0x10] sm:$0xff]
    %v1106 = vld [vmem:[%s1102 + $0x18] sm:$0xff]
    %v1107 = vld [vmem:[%s1102 + $0x20] sm:$0xff]
    %v1108 = vld [vmem:[%s1102 + $0x28] sm:$0xff]
    %v1109 = vld [vmem:[%s1102 + $0x30] sm:$0xff]
    %v1110 = vld [vmem:[%s1102 + $0x38] sm:$0xff]
    %v1111 = vld [vmem:[%s1102 + $0x40] sm:$0xff]
    %v1112 = vld [vmem:[%s1102 + $0x48] sm:$0xff]
    %v1113 = vld [vmem:[%s1102 + $0x50] sm:$0xff]
    %v1114 = vld [vmem:[%s1102 + $0x58] sm:$0xff]
    %v1115 = vld [vmem:[%s1102 + $0x60] sm:$0xff]
    %v1116 = vld [vmem:[%s1102 + $0x68] sm:$0xff]
    %v1117 = vld [vmem:[%s1102 + $0x70] sm:$0xff]
    %v1118 = vld [vmem:[%s1102 + $0x78] sm:$0xff]
    %1119 = vmatprep.subr.mxu0 0.0
    %1120 = vmatpush1.msra.mxu0 %v1118
    %1121 = vmatprep.subr.mxu0 0.0
    %1122 = vmatpush1.msra.mxu0 %v1117
    %1123 = vmatprep.subr.mxu0 0.0
    %1124 = vmatpush1.msra.mxu0 %v1116
    %1125 = vmatprep.subr.mxu0 0.0
    %1126 = vmatpush1.msra.mxu0 %v1115
    %1127 = vmatprep.subr.mxu0 0.0
    %1128 = vmatpush1.msra.mxu0 %v1114
    %1129 = vmatprep.subr.mxu0 0.0
    %1130 = vmatpush1.msra.mxu0 %v1113
    %1131 = vmatprep.subr.mxu0 0.0
    %1132 = vmatpush1.msra.mxu0 %v1112
    %1133 = vmatprep.subr.mxu0 0.0
    %1134 = vmatpush1.msra.mxu0 %v1111
    %1135 = vmatprep.subr.mxu0 0.0
    %1136 = vmatpush1.msra.mxu0 %v1110
    %1137 = vmatprep.subr.mxu0 0.0
    %1138 = vmatpush1.msra.mxu0 %v1109
    %1139 = vmatprep.subr.mxu0 0.0
    %1140 = vmatpush1.msra.mxu0 %v1108
    %1141 = vmatprep.subr.mxu0 0.0
    %1142 = vmatpush1.msra.mxu0 %v1107
    %1143 = vmatprep.subr.mxu0 0.0
    %1144 = vmatpush1.msra.mxu0 %v1106
    %1145 = vmatprep.subr.mxu0 0.0
    %1146 = vmatpush1.msra.mxu0 %v1105
    %1147 = vmatprep.subr.mxu0 0.0
    %1148 = vmatpush1.msra.mxu0 %v1104
    %1149 = vmatprep.subr.mxu0 0.0
    %1150 = vmatpush1.msra.mxu0 %v1103
    %1151 = vmatprep.subr.mxu0 0.0
    %1152 = vmatpush2.msra.mxu0 0.0
    %1153 = vmatprep.subr.mxu0 0.0
    %1154 = vmatpush2.msra.mxu0 0.0
    %1155 = vmatprep.subr.mxu0 0.0
    %1156 = vmatpush2.msra.mxu0 0.0
    %1157 = vmatprep.subr.mxu0 0.0
    %1158 = vmatpush2.msra.mxu0 0.0
    %1159 = vmatprep.subr.mxu0 0.0
    %1160 = vmatpush2.msra.mxu0 0.0
    %1161 = vmatprep.subr.mxu0 0.0
    %1162 = vmatpush2.msra.mxu0 0.0
    %1163 = vmatprep.subr.mxu0 0.0
    %1164 = vmatpush2.msra.mxu0 0.0
    %1165 = vmatprep.subr.mxu0 0.0
    %1166 = vmatpush2.msra.mxu0 0.0
    %1167 = vmatprep.subr.mxu0 0.0
    %1168 = vmatpush2.msra.mxu0 0.0
    %1169 = vmatprep.subr.mxu0 0.0
    %1170 = vmatpush2.msra.mxu0 0.0
    %1171 = vmatprep.subr.mxu0 0.0
    %1172 = vmatpush2.msra.mxu0 0.0
    %1173 = vmatprep.subr.mxu0 0.0
    %1174 = vmatpush2.msra.mxu0 0.0
    %1175 = vmatprep.subr.mxu0 0.0
    %1176 = vmatpush2.msra.mxu0 0.0
    %1177 = vmatprep.subr.mxu0 0.0
    %1178 = vmatpush2.msra.mxu0 0.0
    %1179 = vmatprep.subr.mxu0 0.0
    %1180 = vmatpush2.msra.mxu0 0.0
    %1181 = vmatprep.subr.mxu0 0.0
    %1182 = vmatpush2.msra.mxu0 0.0
    %1183 = vmatprep.mubr.f32.mxu0 0.0
    %1184 = vmatmul.mubr.f32.gmra.mxu0 %v1013
    %v1185 = vpop.f32.mrf.mxu0
    %v1186 = vadd.f32 0.0, %v1185
    %v1187 = vpop.f32.mrf.mxu0
    %1188 = vdwg.mxu0
    %v1189 = vadd.f32 %v1101, %v1186
    %1190 = vset.pattern.permute.xlu0 2
    %1191 = vperm.xlu0 %1190, %v491
    %v1192 = vpop.permute.xlu0 %1191
    %v1195 = vunpack.c.l.s4 839922192
    %v1196 = vunpack.c.0.s8 %v1195
    %v1197 = vlaneseq
    %v1198 = vshrl.u32 %v1197, 7
    %v1199 = vsub.s32 %v1196, %v1198
    %v1200 = vrot.slane %v1192, %v1199
    %1201 = vset.pattern.permute.xlu0 2
    %1202 = vperm.xlu0 %1201, %v492
    %v1203 = vpop.permute.xlu0 %1202
    %v1206 = vunpack.c.l.s4 839922192
    %v1207 = vunpack.c.0.s8 %v1206
    %v1208 = vlaneseq
    %v1209 = vshrl.u32 %v1208, 7
    %v1210 = vsub.s32 %v1207, %v1209
    %v1211 = vrot.slane %v1203, %v1210
    %1212 = vset.pattern.permute.xlu0 2
    %1213 = vperm.xlu0 %1212, %v493
    %v1214 = vpop.permute.xlu0 %1213
    %v1217 = vunpack.c.l.s4 839922192
    %v1218 = vunpack.c.0.s8 %v1217
    %v1219 = vlaneseq
    %v1220 = vshrl.u32 %v1219, 7
    %v1221 = vsub.s32 %v1218, %v1220
    %v1222 = vrot.slane %v1214, %v1221
    %1223 = vset.pattern.permute.xlu0 2
    %1224 = vperm.xlu0 %1223, %v494
    %v1225 = vpop.permute.xlu0 %1224
    %v1228 = vunpack.c.l.s4 839922192
    %v1229 = vunpack.c.0.s8 %v1228
    %v1230 = vlaneseq
    %v1231 = vshrl.u32 %v1230, 7
    %v1232 = vsub.s32 %v1229, %v1231
    %v1233 = vrot.slane %v1225, %v1232
    %1234 = vset.pattern.permute.xlu0 2
    %1235 = vperm.xlu0 %1234, %v495
    %v1236 = vpop.permute.xlu0 %1235
    %v1239 = vunpack.c.l.s4 839922192
    %v1240 = vunpack.c.0.s8 %v1239
    %v1241 = vlaneseq
    %v1242 = vshrl.u32 %v1241, 7
    %v1243 = vsub.s32 %v1240, %v1242
    %v1244 = vrot.slane %v1236, %v1243
    %1245 = vset.pattern.permute.xlu0 2
    %1246 = vperm.xlu0 %1245, %v496
    %v1247 = vpop.permute.xlu0 %1246
    %v1250 = vunpack.c.l.s4 839922192
    %v1251 = vunpack.c.0.s8 %v1250
    %v1252 = vlaneseq
    %v1253 = vshrl.u32 %v1252, 7
    %v1254 = vsub.s32 %v1251, %v1253
    %v1255 = vrot.slane %v1247, %v1254
    %1256 = vset.pattern.permute.xlu0 2
    %1257 = vperm.xlu0 %1256, %v497
    %v1258 = vpop.permute.xlu0 %1257
    %v1261 = vunpack.c.l.s4 839922192
    %v1262 = vunpack.c.0.s8 %v1261
    %v1263 = vlaneseq
    %v1264 = vshrl.u32 %v1263, 7
    %v1265 = vsub.s32 %v1262, %v1264
    %v1266 = vrot.slane %v1258, %v1265
    %1267 = vset.pattern.permute.xlu0 2
    %1268 = vperm.xlu0 %1267, %v498
    %v1269 = vpop.permute.xlu0 %1268
    %v1272 = vunpack.c.l.s4 839922192
    %v1273 = vunpack.c.0.s8 %v1272
    %v1274 = vlaneseq
    %v1275 = vshrl.u32 %v1274, 7
    %v1276 = vsub.s32 %v1273, %v1275
    %v1277 = vrot.slane %v1269, %v1276
    %v1278 = vmul.f32 %v1200, %v491
    %v1279 = vmul.f32 %v1211, %v492
    %v1280 = vmul.f32 %v1222, %v493
    %v1281 = vmul.f32 %v1233, %v494
    %v1282 = vmul.f32 %v1244, %v495
    %v1283 = vmul.f32 %v1255, %v496
    %v1284 = vmul.f32 %v1266, %v497
    %v1285 = vmul.f32 %v1277, %v498
    %v1286 = vsel %vm435, %v1278, 0.0
    %v1287 = vsel %vm435, %v1279, 0.0
    %v1288 = vadd.f32 %v1286, %v1287
    %v1289 = vsel %vm435, %v1280, 0.0
    %v1290 = vadd.f32 %v1288, %v1289
    %v1291 = vsel %vm435, %v1281, 0.0
    %v1292 = vadd.f32 %v1290, %v1291
    %v1293 = vsel %vm435, %v1282, 0.0
    %v1294 = vadd.f32 %v1292, %v1293
    %v1295 = vsel %vm435, %v1283, 0.0
    %v1296 = vadd.f32 %v1294, %v1295
    %v1297 = vsel %vm435, %v1284, 0.0
    %v1298 = vadd.f32 %v1296, %v1297
    %v1299 = vsel %vm435, %v1285, 0.0
    %v1300 = vadd.f32 %v1298, %v1299
    %vm1301 = vcmp.eq.s32.totalorder %v619, 2
    %v1302 = vsel %vm1301, 1, 0
    %v1303 = vcvt.s32.f32 %v1302
    %v1304 = vsub.f32 %v1300, %v1303
    %v1305 = vmul.f32 %v1304, %v1304
    %v1306 = vsel %vm435, %v1305, 0.0
    %1307 = vadd.xlane.f32.xlu0 %v1306
    %v1308 = vpop.xlane.xlu0 %1307
    %v1309 = vadd.f32 %v967, %v1308
    %v1310 = vmul.f32 %v1200, %v39
    %v1311 = vmul.f32 %v1211, %v40
    %v1312 = vmul.f32 %v1222, %v41
    %v1313 = vmul.f32 %v1233, %v42
    %v1314 = vmul.f32 %v1244, %v43
    %v1315 = vmul.f32 %v1255, %v44
    %v1316 = vmul.f32 %v1266, %v45
    %v1317 = vmul.f32 %v1277, %v46
    %v1318 = vsel %vm637, %v1310, 0.0
    %v1319 = vsel %vm637, %v1311, 0.0
    %v1320 = vadd.f32 %v1318, %v1319
    %v1321 = vsel %vm637, %v1312, 0.0
    %v1322 = vadd.f32 %v1320, %v1321
    %v1323 = vsel %vm637, %v1313, 0.0
    %v1324 = vadd.f32 %v1322, %v1323
    %v1325 = vsel %vm637, %v1314, 0.0
    %v1326 = vadd.f32 %v1324, %v1325
    %v1327 = vsel %vm637, %v1315, 0.0
    %v1328 = vadd.f32 %v1326, %v1327
    %v1329 = vsel %vm637, %v1316, 0.0
    %v1330 = vadd.f32 %v1328, %v1329
    %v1331 = vsel %vm637, %v1317, 0.0
    %v1332 = vadd.f32 %v1330, %v1331
    %v1333 = vmul.f32 %v1200, %v47
    %v1334 = vmul.f32 %v1211, %v48
    %v1335 = vmul.f32 %v1222, %v49
    %v1336 = vmul.f32 %v1233, %v50
    %v1337 = vmul.f32 %v1244, %v51
    %v1338 = vmul.f32 %v1255, %v52
    %v1339 = vmul.f32 %v1266, %v53
    %v1340 = vmul.f32 %v1277, %v54
    %v1341 = vsel %vm637, %v1333, 0.0
    %v1342 = vsel %vm637, %v1334, 0.0
    %v1343 = vadd.f32 %v1341, %v1342
    %v1344 = vsel %vm637, %v1335, 0.0
    %v1345 = vadd.f32 %v1343, %v1344
    %v1346 = vsel %vm637, %v1336, 0.0
    %v1347 = vadd.f32 %v1345, %v1346
    %v1348 = vsel %vm637, %v1337, 0.0
    %v1349 = vadd.f32 %v1347, %v1348
    %v1350 = vsel %vm637, %v1338, 0.0
    %v1351 = vadd.f32 %v1349, %v1350
    %v1352 = vsel %vm637, %v1339, 0.0
    %v1353 = vadd.f32 %v1351, %v1352
    %v1354 = vsel %vm637, %v1340, 0.0
    %v1355 = vadd.f32 %v1353, %v1354
    %s1356 = scalar_lea.vmem %s5, 256
    %v1357 = vld [vmem:[%s1356] sm:$0xff]
    %v1358 = vld [vmem:[%s1356 + $0x8] sm:$0xff]
    %v1359 = vld [vmem:[%s1356 + $0x10] sm:$0xff]
    %v1360 = vld [vmem:[%s1356 + $0x18] sm:$0xff]
    %v1361 = vld [vmem:[%s1356 + $0x20] sm:$0xff]
    %v1362 = vld [vmem:[%s1356 + $0x28] sm:$0xff]
    %v1363 = vld [vmem:[%s1356 + $0x30] sm:$0xff]
    %v1364 = vld [vmem:[%s1356 + $0x38] sm:$0xff]
    %v1365 = vld [vmem:[%s1356 + $0x40] sm:$0xff]
    %v1366 = vld [vmem:[%s1356 + $0x48] sm:$0xff]
    %v1367 = vld [vmem:[%s1356 + $0x50] sm:$0xff]
    %v1368 = vld [vmem:[%s1356 + $0x58] sm:$0xff]
    %v1369 = vld [vmem:[%s1356 + $0x60] sm:$0xff]
    %v1370 = vld [vmem:[%s1356 + $0x68] sm:$0xff]
    %v1371 = vld [vmem:[%s1356 + $0x70] sm:$0xff]
    %v1372 = vld [vmem:[%s1356 + $0x78] sm:$0xff]
    %1373 = vmatprep.subr.mxu0 0.0
    %1374 = vmatpush1.msra.mxu0 %v1372
    %1375 = vmatprep.subr.mxu0 0.0
    %1376 = vmatpush1.msra.mxu0 %v1371
    %1377 = vmatprep.subr.mxu0 0.0
    %1378 = vmatpush1.msra.mxu0 %v1370
    %1379 = vmatprep.subr.mxu0 0.0
    %1380 = vmatpush1.msra.mxu0 %v1369
    %1381 = vmatprep.subr.mxu0 0.0
    %1382 = vmatpush1.msra.mxu0 %v1368
    %1383 = vmatprep.subr.mxu0 0.0
    %1384 = vmatpush1.msra.mxu0 %v1367
    %1385 = vmatprep.subr.mxu0 0.0
    %1386 = vmatpush1.msra.mxu0 %v1366
    %1387 = vmatprep.subr.mxu0 0.0
    %1388 = vmatpush1.msra.mxu0 %v1365
    %1389 = vmatprep.subr.mxu0 0.0
    %1390 = vmatpush1.msra.mxu0 %v1364
    %1391 = vmatprep.subr.mxu0 0.0
    %1392 = vmatpush1.msra.mxu0 %v1363
    %1393 = vmatprep.subr.mxu0 0.0
    %1394 = vmatpush1.msra.mxu0 %v1362
    %1395 = vmatprep.subr.mxu0 0.0
    %1396 = vmatpush1.msra.mxu0 %v1361
    %1397 = vmatprep.subr.mxu0 0.0
    %1398 = vmatpush1.msra.mxu0 %v1360
    %1399 = vmatprep.subr.mxu0 0.0
    %1400 = vmatpush1.msra.mxu0 %v1359
    %1401 = vmatprep.subr.mxu0 0.0
    %1402 = vmatpush1.msra.mxu0 %v1358
    %1403 = vmatprep.subr.mxu0 0.0
    %1404 = vmatpush1.msra.mxu0 %v1357
    %1405 = vmatprep.subr.mxu0 0.0
    %1406 = vmatpush2.msra.mxu0 0.0
    %1407 = vmatprep.subr.mxu0 0.0
    %1408 = vmatpush2.msra.mxu0 0.0
    %1409 = vmatprep.subr.mxu0 0.0
    %1410 = vmatpush2.msra.mxu0 0.0
    %1411 = vmatprep.subr.mxu0 0.0
    %1412 = vmatpush2.msra.mxu0 0.0
    %1413 = vmatprep.subr.mxu0 0.0
    %1414 = vmatpush2.msra.mxu0 0.0
    %1415 = vmatprep.subr.mxu0 0.0
    %1416 = vmatpush2.msra.mxu0 0.0
    %1417 = vmatprep.subr.mxu0 0.0
    %1418 = vmatpush2.msra.mxu0 0.0
    %1419 = vmatprep.subr.mxu0 0.0
    %1420 = vmatpush2.msra.mxu0 0.0
    %1421 = vmatprep.subr.mxu0 0.0
    %1422 = vmatpush2.msra.mxu0 0.0
    %1423 = vmatprep.subr.mxu0 0.0
    %1424 = vmatpush2.msra.mxu0 0.0
    %1425 = vmatprep.subr.mxu0 0.0
    %1426 = vmatpush2.msra.mxu0 0.0
    %1427 = vmatprep.subr.mxu0 0.0
    %1428 = vmatpush2.msra.mxu0 0.0
    %1429 = vmatprep.subr.mxu0 0.0
    %1430 = vmatpush2.msra.mxu0 0.0
    %1431 = vmatprep.subr.mxu0 0.0
    %1432 = vmatpush2.msra.mxu0 0.0
    %1433 = vmatprep.subr.mxu0 0.0
    %1434 = vmatpush2.msra.mxu0 0.0
    %1435 = vmatprep.subr.mxu0 0.0
    %1436 = vmatpush2.msra.mxu0 0.0
    %1437 = vmatprep.mubr.f32.mxu0 0.0
    %1438 = vmatmul.mubr.f32.gmra.mxu0 %v1332
    %v1439 = vpop.f32.mrf.mxu0
    %v1440 = vadd.f32 0.0, %v1439
    %v1441 = vpop.f32.mrf.mxu0
    %1442 = vdwg.mxu0
    %v1443 = vadd.f32 %v1189, %v1440
    %s1444 = scalar_lea.vmem %s6, 256
    %v1445 = vld [vmem:[%s1444] sm:$0xff]
    %v1446 = vld [vmem:[%s1444 + $0x8] sm:$0xff]
    %v1447 = vld [vmem:[%s1444 + $0x10] sm:$0xff]
    %v1448 = vld [vmem:[%s1444 + $0x18] sm:$0xff]
    %v1449 = vld [vmem:[%s1444 + $0x20] sm:$0xff]
    %v1450 = vld [vmem:[%s1444 + $0x28] sm:$0xff]
    %v1451 = vld [vmem:[%s1444 + $0x30] sm:$0xff]
    %v1452 = vld [vmem:[%s1444 + $0x38] sm:$0xff]
    %v1453 = vld [vmem:[%s1444 + $0x40] sm:$0xff]
    %v1454 = vld [vmem:[%s1444 + $0x48] sm:$0xff]
    %v1455 = vld [vmem:[%s1444 + $0x50] sm:$0xff]
    %v1456 = vld [vmem:[%s1444 + $0x58] sm:$0xff]
    %v1457 = vld [vmem:[%s1444 + $0x60] sm:$0xff]
    %v1458 = vld [vmem:[%s1444 + $0x68] sm:$0xff]
    %v1459 = vld [vmem:[%s1444 + $0x70] sm:$0xff]
    %v1460 = vld [vmem:[%s1444 + $0x78] sm:$0xff]
    %1461 = vmatprep.subr.mxu0 0.0
    %1462 = vmatpush1.msra.mxu0 %v1460
    %1463 = vmatprep.subr.mxu0 0.0
    %1464 = vmatpush1.msra.mxu0 %v1459
    %1465 = vmatprep.subr.mxu0 0.0
    %1466 = vmatpush1.msra.mxu0 %v1458
    %1467 = vmatprep.subr.mxu0 0.0
    %1468 = vmatpush1.msra.mxu0 %v1457
    %1469 = vmatprep.subr.mxu0 0.0
    %1470 = vmatpush1.msra.mxu0 %v1456
    %1471 = vmatprep.subr.mxu0 0.0
    %1472 = vmatpush1.msra.mxu0 %v1455
    %1473 = vmatprep.subr.mxu0 0.0
    %1474 = vmatpush1.msra.mxu0 %v1454
    %1475 = vmatprep.subr.mxu0 0.0
    %1476 = vmatpush1.msra.mxu0 %v1453
    %1477 = vmatprep.subr.mxu0 0.0
    %1478 = vmatpush1.msra.mxu0 %v1452
    %1479 = vmatprep.subr.mxu0 0.0
    %1480 = vmatpush1.msra.mxu0 %v1451
    %1481 = vmatprep.subr.mxu0 0.0
    %1482 = vmatpush1.msra.mxu0 %v1450
    %1483 = vmatprep.subr.mxu0 0.0
    %1484 = vmatpush1.msra.mxu0 %v1449
    %1485 = vmatprep.subr.mxu0 0.0
    %1486 = vmatpush1.msra.mxu0 %v1448
    %1487 = vmatprep.subr.mxu0 0.0
    %1488 = vmatpush1.msra.mxu0 %v1447
    %1489 = vmatprep.subr.mxu0 0.0
    %1490 = vmatpush1.msra.mxu0 %v1446
    %1491 = vmatprep.subr.mxu0 0.0
    %1492 = vmatpush1.msra.mxu0 %v1445
    %1493 = vmatprep.subr.mxu0 0.0
    %1494 = vmatpush2.msra.mxu0 0.0
    %1495 = vmatprep.subr.mxu0 0.0
    %1496 = vmatpush2.msra.mxu0 0.0
    %1497 = vmatprep.subr.mxu0 0.0
    %1498 = vmatpush2.msra.mxu0 0.0
    %1499 = vmatprep.subr.mxu0 0.0
    %1500 = vmatpush2.msra.mxu0 0.0
    %1501 = vmatprep.subr.mxu0 0.0
    %1502 = vmatpush2.msra.mxu0 0.0
    %1503 = vmatprep.subr.mxu0 0.0
    %1504 = vmatpush2.msra.mxu0 0.0
    %1505 = vmatprep.subr.mxu0 0.0
    %1506 = vmatpush2.msra.mxu0 0.0
    %1507 = vmatprep.subr.mxu0 0.0
    %1508 = vmatpush2.msra.mxu0 0.0
    %1509 = vmatprep.subr.mxu0 0.0
    %1510 = vmatpush2.msra.mxu0 0.0
    %1511 = vmatprep.subr.mxu0 0.0
    %1512 = vmatpush2.msra.mxu0 0.0
    %1513 = vmatprep.subr.mxu0 0.0
    %1514 = vmatpush2.msra.mxu0 0.0
    %1515 = vmatprep.subr.mxu0 0.0
    %1516 = vmatpush2.msra.mxu0 0.0
    %1517 = vmatprep.subr.mxu0 0.0
    %1518 = vmatpush2.msra.mxu0 0.0
    %1519 = vmatprep.subr.mxu0 0.0
    %1520 = vmatpush2.msra.mxu0 0.0
    %1521 = vmatprep.subr.mxu0 0.0
    %1522 = vmatpush2.msra.mxu0 0.0
    %1523 = vmatprep.subr.mxu0 0.0
    %1524 = vmatpush2.msra.mxu0 0.0
    %1525 = vmatprep.mubr.f32.mxu0 0.0
    %1526 = vmatmul.mubr.f32.gmra.mxu0 %v1355
    %v1527 = vpop.f32.mrf.mxu0
    %v1528 = vadd.f32 0.0, %v1527
    %v1529 = vpop.f32.mrf.mxu0
    %1530 = vdwg.mxu0
    %v1531 = vadd.f32 %v1443, %v1528
    %1532 = vset.pattern.permute.xlu0 3
    %1533 = vperm.xlu0 %1532, %v491
    %v1534 = vpop.permute.xlu0 %1533
    %v1537 = vunpack.c.l.s4 839922192
    %v1538 = vunpack.c.0.s8 %v1537
    %v1539 = vlaneseq
    %v1540 = vshrl.u32 %v1539, 7
    %v1541 = vsub.s32 %v1538, %v1540
    %v1542 = vrot.slane %v1534, %v1541
    %1543 = vset.pattern.permute.xlu0 3
    %1544 = vperm.xlu0 %1543, %v492
    %v1545 = vpop.permute.xlu0 %1544
    %v1548 = vunpack.c.l.s4 839922192
    %v1549 = vunpack.c.0.s8 %v1548
    %v1550 = vlaneseq
    %v1551 = vshrl.u32 %v1550, 7
    %v1552 = vsub.s32 %v1549, %v1551
    %v1553 = vrot.slane %v1545, %v1552
    %1554 = vset.pattern.permute.xlu0 3
    %1555 = vperm.xlu0 %1554, %v493
    %v1556 = vpop.permute.xlu0 %1555
    %v1559 = vunpack.c.l.s4 839922192
    %v1560 = vunpack.c.0.s8 %v1559
    %v1561 = vlaneseq
    %v1562 = vshrl.u32 %v1561, 7
    %v1563 = vsub.s32 %v1560, %v1562
    %v1564 = vrot.slane %v1556, %v1563
    %1565 = vset.pattern.permute.xlu0 3
    %1566 = vperm.xlu0 %1565, %v494
    %v1567 = vpop.permute.xlu0 %1566
    %v1570 = vunpack.c.l.s4 839922192
    %v1571 = vunpack.c.0.s8 %v1570
    %v1572 = vlaneseq
    %v1573 = vshrl.u32 %v1572, 7
    %v1574 = vsub.s32 %v1571, %v1573
    %v1575 = vrot.slane %v1567, %v1574
    %1576 = vset.pattern.permute.xlu0 3
    %1577 = vperm.xlu0 %1576, %v495
    %v1578 = vpop.permute.xlu0 %1577
    %v1581 = vunpack.c.l.s4 839922192
    %v1582 = vunpack.c.0.s8 %v1581
    %v1583 = vlaneseq
    %v1584 = vshrl.u32 %v1583, 7
    %v1585 = vsub.s32 %v1582, %v1584
    %v1586 = vrot.slane %v1578, %v1585
    %1587 = vset.pattern.permute.xlu0 3
    %1588 = vperm.xlu0 %1587, %v496
    %v1589 = vpop.permute.xlu0 %1588
    %v1592 = vunpack.c.l.s4 839922192
    %v1593 = vunpack.c.0.s8 %v1592
    %v1594 = vlaneseq
    %v1595 = vshrl.u32 %v1594, 7
    %v1596 = vsub.s32 %v1593, %v1595
    %v1597 = vrot.slane %v1589, %v1596
    %1598 = vset.pattern.permute.xlu0 3
    %1599 = vperm.xlu0 %1598, %v497
    %v1600 = vpop.permute.xlu0 %1599
    %v1603 = vunpack.c.l.s4 839922192
    %v1604 = vunpack.c.0.s8 %v1603
    %v1605 = vlaneseq
    %v1606 = vshrl.u32 %v1605, 7
    %v1607 = vsub.s32 %v1604, %v1606
    %v1608 = vrot.slane %v1600, %v1607
    %1609 = vset.pattern.permute.xlu0 3
    %1610 = vperm.xlu0 %1609, %v498
    %v1611 = vpop.permute.xlu0 %1610
    %v1614 = vunpack.c.l.s4 839922192
    %v1615 = vunpack.c.0.s8 %v1614
    %v1616 = vlaneseq
    %v1617 = vshrl.u32 %v1616, 7
    %v1618 = vsub.s32 %v1615, %v1617
    %v1619 = vrot.slane %v1611, %v1618
    %v1620 = vmul.f32 %v1542, %v491
    %v1621 = vmul.f32 %v1553, %v492
    %v1622 = vmul.f32 %v1564, %v493
    %v1623 = vmul.f32 %v1575, %v494
    %v1624 = vmul.f32 %v1586, %v495
    %v1625 = vmul.f32 %v1597, %v496
    %v1626 = vmul.f32 %v1608, %v497
    %v1627 = vmul.f32 %v1619, %v498
    %v1628 = vsel %vm435, %v1620, 0.0
    %v1629 = vsel %vm435, %v1621, 0.0
    %v1630 = vadd.f32 %v1628, %v1629
    %v1631 = vsel %vm435, %v1622, 0.0
    %v1632 = vadd.f32 %v1630, %v1631
    %v1633 = vsel %vm435, %v1623, 0.0
    %v1634 = vadd.f32 %v1632, %v1633
    %v1635 = vsel %vm435, %v1624, 0.0
    %v1636 = vadd.f32 %v1634, %v1635
    %v1637 = vsel %vm435, %v1625, 0.0
    %v1638 = vadd.f32 %v1636, %v1637
    %v1639 = vsel %vm435, %v1626, 0.0
    %v1640 = vadd.f32 %v1638, %v1639
    %v1641 = vsel %vm435, %v1627, 0.0
    %v1642 = vadd.f32 %v1640, %v1641
    %vm1643 = vcmp.eq.s32.totalorder %v619, 3
    %v1644 = vsel %vm1643, 1, 0
    %v1645 = vcvt.s32.f32 %v1644
    %v1646 = vsub.f32 %v1642, %v1645
    %v1647 = vmul.f32 %v1646, %v1646
    %v1648 = vsel %vm435, %v1647, 0.0
    %1649 = vadd.xlane.f32.xlu0 %v1648
    %v1650 = vpop.xlane.xlu0 %1649
    %v1651 = vadd.f32 %v1309, %v1650
    %v1652 = vmul.f32 %v1542, %v39
    %v1653 = vmul.f32 %v1553, %v40
    %v1654 = vmul.f32 %v1564, %v41
    %v1655 = vmul.f32 %v1575, %v42
    %v1656 = vmul.f32 %v1586, %v43
    %v1657 = vmul.f32 %v1597, %v44
    %v1658 = vmul.f32 %v1608, %v45
    %v1659 = vmul.f32 %v1619, %v46
    %v1660 = vsel %vm637, %v1652, 0.0
    %v1661 = vsel %vm637, %v1653, 0.0
    %v1662 = vadd.f32 %v1660, %v1661
    %v1663 = vsel %vm637, %v1654, 0.0
    %v1664 = vadd.f32 %v1662, %v1663
    %v1665 = vsel %vm637, %v1655, 0.0
    %v1666 = vadd.f32 %v1664, %v1665
    %v1667 = vsel %vm637, %v1656, 0.0
    %v1668 = vadd.f32 %v1666, %v1667
    %v1669 = vsel %vm637, %v1657, 0.0
    %v1670 = vadd.f32 %v1668, %v1669
    %v1671 = vsel %vm637, %v1658, 0.0
    %v1672 = vadd.f32 %v1670, %v1671
    %v1673 = vsel %vm637, %v1659, 0.0
    %v1674 = vadd.f32 %v1672, %v1673
    %v1675 = vmul.f32 %v1542, %v47
    %v1676 = vmul.f32 %v1553, %v48
    %v1677 = vmul.f32 %v1564, %v49
    %v1678 = vmul.f32 %v1575, %v50
    %v1679 = vmul.f32 %v1586, %v51
    %v1680 = vmul.f32 %v1597, %v52
    %v1681 = vmul.f32 %v1608, %v53
    %v1682 = vmul.f32 %v1619, %v54
    %v1683 = vsel %vm637, %v1675, 0.0
    %v1684 = vsel %vm637, %v1676, 0.0
    %v1685 = vadd.f32 %v1683, %v1684
    %v1686 = vsel %vm637, %v1677, 0.0
    %v1687 = vadd.f32 %v1685, %v1686
    %v1688 = vsel %vm637, %v1678, 0.0
    %v1689 = vadd.f32 %v1687, %v1688
    %v1690 = vsel %vm637, %v1679, 0.0
    %v1691 = vadd.f32 %v1689, %v1690
    %v1692 = vsel %vm637, %v1680, 0.0
    %v1693 = vadd.f32 %v1691, %v1692
    %v1694 = vsel %vm637, %v1681, 0.0
    %v1695 = vadd.f32 %v1693, %v1694
    %v1696 = vsel %vm637, %v1682, 0.0
    %v1697 = vadd.f32 %v1695, %v1696
    %s1698 = scalar_lea.vmem %s5, 384
    %v1699 = vld [vmem:[%s1698] sm:$0xff]
    %v1700 = vld [vmem:[%s1698 + $0x8] sm:$0xff]
    %v1701 = vld [vmem:[%s1698 + $0x10] sm:$0xff]
    %v1702 = vld [vmem:[%s1698 + $0x18] sm:$0xff]
    %v1703 = vld [vmem:[%s1698 + $0x20] sm:$0xff]
    %v1704 = vld [vmem:[%s1698 + $0x28] sm:$0xff]
    %v1705 = vld [vmem:[%s1698 + $0x30] sm:$0xff]
    %v1706 = vld [vmem:[%s1698 + $0x38] sm:$0xff]
    %v1707 = vld [vmem:[%s1698 + $0x40] sm:$0xff]
    %v1708 = vld [vmem:[%s1698 + $0x48] sm:$0xff]
    %v1709 = vld [vmem:[%s1698 + $0x50] sm:$0xff]
    %v1710 = vld [vmem:[%s1698 + $0x58] sm:$0xff]
    %v1711 = vld [vmem:[%s1698 + $0x60] sm:$0xff]
    %v1712 = vld [vmem:[%s1698 + $0x68] sm:$0xff]
    %v1713 = vld [vmem:[%s1698 + $0x70] sm:$0xff]
    %v1714 = vld [vmem:[%s1698 + $0x78] sm:$0xff]
    %1715 = vmatprep.subr.mxu0 0.0
    %1716 = vmatpush1.msra.mxu0 %v1714
    %1717 = vmatprep.subr.mxu0 0.0
    %1718 = vmatpush1.msra.mxu0 %v1713
    %1719 = vmatprep.subr.mxu0 0.0
    %1720 = vmatpush1.msra.mxu0 %v1712
    %1721 = vmatprep.subr.mxu0 0.0
    %1722 = vmatpush1.msra.mxu0 %v1711
    %1723 = vmatprep.subr.mxu0 0.0
    %1724 = vmatpush1.msra.mxu0 %v1710
    %1725 = vmatprep.subr.mxu0 0.0
    %1726 = vmatpush1.msra.mxu0 %v1709
    %1727 = vmatprep.subr.mxu0 0.0
    %1728 = vmatpush1.msra.mxu0 %v1708
    %1729 = vmatprep.subr.mxu0 0.0
    %1730 = vmatpush1.msra.mxu0 %v1707
    %1731 = vmatprep.subr.mxu0 0.0
    %1732 = vmatpush1.msra.mxu0 %v1706
    %1733 = vmatprep.subr.mxu0 0.0
    %1734 = vmatpush1.msra.mxu0 %v1705
    %1735 = vmatprep.subr.mxu0 0.0
    %1736 = vmatpush1.msra.mxu0 %v1704
    %1737 = vmatprep.subr.mxu0 0.0
    %1738 = vmatpush1.msra.mxu0 %v1703
    %1739 = vmatprep.subr.mxu0 0.0
    %1740 = vmatpush1.msra.mxu0 %v1702
    %1741 = vmatprep.subr.mxu0 0.0
    %1742 = vmatpush1.msra.mxu0 %v1701
    %1743 = vmatprep.subr.mxu0 0.0
    %1744 = vmatpush1.msra.mxu0 %v1700
    %1745 = vmatprep.subr.mxu0 0.0
    %1746 = vmatpush1.msra.mxu0 %v1699
    %1747 = vmatprep.subr.mxu0 0.0
    %1748 = vmatpush2.msra.mxu0 0.0
    %1749 = vmatprep.subr.mxu0 0.0
    %1750 = vmatpush2.msra.mxu0 0.0
    %1751 = vmatprep.subr.mxu0 0.0
    %1752 = vmatpush2.msra.mxu0 0.0
    %1753 = vmatprep.subr.mxu0 0.0
    %1754 = vmatpush2.msra.mxu0 0.0
    %1755 = vmatprep.subr.mxu0 0.0
    %1756 = vmatpush2.msra.mxu0 0.0
    %1757 = vmatprep.subr.mxu0 0.0
    %1758 = vmatpush2.msra.mxu0 0.0
    %1759 = vmatprep.subr.mxu0 0.0
    %1760 = vmatpush2.msra.mxu0 0.0
    %1761 = vmatprep.subr.mxu0 0.0
    %1762 = vmatpush2.msra.mxu0 0.0
    %1763 = vmatprep.subr.mxu0 0.0
    %1764 = vmatpush2.msra.mxu0 0.0
    %1765 = vmatprep.subr.mxu0 0.0
    %1766 = vmatpush2.msra.mxu0 0.0
    %1767 = vmatprep.subr.mxu0 0.0
    %1768 = vmatpush2.msra.mxu0 0.0
    %1769 = vmatprep.subr.mxu0 0.0
    %1770 = vmatpush2.msra.mxu0 0.0
    %1771 = vmatprep.subr.mxu0 0.0
    %1772 = vmatpush2.msra.mxu0 0.0
    %1773 = vmatprep.subr.mxu0 0.0
    %1774 = vmatpush2.msra.mxu0 0.0
    %1775 = vmatprep.subr.mxu0 0.0
    %1776 = vmatpush2.msra.mxu0 0.0
    %1777 = vmatprep.subr.mxu0 0.0
    %1778 = vmatpush2.msra.mxu0 0.0
    %1779 = vmatprep.mubr.f32.mxu0 0.0
    %1780 = vmatmul.mubr.f32.gmra.mxu0 %v1674
    %v1781 = vpop.f32.mrf.mxu0
    %v1782 = vadd.f32 0.0, %v1781
    %v1783 = vpop.f32.mrf.mxu0
    %1784 = vdwg.mxu0
    %v1785 = vadd.f32 %v1531, %v1782
    %s1786 = scalar_lea.vmem %s6, 384
    %v1787 = vld [vmem:[%s1786] sm:$0xff]
    %v1788 = vld [vmem:[%s1786 + $0x8] sm:$0xff]
    %v1789 = vld [vmem:[%s1786 + $0x10] sm:$0xff]
    %v1790 = vld [vmem:[%s1786 + $0x18] sm:$0xff]
    %v1791 = vld [vmem:[%s1786 + $0x20] sm:$0xff]
    %v1792 = vld [vmem:[%s1786 + $0x28] sm:$0xff]
    %v1793 = vld [vmem:[%s1786 + $0x30] sm:$0xff]
    %v1794 = vld [vmem:[%s1786 + $0x38] sm:$0xff]
    %v1795 = vld [vmem:[%s1786 + $0x40] sm:$0xff]
    %v1796 = vld [vmem:[%s1786 + $0x48] sm:$0xff]
    %v1797 = vld [vmem:[%s1786 + $0x50] sm:$0xff]
    %v1798 = vld [vmem:[%s1786 + $0x58] sm:$0xff]
    %v1799 = vld [vmem:[%s1786 + $0x60] sm:$0xff]
    %v1800 = vld [vmem:[%s1786 + $0x68] sm:$0xff]
    %v1801 = vld [vmem:[%s1786 + $0x70] sm:$0xff]
    %v1802 = vld [vmem:[%s1786 + $0x78] sm:$0xff]
    %1803 = vmatprep.subr.mxu0 0.0
    %1804 = vmatpush1.msra.mxu0 %v1802
    %1805 = vmatprep.subr.mxu0 0.0
    %1806 = vmatpush1.msra.mxu0 %v1801
    %1807 = vmatprep.subr.mxu0 0.0
    %1808 = vmatpush1.msra.mxu0 %v1800
    %1809 = vmatprep.subr.mxu0 0.0
    %1810 = vmatpush1.msra.mxu0 %v1799
    %1811 = vmatprep.subr.mxu0 0.0
    %1812 = vmatpush1.msra.mxu0 %v1798
    %1813 = vmatprep.subr.mxu0 0.0
    %1814 = vmatpush1.msra.mxu0 %v1797
    %1815 = vmatprep.subr.mxu0 0.0
    %1816 = vmatpush1.msra.mxu0 %v1796
    %1817 = vmatprep.subr.mxu0 0.0
    %1818 = vmatpush1.msra.mxu0 %v1795
    %1819 = vmatprep.subr.mxu0 0.0
    %1820 = vmatpush1.msra.mxu0 %v1794
    %1821 = vmatprep.subr.mxu0 0.0
    %1822 = vmatpush1.msra.mxu0 %v1793
    %1823 = vmatprep.subr.mxu0 0.0
    %1824 = vmatpush1.msra.mxu0 %v1792
    %1825 = vmatprep.subr.mxu0 0.0
    %1826 = vmatpush1.msra.mxu0 %v1791
    %1827 = vmatprep.subr.mxu0 0.0
    %1828 = vmatpush1.msra.mxu0 %v1790
    %1829 = vmatprep.subr.mxu0 0.0
    %1830 = vmatpush1.msra.mxu0 %v1789
    %1831 = vmatprep.subr.mxu0 0.0
    %1832 = vmatpush1.msra.mxu0 %v1788
    %1833 = vmatprep.subr.mxu0 0.0
    %1834 = vmatpush1.msra.mxu0 %v1787
    %1835 = vmatprep.subr.mxu0 0.0
    %1836 = vmatpush2.msra.mxu0 0.0
    %1837 = vmatprep.subr.mxu0 0.0
    %1838 = vmatpush2.msra.mxu0 0.0
    %1839 = vmatprep.subr.mxu0 0.0
    %1840 = vmatpush2.msra.mxu0 0.0
    %1841 = vmatprep.subr.mxu0 0.0
    %1842 = vmatpush2.msra.mxu0 0.0
    %1843 = vmatprep.subr.mxu0 0.0
    %1844 = vmatpush2.msra.mxu0 0.0
    %1845 = vmatprep.subr.mxu0 0.0
    %1846 = vmatpush2.msra.mxu0 0.0
    %1847 = vmatprep.subr.mxu0 0.0
    %1848 = vmatpush2.msra.mxu0 0.0
    %1849 = vmatprep.subr.mxu0 0.0
    %1850 = vmatpush2.msra.mxu0 0.0
    %1851 = vmatprep.subr.mxu0 0.0
    %1852 = vmatpush2.msra.mxu0 0.0
    %1853 = vmatprep.subr.mxu0 0.0
    %1854 = vmatpush2.msra.mxu0 0.0
    %1855 = vmatprep.subr.mxu0 0.0
    %1856 = vmatpush2.msra.mxu0 0.0
    %1857 = vmatprep.subr.mxu0 0.0
    %1858 = vmatpush2.msra.mxu0 0.0
    %1859 = vmatprep.subr.mxu0 0.0
    %1860 = vmatpush2.msra.mxu0 0.0
    %1861 = vmatprep.subr.mxu0 0.0
    %1862 = vmatpush2.msra.mxu0 0.0
    %1863 = vmatprep.subr.mxu0 0.0
    %1864 = vmatpush2.msra.mxu0 0.0
    %1865 = vmatprep.subr.mxu0 0.0
    %1866 = vmatpush2.msra.mxu0 0.0
    %1867 = vmatprep.mubr.f32.mxu0 0.0
    %1868 = vmatmul.mubr.f32.gmra.mxu0 %v1697
    %v1869 = vpop.f32.mrf.mxu0
    %v1870 = vadd.f32 0.0, %v1869
    %v1871 = vpop.f32.mrf.mxu0
    %1872 = vdwg.mxu0
    %v1873 = vadd.f32 %v1785, %v1870
    %1874 = vset.pattern.permute.xlu0 4
    %1875 = vperm.xlu0 %1874, %v491
    %v1876 = vpop.permute.xlu0 %1875
    %v1879 = vunpack.c.l.s4 839922192
    %v1880 = vunpack.c.0.s8 %v1879
    %v1881 = vlaneseq
    %v1882 = vshrl.u32 %v1881, 7
    %v1883 = vsub.s32 %v1880, %v1882
    %v1884 = vrot.slane %v1876, %v1883
    %1885 = vset.pattern.permute.xlu0 4
    %1886 = vperm.xlu0 %1885, %v492
    %v1887 = vpop.permute.xlu0 %1886
    %v1890 = vunpack.c.l.s4 839922192
    %v1891 = vunpack.c.0.s8 %v1890
    %v1892 = vlaneseq
    %v1893 = vshrl.u32 %v1892, 7
    %v1894 = vsub.s32 %v1891, %v1893
    %v1895 = vrot.slane %v1887, %v1894
    %1896 = vset.pattern.permute.xlu0 4
    %1897 = vperm.xlu0 %1896, %v493
    %v1898 = vpop.permute.xlu0 %1897
    %v1901 = vunpack.c.l.s4 839922192
    %v1902 = vunpack.c.0.s8 %v1901
    %v1903 = vlaneseq
    %v1904 = vshrl.u32 %v1903, 7
    %v1905 = vsub.s32 %v1902, %v1904
    %v1906 = vrot.slane %v1898, %v1905
    %1907 = vset.pattern.permute.xlu0 4
    %1908 = vperm.xlu0 %1907, %v494
    %v1909 = vpop.permute.xlu0 %1908
    %v1912 = vunpack.c.l.s4 839922192
    %v1913 = vunpack.c.0.s8 %v1912
    %v1914 = vlaneseq
    %v1915 = vshrl.u32 %v1914, 7
    %v1916 = vsub.s32 %v1913, %v1915
    %v1917 = vrot.slane %v1909, %v1916
    %1918 = vset.pattern.permute.xlu0 4
    %1919 = vperm.xlu0 %1918, %v495
    %v1920 = vpop.permute.xlu0 %1919
    %v1923 = vunpack.c.l.s4 839922192
    %v1924 = vunpack.c.0.s8 %v1923
    %v1925 = vlaneseq
    %v1926 = vshrl.u32 %v1925, 7
    %v1927 = vsub.s32 %v1924, %v1926
    %v1928 = vrot.slane %v1920, %v1927
    %1929 = vset.pattern.permute.xlu0 4
    %1930 = vperm.xlu0 %1929, %v496
    %v1931 = vpop.permute.xlu0 %1930
    %v1934 = vunpack.c.l.s4 839922192
    %v1935 = vunpack.c.0.s8 %v1934
    %v1936 = vlaneseq
    %v1937 = vshrl.u32 %v1936, 7
    %v1938 = vsub.s32 %v1935, %v1937
    %v1939 = vrot.slane %v1931, %v1938
    %1940 = vset.pattern.permute.xlu0 4
    %1941 = vperm.xlu0 %1940, %v497
    %v1942 = vpop.permute.xlu0 %1941
    %v1945 = vunpack.c.l.s4 839922192
    %v1946 = vunpack.c.0.s8 %v1945
    %v1947 = vlaneseq
    %v1948 = vshrl.u32 %v1947, 7
    %v1949 = vsub.s32 %v1946, %v1948
    %v1950 = vrot.slane %v1942, %v1949
    %1951 = vset.pattern.permute.xlu0 4
    %1952 = vperm.xlu0 %1951, %v498
    %v1953 = vpop.permute.xlu0 %1952
    %v1956 = vunpack.c.l.s4 839922192
    %v1957 = vunpack.c.0.s8 %v1956
    %v1958 = vlaneseq
    %v1959 = vshrl.u32 %v1958, 7
    %v1960 = vsub.s32 %v1957, %v1959
    %v1961 = vrot.slane %v1953, %v1960
    %v1962 = vmul.f32 %v1884, %v491
    %v1963 = vmul.f32 %v1895, %v492
    %v1964 = vmul.f32 %v1906, %v493
    %v1965 = vmul.f32 %v1917, %v494
    %v1966 = vmul.f32 %v1928, %v495
    %v1967 = vmul.f32 %v1939, %v496
    %v1968 = vmul.f32 %v1950, %v497
    %v1969 = vmul.f32 %v1961, %v498
    %v1970 = vsel %vm435, %v1962, 0.0
    %v1971 = vsel %vm435, %v1963, 0.0
    %v1972 = vadd.f32 %v1970, %v1971
    %v1973 = vsel %vm435, %v1964, 0.0
    %v1974 = vadd.f32 %v1972, %v1973
    %v1975 = vsel %vm435, %v1965, 0.0
    %v1976 = vadd.f32 %v1974, %v1975
    %v1977 = vsel %vm435, %v1966, 0.0
    %v1978 = vadd.f32 %v1976, %v1977
    %v1979 = vsel %vm435, %v1967, 0.0
    %v1980 = vadd.f32 %v1978, %v1979
    %v1981 = vsel %vm435, %v1968, 0.0
    %v1982 = vadd.f32 %v1980, %v1981
    %v1983 = vsel %vm435, %v1969, 0.0
    %v1984 = vadd.f32 %v1982, %v1983
    %vm1985 = vcmp.eq.s32.totalorder %v619, 4
    %v1986 = vsel %vm1985, 1, 0
    %v1987 = vcvt.s32.f32 %v1986
    %v1988 = vsub.f32 %v1984, %v1987
    %v1989 = vmul.f32 %v1988, %v1988
    %v1990 = vsel %vm435, %v1989, 0.0
    %1991 = vadd.xlane.f32.xlu0 %v1990
    %v1992 = vpop.xlane.xlu0 %1991
    %v1993 = vadd.f32 %v1651, %v1992
    %v1994 = vmul.f32 %v1884, %v39
    %v1995 = vmul.f32 %v1895, %v40
    %v1996 = vmul.f32 %v1906, %v41
    %v1997 = vmul.f32 %v1917, %v42
    %v1998 = vmul.f32 %v1928, %v43
    %v1999 = vmul.f32 %v1939, %v44
    %v2000 = vmul.f32 %v1950, %v45
    %v2001 = vmul.f32 %v1961, %v46
    %v2002 = vsel %vm637, %v1994, 0.0
    %v2003 = vsel %vm637, %v1995, 0.0
    %v2004 = vadd.f32 %v2002, %v2003
    %v2005 = vsel %vm637, %v1996, 0.0
    %v2006 = vadd.f32 %v2004, %v2005
    %v2007 = vsel %vm637, %v1997, 0.0
    %v2008 = vadd.f32 %v2006, %v2007
    %v2009 = vsel %vm637, %v1998, 0.0
    %v2010 = vadd.f32 %v2008, %v2009
    %v2011 = vsel %vm637, %v1999, 0.0
    %v2012 = vadd.f32 %v2010, %v2011
    %v2013 = vsel %vm637, %v2000, 0.0
    %v2014 = vadd.f32 %v2012, %v2013
    %v2015 = vsel %vm637, %v2001, 0.0
    %v2016 = vadd.f32 %v2014, %v2015
    %v2017 = vmul.f32 %v1884, %v47
    %v2018 = vmul.f32 %v1895, %v48
    %v2019 = vmul.f32 %v1906, %v49
    %v2020 = vmul.f32 %v1917, %v50
    %v2021 = vmul.f32 %v1928, %v51
    %v2022 = vmul.f32 %v1939, %v52
    %v2023 = vmul.f32 %v1950, %v53
    %v2024 = vmul.f32 %v1961, %v54
    %v2025 = vsel %vm637, %v2017, 0.0
    %v2026 = vsel %vm637, %v2018, 0.0
    %v2027 = vadd.f32 %v2025, %v2026
    %v2028 = vsel %vm637, %v2019, 0.0
    %v2029 = vadd.f32 %v2027, %v2028
    %v2030 = vsel %vm637, %v2020, 0.0
    %v2031 = vadd.f32 %v2029, %v2030
    %v2032 = vsel %vm637, %v2021, 0.0
    %v2033 = vadd.f32 %v2031, %v2032
    %v2034 = vsel %vm637, %v2022, 0.0
    %v2035 = vadd.f32 %v2033, %v2034
    %v2036 = vsel %vm637, %v2023, 0.0
    %v2037 = vadd.f32 %v2035, %v2036
    %v2038 = vsel %vm637, %v2024, 0.0
    %v2039 = vadd.f32 %v2037, %v2038
    %s2040 = scalar_lea.vmem %s5, 512
    %v2041 = vld [vmem:[%s2040] sm:$0xff]
    %v2042 = vld [vmem:[%s2040 + $0x8] sm:$0xff]
    %v2043 = vld [vmem:[%s2040 + $0x10] sm:$0xff]
    %v2044 = vld [vmem:[%s2040 + $0x18] sm:$0xff]
    %v2045 = vld [vmem:[%s2040 + $0x20] sm:$0xff]
    %v2046 = vld [vmem:[%s2040 + $0x28] sm:$0xff]
    %v2047 = vld [vmem:[%s2040 + $0x30] sm:$0xff]
    %v2048 = vld [vmem:[%s2040 + $0x38] sm:$0xff]
    %v2049 = vld [vmem:[%s2040 + $0x40] sm:$0xff]
    %v2050 = vld [vmem:[%s2040 + $0x48] sm:$0xff]
    %v2051 = vld [vmem:[%s2040 + $0x50] sm:$0xff]
    %v2052 = vld [vmem:[%s2040 + $0x58] sm:$0xff]
    %v2053 = vld [vmem:[%s2040 + $0x60] sm:$0xff]
    %v2054 = vld [vmem:[%s2040 + $0x68] sm:$0xff]
    %v2055 = vld [vmem:[%s2040 + $0x70] sm:$0xff]
    %v2056 = vld [vmem:[%s2040 + $0x78] sm:$0xff]
    %2057 = vmatprep.subr.mxu0 0.0
    %2058 = vmatpush1.msra.mxu0 %v2056
    %2059 = vmatprep.subr.mxu0 0.0
    %2060 = vmatpush1.msra.mxu0 %v2055
    %2061 = vmatprep.subr.mxu0 0.0
    %2062 = vmatpush1.msra.mxu0 %v2054
    %2063 = vmatprep.subr.mxu0 0.0
    %2064 = vmatpush1.msra.mxu0 %v2053
    %2065 = vmatprep.subr.mxu0 0.0
    %2066 = vmatpush1.msra.mxu0 %v2052
    %2067 = vmatprep.subr.mxu0 0.0
    %2068 = vmatpush1.msra.mxu0 %v2051
    %2069 = vmatprep.subr.mxu0 0.0
    %2070 = vmatpush1.msra.mxu0 %v2050
    %2071 = vmatprep.subr.mxu0 0.0
    %2072 = vmatpush1.msra.mxu0 %v2049
    %2073 = vmatprep.subr.mxu0 0.0
    %2074 = vmatpush1.msra.mxu0 %v2048
    %2075 = vmatprep.subr.mxu0 0.0
    %2076 = vmatpush1.msra.mxu0 %v2047
    %2077 = vmatprep.subr.mxu0 0.0
    %2078 = vmatpush1.msra.mxu0 %v2046
    %2079 = vmatprep.subr.mxu0 0.0
    %2080 = vmatpush1.msra.mxu0 %v2045
    %2081 = vmatprep.subr.mxu0 0.0
    %2082 = vmatpush1.msra.mxu0 %v2044
    %2083 = vmatprep.subr.mxu0 0.0
    %2084 = vmatpush1.msra.mxu0 %v2043
    %2085 = vmatprep.subr.mxu0 0.0
    %2086 = vmatpush1.msra.mxu0 %v2042
    %2087 = vmatprep.subr.mxu0 0.0
    %2088 = vmatpush1.msra.mxu0 %v2041
    %2089 = vmatprep.subr.mxu0 0.0
    %2090 = vmatpush2.msra.mxu0 0.0
    %2091 = vmatprep.subr.mxu0 0.0
    %2092 = vmatpush2.msra.mxu0 0.0
    %2093 = vmatprep.subr.mxu0 0.0
    %2094 = vmatpush2.msra.mxu0 0.0
    %2095 = vmatprep.subr.mxu0 0.0
    %2096 = vmatpush2.msra.mxu0 0.0
    %2097 = vmatprep.subr.mxu0 0.0
    %2098 = vmatpush2.msra.mxu0 0.0
    %2099 = vmatprep.subr.mxu0 0.0
    %2100 = vmatpush2.msra.mxu0 0.0
    %2101 = vmatprep.subr.mxu0 0.0
    %2102 = vmatpush2.msra.mxu0 0.0
    %2103 = vmatprep.subr.mxu0 0.0
    %2104 = vmatpush2.msra.mxu0 0.0
    %2105 = vmatprep.subr.mxu0 0.0
    %2106 = vmatpush2.msra.mxu0 0.0
    %2107 = vmatprep.subr.mxu0 0.0
    %2108 = vmatpush2.msra.mxu0 0.0
    %2109 = vmatprep.subr.mxu0 0.0
    %2110 = vmatpush2.msra.mxu0 0.0
    %2111 = vmatprep.subr.mxu0 0.0
    %2112 = vmatpush2.msra.mxu0 0.0
    %2113 = vmatprep.subr.mxu0 0.0
    %2114 = vmatpush2.msra.mxu0 0.0
    %2115 = vmatprep.subr.mxu0 0.0
    %2116 = vmatpush2.msra.mxu0 0.0
    %2117 = vmatprep.subr.mxu0 0.0
    %2118 = vmatpush2.msra.mxu0 0.0
    %2119 = vmatprep.subr.mxu0 0.0
    %2120 = vmatpush2.msra.mxu0 0.0
    %2121 = vmatprep.mubr.f32.mxu0 0.0
    %2122 = vmatmul.mubr.f32.gmra.mxu0 %v2016
    %v2123 = vpop.f32.mrf.mxu0
    %v2124 = vadd.f32 0.0, %v2123
    %v2125 = vpop.f32.mrf.mxu0
    %2126 = vdwg.mxu0
    %v2127 = vadd.f32 %v1873, %v2124
    %s2128 = scalar_lea.vmem %s6, 512
    %v2129 = vld [vmem:[%s2128] sm:$0xff]
    %v2130 = vld [vmem:[%s2128 + $0x8] sm:$0xff]
    %v2131 = vld [vmem:[%s2128 + $0x10] sm:$0xff]
    %v2132 = vld [vmem:[%s2128 + $0x18] sm:$0xff]
    %v2133 = vld [vmem:[%s2128 + $0x20] sm:$0xff]
    %v2134 = vld [vmem:[%s2128 + $0x28] sm:$0xff]
    %v2135 = vld [vmem:[%s2128 + $0x30] sm:$0xff]
    %v2136 = vld [vmem:[%s2128 + $0x38] sm:$0xff]
    %v2137 = vld [vmem:[%s2128 + $0x40] sm:$0xff]
    %v2138 = vld [vmem:[%s2128 + $0x48] sm:$0xff]
    %v2139 = vld [vmem:[%s2128 + $0x50] sm:$0xff]
    %v2140 = vld [vmem:[%s2128 + $0x58] sm:$0xff]
    %v2141 = vld [vmem:[%s2128 + $0x60] sm:$0xff]
    %v2142 = vld [vmem:[%s2128 + $0x68] sm:$0xff]
    %v2143 = vld [vmem:[%s2128 + $0x70] sm:$0xff]
    %v2144 = vld [vmem:[%s2128 + $0x78] sm:$0xff]
    %2145 = vmatprep.subr.mxu0 0.0
    %2146 = vmatpush1.msra.mxu0 %v2144
    %2147 = vmatprep.subr.mxu0 0.0
    %2148 = vmatpush1.msra.mxu0 %v2143
    %2149 = vmatprep.subr.mxu0 0.0
    %2150 = vmatpush1.msra.mxu0 %v2142
    %2151 = vmatprep.subr.mxu0 0.0
    %2152 = vmatpush1.msra.mxu0 %v2141
    %2153 = vmatprep.subr.mxu0 0.0
    %2154 = vmatpush1.msra.mxu0 %v2140
    %2155 = vmatprep.subr.mxu0 0.0
    %2156 = vmatpush1.msra.mxu0 %v2139
    %2157 = vmatprep.subr.mxu0 0.0
    %2158 = vmatpush1.msra.mxu0 %v2138
    %2159 = vmatprep.subr.mxu0 0.0
    %2160 = vmatpush1.msra.mxu0 %v2137
    %2161 = vmatprep.subr.mxu0 0.0
    %2162 = vmatpush1.msra.mxu0 %v2136
    %2163 = vmatprep.subr.mxu0 0.0
    %2164 = vmatpush1.msra.mxu0 %v2135
    %2165 = vmatprep.subr.mxu0 0.0
    %2166 = vmatpush1.msra.mxu0 %v2134
    %2167 = vmatprep.subr.mxu0 0.0
    %2168 = vmatpush1.msra.mxu0 %v2133
    %2169 = vmatprep.subr.mxu0 0.0
    %2170 = vmatpush1.msra.mxu0 %v2132
    %2171 = vmatprep.subr.mxu0 0.0
    %2172 = vmatpush1.msra.mxu0 %v2131
    %2173 = vmatprep.subr.mxu0 0.0
    %2174 = vmatpush1.msra.mxu0 %v2130
    %2175 = vmatprep.subr.mxu0 0.0
    %2176 = vmatpush1.msra.mxu0 %v2129
    %2177 = vmatprep.subr.mxu0 0.0
    %2178 = vmatpush2.msra.mxu0 0.0
    %2179 = vmatprep.subr.mxu0 0.0
    %2180 = vmatpush2.msra.mxu0 0.0
    %2181 = vmatprep.subr.mxu0 0.0
    %2182 = vmatpush2.msra.mxu0 0.0
    %2183 = vmatprep.subr.mxu0 0.0
    %2184 = vmatpush2.msra.mxu0 0.0
    %2185 = vmatprep.subr.mxu0 0.0
    %2186 = vmatpush2.msra.mxu0 0.0
    %2187 = vmatprep.subr.mxu0 0.0
    %2188 = vmatpush2.msra.mxu0 0.0
    %2189 = vmatprep.subr.mxu0 0.0
    %2190 = vmatpush2.msra.mxu0 0.0
    %2191 = vmatprep.subr.mxu0 0.0
    %2192 = vmatpush2.msra.mxu0 0.0
    %2193 = vmatprep.subr.mxu0 0.0
    %2194 = vmatpush2.msra.mxu0 0.0
    %2195 = vmatprep.subr.mxu0 0.0
    %2196 = vmatpush2.msra.mxu0 0.0
    %2197 = vmatprep.subr.mxu0 0.0
    %2198 = vmatpush2.msra.mxu0 0.0
    %2199 = vmatprep.subr.mxu0 0.0
    %2200 = vmatpush2.msra.mxu0 0.0
    %2201 = vmatprep.subr.mxu0 0.0
    %2202 = vmatpush2.msra.mxu0 0.0
    %2203 = vmatprep.subr.mxu0 0.0
    %2204 = vmatpush2.msra.mxu0 0.0
    %2205 = vmatprep.subr.mxu0 0.0
    %2206 = vmatpush2.msra.mxu0 0.0
    %2207 = vmatprep.subr.mxu0 0.0
    %2208 = vmatpush2.msra.mxu0 0.0
    %2209 = vmatprep.mubr.f32.mxu0 0.0
    %2210 = vmatmul.mubr.f32.gmra.mxu0 %v2039
    %v2211 = vpop.f32.mrf.mxu0
    %v2212 = vadd.f32 0.0, %v2211
    %v2213 = vpop.f32.mrf.mxu0
    %2214 = vdwg.mxu0
    %v2215 = vadd.f32 %v2127, %v2212
    %v2216 = vld [vmem:[%s7] sm:$0x1]
    %v2218 = vlaneseq
    %v2219 = vshrl.u32 %v2218, 7
    %v2220 = vsub.s32 0, %v2219
    %v2221 = vrot.slane %v2216, %v2220
    %v2223 = vadd.f32 %v2215, %v2221
    %v2224 = vmax.f32 %v2223, 0.0
    %v2225 = vld [vmem:[%s8] sm:$0xff]
    %v2226 = vld [vmem:[%s8 + $0x8] sm:$0xff]
    %v2227 = vld [vmem:[%s8 + $0x10] sm:$0xff]
    %v2228 = vld [vmem:[%s8 + $0x18] sm:$0xff]
    %v2229 = vld [vmem:[%s8 + $0x20] sm:$0xff]
    %v2230 = vld [vmem:[%s8 + $0x28] sm:$0xff]
    %v2231 = vld [vmem:[%s8 + $0x30] sm:$0xff]
    %v2232 = vld [vmem:[%s8 + $0x38] sm:$0xff]
    %v2233 = vld [vmem:[%s8 + $0x40] sm:$0xff]
    %v2234 = vld [vmem:[%s8 + $0x48] sm:$0xff]
    %v2235 = vld [vmem:[%s8 + $0x50] sm:$0xff]
    %v2236 = vld [vmem:[%s8 + $0x58] sm:$0xff]
    %v2237 = vld [vmem:[%s8 + $0x60] sm:$0xff]
    %v2238 = vld [vmem:[%s8 + $0x68] sm:$0xff]
    %v2239 = vld [vmem:[%s8 + $0x70] sm:$0xff]
    %v2240 = vld [vmem:[%s8 + $0x78] sm:$0xff]
    %v2241 = vld [vmem:[%s9] sm:$0x1]
    %v2243 = vlaneseq
    %v2244 = vshrl.u32 %v2243, 7
    %v2245 = vsub.s32 0, %v2244
    %v2246 = vrot.slane %v2241, %v2245
    %2248 = vmatprep.subr.mxu0 0.0
    %2249 = vmatpush1.msra.mxu0 %v2240
    %2250 = vmatprep.subr.mxu0 0.0
    %2251 = vmatpush1.msra.mxu0 %v2239
    %2252 = vmatprep.subr.mxu0 0.0
    %2253 = vmatpush1.msra.mxu0 %v2238
    %2254 = vmatprep.subr.mxu0 0.0
    %2255 = vmatpush1.msra.mxu0 %v2237
    %2256 = vmatprep.subr.mxu0 0.0
    %2257 = vmatpush1.msra.mxu0 %v2236
    %2258 = vmatprep.subr.mxu0 0.0
    %2259 = vmatpush1.msra.mxu0 %v2235
    %2260 = vmatprep.subr.mxu0 0.0
    %2261 = vmatpush1.msra.mxu0 %v2234
    %2262 = vmatprep.subr.mxu0 0.0
    %2263 = vmatpush1.msra.mxu0 %v2233
    %2264 = vmatprep.subr.mxu0 0.0
    %2265 = vmatpush1.msra.mxu0 %v2232
    %2266 = vmatprep.subr.mxu0 0.0
    %2267 = vmatpush1.msra.mxu0 %v2231
    %2268 = vmatprep.subr.mxu0 0.0
    %2269 = vmatpush1.msra.mxu0 %v2230
    %2270 = vmatprep.subr.mxu0 0.0
    %2271 = vmatpush1.msra.mxu0 %v2229
    %2272 = vmatprep.subr.mxu0 0.0
    %2273 = vmatpush1.msra.mxu0 %v2228
    %2274 = vmatprep.subr.mxu0 0.0
    %2275 = vmatpush1.msra.mxu0 %v2227
    %2276 = vmatprep.subr.mxu0 0.0
    %2277 = vmatpush1.msra.mxu0 %v2226
    %2278 = vmatprep.subr.mxu0 0.0
    %2279 = vmatpush1.msra.mxu0 %v2225
    %2280 = vmatprep.subr.mxu0 0.0
    %2281 = vmatpush2.msra.mxu0 0.0
    %2282 = vmatprep.subr.mxu0 0.0
    %2283 = vmatpush2.msra.mxu0 0.0
    %2284 = vmatprep.subr.mxu0 0.0
    %2285 = vmatpush2.msra.mxu0 0.0
    %2286 = vmatprep.subr.mxu0 0.0
    %2287 = vmatpush2.msra.mxu0 0.0
    %2288 = vmatprep.subr.mxu0 0.0
    %2289 = vmatpush2.msra.mxu0 0.0
    %2290 = vmatprep.subr.mxu0 0.0
    %2291 = vmatpush2.msra.mxu0 0.0
    %2292 = vmatprep.subr.mxu0 0.0
    %2293 = vmatpush2.msra.mxu0 0.0
    %2294 = vmatprep.subr.mxu0 0.0
    %2295 = vmatpush2.msra.mxu0 0.0
    %2296 = vmatprep.subr.mxu0 0.0
    %2297 = vmatpush2.msra.mxu0 0.0
    %2298 = vmatprep.subr.mxu0 0.0
    %2299 = vmatpush2.msra.mxu0 0.0
    %2300 = vmatprep.subr.mxu0 0.0
    %2301 = vmatpush2.msra.mxu0 0.0
    %2302 = vmatprep.subr.mxu0 0.0
    %2303 = vmatpush2.msra.mxu0 0.0
    %2304 = vmatprep.subr.mxu0 0.0
    %2305 = vmatpush2.msra.mxu0 0.0
    %2306 = vmatprep.subr.mxu0 0.0
    %2307 = vmatpush2.msra.mxu0 0.0
    %2308 = vmatprep.subr.mxu0 0.0
    %2309 = vmatpush2.msra.mxu0 0.0
    %2310 = vmatprep.subr.mxu0 0.0
    %2311 = vmatpush2.msra.mxu0 0.0
    %2312 = vmatprep.mubr.f32.mxu0 0.0
    %2313 = vmatmul.mubr.f32.gmra.mxu0 %v2224
    %v2314 = vpop.f32.mrf.mxu0
    %v2315 = vadd.f32 %v2246, %v2314
    %v2316 = vpop.f32.mrf.mxu0
    %2317 = vdwg.mxu0
    %vm2318 = vcmask 52224
    %2319 = vst.msk [vmem:[#allocation2] sm:$0xf] %vm2318, %v2315
    %p2320 = scmp.eq.s32.totalorder 0, 0
    // Predicated region
    $region42: #{bidirec_lstm_forward.3} parent=1 // pred_check
      %p2321 = pneg %p2320
    $region43: #{bidirec_lstm_forward.3} parent=1 // pred_check_branch
      %2323 = sbr.rel (%p2321) target = $region45
    $region44: #{bidirec_lstm_forward.3} parent=1 // pred_region
      %vm2324 = vcmask 0
      %2325 = vst.msk [vmem:[#allocation4] sm:$0x1] %vm2324, 0.0
    $region45: #{bidirec_lstm_forward.3} parent=1 // pred_fallthru
      _
    %v2326 = vld [vmem:[#allocation4] sm:$0x1]
    %v2327 = vadd.f32 %v1993, 1e-10
    %v2328 = vrsqrt.pop %v2327
    %v2329 = vmul.f32 %v2327, %v2328
    %vm2330 = vcmp.eq.f32.partialorder %v2327, inf
    %v2331 = vsel %vm2330, %v2327, %v2329
    %vm2332 = vcmp.eq.f32.partialorder %v2327, 0.0
    %v2333 = vand.u32 %v2327, 2147483648
    %v2334 = vsel %vm2332, %v2333, %v2331
    %vm2335 = vcmask 3072
    %v2336 = vsel %vm2335, %v2334, 0.0
    %2337 = vadd.xlane.f32.xlu0 %v2336
    %v2338 = vpop.xlane.xlu0 %2337
    %v2339 = vrot.slane %v2338, 4
    %v2340 = vadd.f32 %v2338, %v2339
    %v2341 = vrot.slane %v2340, 2
    %v2342 = vadd.f32 %v2340, %v2341
    %v2343 = vrot.slane %v2342, 1
    %v2344 = vadd.f32 %v2342, %v2343
    %s2345 = vtos %v2344
    %v2346 = vstv %s2345
    %v2347 = vadd.f32 %v2326, %v2346
    %vm2348 = vcmask 0
    %2349 = vst.msk [vmem:[#allocation4] sm:$0x1] %vm2348, %v2347
    // Predicated region
    $region46: #{bidirec_lstm_forward.3} parent=1 // pred_check
      %p2350 = pneg %p2320
    $region47: #{bidirec_lstm_forward.3} parent=1 // pred_check_branch
      %2352 = sbr.rel (%p2350) target = $region49
    $region48: #{bidirec_lstm_forward.3} parent=1 // pred_region
      %v2353 = vld [vmem:[#allocation4] sm:$0x1]
      %v2354 = vrcp.pop 4.0
      %v2355 = vmul.f32 %v2353, %v2354
      %2356 = vst.msk [vmem:[#allocation4] sm:$0x1] %vm2348, %v2355
    $region49: #{bidirec_lstm_forward.3} parent=1 // pred_fallthru
      _
    // Predicated region
    $region50: #{bidirec_lstm_forward.3} parent=1 // pred_check
      _
    $region51: #{bidirec_lstm_forward.3} parent=1 // pred_check_branch
      %2358 = sbr.rel (0) target = $region53
    $region52: #{bidirec_lstm_forward.3} parent=1 // pred_region
      %s2360 = ssub.s32 64, 64
      %2361 = vsyncadd [#allocation3], %s2360
      %s2363 = sshll.u32 [#allocation2], 4
      %s2364 = int_to_ptr.vmem [resolvable:$true] %s2363
      %2366 = dma.vmem_to_hbm [thread:$0]  %s2364, 64, %s10, [#allocation3]
    $region53: #{bidirec_lstm_forward.3} parent=1 // pred_fallthru
      _
    // Predicated region
    $region54: #{bidirec_lstm_forward.3} parent=1 // pred_check
      _
    $region55: #{bidirec_lstm_forward.3} parent=1 // pred_check_branch
      %2368 = sbr.rel (0) target = $region57
    $region56: #{bidirec_lstm_forward.3} parent=1 // pred_region
      %s2370 = ssub.s32 16, 16
      %2371 = vsyncadd [#allocation5], %s2370
      %s2373 = sshll.u32 [#allocation4], 4
      %s2374 = int_to_ptr.vmem [resolvable:$true] %s2373
      %2376 = dma.vmem_to_hbm [thread:$0]  %s2374, 16, %s11, [#allocation5]
    $region57: #{bidirec_lstm_forward.3} parent=1 // pred_fallthru
      _
    // Predicated region
    $region58: #{bidirec_lstm_forward.3} parent=1 // pred_check
      _
    $region59: #{bidirec_lstm_forward.3} parent=1 // pred_check_branch
      %2378 = sbr.rel (0) target = $region61
    $region60: #{bidirec_lstm_forward.3} parent=1 // pred_region
      %2379 = dma.done [#allocation3], 64
    $region61: #{bidirec_lstm_forward.3} parent=1 // pred_fallthru
      _
    // Predicated region
    $region62: #{bidirec_lstm_forward.3} parent=1 // pred_check
      _
    $region63: #{bidirec_lstm_forward.3} parent=1 // pred_check_branch
      %2381 = sbr.rel (0) target = $region65
    $region64: #{bidirec_lstm_forward.3} parent=1 // pred_region
      %2382 = dma.done [#allocation5], 16
    $region65: #{bidirec_lstm_forward.3} parent=1 // pred_fallthru
      _
    %2383 = vsyncpa [#allocation3], 1
    %2384 = vsyncpa [#allocation5], 1

// kernel: bidirec_lstm_forward.2
$region0: #{bidirec_lstm_forward.2}
  #allocation0 [shape = 'u32[]', space=smem, size = 0x4, offset = 0x4, fixed_abs, tag = 'smem constant byte address 0x4 - core index']
  #allocation1 [shape = 'u32[144,128]{1,0:T(1,128)}', space=vmem, size = 0x12000, scoped, tag = 'internal scratch']
  #allocation2 [shape = 'f32[4,4,1024]{2,1,0:T(4,128)}', space=vmem, size = 0x10000, scoped, tag = 'scratch operand']
  #allocation3 [shape = 'f32[4,256]{1,0:T(4,128)}', space=vmem, size = 0x1000, scoped, tag = 'scratch operand']
  #allocation4 [shape = 'f32[4,256]{1,0:T(4,128)}', space=vmem, size = 0x1000, scoped, tag = 'scratch operand']
  %s0 = inlined_call_operand.vmem [shape: bf16[8,4,64], index: 0, kind: input, shape index: {}, may-alias: {0,1}]
  %s1 = inlined_call_operand.vmem [shape: bf16[8,4,64], index: 1, kind: input, shape index: {}, may-alias: {0,1}]
  %s2 = inlined_call_operand.vmem [shape: s32[4,1], index: 2, kind: input, shape index: {}]
  %s3 = inlined_call_operand.hbm [shape: bf16[64,1024], index: 3, kind: input, shape index: {}]
  %s4 = inlined_call_operand.hbm [shape: bf16[256,1024], index: 4, kind: input, shape index: {}]
  %s5 = inlined_call_operand.vmem [shape: f32[1,1024], index: 5, kind: input, shape index: {}]
  %s6 = inlined_call_operand.vmem [shape: f32[8,4,128], index: 6, kind: output, shape index: {0}]
  %s7 = inlined_call_operand.vmem [shape: f32[8,4,128], index: 7, kind: output, shape index: {1}]
  %8 = xla_tuple %s6, %s7
  %s9 = sld [smem:[#allocation0]]
  $region77: #{bidirec_lstm_forward.2} parent=0
    _
  %s11 = ssub.s32 1, %s9
  %s12 = scalar_select 0, %s11, %s9
  $region1: #{bidirec_lstm_forward.2} parent=0
    #allocation5 [shape = 'u8[131072]{0}', space=vmem, size = 0x20000, scoped, tag = 'input window, operand 3, single buffered']
    #allocation6 [shape = 's32[2]{0}', space=sflag, size = 0x8, scoped, tag = 'scoped memory for bidirec_lstm_forward.2']
    #allocation7 [shape = 'u8[524288]{0}', space=vmem, size = 0x80000, scoped, tag = 'input window, operand 4, single buffered']
    #allocation8 [shape = 's32[1]{0}', space=sflag, size = 0x4, scoped, tag = 'scoped memory for bidirec_lstm_forward.2']
    %13 = vsyncpa [#allocation6], 0
    %14 = vsyncpa [#allocation8], 0
    loop: start=0, step=1, limit=4
    $region2: #{bidirec_lstm_forward.2} parent=1 // loop_pre_header
      _
    $region3: #{bidirec_lstm_forward.2} parent=1 // loop_header
      %s16 = sphi 0, %s20
      %p17 = scmp.ge.s32.totalorder %s16, 4
      %s23 = sphi 0, %s35
      %s24 = sphi 0, %s31
      %s25 = sphi 0, %s23
      %s26 = sphi 0, %s24
      %s27 = sphi 0, %s25
      %s28 = sphi 0, %s26
      %s40 = sphi 0, %s42
      %s43 = sphi 0, %s40
      %s44 = sphi 0, %s43
      %s60 = sphi 0, %s44
      %s70 = sphi 0, %s72
      %s73 = sphi 0, %s70
      %s74 = sphi 0, %s73
      %s90 = sphi 0, %s74
      %s96 = sphi 0, %s98
      %s99 = sphi 0, %s96
      %s100 = sphi 0, %s99
      %s116 = sphi 0, %s100
      %s120 = sphi 0, %s120
      %s122 = sphi 0, %s120
      %s123 = sphi 0, %s122
      %s137 = sphi 0, %s123
      %s141 = sphi 0, %s141
      %s143 = sphi 0, %s141
      %s144 = sphi 0, %s143
      %s158 = sphi 0, %s144
      %s162 = sphi 0, %s162
      %s164 = sphi 0, %s162
      %s165 = sphi 0, %s164
      %s179 = sphi 0, %s165
      %s187 = sphi 0, %s189
      %s190 = sphi 0, %s187
      %s191 = sphi 0, %s190
      %s207 = sphi 0, %s191
      %s217 = sphi 0, %s219
      %s220 = sphi 0, %s217
      %s221 = sphi 0, %s220
      %s237 = sphi 0, %s221
    $region4: #{bidirec_lstm_forward.2} parent=1 // loop_header_branch
      %19 = sbr.rel (%p17) target = $region8
    $region5: #{bidirec_lstm_forward.2} parent=1 // loop_body
      %s21 = ssub.s32 %s16, 1
      %s22 = ssub.s32 %s16, 2
      %s29 = sadd.s32 1, %s24
      %p30 = scmp.ge.s32.totalorder %s29, 2
      %s31 = scalar_select %p30, 0, %s29
      %s32 = sadd.s32 1, %s23
      %s33 = scalar_select %p30, %s32, %s23
      %p34 = scmp.ge.s32.totalorder %s33, 1
      %s35 = scalar_select %p34, 0, %s33
      %s36 = ssub.s32 %s24, %s31
      %s37 = ssub.s32 %s23, %s35
      %s38 = sor.u32 %s36, %s37
      %p39 = scmp.eq.s32.totalorder %s38, 0
      %s41 = sadd.s32 %s40, 1
      %s42 = scalar_select %p39, %s40, %s41
      %p45 = pneg %p39
      %p46 = scmp.eq.s32.totalorder %s16, 1
      %p47 = por %p45, %p46
      %p48 = scmp.ne.s32.totalorder %s40, %s43
      %p49 = scmp.eq.s32.totalorder %s16, 0
      %p50 = por %p48, %p49
      %p51 = scmp.ne.s32.totalorder %s40, %s43
      %p52 = scmp.eq.s32.totalorder %s21, 1
      %p53 = por %p51, %p52
      %p54 = scmp.ne.s32.totalorder %s43, %s44
      %p55 = scmp.eq.s32.totalorder %s21, 0
      %p56 = por %p54, %p55
      %p57 = scmp.ne.s32.totalorder %s43, %s44
      %p58 = scmp.eq.s32.totalorder %s22, 1
      %p59 = por %p57, %p58
      %p61 = scmp.ne.s32.totalorder %s44, %s60
      %p62 = scmp.eq.s32.totalorder %s22, 0
      %p63 = por %p61, %p62
      %s64 = ssub.s32 1, %s24
      %s65 = ssub.s32 1, %s31
      %s66 = ssub.s32 %s64, %s65
      %s67 = ssub.s32 %s23, %s35
      %s68 = sor.u32 %s66, %s67
      %p69 = scmp.eq.s32.totalorder %s68, 0
      %s71 = sadd.s32 %s70, 1
      %s72 = scalar_select %p69, %s70, %s71
      %p75 = pneg %p69
      %p76 = scmp.eq.s32.totalorder %s16, 1
      %p77 = por %p75, %p76
      %p78 = scmp.ne.s32.totalorder %s70, %s73
      %p79 = scmp.eq.s32.totalorder %s16, 0
      %p80 = por %p78, %p79
      %p81 = scmp.ne.s32.totalorder %s70, %s73
      %p82 = scmp.eq.s32.totalorder %s21, 1
      %p83 = por %p81, %p82
      %p84 = scmp.ne.s32.totalorder %s73, %s74
      %p85 = scmp.eq.s32.totalorder %s21, 0
      %p86 = por %p84, %p85
      %p87 = scmp.ne.s32.totalorder %s73, %s74
      %p88 = scmp.eq.s32.totalorder %s22, 1
      %p89 = por %p87, %p88
      %p91 = scmp.ne.s32.totalorder %s74, %s90
      %p92 = scmp.eq.s32.totalorder %s22, 0
      %p93 = por %p91, %p92
      %s94 = ssub.s32 %s23, %s35
      %p95 = scmp.eq.s32.totalorder %s94, 0
      %s97 = sadd.s32 %s96, 1
      %s98 = scalar_select %p95, %s96, %s97
      %p101 = pneg %p95
      %p102 = scmp.eq.s32.totalorder %s16, 1
      %p103 = por %p101, %p102
      %p104 = scmp.ne.s32.totalorder %s96, %s99
      %p105 = scmp.eq.s32.totalorder %s16, 0
      %p106 = por %p104, %p105
      %p107 = scmp.ne.s32.totalorder %s96, %s99
      %p108 = scmp.eq.s32.totalorder %s21, 1
      %p109 = por %p107, %p108
      %p110 = scmp.ne.s32.totalorder %s99, %s100
      %p111 = scmp.eq.s32.totalorder %s21, 0
      %p112 = por %p110, %p111
      %p113 = scmp.ne.s32.totalorder %s99, %s100
      %p114 = scmp.eq.s32.totalorder %s22, 1
      %p115 = por %p113, %p114
      %p117 = scmp.ne.s32.totalorder %s100, %s116
      %p118 = scmp.eq.s32.totalorder %s22, 0
      %p119 = por %p117, %p118
      %s121 = sadd.s32 %s120, 1
      %p124 = scmp.eq.s32.totalorder %s16, 1
      %p125 = scmp.ne.s32.totalorder %s120, %s122
      %p126 = scmp.eq.s32.totalorder %s16, 0
      %p127 = por %p125, %p126
      %p128 = scmp.ne.s32.totalorder %s120, %s122
      %p129 = scmp.eq.s32.totalorder %s21, 1
      %p130 = por %p128, %p129
      %p131 = scmp.ne.s32.totalorder %s122, %s123
      %p132 = scmp.eq.s32.totalorder %s21, 0
      %p133 = por %p131, %p132
      %p134 = scmp.ne.s32.totalorder %s122, %s123
      %p135 = scmp.eq.s32.totalorder %s22, 1
      %p136 = por %p134, %p135
      %p138 = scmp.ne.s32.totalorder %s123, %s137
      %p139 = scmp.eq.s32.totalorder %s22, 0
      %p140 = por %p138, %p139
      %s142 = sadd.s32 %s141, 1
      %p145 = scmp.eq.s32.totalorder %s16, 1
      %p146 = scmp.ne.s32.totalorder %s141, %s143
      %p147 = scmp.eq.s32.totalorder %s16, 0
      %p148 = por %p146, %p147
      %p149 = scmp.ne.s32.totalorder %s141, %s143
      %p150 = scmp.eq.s32.totalorder %s21, 1
      %p151 = por %p149, %p150
      %p152 = scmp.ne.s32.totalorder %s143, %s144
      %p153 = scmp.eq.s32.totalorder %s21, 0
      %p154 = por %p152, %p153
      %p155 = scmp.ne.s32.totalorder %s143, %s144
      %p156 = scmp.eq.s32.totalorder %s22, 1
      %p157 = por %p155, %p156
      %p159 = scmp.ne.s32.totalorder %s144, %s158
      %p160 = scmp.eq.s32.totalorder %s22, 0
      %p161 = por %p159, %p160
      %s163 = sadd.s32 %s162, 1
      %p166 = scmp.eq.s32.totalorder %s16, 1
      %p167 = scmp.ne.s32.totalorder %s162, %s164
      %p168 = scmp.eq.s32.totalorder %s16, 0
      %p169 = por %p167, %p168
      %p170 = scmp.ne.s32.totalorder %s162, %s164
      %p171 = scmp.eq.s32.totalorder %s21, 1
      %p172 = por %p170, %p171
      %p173 = scmp.ne.s32.totalorder %s164, %s165
      %p174 = scmp.eq.s32.totalorder %s21, 0
      %p175 = por %p173, %p174
      %p176 = scmp.ne.s32.totalorder %s164, %s165
      %p177 = scmp.eq.s32.totalorder %s22, 1
      %p178 = por %p176, %p177
      %p180 = scmp.ne.s32.totalorder %s165, %s179
      %p181 = scmp.eq.s32.totalorder %s22, 0
      %p182 = por %p180, %p181
      %s183 = ssub.s32 %s24, %s31
      %s184 = ssub.s32 %s23, %s35
      %s185 = sor.u32 %s183, %s184
      %p186 = scmp.eq.s32.totalorder %s185, 0
      %s188 = sadd.s32 %s187, 1
      %s189 = scalar_select %p186, %s187, %s188
      %p192 = pneg %p186
      %p193 = scmp.eq.s32.totalorder %s16, 1
      %p194 = por %p192, %p193
      %p195 = scmp.ne.s32.totalorder %s187, %s190
      %p196 = scmp.eq.s32.totalorder %s16, 0
      %p197 = por %p195, %p196
      %p198 = scmp.ne.s32.totalorder %s187, %s190
      %p199 = scmp.eq.s32.totalorder %s21, 1
      %p200 = por %p198, %p199
      %p201 = scmp.ne.s32.totalorder %s190, %s191
      %p202 = scmp.eq.s32.totalorder %s21, 0
      %p203 = por %p201, %p202
      %p204 = scmp.ne.s32.totalorder %s190, %s191
      %p205 = scmp.eq.s32.totalorder %s22, 1
      %p206 = por %p204, %p205
      %p208 = scmp.ne.s32.totalorder %s191, %s207
      %p209 = scmp.eq.s32.totalorder %s22, 0
      %p210 = por %p208, %p209
      %s211 = ssub.s32 1, %s24
      %s212 = ssub.s32 1, %s31
      %s213 = ssub.s32 %s211, %s212
      %s214 = ssub.s32 %s23, %s35
      %s215 = sor.u32 %s213, %s214
      %p216 = scmp.eq.s32.totalorder %s215, 0
      %s218 = sadd.s32 %s217, 1
      %s219 = scalar_select %p216, %s217, %s218
      %p222 = pneg %p216
      %p223 = scmp.eq.s32.totalorder %s16, 1
      %p224 = por %p222, %p223
      %p225 = scmp.ne.s32.totalorder %s217, %s220
      %p226 = scmp.eq.s32.totalorder %s16, 0
      %p227 = por %p225, %p226
      %p228 = scmp.ne.s32.totalorder %s217, %s220
      %p229 = scmp.eq.s32.totalorder %s21, 1
      %p230 = por %p228, %p229
      %p231 = scmp.ne.s32.totalorder %s220, %s221
      %p232 = scmp.eq.s32.totalorder %s21, 0
      %p233 = por %p231, %p232
      %p234 = scmp.ne.s32.totalorder %s220, %s221
      %p235 = scmp.eq.s32.totalorder %s22, 1
      %p236 = por %p234, %p235
      %p238 = scmp.ne.s32.totalorder %s221, %s237
      %p239 = scmp.eq.s32.totalorder %s22, 0
      %p240 = por %p238, %p239
      %p241 = scmp.le.s32.totalorder 1, %s16
      %p242 = scmp.lt.s32.totalorder %s16, 3
      %p243 = pnand %p241, %p242
      %p244 = pneg %p243
      // Predicated region
      $region9: #{bidirec_lstm_forward.2} parent=5 // pred_check
        _
      $region10: #{bidirec_lstm_forward.2} parent=5 // pred_check_branch
        %246 = sbr.rel (%p243) target = $region12
      $region11: #{bidirec_lstm_forward.2} parent=5 // pred_region
        %s247 = ssub.s32 %s16, 1
        // Predicated region
        $region13: #{bidirec_lstm_forward.2} parent=11 // pred_check
          %p248 = pneg %p112
        $region14: #{bidirec_lstm_forward.2} parent=11 // pred_check_branch
          %250 = sbr.rel (%p248) target = $region16
        $region15: #{bidirec_lstm_forward.2} parent=11 // pred_region
          %p251 = scmp.lt.s32.totalorder %s25, 0
          %s252 = scalar_select %p251, %s25, 0
          %s253 = smul.addr %s252, 4
          %s254 = scalar_lea.vmem %s2, %s253
        $region16: #{bidirec_lstm_forward.2} parent=11 // pred_fallthru
          _
        // Predicated region
        $region17: #{bidirec_lstm_forward.2} parent=11 // pred_check
          %p255 = pneg %p133
        $region18: #{bidirec_lstm_forward.2} parent=11 // pred_check_branch
          %257 = sbr.rel (%p255) target = $region20
        $region19: #{bidirec_lstm_forward.2} parent=11 // pred_region
          %s259 = ssub.s32 4096, 4096
          %260 = vsyncadd [#allocation6], %s259
          %s261 = sshll.u32 [#allocation5], 4
          %s262 = int_to_ptr.vmem [resolvable:$true] %s261
          %267 = dma.hbm_to_vmem [thread:$0]  %s3, 4096, %s262, [#allocation6], 512, 512, 32
        $region20: #{bidirec_lstm_forward.2} parent=11 // pred_fallthru
          _
        // Predicated region
        $region21: #{bidirec_lstm_forward.2} parent=11 // pred_check
          %p268 = pneg %p154
        $region22: #{bidirec_lstm_forward.2} parent=11 // pred_check_branch
          %270 = sbr.rel (%p268) target = $region24
        $region23: #{bidirec_lstm_forward.2} parent=11 // pred_region
          %s272 = ssub.s32 16384, 16384
          %273 = vsyncadd [#allocation8], %s272
          %s274 = sshll.u32 [#allocation7], 4
          %s275 = int_to_ptr.vmem [resolvable:$true] %s274
          %280 = dma.hbm_to_vmem [thread:$0]  %s4, 16384, %s275, [#allocation8], 512, 512, 32
        $region24: #{bidirec_lstm_forward.2} parent=11 // pred_fallthru
          _
        // Predicated region
        $region25: #{bidirec_lstm_forward.2} parent=11 // pred_check
          %p281 = pneg %p175
        $region26: #{bidirec_lstm_forward.2} parent=11 // pred_check_branch
          %283 = sbr.rel (%p281) target = $region28
        $region27: #{bidirec_lstm_forward.2} parent=11 // pred_region
          _
        $region28: #{bidirec_lstm_forward.2} parent=11 // pred_fallthru
          _
      $region12: #{bidirec_lstm_forward.2} parent=5 // pred_fallthru
        _
      %p284 = scmp.lt.s32.totalorder %s16, 2
      // Predicated region
      $region29: #{bidirec_lstm_forward.2} parent=5 // pred_check
        %p285 = pneg %p284
      $region30: #{bidirec_lstm_forward.2} parent=5 // pred_check_branch
        %287 = sbr.rel (%p285) target = $region32
      $region31: #{bidirec_lstm_forward.2} parent=5 // pred_region
        // Predicated region
        $region33: #{bidirec_lstm_forward.2} parent=31 // pred_check
          %p288 = pneg %p50
        $region34: #{bidirec_lstm_forward.2} parent=31 // pred_check_branch
          %290 = sbr.rel (%p288) target = $region36
        $region35: #{bidirec_lstm_forward.2} parent=31 // pred_region
          %s291 = smul.u32 4, %s24
          %p292 = scmp.lt.s32.totalorder %s291, 7
          %s293 = scalar_select %p292, %s291, 7
          %p294 = scmp.lt.s32.totalorder %s23, 0
          %s295 = scalar_select %p294, %s23, 0
          %s296 = sadd.s32 %s295, %s293
          %s297 = smul.addr %s296, 2
          %s298 = scalar_lea.vmem %s0, %s297
          %s299 = smul.u32 4, %s24
        $region36: #{bidirec_lstm_forward.2} parent=31 // pred_fallthru
          _
        // Predicated region
        $region37: #{bidirec_lstm_forward.2} parent=31 // pred_check
          %p300 = pneg %p80
        $region38: #{bidirec_lstm_forward.2} parent=31 // pred_check_branch
          %302 = sbr.rel (%p300) target = $region40
        $region39: #{bidirec_lstm_forward.2} parent=31 // pred_region
          %s303 = ssub.s32 1, %s24
          %s304 = smul.u32 4, %s303
          %p305 = scmp.lt.s32.totalorder %s304, 7
          %s306 = scalar_select %p305, %s304, 7
          %p307 = scmp.lt.s32.totalorder %s23, 0
          %s308 = scalar_select %p307, %s23, 0
          %s309 = sadd.s32 %s308, %s306
          %s310 = smul.addr %s309, 2
          %s311 = scalar_lea.vmem %s1, %s310
          %s312 = ssub.s32 1, %s24
          %s313 = smul.u32 4, %s312
        $region40: #{bidirec_lstm_forward.2} parent=31 // pred_fallthru
          _
      $region32: #{bidirec_lstm_forward.2} parent=5 // pred_fallthru
        _
      %p314 = scmp.le.s32.totalorder 1, %s16
      %p315 = scmp.lt.s32.totalorder %s16, 3
      %p316 = pnand %p314, %p315
      %p317 = pneg %p316
      // Predicated region
      $region41: #{bidirec_lstm_forward.2} parent=5 // pred_check
        _
      $region42: #{bidirec_lstm_forward.2} parent=5 // pred_check_branch
        %319 = sbr.rel (%p316) target = $region44
      $region43: #{bidirec_lstm_forward.2} parent=5 // pred_region
        %s320 = ssub.s32 %s16, 1
        // Predicated region
        $region45: #{bidirec_lstm_forward.2} parent=43 // pred_check
          %p321 = pneg %p133
        $region46: #{bidirec_lstm_forward.2} parent=43 // pred_check_branch
          %323 = sbr.rel (%p321) target = $region48
        $region47: #{bidirec_lstm_forward.2} parent=43 // pred_region
          %324 = dma.done [#allocation6], 4096
        $region48: #{bidirec_lstm_forward.2} parent=43 // pred_fallthru
          _
        // Predicated region
        $region49: #{bidirec_lstm_forward.2} parent=43 // pred_check
          %p325 = pneg %p154
        $region50: #{bidirec_lstm_forward.2} parent=43 // pred_check_branch
          %327 = sbr.rel (%p325) target = $region52
        $region51: #{bidirec_lstm_forward.2} parent=43 // pred_region
          %328 = dma.done [#allocation8], 16384
        $region52: #{bidirec_lstm_forward.2} parent=43 // pred_fallthru
          _
        %s329 = smul.u32 4, %s26
        %p330 = scmp.lt.s32.totalorder %s329, 7
        %s331 = scalar_select %p330, %s329, 7
        %p332 = scmp.lt.s32.totalorder %s25, 0
        %s333 = scalar_select %p332, %s25, 0
        %s334 = sadd.s32 %s333, %s331
        %s335 = smul.addr %s334, 2
        %s336 = scalar_lea.vmem %s0, %s335
        %p337 = pneg %p56
        %p338 = pneg %p53
        %s339 = ssub.s32 1, %s26
        %s340 = smul.u32 4, %s339
        %p341 = scmp.lt.s32.totalorder %s340, 7
        %s342 = scalar_select %p341, %s340, 7
        %p343 = scmp.lt.s32.totalorder %s25, 0
        %s344 = scalar_select %p343, %s25, 0
        %s345 = sadd.s32 %s344, %s342
        %s346 = smul.addr %s345, 2
        %s347 = scalar_lea.vmem %s1, %s346
        %p348 = pneg %p86
        %p349 = pneg %p83
        %p350 = scmp.lt.s32.totalorder %s25, 0
        %s351 = scalar_select %p350, %s25, 0
        %s352 = smul.addr %s351, 4
        %s353 = scalar_lea.vmem %s2, %s352
        %p354 = pneg %p112
        %p355 = pneg %p109
        %p356 = pneg %p133
        %p357 = pneg %p130
        %p358 = pneg %p154
        %p359 = pneg %p151
        %p360 = pneg %p175
        %p361 = pneg %p172
        %p362 = pneg %p203
        %p363 = pneg %p200
        %s364 = smul.u32 4, %s26
        %p365 = scmp.lt.s32.totalorder %s364, 7
        %s366 = scalar_select %p365, %s364, 7
        %p367 = scmp.lt.s32.totalorder %s25, 0
        %s368 = scalar_select %p367, %s25, 0
        %s369 = sadd.s32 %s368, %s366
        %s370 = smul.addr %s369, 4
        %s371 = scalar_lea.vmem %s6, %s370
        %p372 = pneg %p233
        %p373 = pneg %p230
        %s374 = ssub.s32 1, %s26
        %s375 = smul.u32 4, %s374
        %p376 = scmp.lt.s32.totalorder %s375, 7
        %s377 = scalar_select %p376, %s375, 7
        %p378 = scmp.lt.s32.totalorder %s25, 0
        %s379 = scalar_select %p378, %s25, 0
        %s380 = sadd.s32 %s379, %s377
        %s381 = smul.addr %s380, 4
        %s382 = scalar_lea.vmem %s7, %s381
        %s383 = smul.u32 4, %s26
        %p384 = scmp.lt.s32.totalorder %s383, 7
        %s385 = scalar_select %p384, %s383, 7
        %p386 = scmp.lt.s32.totalorder %s25, 0
        %s387 = scalar_select %p386, %s25, 0
        %s388 = sadd.s32 %s387, %s385
        %s389 = smul.addr %s388, 2
        %s390 = scalar_lea.vmem %s0, %s389
        %s391 = smul.u32 4, %s26
        %s392 = ssub.s32 1, %s26
        %s393 = smul.u32 4, %s392
        %p394 = scmp.lt.s32.totalorder %s393, 7
        %s395 = scalar_select %p394, %s393, 7
        %p396 = scmp.lt.s32.totalorder %s25, 0
        %s397 = scalar_select %p396, %s25, 0
        %s398 = sadd.s32 %s397, %s395
        %s399 = smul.addr %s398, 2
        %s400 = scalar_lea.vmem %s1, %s399
        %s401 = ssub.s32 1, %s26
        %s402 = smul.u32 4, %s401
        %p403 = scmp.lt.s32.totalorder %s25, 0
        %s404 = scalar_select %p403, %s25, 0
        %s405 = smul.addr %s404, 4
        %s406 = scalar_lea.vmem %s2, %s405
        %s407 = smul.u32 4, %s26
        %p408 = scmp.lt.s32.totalorder %s407, 7
        %s409 = scalar_select %p408, %s407, 7
        %p410 = scmp.lt.s32.totalorder %s25, 0
        %s411 = scalar_select %p410, %s25, 0
        %s412 = sadd.s32 %s411, %s409
        %s413 = smul.addr %s412, 4
        %s414 = scalar_lea.vmem %s6, %s413
        %s415 = smul.u32 4, %s26
        %s416 = ssub.s32 1, %s26
        %s417 = smul.u32 4, %s416
        %p418 = scmp.lt.s32.totalorder %s417, 7
        %s419 = scalar_select %p418, %s417, 7
        %p420 = scmp.lt.s32.totalorder %s25, 0
        %s421 = scalar_select %p420, %s25, 0
        %s422 = sadd.s32 %s421, %s419
        %s423 = smul.addr %s422, 4
        %s424 = scalar_lea.vmem %s7, %s423
        %s425 = ssub.s32 1, %s26
        %s426 = smul.u32 4, %s425
        %p428 = scmp.eq.s32.totalorder %s26, 0
        // Predicated region
        $region53: #{bidirec_lstm_forward.2} parent=43 // pred_check
          %p429 = pneg %p428
        $region54: #{bidirec_lstm_forward.2} parent=43 // pred_check_branch
          %431 = sbr.rel (%p429) target = $region56
        $region55: #{bidirec_lstm_forward.2} parent=43 // pred_region
          %432 = vst [vmem:[#allocation3] sm:$0xff] 0.0
          %433 = vst [vmem:[#allocation4] sm:$0xff] 0.0
        $region56: #{bidirec_lstm_forward.2} parent=43 // pred_fallthru
          _
        %v434 = vld [vmem:[%s390] sm:$0x3]
        %v435 = vld [vmem:[%s390 + $0x2] sm:$0x3]
        %v436 = vld [vmem:[%s390 + $0x4] sm:$0x3]
        %v437 = vld [vmem:[%s390 + $0x6] sm:$0x3]
        %v438 = vld [vmem:[#allocation5] sm:$0xff]
        %v439 = vld [vmem:[#allocation5 + $0x8] sm:$0xff]
        %v440 = vld [vmem:[#allocation5 + $0x20] sm:$0xff]
        %v441 = vld [vmem:[#allocation5 + $0x28] sm:$0xff]
        %v442 = vld [vmem:[#allocation5 + $0x40] sm:$0xff]
        %v443 = vld [vmem:[#allocation5 + $0x48] sm:$0xff]
        %v444 = vld [vmem:[#allocation5 + $0x60] sm:$0xff]
        %v445 = vld [vmem:[#allocation5 + $0x68] sm:$0xff]
        %v446 = vld [vmem:[#allocation5 + $0x80] sm:$0xff]
        %v447 = vld [vmem:[#allocation5 + $0x88] sm:$0xff]
        %v448 = vld [vmem:[#allocation5 + $0xa0] sm:$0xff]
        %v449 = vld [vmem:[#allocation5 + $0xa8] sm:$0xff]
        %v450 = vld [vmem:[#allocation5 + $0xc0] sm:$0xff]
        %v451 = vld [vmem:[#allocation5 + $0xc8] sm:$0xff]
        %v452 = vld [vmem:[#allocation5 + $0xe0] sm:$0xff]
        %v453 = vld [vmem:[#allocation5 + $0xe8] sm:$0xff]
        %v454 = vld [vmem:[%s5] sm:$0xf]
        %v456 = vlaneseq
        %v457 = vshrl.u32 %v456, 7
        %v458 = vsub.s32 0, %v457
        %v459 = vrot.slane %v454, %v458
        %v460 = vlaneseq
        %v461 = vshrl.u32 %v460, 7
        %v462 = vsub.s32 1, %v461
        %v463 = vrot.slane %v454, %v462
        %v464 = vlaneseq
        %v465 = vshrl.u32 %v464, 7
        %v466 = vsub.s32 2, %v465
        %v467 = vrot.slane %v454, %v466
        %v468 = vlaneseq
        %v469 = vshrl.u32 %v468, 7
        %v470 = vsub.s32 3, %v469
        %v471 = vrot.slane %v454, %v470
        %v472 = vcombine.low %v459, %v463
        %v473 = vcombine.low %v467, %v471
        %v478 = vcombine.low %v434, %v435
        %v479 = vcombine.low %v436, %v437
        %v481 = vunpack.c.l.s4 1983009808
        %v482 = vunpack.c.0.s8 %v481
        %v483 = vlaneseq
        %v484 = vshrl.u32 %v483, 7
        %v485 = vsub.s32 %v482, %v484
        %v486 = vrot.slane %v478, %v485
        %v488 = vunpack.c.l.s4 1983009808
        %v489 = vunpack.c.0.s8 %v488
        %v490 = vlaneseq
        %v491 = vshrl.u32 %v490, 7
        %v492 = vsub.s32 %v489, %v491
        %v493 = vrot.slane %v479, %v492
        %v494 = vcombine.low %v486, %v493
        %v511 = vunpack.c.l.b16 %v438
        %v512 = vunpack.c.h.b16 %v438
        %v513 = vunpack.c.l.b16 %v439
        %v514 = vunpack.c.h.b16 %v439
        %v515 = vunpack.c.l.b16 %v440
        %v516 = vunpack.c.h.b16 %v440
        %v517 = vunpack.c.l.b16 %v441
        %v518 = vunpack.c.h.b16 %v441
        %v519 = vunpack.c.l.b16 %v442
        %v520 = vunpack.c.h.b16 %v442
        %v521 = vunpack.c.l.b16 %v443
        %v522 = vunpack.c.h.b16 %v443
        %v523 = vunpack.c.l.b16 %v444
        %v524 = vunpack.c.h.b16 %v444
        %v525 = vunpack.c.l.b16 %v445
        %v526 = vunpack.c.h.b16 %v445
        %v527 = vunpack.c.l.b16 %v446
        %v528 = vunpack.c.h.b16 %v446
        %v529 = vunpack.c.l.b16 %v447
        %v530 = vunpack.c.h.b16 %v447
        %v531 = vunpack.c.l.b16 %v448
        %v532 = vunpack.c.h.b16 %v448
        %v533 = vunpack.c.l.b16 %v449
        %v534 = vunpack.c.h.b16 %v449
        %v535 = vunpack.c.l.b16 %v450
        %v536 = vunpack.c.h.b16 %v450
        %v537 = vunpack.c.l.b16 %v451
        %v538 = vunpack.c.h.b16 %v451
        %v539 = vunpack.c.l.b16 %v452
        %v540 = vunpack.c.h.b16 %v452
        %v541 = vunpack.c.l.b16 %v453
        %v542 = vunpack.c.h.b16 %v453
        %v543 = vpack.c.b16 %v515, %v511
        %v544 = vpack.c.b16 %v516, %v512
        %v545 = vpack.c.b16 %v517, %v513
        %v546 = vpack.c.b16 %v518, %v514
        %v547 = vpack.c.b16 %v523, %v519
        %v548 = vpack.c.b16 %v524, %v520
        %v549 = vpack.c.b16 %v525, %v521
        %v550 = vpack.c.b16 %v526, %v522
        %v551 = vpack.c.b16 %v531, %v527
        %v552 = vpack.c.b16 %v532, %v528
        %v553 = vpack.c.b16 %v533, %v529
        %v554 = vpack.c.b16 %v534, %v530
        %v555 = vpack.c.b16 %v539, %v535
        %v556 = vpack.c.b16 %v540, %v536
        %v557 = vpack.c.b16 %v541, %v537
        %v558 = vpack.c.b16 %v542, %v538
        %v575 = vcombine.low %v472, %v472
        %v576 = vcombine.high %v472, %v472
        %v577 = vcombine.low %v473, %v473
        %v578 = vcombine.high %v473, %v473
        %vm583 = vcmask 523264
        %v585 = vsel %vm583, %v494, 0
        %587 = vmatprep.subr.bf16.mxu0 0
        %588 = vmatpush1.bf16.msra.mxu0 0
        %589 = vmatprep.subr.bf16.mxu0 0
        %590 = vmatpush1.bf16.msra.mxu0 0
        %591 = vmatprep.subr.bf16.mxu0 0
        %592 = vmatpush1.bf16.msra.mxu0 0
        %593 = vmatprep.subr.bf16.mxu0 0
        %594 = vmatpush1.bf16.msra.mxu0 0
        %595 = vmatprep.subr.bf16.mxu0 %v556
        %596 = vmatpush1.bf16.msra.mxu0 %v555
        %597 = vmatprep.subr.bf16.mxu0 %v552
        %598 = vmatpush1.bf16.msra.mxu0 %v551
        %599 = vmatprep.subr.bf16.mxu0 %v548
        %600 = vmatpush1.bf16.msra.mxu0 %v547
        %601 = vmatprep.subr.bf16.mxu0 %v544
        %602 = vmatpush1.bf16.msra.mxu0 %v543
        %603 = vmatprep.subr.bf16.mxu0 0
        %604 = vmatpush2.bf16.msra.mxu0 0
        %605 = vmatprep.subr.bf16.mxu0 0
        %606 = vmatpush2.bf16.msra.mxu0 0
        %607 = vmatprep.subr.bf16.mxu0 0
        %608 = vmatpush2.bf16.msra.mxu0 0
        %609 = vmatprep.subr.bf16.mxu0 0
        %610 = vmatpush2.bf16.msra.mxu0 0
        %611 = vmatprep.subr.bf16.mxu0 0
        %612 = vmatpush2.bf16.msra.mxu0 0
        %613 = vmatprep.subr.bf16.mxu0 0
        %614 = vmatpush2.bf16.msra.mxu0 0
        %615 = vmatprep.subr.bf16.mxu0 0
        %616 = vmatpush2.bf16.msra.mxu0 0
        %617 = vmatprep.subr.bf16.mxu0 0
        %618 = vmatpush2.bf16.msra.mxu0 0
        %619 = vmatprep.mubr.bf16.mxu0 0
        %620 = vmatmul.mubr.bf16.gmra.mxu0 %v585
        %v621 = vpop.f32.mrf.mxu0
        %v622 = vadd.f32 %v575, %v621
        %v623 = vpop.f32.mrf.mxu0
        %v624 = vadd.f32 %v576, %v623
        %v625 = vpop.f32.mrf.mxu0
        %v626 = vadd.f32 %v575, %v625
        %v627 = vpop.f32.mrf.mxu0
        %v628 = vadd.f32 %v576, %v627
        %629 = vdwg.mxu0
        %630 = vmatprep.subr.bf16.mxu0 0
        %631 = vmatpush1.bf16.msra.mxu0 0
        %632 = vmatprep.subr.bf16.mxu0 0
        %633 = vmatpush1.bf16.msra.mxu0 0
        %634 = vmatprep.subr.bf16.mxu0 0
        %635 = vmatpush1.bf16.msra.mxu0 0
        %636 = vmatprep.subr.bf16.mxu0 0
        %637 = vmatpush1.bf16.msra.mxu0 0
        %638 = vmatprep.subr.bf16.mxu0 %v558
        %639 = vmatpush1.bf16.msra.mxu0 %v557
        %640 = vmatprep.subr.bf16.mxu0 %v554
        %641 = vmatpush1.bf16.msra.mxu0 %v553
        %642 = vmatprep.subr.bf16.mxu0 %v550
        %643 = vmatpush1.bf16.msra.mxu0 %v549
        %644 = vmatprep.subr.bf16.mxu0 %v546
        %645 = vmatpush1.bf16.msra.mxu0 %v545
        %646 = vmatprep.subr.bf16.mxu0 0
        %647 = vmatpush2.bf16.msra.mxu0 0
        %648 = vmatprep.subr.bf16.mxu0 0
        %649 = vmatpush2.bf16.msra.mxu0 0
        %650 = vmatprep.subr.bf16.mxu0 0
        %651 = vmatpush2.bf16.msra.mxu0 0
        %652 = vmatprep.subr.bf16.mxu0 0
        %653 = vmatpush2.bf16.msra.mxu0 0
        %654 = vmatprep.subr.bf16.mxu0 0
        %655 = vmatpush2.bf16.msra.mxu0 0
        %656 = vmatprep.subr.bf16.mxu0 0
        %657 = vmatpush2.bf16.msra.mxu0 0
        %658 = vmatprep.subr.bf16.mxu0 0
        %659 = vmatpush2.bf16.msra.mxu0 0
        %660 = vmatprep.subr.bf16.mxu0 0
        %661 = vmatpush2.bf16.msra.mxu0 0
        %662 = vmatprep.mubr.bf16.mxu0 0
        %663 = vmatmul.mubr.bf16.gmra.mxu0 %v585
        %v664 = vpop.f32.mrf.mxu0
        %v665 = vadd.f32 %v577, %v664
        %v666 = vpop.f32.mrf.mxu0
        %v667 = vadd.f32 %v578, %v666
        %v668 = vpop.f32.mrf.mxu0
        %v669 = vadd.f32 %v577, %v668
        %v670 = vpop.f32.mrf.mxu0
        %v671 = vadd.f32 %v578, %v670
        %672 = vdwg.mxu0
        %v681 = vcombine.low %v622, %v624
        %v682 = vcombine.high %v622, %v624
        %v683 = vcombine.low %v665, %v667
        %v684 = vcombine.high %v665, %v667
        %v685 = vcombine.low %v626, %v628
        %v686 = vcombine.high %v626, %v628
        %v687 = vcombine.low %v669, %v671
        %v688 = vcombine.high %v669, %v671
        %697 = vst [vmem:[#allocation2] sm:$0xff] %v681
        %698 = vst [vmem:[#allocation2 + $0x8] sm:$0xff] %v683
        %699 = vst [vmem:[#allocation2 + $0x20] sm:$0xff] %v682
        %700 = vst [vmem:[#allocation2 + $0x28] sm:$0xff] %v684
        %701 = vst [vmem:[#allocation2 + $0x40] sm:$0xff] %v685
        %702 = vst [vmem:[#allocation2 + $0x48] sm:$0xff] %v687
        %703 = vst [vmem:[#allocation2 + $0x60] sm:$0xff] %v686
        %704 = vst [vmem:[#allocation2 + $0x68] sm:$0xff] %v688
        %v705 = vld [vmem:[%s400] sm:$0x3]
        %v706 = vld [vmem:[%s400 + $0x2] sm:$0x3]
        %v707 = vld [vmem:[%s400 + $0x4] sm:$0x3]
        %v708 = vld [vmem:[%s400 + $0x6] sm:$0x3]
        %v709 = vld [vmem:[#allocation5 + $0x10] sm:$0xff]
        %v710 = vld [vmem:[#allocation5 + $0x18] sm:$0xff]
        %v711 = vld [vmem:[#allocation5 + $0x30] sm:$0xff]
        %v712 = vld [vmem:[#allocation5 + $0x38] sm:$0xff]
        %v713 = vld [vmem:[#allocation5 + $0x50] sm:$0xff]
        %v714 = vld [vmem:[#allocation5 + $0x58] sm:$0xff]
        %v715 = vld [vmem:[#allocation5 + $0x70] sm:$0xff]
        %v716 = vld [vmem:[#allocation5 + $0x78] sm:$0xff]
        %v717 = vld [vmem:[#allocation5 + $0x90] sm:$0xff]
        %v718 = vld [vmem:[#allocation5 + $0x98] sm:$0xff]
        %v719 = vld [vmem:[#allocation5 + $0xb0] sm:$0xff]
        %v720 = vld [vmem:[#allocation5 + $0xb8] sm:$0xff]
        %v721 = vld [vmem:[#allocation5 + $0xd0] sm:$0xff]
        %v722 = vld [vmem:[#allocation5 + $0xd8] sm:$0xff]
        %v723 = vld [vmem:[#allocation5 + $0xf0] sm:$0xff]
        %v724 = vld [vmem:[#allocation5 + $0xf8] sm:$0xff]
        %v725 = vld [vmem:[%s5 + $0x4] sm:$0xf]
        %v727 = vlaneseq
        %v728 = vshrl.u32 %v727, 7
        %v729 = vsub.s32 0, %v728
        %v730 = vrot.slane %v725, %v729
        %v731 = vlaneseq
        %v732 = vshrl.u32 %v731, 7
        %v733 = vsub.s32 1, %v732
        %v734 = vrot.slane %v725, %v733
        %v735 = vlaneseq
        %v736 = vshrl.u32 %v735, 7
        %v737 = vsub.s32 2, %v736
        %v738 = vrot.slane %v725, %v737
        %v739 = vlaneseq
        %v740 = vshrl.u32 %v739, 7
        %v741 = vsub.s32 3, %v740
        %v742 = vrot.slane %v725, %v741
        %v743 = vcombine.low %v730, %v734
        %v744 = vcombine.low %v738, %v742
        %v749 = vcombine.low %v705, %v706
        %v750 = vcombine.low %v707, %v708
        %v752 = vunpack.c.l.s4 1983009808
        %v753 = vunpack.c.0.s8 %v752
        %v754 = vlaneseq
        %v755 = vshrl.u32 %v754, 7
        %v756 = vsub.s32 %v753, %v755
        %v757 = vrot.slane %v749, %v756
        %v759 = vunpack.c.l.s4 1983009808
        %v760 = vunpack.c.0.s8 %v759
        %v761 = vlaneseq
        %v762 = vshrl.u32 %v761, 7
        %v763 = vsub.s32 %v760, %v762
        %v764 = vrot.slane %v750, %v763
        %v765 = vcombine.low %v757, %v764
        %v782 = vunpack.c.l.b16 %v709
        %v783 = vunpack.c.h.b16 %v709
        %v784 = vunpack.c.l.b16 %v710
        %v785 = vunpack.c.h.b16 %v710
        %v786 = vunpack.c.l.b16 %v711
        %v787 = vunpack.c.h.b16 %v711
        %v788 = vunpack.c.l.b16 %v712
        %v789 = vunpack.c.h.b16 %v712
        %v790 = vunpack.c.l.b16 %v713
        %v791 = vunpack.c.h.b16 %v713
        %v792 = vunpack.c.l.b16 %v714
        %v793 = vunpack.c.h.b16 %v714
        %v794 = vunpack.c.l.b16 %v715
        %v795 = vunpack.c.h.b16 %v715
        %v796 = vunpack.c.l.b16 %v716
        %v797 = vunpack.c.h.b16 %v716
        %v798 = vunpack.c.l.b16 %v717
        %v799 = vunpack.c.h.b16 %v717
        %v800 = vunpack.c.l.b16 %v718
        %v801 = vunpack.c.h.b16 %v718
        %v802 = vunpack.c.l.b16 %v719
        %v803 = vunpack.c.h.b16 %v719
        %v804 = vunpack.c.l.b16 %v720
        %v805 = vunpack.c.h.b16 %v720
        %v806 = vunpack.c.l.b16 %v721
        %v807 = vunpack.c.h.b16 %v721
        %v808 = vunpack.c.l.b16 %v722
        %v809 = vunpack.c.h.b16 %v722
        %v810 = vunpack.c.l.b16 %v723
        %v811 = vunpack.c.h.b16 %v723
        %v812 = vunpack.c.l.b16 %v724
        %v813 = vunpack.c.h.b16 %v724
        %v814 = vpack.c.b16 %v786, %v782
        %v815 = vpack.c.b16 %v787, %v783
        %v816 = vpack.c.b16 %v788, %v784
        %v817 = vpack.c.b16 %v789, %v785
        %v818 = vpack.c.b16 %v794, %v790
        %v819 = vpack.c.b16 %v795, %v791
        %v820 = vpack.c.b16 %v796, %v792
        %v821 = vpack.c.b16 %v797, %v793
        %v822 = vpack.c.b16 %v802, %v798
        %v823 = vpack.c.b16 %v803, %v799
        %v824 = vpack.c.b16 %v804, %v800
        %v825 = vpack.c.b16 %v805, %v801
        %v826 = vpack.c.b16 %v810, %v806
        %v827 = vpack.c.b16 %v811, %v807
        %v828 = vpack.c.b16 %v812, %v808
        %v829 = vpack.c.b16 %v813, %v809
        %v846 = vcombine.low %v743, %v743
        %v847 = vcombine.high %v743, %v743
        %v848 = vcombine.low %v744, %v744
        %v849 = vcombine.high %v744, %v744
        %v855 = vsel %vm583, %v765, 0
        %857 = vmatprep.subr.bf16.mxu0 0
        %858 = vmatpush1.bf16.msra.mxu0 0
        %859 = vmatprep.subr.bf16.mxu0 0
        %860 = vmatpush1.bf16.msra.mxu0 0
        %861 = vmatprep.subr.bf16.mxu0 0
        %862 = vmatpush1.bf16.msra.mxu0 0
        %863 = vmatprep.subr.bf16.mxu0 0
        %864 = vmatpush1.bf16.msra.mxu0 0
        %865 = vmatprep.subr.bf16.mxu0 %v827
        %866 = vmatpush1.bf16.msra.mxu0 %v826
        %867 = vmatprep.subr.bf16.mxu0 %v823
        %868 = vmatpush1.bf16.msra.mxu0 %v822
        %869 = vmatprep.subr.bf16.mxu0 %v819
        %870 = vmatpush1.bf16.msra.mxu0 %v818
        %871 = vmatprep.subr.bf16.mxu0 %v815
        %872 = vmatpush1.bf16.msra.mxu0 %v814
        %873 = vmatprep.subr.bf16.mxu0 0
        %874 = vmatpush2.bf16.msra.mxu0 0
        %875 = vmatprep.subr.bf16.mxu0 0
        %876 = vmatpush2.bf16.msra.mxu0 0
        %877 = vmatprep.subr.bf16.mxu0 0
        %878 = vmatpush2.bf16.msra.mxu0 0
        %879 = vmatprep.subr.bf16.mxu0 0
        %880 = vmatpush2.bf16.msra.mxu0 0
        %881 = vmatprep.subr.bf16.mxu0 0
        %882 = vmatpush2.bf16.msra.mxu0 0
        %883 = vmatprep.subr.bf16.mxu0 0
        %884 = vmatpush2.bf16.msra.mxu0 0
        %885 = vmatprep.subr.bf16.mxu0 0
        %886 = vmatpush2.bf16.msra.mxu0 0
        %887 = vmatprep.subr.bf16.mxu0 0
        %888 = vmatpush2.bf16.msra.mxu0 0
        %889 = vmatprep.mubr.bf16.mxu0 0
        %890 = vmatmul.mubr.bf16.gmra.mxu0 %v855
        %v891 = vpop.f32.mrf.mxu0
        %v892 = vadd.f32 %v846, %v891
        %v893 = vpop.f32.mrf.mxu0
        %v894 = vadd.f32 %v847, %v893
        %v895 = vpop.f32.mrf.mxu0
        %v896 = vadd.f32 %v846, %v895
        %v897 = vpop.f32.mrf.mxu0
        %v898 = vadd.f32 %v847, %v897
        %899 = vdwg.mxu0
        %900 = vmatprep.subr.bf16.mxu0 0
        %901 = vmatpush1.bf16.msra.mxu0 0
        %902 = vmatprep.subr.bf16.mxu0 0
        %903 = vmatpush1.bf16.msra.mxu0 0
        %904 = vmatprep.subr.bf16.mxu0 0
        %905 = vmatpush1.bf16.msra.mxu0 0
        %906 = vmatprep.subr.bf16.mxu0 0
        %907 = vmatpush1.bf16.msra.mxu0 0
        %908 = vmatprep.subr.bf16.mxu0 %v829
        %909 = vmatpush1.bf16.msra.mxu0 %v828
        %910 = vmatprep.subr.bf16.mxu0 %v825
        %911 = vmatpush1.bf16.msra.mxu0 %v824
        %912 = vmatprep.subr.bf16.mxu0 %v821
        %913 = vmatpush1.bf16.msra.mxu0 %v820
        %914 = vmatprep.subr.bf16.mxu0 %v817
        %915 = vmatpush1.bf16.msra.mxu0 %v816
        %916 = vmatprep.subr.bf16.mxu0 0
        %917 = vmatpush2.bf16.msra.mxu0 0
        %918 = vmatprep.subr.bf16.mxu0 0
        %919 = vmatpush2.bf16.msra.mxu0 0
        %920 = vmatprep.subr.bf16.mxu0 0
        %921 = vmatpush2.bf16.msra.mxu0 0
        %922 = vmatprep.subr.bf16.mxu0 0
        %923 = vmatpush2.bf16.msra.mxu0 0
        %924 = vmatprep.subr.bf16.mxu0 0
        %925 = vmatpush2.bf16.msra.mxu0 0
        %926 = vmatprep.subr.bf16.mxu0 0
        %927 = vmatpush2.bf16.msra.mxu0 0
        %928 = vmatprep.subr.bf16.mxu0 0
        %929 = vmatpush2.bf16.msra.mxu0 0
        %930 = vmatprep.subr.bf16.mxu0 0
        %931 = vmatpush2.bf16.msra.mxu0 0
        %932 = vmatprep.mubr.bf16.mxu0 0
        %933 = vmatmul.mubr.bf16.gmra.mxu0 %v855
        %v934 = vpop.f32.mrf.mxu0
        %v935 = vadd.f32 %v848, %v934
        %v936 = vpop.f32.mrf.mxu0
        %v937 = vadd.f32 %v849, %v936
        %v938 = vpop.f32.mrf.mxu0
        %v939 = vadd.f32 %v848, %v938
        %v940 = vpop.f32.mrf.mxu0
        %v941 = vadd.f32 %v849, %v940
        %942 = vdwg.mxu0
        %v951 = vcombine.low %v892, %v894
        %v952 = vcombine.high %v892, %v894
        %v953 = vcombine.low %v935, %v937
        %v954 = vcombine.high %v935, %v937
        %v955 = vcombine.low %v896, %v898
        %v956 = vcombine.high %v896, %v898
        %v957 = vcombine.low %v939, %v941
        %v958 = vcombine.high %v939, %v941
        %967 = vst [vmem:[#allocation2 + $0x10] sm:$0xff] %v951
        %968 = vst [vmem:[#allocation2 + $0x18] sm:$0xff] %v953
        %969 = vst [vmem:[#allocation2 + $0x30] sm:$0xff] %v952
        %970 = vst [vmem:[#allocation2 + $0x38] sm:$0xff] %v954
        %971 = vst [vmem:[#allocation2 + $0x50] sm:$0xff] %v955
        %972 = vst [vmem:[#allocation2 + $0x58] sm:$0xff] %v957
        %973 = vst [vmem:[#allocation2 + $0x70] sm:$0xff] %v956
        %974 = vst [vmem:[#allocation2 + $0x78] sm:$0xff] %v958
        %v975 = vld [vmem:[%s406] sm:$0xf]
        %s976 = smul.u32 %s26, 4
        %s977 = ssub.s32 7, %s976
        %v978 = vld [vmem:[#allocation2] sm:$0xff]
        %v979 = vld [vmem:[#allocation2 + $0x8] sm:$0xff]
        %s980 = scalar_lea.vmem [#allocation2], 96
        %v981 = vld [vmem:[%s980 + $0x10] sm:$0xff]
        %v982 = vld [vmem:[%s980 + $0x18] sm:$0xff]
        %v983 = vld [vmem:[#allocation3] sm:$0xff]
        %v984 = vld [vmem:[#allocation4] sm:$0xff]
        %v986 = vcombine.high %v983, %v983
        %v988 = vpack.c.bf16 %v983, %v983
        %v989 = vpack.c.bf16 %v986, %v986
        %v990 = vld [vmem:[#allocation7] sm:$0xff]
        %v991 = vld [vmem:[#allocation7 + $0x8] sm:$0xff]
        %v992 = vld [vmem:[#allocation7 + $0x10] sm:$0xff]
        %v993 = vld [vmem:[#allocation7 + $0x18] sm:$0xff]
        %v994 = vld [vmem:[#allocation7 + $0x20] sm:$0xff]
        %v995 = vld [vmem:[#allocation7 + $0x28] sm:$0xff]
        %v996 = vld [vmem:[#allocation7 + $0x30] sm:$0xff]
        %v997 = vld [vmem:[#allocation7 + $0x38] sm:$0xff]
        %v998 = vld [vmem:[#allocation7 + $0x40] sm:$0xff]
        %v999 = vld [vmem:[#allocation7 + $0x48] sm:$0xff]
        %v1000 = vld [vmem:[#allocation7 + $0x50] sm:$0xff]
        %v1001 = vld [vmem:[#allocation7 + $0x58] sm:$0xff]
        %v1002 = vld [vmem:[#allocation7 + $0x60] sm:$0xff]
        %v1003 = vld [vmem:[#allocation7 + $0x68] sm:$0xff]
        %v1004 = vld [vmem:[#allocation7 + $0x70] sm:$0xff]
        %v1005 = vld [vmem:[#allocation7 + $0x78] sm:$0xff]
        %v1006 = vld [vmem:[#allocation7 + $0x80] sm:$0xff]
        %v1007 = vld [vmem:[#allocation7 + $0x88] sm:$0xff]
        %v1008 = vld [vmem:[#allocation7 + $0x90] sm:$0xff]
        %v1009 = vld [vmem:[#allocation7 + $0x98] sm:$0xff]
        %v1010 = vld [vmem:[#allocation7 + $0xa0] sm:$0xff]
        %v1011 = vld [vmem:[#allocation7 + $0xa8] sm:$0xff]
        %v1012 = vld [vmem:[#allocation7 + $0xb0] sm:$0xff]
        %v1013 = vld [vmem:[#allocation7 + $0xb8] sm:$0xff]
        %v1014 = vld [vmem:[#allocation7 + $0xc0] sm:$0xff]
        %v1015 = vld [vmem:[#allocation7 + $0xc8] sm:$0xff]
        %v1016 = vld [vmem:[#allocation7 + $0xd0] sm:$0xff]
        %v1017 = vld [vmem:[#allocation7 + $0xd8] sm:$0xff]
        %v1018 = vld [vmem:[#allocation7 + $0xe0] sm:$0xff]
        %v1019 = vld [vmem:[#allocation7 + $0xe8] sm:$0xff]
        %v1020 = vld [vmem:[#allocation7 + $0xf0] sm:$0xff]
        %v1021 = vld [vmem:[#allocation7 + $0xf8] sm:$0xff]
        %v1022 = vld [vmem:[#allocation7 + $0x100] sm:$0xff]
        %v1023 = vld [vmem:[#allocation7 + $0x108] sm:$0xff]
        %v1024 = vld [vmem:[#allocation7 + $0x110] sm:$0xff]
        %v1025 = vld [vmem:[#allocation7 + $0x118] sm:$0xff]
        %v1026 = vld [vmem:[#allocation7 + $0x120] sm:$0xff]
        %v1027 = vld [vmem:[#allocation7 + $0x128] sm:$0xff]
        %v1028 = vld [vmem:[#allocation7 + $0x130] sm:$0xff]
        %v1029 = vld [vmem:[#allocation7 + $0x138] sm:$0xff]
        %v1030 = vld [vmem:[#allocation7 + $0x140] sm:$0xff]
        %v1031 = vld [vmem:[#allocation7 + $0x148] sm:$0xff]
        %v1032 = vld [vmem:[#allocation7 + $0x150] sm:$0xff]
        %v1033 = vld [vmem:[#allocation7 + $0x158] sm:$0xff]
        %v1034 = vld [vmem:[#allocation7 + $0x160] sm:$0xff]
        %v1035 = vld [vmem:[#allocation7 + $0x168] sm:$0xff]
        %v1036 = vld [vmem:[#allocation7 + $0x170] sm:$0xff]
        %v1037 = vld [vmem:[#allocation7 + $0x178] sm:$0xff]
        %v1038 = vld [vmem:[#allocation7 + $0x180] sm:$0xff]
        %v1039 = vld [vmem:[#allocation7 + $0x188] sm:$0xff]
        %v1040 = vld [vmem:[#allocation7 + $0x190] sm:$0xff]
        %v1041 = vld [vmem:[#allocation7 + $0x198] sm:$0xff]
        %v1042 = vld [vmem:[#allocation7 + $0x1a0] sm:$0xff]
        %v1043 = vld [vmem:[#allocation7 + $0x1a8] sm:$0xff]
        %v1044 = vld [vmem:[#allocation7 + $0x1b0] sm:$0xff]
        %v1045 = vld [vmem:[#allocation7 + $0x1b8] sm:$0xff]
        %v1046 = vld [vmem:[#allocation7 + $0x1c0] sm:$0xff]
        %v1047 = vld [vmem:[#allocation7 + $0x1c8] sm:$0xff]
        %v1048 = vld [vmem:[#allocation7 + $0x1d0] sm:$0xff]
        %v1049 = vld [vmem:[#allocation7 + $0x1d8] sm:$0xff]
        %v1050 = vld [vmem:[#allocation7 + $0x1e0] sm:$0xff]
        %v1051 = vld [vmem:[#allocation7 + $0x1e8] sm:$0xff]
        %v1052 = vld [vmem:[#allocation7 + $0x1f0] sm:$0xff]
        %v1053 = vld [vmem:[#allocation7 + $0x1f8] sm:$0xff]
        %v1054 = vld [vmem:[#allocation7 + $0x200] sm:$0xff]
        %v1055 = vld [vmem:[#allocation7 + $0x208] sm:$0xff]
        %v1056 = vld [vmem:[#allocation7 + $0x210] sm:$0xff]
        %v1057 = vld [vmem:[#allocation7 + $0x218] sm:$0xff]
        %v1058 = vld [vmem:[#allocation7 + $0x220] sm:$0xff]
        %v1059 = vld [vmem:[#allocation7 + $0x228] sm:$0xff]
        %v1060 = vld [vmem:[#allocation7 + $0x230] sm:$0xff]
        %v1061 = vld [vmem:[#allocation7 + $0x238] sm:$0xff]
        %v1062 = vld [vmem:[#allocation7 + $0x240] sm:$0xff]
        %v1063 = vld [vmem:[#allocation7 + $0x248] sm:$0xff]
        %v1064 = vld [vmem:[#allocation7 + $0x250] sm:$0xff]
        %v1065 = vld [vmem:[#allocation7 + $0x258] sm:$0xff]
        %v1066 = vld [vmem:[#allocation7 + $0x260] sm:$0xff]
        %v1067 = vld [vmem:[#allocation7 + $0x268] sm:$0xff]
        %v1068 = vld [vmem:[#allocation7 + $0x270] sm:$0xff]
        %v1069 = vld [vmem:[#allocation7 + $0x278] sm:$0xff]
        %v1070 = vld [vmem:[#allocation7 + $0x280] sm:$0xff]
        %v1071 = vld [vmem:[#allocation7 + $0x288] sm:$0xff]
        %v1072 = vld [vmem:[#allocation7 + $0x290] sm:$0xff]
        %v1073 = vld [vmem:[#allocation7 + $0x298] sm:$0xff]
        %v1074 = vld [vmem:[#allocation7 + $0x2a0] sm:$0xff]
        %v1075 = vld [vmem:[#allocation7 + $0x2a8] sm:$0xff]
        %v1076 = vld [vmem:[#allocation7 + $0x2b0] sm:$0xff]
        %v1077 = vld [vmem:[#allocation7 + $0x2b8] sm:$0xff]
        %v1078 = vld [vmem:[#allocation7 + $0x2c0] sm:$0xff]
        %v1079 = vld [vmem:[#allocation7 + $0x2c8] sm:$0xff]
        %v1080 = vld [vmem:[#allocation7 + $0x2d0] sm:$0xff]
        %v1081 = vld [vmem:[#allocation7 + $0x2d8] sm:$0xff]
        %v1082 = vld [vmem:[#allocation7 + $0x2e0] sm:$0xff]
        %v1083 = vld [vmem:[#allocation7 + $0x2e8] sm:$0xff]
        %v1084 = vld [vmem:[#allocation7 + $0x2f0] sm:$0xff]
        %v1085 = vld [vmem:[#allocation7 + $0x2f8] sm:$0xff]
        %v1086 = vld [vmem:[#allocation7 + $0x300] sm:$0xff]
        %v1087 = vld [vmem:[#allocation7 + $0x308] sm:$0xff]
        %v1088 = vld [vmem:[#allocation7 + $0x310] sm:$0xff]
        %v1089 = vld [vmem:[#allocation7 + $0x318] sm:$0xff]
        %v1090 = vld [vmem:[#allocation7 + $0x320] sm:$0xff]
        %v1091 = vld [vmem:[#allocation7 + $0x328] sm:$0xff]
        %v1092 = vld [vmem:[#allocation7 + $0x330] sm:$0xff]
        %v1093 = vld [vmem:[#allocation7 + $0x338] sm:$0xff]
        %v1094 = vld [vmem:[#allocation7 + $0x340] sm:$0xff]
        %v1095 = vld [vmem:[#allocation7 + $0x348] sm:$0xff]
        %v1096 = vld [vmem:[#allocation7 + $0x350] sm:$0xff]
        %v1097 = vld [vmem:[#allocation7 + $0x358] sm:$0xff]
        %v1098 = vld [vmem:[#allocation7 + $0x360] sm:$0xff]
        %v1099 = vld [vmem:[#allocation7 + $0x368] sm:$0xff]
        %v1100 = vld [vmem:[#allocation7 + $0x370] sm:$0xff]
        %v1101 = vld [vmem:[#allocation7 + $0x378] sm:$0xff]
        %v1102 = vld [vmem:[#allocation7 + $0x380] sm:$0xff]
        %v1103 = vld [vmem:[#allocation7 + $0x388] sm:$0xff]
        %v1104 = vld [vmem:[#allocation7 + $0x390] sm:$0xff]
        %v1105 = vld [vmem:[#allocation7 + $0x398] sm:$0xff]
        %v1106 = vld [vmem:[#allocation7 + $0x3a0] sm:$0xff]
        %v1107 = vld [vmem:[#allocation7 + $0x3a8] sm:$0xff]
        %v1108 = vld [vmem:[#allocation7 + $0x3b0] sm:$0xff]
        %v1109 = vld [vmem:[#allocation7 + $0x3b8] sm:$0xff]
        %v1110 = vld [vmem:[#allocation7 + $0x3c0] sm:$0xff]
        %v1111 = vld [vmem:[#allocation7 + $0x3c8] sm:$0xff]
        %v1112 = vld [vmem:[#allocation7 + $0x3d0] sm:$0xff]
        %v1113 = vld [vmem:[#allocation7 + $0x3d8] sm:$0xff]
        %v1114 = vld [vmem:[#allocation7 + $0x3e0] sm:$0xff]
        %v1115 = vld [vmem:[#allocation7 + $0x3e8] sm:$0xff]
        %v1116 = vld [vmem:[#allocation7 + $0x3f0] sm:$0xff]
        %v1117 = vld [vmem:[#allocation7 + $0x3f8] sm:$0xff]
        %v1246 = vunpack.c.l.b16 %v990
        %v1247 = vunpack.c.h.b16 %v990
        %v1248 = vunpack.c.l.b16 %v991
        %v1249 = vunpack.c.h.b16 %v991
        %v1250 = vunpack.c.l.b16 %v992
        %v1251 = vunpack.c.h.b16 %v992
        %v1252 = vunpack.c.l.b16 %v993
        %v1253 = vunpack.c.h.b16 %v993
        %v1254 = vunpack.c.l.b16 %v994
        %v1255 = vunpack.c.h.b16 %v994
        %v1256 = vunpack.c.l.b16 %v995
        %v1257 = vunpack.c.h.b16 %v995
        %v1258 = vunpack.c.l.b16 %v996
        %v1259 = vunpack.c.h.b16 %v996
        %v1260 = vunpack.c.l.b16 %v997
        %v1261 = vunpack.c.h.b16 %v997
        %v1262 = vunpack.c.l.b16 %v998
        %v1263 = vunpack.c.h.b16 %v998
        %v1264 = vunpack.c.l.b16 %v999
        %v1265 = vunpack.c.h.b16 %v999
        %v1266 = vunpack.c.l.b16 %v1000
        %v1267 = vunpack.c.h.b16 %v1000
        %v1268 = vunpack.c.l.b16 %v1001
        %v1269 = vunpack.c.h.b16 %v1001
        %v1270 = vunpack.c.l.b16 %v1002
        %v1271 = vunpack.c.h.b16 %v1002
        %v1272 = vunpack.c.l.b16 %v1003
        %v1273 = vunpack.c.h.b16 %v1003
        %v1274 = vunpack.c.l.b16 %v1004
        %v1275 = vunpack.c.h.b16 %v1004
        %v1276 = vunpack.c.l.b16 %v1005
        %v1277 = vunpack.c.h.b16 %v1005
        %v1278 = vunpack.c.l.b16 %v1006
        %v1279 = vunpack.c.h.b16 %v1006
        %v1280 = vunpack.c.l.b16 %v1007
        %v1281 = vunpack.c.h.b16 %v1007
        %v1282 = vunpack.c.l.b16 %v1008
        %v1283 = vunpack.c.h.b16 %v1008
        %v1284 = vunpack.c.l.b16 %v1009
        %v1285 = vunpack.c.h.b16 %v1009
        %v1286 = vunpack.c.l.b16 %v1010
        %v1287 = vunpack.c.h.b16 %v1010
        %v1288 = vunpack.c.l.b16 %v1011
        %v1289 = vunpack.c.h.b16 %v1011
        %v1290 = vunpack.c.l.b16 %v1012
        %v1291 = vunpack.c.h.b16 %v1012
        %v1292 = vunpack.c.l.b16 %v1013
        %v1293 = vunpack.c.h.b16 %v1013
        %v1294 = vunpack.c.l.b16 %v1014
        %v1295 = vunpack.c.h.b16 %v1014
        %v1296 = vunpack.c.l.b16 %v1015
        %v1297 = vunpack.c.h.b16 %v1015
        %v1298 = vunpack.c.l.b16 %v1016
        %v1299 = vunpack.c.h.b16 %v1016
        %v1300 = vunpack.c.l.b16 %v1017
        %v1301 = vunpack.c.h.b16 %v1017
        %v1302 = vunpack.c.l.b16 %v1018
        %v1303 = vunpack.c.h.b16 %v1018
        %v1304 = vunpack.c.l.b16 %v1019
        %v1305 = vunpack.c.h.b16 %v1019
        %v1306 = vunpack.c.l.b16 %v1020
        %v1307 = vunpack.c.h.b16 %v1020
        %v1308 = vunpack.c.l.b16 %v1021
        %v1309 = vunpack.c.h.b16 %v1021
        %v1310 = vunpack.c.l.b16 %v1022
        %v1311 = vunpack.c.h.b16 %v1022
        %v1312 = vunpack.c.l.b16 %v1023
        %v1313 = vunpack.c.h.b16 %v1023
        %v1314 = vunpack.c.l.b16 %v1024
        %v1315 = vunpack.c.h.b16 %v1024
        %v1316 = vunpack.c.l.b16 %v1025
        %v1317 = vunpack.c.h.b16 %v1025
        %v1318 = vunpack.c.l.b16 %v1026
        %v1319 = vunpack.c.h.b16 %v1026
        %v1320 = vunpack.c.l.b16 %v1027
        %v1321 = vunpack.c.h.b16 %v1027
        %v1322 = vunpack.c.l.b16 %v1028
        %v1323 = vunpack.c.h.b16 %v1028
        %v1324 = vunpack.c.l.b16 %v1029
        %v1325 = vunpack.c.h.b16 %v1029
        %v1326 = vunpack.c.l.b16 %v1030
        %v1327 = vunpack.c.h.b16 %v1030
        %v1328 = vunpack.c.l.b16 %v1031
        %v1329 = vunpack.c.h.b16 %v1031
        %v1330 = vunpack.c.l.b16 %v1032
        %v1331 = vunpack.c.h.b16 %v1032
        %v1332 = vunpack.c.l.b16 %v1033
        %v1333 = vunpack.c.h.b16 %v1033
        %v1334 = vunpack.c.l.b16 %v1034
        %v1335 = vunpack.c.h.b16 %v1034
        %v1336 = vunpack.c.l.b16 %v1035
        %v1337 = vunpack.c.h.b16 %v1035
        %v1338 = vunpack.c.l.b16 %v1036
        %v1339 = vunpack.c.h.b16 %v1036
        %v1340 = vunpack.c.l.b16 %v1037
        %v1341 = vunpack.c.h.b16 %v1037
        %v1342 = vunpack.c.l.b16 %v1038
        %v1343 = vunpack.c.h.b16 %v1038
        %v1344 = vunpack.c.l.b16 %v1039
        %v1345 = vunpack.c.h.b16 %v1039
        %v1346 = vunpack.c.l.b16 %v1040
        %v1347 = vunpack.c.h.b16 %v1040
        %v1348 = vunpack.c.l.b16 %v1041
        %v1349 = vunpack.c.h.b16 %v1041
        %v1350 = vunpack.c.l.b16 %v1042
        %v1351 = vunpack.c.h.b16 %v1042
        %v1352 = vunpack.c.l.b16 %v1043
        %v1353 = vunpack.c.h.b16 %v1043
        %v1354 = vunpack.c.l.b16 %v1044
        %v1355 = vunpack.c.h.b16 %v1044
        %v1356 = vunpack.c.l.b16 %v1045
        %v1357 = vunpack.c.h.b16 %v1045
        %v1358 = vunpack.c.l.b16 %v1046
        %v1359 = vunpack.c.h.b16 %v1046
        %v1360 = vunpack.c.l.b16 %v1047
        %v1361 = vunpack.c.h.b16 %v1047
        %v1362 = vunpack.c.l.b16 %v1048
        %v1363 = vunpack.c.h.b16 %v1048
        %v1364 = vunpack.c.l.b16 %v1049
        %v1365 = vunpack.c.h.b16 %v1049
        %v1366 = vunpack.c.l.b16 %v1050
        %v1367 = vunpack.c.h.b16 %v1050
        %v1368 = vunpack.c.l.b16 %v1051
        %v1369 = vunpack.c.h.b16 %v1051
        %v1370 = vunpack.c.l.b16 %v1052
        %v1371 = vunpack.c.h.b16 %v1052
        %v1372 = vunpack.c.l.b16 %v1053
        %v1373 = vunpack.c.h.b16 %v1053
        %v1374 = vunpack.c.l.b16 %v1054
        %v1375 = vunpack.c.h.b16 %v1054
        %v1376 = vunpack.c.l.b16 %v1055
        %v1377 = vunpack.c.h.b16 %v1055
        %v1378 = vunpack.c.l.b16 %v1056
        %v1379 = vunpack.c.h.b16 %v1056
        %v1380 = vunpack.c.l.b16 %v1057
        %v1381 = vunpack.c.h.b16 %v1057
        %v1382 = vunpack.c.l.b16 %v1058
        %v1383 = vunpack.c.h.b16 %v1058
        %v1384 = vunpack.c.l.b16 %v1059
        %v1385 = vunpack.c.h.b16 %v1059
        %v1386 = vunpack.c.l.b16 %v1060
        %v1387 = vunpack.c.h.b16 %v1060
        %v1388 = vunpack.c.l.b16 %v1061
        %v1389 = vunpack.c.h.b16 %v1061
        %v1390 = vunpack.c.l.b16 %v1062
        %v1391 = vunpack.c.h.b16 %v1062
        %v1392 = vunpack.c.l.b16 %v1063
        %v1393 = vunpack.c.h.b16 %v1063
        %v1394 = vunpack.c.l.b16 %v1064
        %v1395 = vunpack.c.h.b16 %v1064
        %v1396 = vunpack.c.l.b16 %v1065
        %v1397 = vunpack.c.h.b16 %v1065
        %v1398 = vunpack.c.l.b16 %v1066
        %v1399 = vunpack.c.h.b16 %v1066
        %v1400 = vunpack.c.l.b16 %v1067
        %v1401 = vunpack.c.h.b16 %v1067
        %v1402 = vunpack.c.l.b16 %v1068
        %v1403 = vunpack.c.h.b16 %v1068
        %v1404 = vunpack.c.l.b16 %v1069
        %v1405 = vunpack.c.h.b16 %v1069
        %v1406 = vunpack.c.l.b16 %v1070
        %v1407 = vunpack.c.h.b16 %v1070
        %v1408 = vunpack.c.l.b16 %v1071
        %v1409 = vunpack.c.h.b16 %v1071
        %v1410 = vunpack.c.l.b16 %v1072
        %v1411 = vunpack.c.h.b16 %v1072
        %v1412 = vunpack.c.l.b16 %v1073
        %v1413 = vunpack.c.h.b16 %v1073
        %v1414 = vunpack.c.l.b16 %v1074
        %v1415 = vunpack.c.h.b16 %v1074
        %v1416 = vunpack.c.l.b16 %v1075
        %v1417 = vunpack.c.h.b16 %v1075
        %v1418 = vunpack.c.l.b16 %v1076
        %v1419 = vunpack.c.h.b16 %v1076
        %v1420 = vunpack.c.l.b16 %v1077
        %v1421 = vunpack.c.h.b16 %v1077
        %v1422 = vunpack.c.l.b16 %v1078
        %v1423 = vunpack.c.h.b16 %v1078
        %v1424 = vunpack.c.l.b16 %v1079
        %v1425 = vunpack.c.h.b16 %v1079
        %v1426 = vunpack.c.l.b16 %v1080
        %v1427 = vunpack.c.h.b16 %v1080
        %v1428 = vunpack.c.l.b16 %v1081
        %v1429 = vunpack.c.h.b16 %v1081
        %v1430 = vunpack.c.l.b16 %v1082
        %v1431 = vunpack.c.h.b16 %v1082
        %v1432 = vunpack.c.l.b16 %v1083
        %v1433 = vunpack.c.h.b16 %v1083
        %v1434 = vunpack.c.l.b16 %v1084
        %v1435 = vunpack.c.h.b16 %v1084
        %v1436 = vunpack.c.l.b16 %v1085
        %v1437 = vunpack.c.h.b16 %v1085
        %v1438 = vunpack.c.l.b16 %v1086
        %v1439 = vunpack.c.h.b16 %v1086
        %v1440 = vunpack.c.l.b16 %v1087
        %v1441 = vunpack.c.h.b16 %v1087
        %v1442 = vunpack.c.l.b16 %v1088
        %v1443 = vunpack.c.h.b16 %v1088
        %v1444 = vunpack.c.l.b16 %v1089
        %v1445 = vunpack.c.h.b16 %v1089
        %v1446 = vunpack.c.l.b16 %v1090
        %v1447 = vunpack.c.h.b16 %v1090
        %v1448 = vunpack.c.l.b16 %v1091
        %v1449 = vunpack.c.h.b16 %v1091
        %v1450 = vunpack.c.l.b16 %v1092
        %v1451 = vunpack.c.h.b16 %v1092
        %v1452 = vunpack.c.l.b16 %v1093
        %v1453 = vunpack.c.h.b16 %v1093
        %v1454 = vunpack.c.l.b16 %v1094
        %v1455 = vunpack.c.h.b16 %v1094
        %v1456 = vunpack.c.l.b16 %v1095
        %v1457 = vunpack.c.h.b16 %v1095
        %v1458 = vunpack.c.l.b16 %v1096
        %v1459 = vunpack.c.h.b16 %v1096
        %v1460 = vunpack.c.l.b16 %v1097
        %v1461 = vunpack.c.h.b16 %v1097
        %v1462 = vunpack.c.l.b16 %v1098
        %v1463 = vunpack.c.h.b16 %v1098
        %v1464 = vunpack.c.l.b16 %v1099
        %v1465 = vunpack.c.h.b16 %v1099
        %v1466 = vunpack.c.l.b16 %v1100
        %v1467 = vunpack.c.h.b16 %v1100
        %v1468 = vunpack.c.l.b16 %v1101
        %v1469 = vunpack.c.h.b16 %v1101
        %v1470 = vunpack.c.l.b16 %v1102
        %v1471 = vunpack.c.h.b16 %v1102
        %v1472 = vunpack.c.l.b16 %v1103
        %v1473 = vunpack.c.h.b16 %v1103
        %v1474 = vunpack.c.l.b16 %v1104
        %v1475 = vunpack.c.h.b16 %v1104
        %v1476 = vunpack.c.l.b16 %v1105
        %v1477 = vunpack.c.h.b16 %v1105
        %v1478 = vunpack.c.l.b16 %v1106
        %v1479 = vunpack.c.h.b16 %v1106
        %v1480 = vunpack.c.l.b16 %v1107
        %v1481 = vunpack.c.h.b16 %v1107
        %v1482 = vunpack.c.l.b16 %v1108
        %v1483 = vunpack.c.h.b16 %v1108
        %v1484 = vunpack.c.l.b16 %v1109
        %v1485 = vunpack.c.h.b16 %v1109
        %v1486 = vunpack.c.l.b16 %v1110
        %v1487 = vunpack.c.h.b16 %v1110
        %v1488 = vunpack.c.l.b16 %v1111
        %v1489 = vunpack.c.h.b16 %v1111
        %v1490 = vunpack.c.l.b16 %v1112
        %v1491 = vunpack.c.h.b16 %v1112
        %v1492 = vunpack.c.l.b16 %v1113
        %v1493 = vunpack.c.h.b16 %v1113
        %v1494 = vunpack.c.l.b16 %v1114
        %v1495 = vunpack.c.h.b16 %v1114
        %v1496 = vunpack.c.l.b16 %v1115
        %v1497 = vunpack.c.h.b16 %v1115
        %v1498 = vunpack.c.l.b16 %v1116
        %v1499 = vunpack.c.h.b16 %v1116
        %v1500 = vunpack.c.l.b16 %v1117
        %v1501 = vunpack.c.h.b16 %v1117
        %v1502 = vpack.c.b16 %v1254, %v1246
        %v1503 = vpack.c.b16 %v1255, %v1247
        %v1504 = vpack.c.b16 %v1256, %v1248
        %v1505 = vpack.c.b16 %v1257, %v1249
        %v1506 = vpack.c.b16 %v1258, %v1250
        %v1507 = vpack.c.b16 %v1259, %v1251
        %v1508 = vpack.c.b16 %v1260, %v1252
        %v1509 = vpack.c.b16 %v1261, %v1253
        %v1510 = vpack.c.b16 %v1270, %v1262
        %v1511 = vpack.c.b16 %v1271, %v1263
        %v1512 = vpack.c.b16 %v1272, %v1264
        %v1513 = vpack.c.b16 %v1273, %v1265
        %v1514 = vpack.c.b16 %v1274, %v1266
        %v1515 = vpack.c.b16 %v1275, %v1267
        %v1516 = vpack.c.b16 %v1276, %v1268
        %v1517 = vpack.c.b16 %v1277, %v1269
        %v1518 = vpack.c.b16 %v1286, %v1278
        %v1519 = vpack.c.b16 %v1287, %v1279
        %v1520 = vpack.c.b16 %v1288, %v1280
        %v1521 = vpack.c.b16 %v1289, %v1281
        %v1522 = vpack.c.b16 %v1290, %v1282
        %v1523 = vpack.c.b16 %v1291, %v1283
        %v1524 = vpack.c.b16 %v1292, %v1284
        %v1525 = vpack.c.b16 %v1293, %v1285
        %v1526 = vpack.c.b16 %v1302, %v1294
        %v1527 = vpack.c.b16 %v1303, %v1295
        %v1528 = vpack.c.b16 %v1304, %v1296
        %v1529 = vpack.c.b16 %v1305, %v1297
        %v1530 = vpack.c.b16 %v1306, %v1298
        %v1531 = vpack.c.b16 %v1307, %v1299
        %v1532 = vpack.c.b16 %v1308, %v1300
        %v1533 = vpack.c.b16 %v1309, %v1301
        %v1534 = vpack.c.b16 %v1318, %v1310
        %v1535 = vpack.c.b16 %v1319, %v1311
        %v1536 = vpack.c.b16 %v1320, %v1312
        %v1537 = vpack.c.b16 %v1321, %v1313
        %v1538 = vpack.c.b16 %v1322, %v1314
        %v1539 = vpack.c.b16 %v1323, %v1315
        %v1540 = vpack.c.b16 %v1324, %v1316
        %v1541 = vpack.c.b16 %v1325, %v1317
        %v1542 = vpack.c.b16 %v1334, %v1326
        %v1543 = vpack.c.b16 %v1335, %v1327
        %v1544 = vpack.c.b16 %v1336, %v1328
        %v1545 = vpack.c.b16 %v1337, %v1329
        %v1546 = vpack.c.b16 %v1338, %v1330
        %v1547 = vpack.c.b16 %v1339, %v1331
        %v1548 = vpack.c.b16 %v1340, %v1332
        %v1549 = vpack.c.b16 %v1341, %v1333
        %v1550 = vpack.c.b16 %v1350, %v1342
        %v1551 = vpack.c.b16 %v1351, %v1343
        %v1552 = vpack.c.b16 %v1352, %v1344
        %v1553 = vpack.c.b16 %v1353, %v1345
        %v1554 = vpack.c.b16 %v1354, %v1346
        %v1555 = vpack.c.b16 %v1355, %v1347
        %v1556 = vpack.c.b16 %v1356, %v1348
        %v1557 = vpack.c.b16 %v1357, %v1349
        %v1558 = vpack.c.b16 %v1366, %v1358
        %v1559 = vpack.c.b16 %v1367, %v1359
        %v1560 = vpack.c.b16 %v1368, %v1360
        %v1561 = vpack.c.b16 %v1369, %v1361
        %v1562 = vpack.c.b16 %v1370, %v1362
        %v1563 = vpack.c.b16 %v1371, %v1363
        %v1564 = vpack.c.b16 %v1372, %v1364
        %v1565 = vpack.c.b16 %v1373, %v1365
        %v1566 = vpack.c.b16 %v1382, %v1374
        %v1567 = vpack.c.b16 %v1383, %v1375
        %v1568 = vpack.c.b16 %v1384, %v1376
        %v1569 = vpack.c.b16 %v1385, %v1377
        %v1570 = vpack.c.b16 %v1386, %v1378
        %v1571 = vpack.c.b16 %v1387, %v1379
        %v1572 = vpack.c.b16 %v1388, %v1380
        %v1573 = vpack.c.b16 %v1389, %v1381
        %v1574 = vpack.c.b16 %v1398, %v1390
        %v1575 = vpack.c.b16 %v1399, %v1391
        %v1576 = vpack.c.b16 %v1400, %v1392
        %v1577 = vpack.c.b16 %v1401, %v1393
        %v1578 = vpack.c.b16 %v1402, %v1394
        %v1579 = vpack.c.b16 %v1403, %v1395
        %v1580 = vpack.c.b16 %v1404, %v1396
        %v1581 = vpack.c.b16 %v1405, %v1397
        %v1582 = vpack.c.b16 %v1414, %v1406
        %v1583 = vpack.c.b16 %v1415, %v1407
        %v1584 = vpack.c.b16 %v1416, %v1408
        %v1585 = vpack.c.b16 %v1417, %v1409
        %v1586 = vpack.c.b16 %v1418, %v1410
        %v1587 = vpack.c.b16 %v1419, %v1411
        %v1588 = vpack.c.b16 %v1420, %v1412
        %v1589 = vpack.c.b16 %v1421, %v1413
        %v1590 = vpack.c.b16 %v1430, %v1422
        %v1591 = vpack.c.b16 %v1431, %v1423
        %v1592 = vpack.c.b16 %v1432, %v1424
        %v1593 = vpack.c.b16 %v1433, %v1425
        %v1594 = vpack.c.b16 %v1434, %v1426
        %v1595 = vpack.c.b16 %v1435, %v1427
        %v1596 = vpack.c.b16 %v1436, %v1428
        %v1597 = vpack.c.b16 %v1437, %v1429
        %v1598 = vpack.c.b16 %v1446, %v1438
        %v1599 = vpack.c.b16 %v1447, %v1439
        %v1600 = vpack.c.b16 %v1448, %v1440
        %v1601 = vpack.c.b16 %v1449, %v1441
        %v1602 = vpack.c.b16 %v1450, %v1442
        %v1603 = vpack.c.b16 %v1451, %v1443
        %v1604 = vpack.c.b16 %v1452, %v1444
        %v1605 = vpack.c.b16 %v1453, %v1445
        %v1606 = vpack.c.b16 %v1462, %v1454
        %v1607 = vpack.c.b16 %v1463, %v1455
        %v1608 = vpack.c.b16 %v1464, %v1456
        %v1609 = vpack.c.b16 %v1465, %v1457
        %v1610 = vpack.c.b16 %v1466, %v1458
        %v1611 = vpack.c.b16 %v1467, %v1459
        %v1612 = vpack.c.b16 %v1468, %v1460
        %v1613 = vpack.c.b16 %v1469, %v1461
        %v1614 = vpack.c.b16 %v1478, %v1470
        %v1615 = vpack.c.b16 %v1479, %v1471
        %v1616 = vpack.c.b16 %v1480, %v1472
        %v1617 = vpack.c.b16 %v1481, %v1473
        %v1618 = vpack.c.b16 %v1482, %v1474
        %v1619 = vpack.c.b16 %v1483, %v1475
        %v1620 = vpack.c.b16 %v1484, %v1476
        %v1621 = vpack.c.b16 %v1485, %v1477
        %v1622 = vpack.c.b16 %v1494, %v1486
        %v1623 = vpack.c.b16 %v1495, %v1487
        %v1624 = vpack.c.b16 %v1496, %v1488
        %v1625 = vpack.c.b16 %v1497, %v1489
        %v1626 = vpack.c.b16 %v1498, %v1490
        %v1627 = vpack.c.b16 %v1499, %v1491
        %v1628 = vpack.c.b16 %v1500, %v1492
        %v1629 = vpack.c.b16 %v1501, %v1493
        %1758 = vmatprep.subr.bf16.mxu0 %v1559
        %1759 = vmatpush1.bf16.msra.mxu0 %v1558
        %1760 = vmatprep.subr.bf16.mxu0 %v1551
        %1761 = vmatpush1.bf16.msra.mxu0 %v1550
        %1762 = vmatprep.subr.bf16.mxu0 %v1543
        %1763 = vmatpush1.bf16.msra.mxu0 %v1542
        %1764 = vmatprep.subr.bf16.mxu0 %v1535
        %1765 = vmatpush1.bf16.msra.mxu0 %v1534
        %1766 = vmatprep.subr.bf16.mxu0 %v1527
        %1767 = vmatpush1.bf16.msra.mxu0 %v1526
        %1768 = vmatprep.subr.bf16.mxu0 %v1519
        %1769 = vmatpush1.bf16.msra.mxu0 %v1518
        %1770 = vmatprep.subr.bf16.mxu0 %v1511
        %1771 = vmatpush1.bf16.msra.mxu0 %v1510
        %1772 = vmatprep.subr.bf16.mxu0 %v1503
        %1773 = vmatpush1.bf16.msra.mxu0 %v1502
        %1774 = vmatprep.subr.bf16.mxu0 %v1623
        %1775 = vmatpush2.bf16.msra.mxu0 %v1622
        %1776 = vmatprep.subr.bf16.mxu0 %v1615
        %1777 = vmatpush2.bf16.msra.mxu0 %v1614
        %1778 = vmatprep.subr.bf16.mxu0 %v1607
        %1779 = vmatpush2.bf16.msra.mxu0 %v1606
        %1780 = vmatprep.subr.bf16.mxu0 %v1599
        %1781 = vmatpush2.bf16.msra.mxu0 %v1598
        %1782 = vmatprep.subr.bf16.mxu0 %v1591
        %1783 = vmatpush2.bf16.msra.mxu0 %v1590
        %1784 = vmatprep.subr.bf16.mxu0 %v1583
        %1785 = vmatpush2.bf16.msra.mxu0 %v1582
        %1786 = vmatprep.subr.bf16.mxu0 %v1575
        %1787 = vmatpush2.bf16.msra.mxu0 %v1574
        %1788 = vmatprep.subr.bf16.mxu0 %v1567
        %1789 = vmatpush2.bf16.msra.mxu0 %v1566
        %1790 = vmatprep.mubr.bf16.mxu0 %v989
        %1791 = vmatmul.mubr.bf16.gmra.mxu0 %v988
        %v1792 = vpop.f32.mrf.mxu0
        %v1793 = vadd.f32 0.0, %v1792
        %v1794 = vpop.f32.mrf.mxu0
        %v1795 = vadd.f32 0.0, %v1794
        %v1796 = vpop.f32.mrf.mxu0
        %v1797 = vpop.f32.mrf.mxu0
        %1798 = vdwg.mxu0
        %1799 = vmatprep.subr.bf16.mxu0 %v1561
        %1800 = vmatpush1.bf16.msra.mxu0 %v1560
        %1801 = vmatprep.subr.bf16.mxu0 %v1553
        %1802 = vmatpush1.bf16.msra.mxu0 %v1552
        %1803 = vmatprep.subr.bf16.mxu0 %v1545
        %1804 = vmatpush1.bf16.msra.mxu0 %v1544
        %1805 = vmatprep.subr.bf16.mxu0 %v1537
        %1806 = vmatpush1.bf16.msra.mxu0 %v1536
        %1807 = vmatprep.subr.bf16.mxu0 %v1529
        %1808 = vmatpush1.bf16.msra.mxu0 %v1528
        %1809 = vmatprep.subr.bf16.mxu0 %v1521
        %1810 = vmatpush1.bf16.msra.mxu0 %v1520
        %1811 = vmatprep.subr.bf16.mxu0 %v1513
        %1812 = vmatpush1.bf16.msra.mxu0 %v1512
        %1813 = vmatprep.subr.bf16.mxu0 %v1505
        %1814 = vmatpush1.bf16.msra.mxu0 %v1504
        %1815 = vmatprep.subr.bf16.mxu0 %v1625
        %1816 = vmatpush2.bf16.msra.mxu0 %v1624
        %1817 = vmatprep.subr.bf16.mxu0 %v1617
        %1818 = vmatpush2.bf16.msra.mxu0 %v1616
        %1819 = vmatprep.subr.bf16.mxu0 %v1609
        %1820 = vmatpush2.bf16.msra.mxu0 %v1608
        %1821 = vmatprep.subr.bf16.mxu0 %v1601
        %1822 = vmatpush2.bf16.msra.mxu0 %v1600
        %1823 = vmatprep.subr.bf16.mxu0 %v1593
        %1824 = vmatpush2.bf16.msra.mxu0 %v1592
        %1825 = vmatprep.subr.bf16.mxu0 %v1585
        %1826 = vmatpush2.bf16.msra.mxu0 %v1584
        %1827 = vmatprep.subr.bf16.mxu0 %v1577
        %1828 = vmatpush2.bf16.msra.mxu0 %v1576
        %1829 = vmatprep.subr.bf16.mxu0 %v1569
        %1830 = vmatpush2.bf16.msra.mxu0 %v1568
        %1831 = vmatprep.mubr.bf16.mxu0 %v989
        %1832 = vmatmul.mubr.bf16.gmra.mxu0 %v988
        %v1833 = vpop.f32.mrf.mxu0
        %v1834 = vadd.f32 0.0, %v1833
        %v1835 = vpop.f32.mrf.mxu0
        %v1836 = vadd.f32 0.0, %v1835
        %v1837 = vpop.f32.mrf.mxu0
        %v1838 = vpop.f32.mrf.mxu0
        %1839 = vdwg.mxu0
        %1840 = vmatprep.subr.bf16.mxu0 %v1563
        %1841 = vmatpush1.bf16.msra.mxu0 %v1562
        %1842 = vmatprep.subr.bf16.mxu0 %v1555
        %1843 = vmatpush1.bf16.msra.mxu0 %v1554
        %1844 = vmatprep.subr.bf16.mxu0 %v1547
        %1845 = vmatpush1.bf16.msra.mxu0 %v1546
        %1846 = vmatprep.subr.bf16.mxu0 %v1539
        %1847 = vmatpush1.bf16.msra.mxu0 %v1538
        %1848 = vmatprep.subr.bf16.mxu0 %v1531
        %1849 = vmatpush1.bf16.msra.mxu0 %v1530
        %1850 = vmatprep.subr.bf16.mxu0 %v1523
        %1851 = vmatpush1.bf16.msra.mxu0 %v1522
        %1852 = vmatprep.subr.bf16.mxu0 %v1515
        %1853 = vmatpush1.bf16.msra.mxu0 %v1514
        %1854 = vmatprep.subr.bf16.mxu0 %v1507
        %1855 = vmatpush1.bf16.msra.mxu0 %v1506
        %1856 = vmatprep.subr.bf16.mxu0 %v1627
        %1857 = vmatpush2.bf16.msra.mxu0 %v1626
        %1858 = vmatprep.subr.bf16.mxu0 %v1619
        %1859 = vmatpush2.bf16.msra.mxu0 %v1618
        %1860 = vmatprep.subr.bf16.mxu0 %v1611
        %1861 = vmatpush2.bf16.msra.mxu0 %v1610
        %1862 = vmatprep.subr.bf16.mxu0 %v1603
        %1863 = vmatpush2.bf16.msra.mxu0 %v1602
        %1864 = vmatprep.subr.bf16.mxu0 %v1595
        %1865 = vmatpush2.bf16.msra.mxu0 %v1594
        %1866 = vmatprep.subr.bf16.mxu0 %v1587
        %1867 = vmatpush2.bf16.msra.mxu0 %v1586
        %1868 = vmatprep.subr.bf16.mxu0 %v1579
        %1869 = vmatpush2.bf16.msra.mxu0 %v1578
        %1870 = vmatprep.subr.bf16.mxu0 %v1571
        %1871 = vmatpush2.bf16.msra.mxu0 %v1570
        %1872 = vmatprep.mubr.bf16.mxu0 %v989
        %1873 = vmatmul.mubr.bf16.gmra.mxu0 %v988
        %v1874 = vpop.f32.mrf.mxu0
        %v1875 = vadd.f32 0.0, %v1874
        %v1876 = vpop.f32.mrf.mxu0
        %v1877 = vadd.f32 0.0, %v1876
        %v1878 = vpop.f32.mrf.mxu0
        %v1879 = vpop.f32.mrf.mxu0
        %1880 = vdwg.mxu0
        %1881 = vmatprep.subr.bf16.mxu0 %v1565
        %1882 = vmatpush1.bf16.msra.mxu0 %v1564
        %1883 = vmatprep.subr.bf16.mxu0 %v1557
        %1884 = vmatpush1.bf16.msra.mxu0 %v1556
        %1885 = vmatprep.subr.bf16.mxu0 %v1549
        %1886 = vmatpush1.bf16.msra.mxu0 %v1548
        %1887 = vmatprep.subr.bf16.mxu0 %v1541
        %1888 = vmatpush1.bf16.msra.mxu0 %v1540
        %1889 = vmatprep.subr.bf16.mxu0 %v1533
        %1890 = vmatpush1.bf16.msra.mxu0 %v1532
        %1891 = vmatprep.subr.bf16.mxu0 %v1525
        %1892 = vmatpush1.bf16.msra.mxu0 %v1524
        %1893 = vmatprep.subr.bf16.mxu0 %v1517
        %1894 = vmatpush1.bf16.msra.mxu0 %v1516
        %1895 = vmatprep.subr.bf16.mxu0 %v1509
        %1896 = vmatpush1.bf16.msra.mxu0 %v1508
        %1897 = vmatprep.subr.bf16.mxu0 %v1629
        %1898 = vmatpush2.bf16.msra.mxu0 %v1628
        %1899 = vmatprep.subr.bf16.mxu0 %v1621
        %1900 = vmatpush2.bf16.msra.mxu0 %v1620
        %1901 = vmatprep.subr.bf16.mxu0 %v1613
        %1902 = vmatpush2.bf16.msra.mxu0 %v1612
        %1903 = vmatprep.subr.bf16.mxu0 %v1605
        %1904 = vmatpush2.bf16.msra.mxu0 %v1604
        %1905 = vmatprep.subr.bf16.mxu0 %v1597
        %1906 = vmatpush2.bf16.msra.mxu0 %v1596
        %1907 = vmatprep.subr.bf16.mxu0 %v1589
        %1908 = vmatpush2.bf16.msra.mxu0 %v1588
        %1909 = vmatprep.subr.bf16.mxu0 %v1581
        %1910 = vmatpush2.bf16.msra.mxu0 %v1580
        %1911 = vmatprep.subr.bf16.mxu0 %v1573
        %1912 = vmatpush2.bf16.msra.mxu0 %v1572
        %1913 = vmatprep.mubr.bf16.mxu0 %v989
        %1914 = vmatmul.mubr.bf16.gmra.mxu0 %v988
        %v1915 = vpop.f32.mrf.mxu0
        %v1916 = vadd.f32 0.0, %v1915
        %v1917 = vpop.f32.mrf.mxu0
        %v1918 = vadd.f32 0.0, %v1917
        %v1919 = vpop.f32.mrf.mxu0
        %v1920 = vpop.f32.mrf.mxu0
        %1921 = vdwg.mxu0
        %v1926 = vcombine.low %v1793, %v1795
        %v1927 = vcombine.low %v1834, %v1836
        %v1930 = vadd.f32 %v978, %v1926
        %v1931 = vadd.f32 %v979, %v1927
        %v1932 = vxor.u32 %v1930, 2147483648
        %v1933 = vmul.f32 %v1932, 1.442695
        %v1934 = vpow.pop %v1933
        %v1935 = vadd.f32 %v1934, 1.0
        %v1936 = vrcp.pop %v1935
        %v1937 = vmul.f32 1.0, %v1936
        %v1939 = vrot.slane %v1930, 4
        %v1941 = vxor.u32 %v1939, 2147483648
        %v1942 = vmul.f32 %v1941, 1.442695
        %v1943 = vpow.pop %v1942
        %v1944 = vadd.f32 %v1943, 1.0
        %v1945 = vrcp.pop %v1944
        %v1946 = vmul.f32 1.0, %v1945
        %v1947 = vtanh.pop %v1931
        %v1949 = vrot.slane %v1931, 4
        %v1951 = vxor.u32 %v1949, 2147483648
        %v1952 = vmul.f32 %v1951, 1.442695
        %v1953 = vpow.pop %v1952
        %v1954 = vadd.f32 %v1953, 1.0
        %v1955 = vrcp.pop %v1954
        %v1956 = vmul.f32 1.0, %v1955
        %v1957 = vmul.f32 %v1946, %v984
        %v1958 = vmul.f32 %v1937, %v1947
        %v1959 = vadd.f32 %v1957, %v1958
        %v1960 = vtanh.pop %v1959
        %v1961 = vmul.f32 %v1956, %v1960
        %v1966 = vcombine.low %v1875, %v1877
        %v1967 = vcombine.low %v1916, %v1918
        %v1970 = vadd.f32 %v981, %v1966
        %v1971 = vadd.f32 %v982, %v1967
        %v1972 = vxor.u32 %v1970, 2147483648
        %v1973 = vmul.f32 %v1972, 1.442695
        %v1974 = vpow.pop %v1973
        %v1975 = vadd.f32 %v1974, 1.0
        %v1976 = vrcp.pop %v1975
        %v1977 = vmul.f32 1.0, %v1976
        %v1979 = vrot.slane %v1970, 4
        %v1981 = vxor.u32 %v1979, 2147483648
        %v1982 = vmul.f32 %v1981, 1.442695
        %v1983 = vpow.pop %v1982
        %v1984 = vadd.f32 %v1983, 1.0
        %v1985 = vrcp.pop %v1984
        %v1986 = vmul.f32 1.0, %v1985
        %v1987 = vtanh.pop %v1971
        %v1989 = vrot.slane %v1971, 4
        %v1991 = vxor.u32 %v1989, 2147483648
        %v1992 = vmul.f32 %v1991, 1.442695
        %v1993 = vpow.pop %v1992
        %v1994 = vadd.f32 %v1993, 1.0
        %v1995 = vrcp.pop %v1994
        %v1996 = vmul.f32 1.0, %v1995
        %v1998 = vrot.slane %v984, 4
        %v2000 = vmul.f32 %v1986, %v1998
        %v2001 = vmul.f32 %v1977, %v1987
        %v2002 = vadd.f32 %v2000, %v2001
        %v2003 = vtanh.pop %v2002
        %v2004 = vmul.f32 %v1996, %v2003
        %v2005 = vstv %s976
        %vm2006 = vcmp.gt.s32.totalorder %v975, %v2005
        %v2007 = vstv %s977
        %vm2008 = vcmp.gt.s32.totalorder %v975, %v2007
        %v2009 = vsel %vm2006, 1, 0
        %2010 = vset.pattern.permute.xlu0 0
        %2011 = vperm.xlu0 %2010, %v2009
        %v2012 = vpop.permute.xlu0 %2011
        %vm2013 = vcmp.eq.s32.totalorder %v2012, 1
        %v2014 = vsel %vm2013, %v1961, %v983
        %2015 = vst [vmem:[#allocation3] sm:$0xf] %v2014
        %v2016 = vsel %vm2008, 1, 0
        %2017 = vset.pattern.permute.xlu0 0
        %2018 = vperm.xlu0 %2017, %v2016
        %v2019 = vpop.permute.xlu0 %2018
        %vm2020 = vcmp.eq.s32.totalorder %v2019, 1
        %v2021 = vsel %vm2020, %v2004, %v986
        %2022 = vst [vmem:[#allocation3 + $0x4] sm:$0xf] %v2021
        %v2023 = vsel %vm2013, %v1959, %v984
        %2024 = vst [vmem:[#allocation4] sm:$0xf] %v2023
        %v2025 = vcombine.high %v984, %v984
        %v2027 = vsel %vm2020, %v2002, %v2025
        %2028 = vst [vmem:[#allocation4 + $0x4] sm:$0xf] %v2027
        %v2029 = vsel %vm2013, %v1961, 0.0
        %2030 = vst [vmem:[%s414] sm:$0xf] %v2029
        %v2031 = vsel %vm2020, %v2004, 0.0
        %s2032 = scalar_lea.vmem %s424, 12
        %2033 = vst [vmem:[%s2032] sm:$0xf] %v2031
        %s2034 = sadd.s32 %s976, 1
        %s2035 = ssub.s32 6, %s976
        %s2036 = scalar_lea.vmem [#allocation2], 32
        %v2037 = vld [vmem:[%s2036] sm:$0xff]
        %v2038 = vld [vmem:[%s2036 + $0x8] sm:$0xff]
        %s2039 = scalar_lea.vmem [#allocation2], 64
        %v2040 = vld [vmem:[%s2039 + $0x10] sm:$0xff]
        %v2041 = vld [vmem:[%s2039 + $0x18] sm:$0xff]
        %v2042 = vld [vmem:[#allocation3] sm:$0xff]
        %v2043 = vld [vmem:[#allocation4] sm:$0xff]
        %v2045 = vcombine.high %v2042, %v2042
        %v2047 = vpack.c.bf16 %v2042, %v2042
        %v2048 = vpack.c.bf16 %v2045, %v2045
        %v2049 = vld [vmem:[#allocation7] sm:$0xff]
        %v2050 = vld [vmem:[#allocation7 + $0x8] sm:$0xff]
        %v2051 = vld [vmem:[#allocation7 + $0x10] sm:$0xff]
        %v2052 = vld [vmem:[#allocation7 + $0x18] sm:$0xff]
        %v2053 = vld [vmem:[#allocation7 + $0x20] sm:$0xff]
        %v2054 = vld [vmem:[#allocation7 + $0x28] sm:$0xff]
        %v2055 = vld [vmem:[#allocation7 + $0x30] sm:$0xff]
        %v2056 = vld [vmem:[#allocation7 + $0x38] sm:$0xff]
        %v2057 = vld [vmem:[#allocation7 + $0x40] sm:$0xff]
        %v2058 = vld [vmem:[#allocation7 + $0x48] sm:$0xff]
        %v2059 = vld [vmem:[#allocation7 + $0x50] sm:$0xff]
        %v2060 = vld [vmem:[#allocation7 + $0x58] sm:$0xff]
        %v2061 = vld [vmem:[#allocation7 + $0x60] sm:$0xff]
        %v2062 = vld [vmem:[#allocation7 + $0x68] sm:$0xff]
        %v2063 = vld [vmem:[#allocation7 + $0x70] sm:$0xff]
        %v2064 = vld [vmem:[#allocation7 + $0x78] sm:$0xff]
        %v2065 = vld [vmem:[#allocation7 + $0x80] sm:$0xff]
        %v2066 = vld [vmem:[#allocation7 + $0x88] sm:$0xff]
        %v2067 = vld [vmem:[#allocation7 + $0x90] sm:$0xff]
        %v2068 = vld [vmem:[#allocation7 + $0x98] sm:$0xff]
        %v2069 = vld [vmem:[#allocation7 + $0xa0] sm:$0xff]
        %v2070 = vld [vmem:[#allocation7 + $0xa8] sm:$0xff]
        %v2071 = vld [vmem:[#allocation7 + $0xb0] sm:$0xff]
        %v2072 = vld [vmem:[#allocation7 + $0xb8] sm:$0xff]
        %v2073 = vld [vmem:[#allocation7 + $0xc0] sm:$0xff]
        %v2074 = vld [vmem:[#allocation7 + $0xc8] sm:$0xff]
        %v2075 = vld [vmem:[#allocation7 + $0xd0] sm:$0xff]
        %v2076 = vld [vmem:[#allocation7 + $0xd8] sm:$0xff]
        %v2077 = vld [vmem:[#allocation7 + $0xe0] sm:$0xff]
        %v2078 = vld [vmem:[#allocation7 + $0xe8] sm:$0xff]
        %v2079 = vld [vmem:[#allocation7 + $0xf0] sm:$0xff]
        %v2080 = vld [vmem:[#allocation7 + $0xf8] sm:$0xff]
        %v2081 = vld [vmem:[#allocation7 + $0x100] sm:$0xff]
        %v2082 = vld [vmem:[#allocation7 + $0x108] sm:$0xff]
        %v2083 = vld [vmem:[#allocation7 + $0x110] sm:$0xff]
        %v2084 = vld [vmem:[#allocation7 + $0x118] sm:$0xff]
        %v2085 = vld [vmem:[#allocation7 + $0x120] sm:$0xff]
        %v2086 = vld [vmem:[#allocation7 + $0x128] sm:$0xff]
        %v2087 = vld [vmem:[#allocation7 + $0x130] sm:$0xff]
        %v2088 = vld [vmem:[#allocation7 + $0x138] sm:$0xff]
        %v2089 = vld [vmem:[#allocation7 + $0x140] sm:$0xff]
        %v2090 = vld [vmem:[#allocation7 + $0x148] sm:$0xff]
        %v2091 = vld [vmem:[#allocation7 + $0x150] sm:$0xff]
        %v2092 = vld [vmem:[#allocation7 + $0x158] sm:$0xff]
        %v2093 = vld [vmem:[#allocation7 + $0x160] sm:$0xff]
        %v2094 = vld [vmem:[#allocation7 + $0x168] sm:$0xff]
        %v2095 = vld [vmem:[#allocation7 + $0x170] sm:$0xff]
        %v2096 = vld [vmem:[#allocation7 + $0x178] sm:$0xff]
        %v2097 = vld [vmem:[#allocation7 + $0x180] sm:$0xff]
        %v2098 = vld [vmem:[#allocation7 + $0x188] sm:$0xff]
        %v2099 = vld [vmem:[#allocation7 + $0x190] sm:$0xff]
        %v2100 = vld [vmem:[#allocation7 + $0x198] sm:$0xff]
        %v2101 = vld [vmem:[#allocation7 + $0x1a0] sm:$0xff]
        %v2102 = vld [vmem:[#allocation7 + $0x1a8] sm:$0xff]
        %v2103 = vld [vmem:[#allocation7 + $0x1b0] sm:$0xff]
        %v2104 = vld [vmem:[#allocation7 + $0x1b8] sm:$0xff]
        %v2105 = vld [vmem:[#allocation7 + $0x1c0] sm:$0xff]
        %v2106 = vld [vmem:[#allocation7 + $0x1c8] sm:$0xff]
        %v2107 = vld [vmem:[#allocation7 + $0x1d0] sm:$0xff]
        %v2108 = vld [vmem:[#allocation7 + $0x1d8] sm:$0xff]
        %v2109 = vld [vmem:[#allocation7 + $0x1e0] sm:$0xff]
        %v2110 = vld [vmem:[#allocation7 + $0x1e8] sm:$0xff]
        %v2111 = vld [vmem:[#allocation7 + $0x1f0] sm:$0xff]
        %v2112 = vld [vmem:[#allocation7 + $0x1f8] sm:$0xff]
        %v2113 = vld [vmem:[#allocation7 + $0x200] sm:$0xff]
        %v2114 = vld [vmem:[#allocation7 + $0x208] sm:$0xff]
        %v2115 = vld [vmem:[#allocation7 + $0x210] sm:$0xff]
        %v2116 = vld [vmem:[#allocation7 + $0x218] sm:$0xff]
        %v2117 = vld [vmem:[#allocation7 + $0x220] sm:$0xff]
        %v2118 = vld [vmem:[#allocation7 + $0x228] sm:$0xff]
        %v2119 = vld [vmem:[#allocation7 + $0x230] sm:$0xff]
        %v2120 = vld [vmem:[#allocation7 + $0x238] sm:$0xff]
        %v2121 = vld [vmem:[#allocation7 + $0x240] sm:$0xff]
        %v2122 = vld [vmem:[#allocation7 + $0x248] sm:$0xff]
        %v2123 = vld [vmem:[#allocation7 + $0x250] sm:$0xff]
        %v2124 = vld [vmem:[#allocation7 + $0x258] sm:$0xff]
        %v2125 = vld [vmem:[#allocation7 + $0x260] sm:$0xff]
        %v2126 = vld [vmem:[#allocation7 + $0x268] sm:$0xff]
        %v2127 = vld [vmem:[#allocation7 + $0x270] sm:$0xff]
        %v2128 = vld [vmem:[#allocation7 + $0x278] sm:$0xff]
        %v2129 = vld [vmem:[#allocation7 + $0x280] sm:$0xff]
        %v2130 = vld [vmem:[#allocation7 + $0x288] sm:$0xff]
        %v2131 = vld [vmem:[#allocation7 + $0x290] sm:$0xff]
        %v2132 = vld [vmem:[#allocation7 + $0x298] sm:$0xff]
        %v2133 = vld [vmem:[#allocation7 + $0x2a0] sm:$0xff]
        %v2134 = vld [vmem:[#allocation7 + $0x2a8] sm:$0xff]
        %v2135 = vld [vmem:[#allocation7 + $0x2b0] sm:$0xff]
        %v2136 = vld [vmem:[#allocation7 + $0x2b8] sm:$0xff]
        %v2137 = vld [vmem:[#allocation7 + $0x2c0] sm:$0xff]
        %v2138 = vld [vmem:[#allocation7 + $0x2c8] sm:$0xff]
        %v2139 = vld [vmem:[#allocation7 + $0x2d0] sm:$0xff]
        %v2140 = vld [vmem:[#allocation7 + $0x2d8] sm:$0xff]
        %v2141 = vld [vmem:[#allocation7 + $0x2e0] sm:$0xff]
        %v2142 = vld [vmem:[#allocation7 + $0x2e8] sm:$0xff]
        %v2143 = vld [vmem:[#allocation7 + $0x2f0] sm:$0xff]
        %v2144 = vld [vmem:[#allocation7 + $0x2f8] sm:$0xff]
        %v2145 = vld [vmem:[#allocation7 + $0x300] sm:$0xff]
        %v2146 = vld [vmem:[#allocation7 + $0x308] sm:$0xff]
        %v2147 = vld [vmem:[#allocation7 + $0x310] sm:$0xff]
        %v2148 = vld [vmem:[#allocation7 + $0x318] sm:$0xff]
        %v2149 = vld [vmem:[#allocation7 + $0x320] sm:$0xff]
        %v2150 = vld [vmem:[#allocation7 + $0x328] sm:$0xff]
        %v2151 = vld [vmem:[#allocation7 + $0x330] sm:$0xff]
        %v2152 = vld [vmem:[#allocation7 + $0x338] sm:$0xff]
        %v2153 = vld [vmem:[#allocation7 + $0x340] sm:$0xff]
        %v2154 = vld [vmem:[#allocation7 + $0x348] sm:$0xff]
        %v2155 = vld [vmem:[#allocation7 + $0x350] sm:$0xff]
        %v2156 = vld [vmem:[#allocation7 + $0x358] sm:$0xff]
        %v2157 = vld [vmem:[#allocation7 + $0x360] sm:$0xff]
        %v2158 = vld [vmem:[#allocation7 + $0x368] sm:$0xff]
        %v2159 = vld [vmem:[#allocation7 + $0x370] sm:$0xff]
        %v2160 = vld [vmem:[#allocation7 + $0x378] sm:$0xff]
        %v2161 = vld [vmem:[#allocation7 + $0x380] sm:$0xff]
        %v2162 = vld [vmem:[#allocation7 + $0x388] sm:$0xff]
        %v2163 = vld [vmem:[#allocation7 + $0x390] sm:$0xff]
        %v2164 = vld [vmem:[#allocation7 + $0x398] sm:$0xff]
        %v2165 = vld [vmem:[#allocation7 + $0x3a0] sm:$0xff]
        %v2166 = vld [vmem:[#allocation7 + $0x3a8] sm:$0xff]
        %v2167 = vld [vmem:[#allocation7 + $0x3b0] sm:$0xff]
        %v2168 = vld [vmem:[#allocation7 + $0x3b8] sm:$0xff]
        %v2169 = vld [vmem:[#allocation7 + $0x3c0] sm:$0xff]
        %v2170 = vld [vmem:[#allocation7 + $0x3c8] sm:$0xff]
        %v2171 = vld [vmem:[#allocation7 + $0x3d0] sm:$0xff]
        %v2172 = vld [vmem:[#allocation7 + $0x3d8] sm:$0xff]
        %v2173 = vld [vmem:[#allocation7 + $0x3e0] sm:$0xff]
        %v2174 = vld [vmem:[#allocation7 + $0x3e8] sm:$0xff]
        %v2175 = vld [vmem:[#allocation7 + $0x3f0] sm:$0xff]
        %v2176 = vld [vmem:[#allocation7 + $0x3f8] sm:$0xff]
        %v2305 = vunpack.c.l.b16 %v2049
        %v2306 = vunpack.c.h.b16 %v2049
        %v2307 = vunpack.c.l.b16 %v2050
        %v2308 = vunpack.c.h.b16 %v2050
        %v2309 = vunpack.c.l.b16 %v2051
        %v2310 = vunpack.c.h.b16 %v2051
        %v2311 = vunpack.c.l.b16 %v2052
        %v2312 = vunpack.c.h.b16 %v2052
        %v2313 = vunpack.c.l.b16 %v2053
        %v2314 = vunpack.c.h.b16 %v2053
        %v2315 = vunpack.c.l.b16 %v2054
        %v2316 = vunpack.c.h.b16 %v2054
        %v2317 = vunpack.c.l.b16 %v2055
        %v2318 = vunpack.c.h.b16 %v2055
        %v2319 = vunpack.c.l.b16 %v2056
        %v2320 = vunpack.c.h.b16 %v2056
        %v2321 = vunpack.c.l.b16 %v2057
        %v2322 = vunpack.c.h.b16 %v2057
        %v2323 = vunpack.c.l.b16 %v2058
        %v2324 = vunpack.c.h.b16 %v2058
        %v2325 = vunpack.c.l.b16 %v2059
        %v2326 = vunpack.c.h.b16 %v2059
        %v2327 = vunpack.c.l.b16 %v2060
        %v2328 = vunpack.c.h.b16 %v2060
        %v2329 = vunpack.c.l.b16 %v2061
        %v2330 = vunpack.c.h.b16 %v2061
        %v2331 = vunpack.c.l.b16 %v2062
        %v2332 = vunpack.c.h.b16 %v2062
        %v2333 = vunpack.c.l.b16 %v2063
        %v2334 = vunpack.c.h.b16 %v2063
        %v2335 = vunpack.c.l.b16 %v2064
        %v2336 = vunpack.c.h.b16 %v2064
        %v2337 = vunpack.c.l.b16 %v2065
        %v2338 = vunpack.c.h.b16 %v2065
        %v2339 = vunpack.c.l.b16 %v2066
        %v2340 = vunpack.c.h.b16 %v2066
        %v2341 = vunpack.c.l.b16 %v2067
        %v2342 = vunpack.c.h.b16 %v2067
        %v2343 = vunpack.c.l.b16 %v2068
        %v2344 = vunpack.c.h.b16 %v2068
        %v2345 = vunpack.c.l.b16 %v2069
        %v2346 = vunpack.c.h.b16 %v2069
        %v2347 = vunpack.c.l.b16 %v2070
        %v2348 = vunpack.c.h.b16 %v2070
        %v2349 = vunpack.c.l.b16 %v2071
        %v2350 = vunpack.c.h.b16 %v2071
        %v2351 = vunpack.c.l.b16 %v2072
        %v2352 = vunpack.c.h.b16 %v2072
        %v2353 = vunpack.c.l.b16 %v2073
        %v2354 = vunpack.c.h.b16 %v2073
        %v2355 = vunpack.c.l.b16 %v2074
        %v2356 = vunpack.c.h.b16 %v2074
        %v2357 = vunpack.c.l.b16 %v2075
        %v2358 = vunpack.c.h.b16 %v2075
        %v2359 = vunpack.c.l.b16 %v2076
        %v2360 = vunpack.c.h.b16 %v2076
        %v2361 = vunpack.c.l.b16 %v2077
        %v2362 = vunpack.c.h.b16 %v2077
        %v2363 = vunpack.c.l.b16 %v2078
        %v2364 = vunpack.c.h.b16 %v2078
        %v2365 = vunpack.c.l.b16 %v2079
        %v2366 = vunpack.c.h.b16 %v2079
        %v2367 = vunpack.c.l.b16 %v2080
        %v2368 = vunpack.c.h.b16 %v2080
        %v2369 = vunpack.c.l.b16 %v2081
        %v2370 = vunpack.c.h.b16 %v2081
        %v2371 = vunpack.c.l.b16 %v2082
        %v2372 = vunpack.c.h.b16 %v2082
        %v2373 = vunpack.c.l.b16 %v2083
        %v2374 = vunpack.c.h.b16 %v2083
        %v2375 = vunpack.c.l.b16 %v2084
        %v2376 = vunpack.c.h.b16 %v2084
        %v2377 = vunpack.c.l.b16 %v2085
        %v2378 = vunpack.c.h.b16 %v2085
        %v2379 = vunpack.c.l.b16 %v2086
        %v2380 = vunpack.c.h.b16 %v2086
        %v2381 = vunpack.c.l.b16 %v2087
        %v2382 = vunpack.c.h.b16 %v2087
        %v2383 = vunpack.c.l.b16 %v2088
        %v2384 = vunpack.c.h.b16 %v2088
        %v2385 = vunpack.c.l.b16 %v2089
        %v2386 = vunpack.c.h.b16 %v2089
        %v2387 = vunpack.c.l.b16 %v2090
        %v2388 = vunpack.c.h.b16 %v2090
        %v2389 = vunpack.c.l.b16 %v2091
        %v2390 = vunpack.c.h.b16 %v2091
        %v2391 = vunpack.c.l.b16 %v2092
        %v2392 = vunpack.c.h.b16 %v2092
        %v2393 = vunpack.c.l.b16 %v2093
        %v2394 = vunpack.c.h.b16 %v2093
        %v2395 = vunpack.c.l.b16 %v2094
        %v2396 = vunpack.c.h.b16 %v2094
        %v2397 = vunpack.c.l.b16 %v2095
        %v2398 = vunpack.c.h.b16 %v2095
        %v2399 = vunpack.c.l.b16 %v2096
        %v2400 = vunpack.c.h.b16 %v2096
        %v2401 = vunpack.c.l.b16 %v2097
        %v2402 = vunpack.c.h.b16 %v2097
        %v2403 = vunpack.c.l.b16 %v2098
        %v2404 = vunpack.c.h.b16 %v2098
        %v2405 = vunpack.c.l.b16 %v2099
        %v2406 = vunpack.c.h.b16 %v2099
        %v2407 = vunpack.c.l.b16 %v2100
        %v2408 = vunpack.c.h.b16 %v2100
        %v2409 = vunpack.c.l.b16 %v2101
        %v2410 = vunpack.c.h.b16 %v2101
        %v2411 = vunpack.c.l.b16 %v2102
        %v2412 = vunpack.c.h.b16 %v2102
        %v2413 = vunpack.c.l.b16 %v2103
        %v2414 = vunpack.c.h.b16 %v2103
        %v2415 = vunpack.c.l.b16 %v2104
        %v2416 = vunpack.c.h.b16 %v2104
        %v2417 = vunpack.c.l.b16 %v2105
        %v2418 = vunpack.c.h.b16 %v2105
        %v2419 = vunpack.c.l.b16 %v2106
        %v2420 = vunpack.c.h.b16 %v2106
        %v2421 = vunpack.c.l.b16 %v2107
        %v2422 = vunpack.c.h.b16 %v2107
        %v2423 = vunpack.c.l.b16 %v2108
        %v2424 = vunpack.c.h.b16 %v2108
        %v2425 = vunpack.c.l.b16 %v2109
        %v2426 = vunpack.c.h.b16 %v2109
        %v2427 = vunpack.c.l.b16 %v2110
        %v2428 = vunpack.c.h.b16 %v2110
        %v2429 = vunpack.c.l.b16 %v2111
        %v2430 = vunpack.c.h.b16 %v2111
        %v2431 = vunpack.c.l.b16 %v2112
        %v2432 = vunpack.c.h.b16 %v2112
        %v2433 = vunpack.c.l.b16 %v2113
        %v2434 = vunpack.c.h.b16 %v2113
        %v2435 = vunpack.c.l.b16 %v2114
        %v2436 = vunpack.c.h.b16 %v2114
        %v2437 = vunpack.c.l.b16 %v2115
        %v2438 = vunpack.c.h.b16 %v2115
        %v2439 = vunpack.c.l.b16 %v2116
        %v2440 = vunpack.c.h.b16 %v2116
        %v2441 = vunpack.c.l.b16 %v2117
        %v2442 = vunpack.c.h.b16 %v2117
        %v2443 = vunpack.c.l.b16 %v2118
        %v2444 = vunpack.c.h.b16 %v2118
        %v2445 = vunpack.c.l.b16 %v2119
        %v2446 = vunpack.c.h.b16 %v2119
        %v2447 = vunpack.c.l.b16 %v2120
        %v2448 = vunpack.c.h.b16 %v2120
        %v2449 = vunpack.c.l.b16 %v2121
        %v2450 = vunpack.c.h.b16 %v2121
        %v2451 = vunpack.c.l.b16 %v2122
        %v2452 = vunpack.c.h.b16 %v2122
        %v2453 = vunpack.c.l.b16 %v2123
        %v2454 = vunpack.c.h.b16 %v2123
        %v2455 = vunpack.c.l.b16 %v2124
        %v2456 = vunpack.c.h.b16 %v2124
        %v2457 = vunpack.c.l.b16 %v2125
        %v2458 = vunpack.c.h.b16 %v2125
        %v2459 = vunpack.c.l.b16 %v2126
        %v2460 = vunpack.c.h.b16 %v2126
        %v2461 = vunpack.c.l.b16 %v2127
        %v2462 = vunpack.c.h.b16 %v2127
        %v2463 = vunpack.c.l.b16 %v2128
        %v2464 = vunpack.c.h.b16 %v2128
        %v2465 = vunpack.c.l.b16 %v2129
        %v2466 = vunpack.c.h.b16 %v2129
        %v2467 = vunpack.c.l.b16 %v2130
        %v2468 = vunpack.c.h.b16 %v2130
        %v2469 = vunpack.c.l.b16 %v2131
        %v2470 = vunpack.c.h.b16 %v2131
        %v2471 = vunpack.c.l.b16 %v2132
        %v2472 = vunpack.c.h.b16 %v2132
        %v2473 = vunpack.c.l.b16 %v2133
        %v2474 = vunpack.c.h.b16 %v2133
        %v2475 = vunpack.c.l.b16 %v2134
        %v2476 = vunpack.c.h.b16 %v2134
        %v2477 = vunpack.c.l.b16 %v2135
        %v2478 = vunpack.c.h.b16 %v2135
        %v2479 = vunpack.c.l.b16 %v2136
        %v2480 = vunpack.c.h.b16 %v2136
        %v2481 = vunpack.c.l.b16 %v2137
        %v2482 = vunpack.c.h.b16 %v2137
        %v2483 = vunpack.c.l.b16 %v2138
        %v2484 = vunpack.c.h.b16 %v2138
        %v2485 = vunpack.c.l.b16 %v2139
        %v2486 = vunpack.c.h.b16 %v2139
        %v2487 = vunpack.c.l.b16 %v2140
        %v2488 = vunpack.c.h.b16 %v2140
        %v2489 = vunpack.c.l.b16 %v2141
        %v2490 = vunpack.c.h.b16 %v2141
        %v2491 = vunpack.c.l.b16 %v2142
        %v2492 = vunpack.c.h.b16 %v2142
        %v2493 = vunpack.c.l.b16 %v2143
        %v2494 = vunpack.c.h.b16 %v2143
        %v2495 = vunpack.c.l.b16 %v2144
        %v2496 = vunpack.c.h.b16 %v2144
        %v2497 = vunpack.c.l.b16 %v2145
        %v2498 = vunpack.c.h.b16 %v2145
        %v2499 = vunpack.c.l.b16 %v2146
        %v2500 = vunpack.c.h.b16 %v2146
        %v2501 = vunpack.c.l.b16 %v2147
        %v2502 = vunpack.c.h.b16 %v2147
        %v2503 = vunpack.c.l.b16 %v2148
        %v2504 = vunpack.c.h.b16 %v2148
        %v2505 = vunpack.c.l.b16 %v2149
        %v2506 = vunpack.c.h.b16 %v2149
        %v2507 = vunpack.c.l.b16 %v2150
        %v2508 = vunpack.c.h.b16 %v2150
        %v2509 = vunpack.c.l.b16 %v2151
        %v2510 = vunpack.c.h.b16 %v2151
        %v2511 = vunpack.c.l.b16 %v2152
        %v2512 = vunpack.c.h.b16 %v2152
        %v2513 = vunpack.c.l.b16 %v2153
        %v2514 = vunpack.c.h.b16 %v2153
        %v2515 = vunpack.c.l.b16 %v2154
        %v2516 = vunpack.c.h.b16 %v2154
        %v2517 = vunpack.c.l.b16 %v2155
        %v2518 = vunpack.c.h.b16 %v2155
        %v2519 = vunpack.c.l.b16 %v2156
        %v2520 = vunpack.c.h.b16 %v2156
        %v2521 = vunpack.c.l.b16 %v2157
        %v2522 = vunpack.c.h.b16 %v2157
        %v2523 = vunpack.c.l.b16 %v2158
        %v2524 = vunpack.c.h.b16 %v2158
        %v2525 = vunpack.c.l.b16 %v2159
        %v2526 = vunpack.c.h.b16 %v2159
        %v2527 = vunpack.c.l.b16 %v2160
        %v2528 = vunpack.c.h.b16 %v2160
        %v2529 = vunpack.c.l.b16 %v2161
        %v2530 = vunpack.c.h.b16 %v2161
        %v2531 = vunpack.c.l.b16 %v2162
        %v2532 = vunpack.c.h.b16 %v2162
        %v2533 = vunpack.c.l.b16 %v2163
        %v2534 = vunpack.c.h.b16 %v2163
        %v2535 = vunpack.c.l.b16 %v2164
        %v2536 = vunpack.c.h.b16 %v2164
        %v2537 = vunpack.c.l.b16 %v2165
        %v2538 = vunpack.c.h.b16 %v2165
        %v2539 = vunpack.c.l.b16 %v2166
        %v2540 = vunpack.c.h.b16 %v2166
        %v2541 = vunpack.c.l.b16 %v2167
        %v2542 = vunpack.c.h.b16 %v2167
        %v2543 = vunpack.c.l.b16 %v2168
        %v2544 = vunpack.c.h.b16 %v2168
        %v2545 = vunpack.c.l.b16 %v2169
        %v2546 = vunpack.c.h.b16 %v2169
        %v2547 = vunpack.c.l.b16 %v2170
        %v2548 = vunpack.c.h.b16 %v2170
        %v2549 = vunpack.c.l.b16 %v2171
        %v2550 = vunpack.c.h.b16 %v2171
        %v2551 = vunpack.c.l.b16 %v2172
        %v2552 = vunpack.c.h.b16 %v2172
        %v2553 = vunpack.c.l.b16 %v2173
        %v2554 = vunpack.c.h.b16 %v2173
        %v2555 = vunpack.c.l.b16 %v2174
        %v2556 = vunpack.c.h.b16 %v2174
        %v2557 = vunpack.c.l.b16 %v2175
        %v2558 = vunpack.c.h.b16 %v2175
        %v2559 = vunpack.c.l.b16 %v2176
        %v2560 = vunpack.c.h.b16 %v2176
        %v2561 = vpack.c.b16 %v2313, %v2305
        %v2562 = vpack.c.b16 %v2314, %v2306
        %v2563 = vpack.c.b16 %v2315, %v2307
        %v2564 = vpack.c.b16 %v2316, %v2308
        %v2565 = vpack.c.b16 %v2317, %v2309
        %v2566 = vpack.c.b16 %v2318, %v2310
        %v2567 = vpack.c.b16 %v2319, %v2311
        %v2568 = vpack.c.b16 %v2320, %v2312
        %v2569 = vpack.c.b16 %v2329, %v2321
        %v2570 = vpack.c.b16 %v2330, %v2322
        %v2571 = vpack.c.b16 %v2331, %v2323
        %v2572 = vpack.c.b16 %v2332, %v2324
        %v2573 = vpack.c.b16 %v2333, %v2325
        %v2574 = vpack.c.b16 %v2334, %v2326
        %v2575 = vpack.c.b16 %v2335, %v2327
        %v2576 = vpack.c.b16 %v2336, %v2328
        %v2577 = vpack.c.b16 %v2345, %v2337
        %v2578 = vpack.c.b16 %v2346, %v2338
        %v2579 = vpack.c.b16 %v2347, %v2339
        %v2580 = vpack.c.b16 %v2348, %v2340
        %v2581 = vpack.c.b16 %v2349, %v2341
        %v2582 = vpack.c.b16 %v2350, %v2342
        %v2583 = vpack.c.b16 %v2351, %v2343
        %v2584 = vpack.c.b16 %v2352, %v2344
        %v2585 = vpack.c.b16 %v2361, %v2353
        %v2586 = vpack.c.b16 %v2362, %v2354
        %v2587 = vpack.c.b16 %v2363, %v2355
        %v2588 = vpack.c.b16 %v2364, %v2356
        %v2589 = vpack.c.b16 %v2365, %v2357
        %v2590 = vpack.c.b16 %v2366, %v2358
        %v2591 = vpack.c.b16 %v2367, %v2359
        %v2592 = vpack.c.b16 %v2368, %v2360
        %v2593 = vpack.c.b16 %v2377, %v2369
        %v2594 = vpack.c.b16 %v2378, %v2370
        %v2595 = vpack.c.b16 %v2379, %v2371
        %v2596 = vpack.c.b16 %v2380, %v2372
        %v2597 = vpack.c.b16 %v2381, %v2373
        %v2598 = vpack.c.b16 %v2382, %v2374
        %v2599 = vpack.c.b16 %v2383, %v2375
        %v2600 = vpack.c.b16 %v2384, %v2376
        %v2601 = vpack.c.b16 %v2393, %v2385
        %v2602 = vpack.c.b16 %v2394, %v2386
        %v2603 = vpack.c.b16 %v2395, %v2387
        %v2604 = vpack.c.b16 %v2396, %v2388
        %v2605 = vpack.c.b16 %v2397, %v2389
        %v2606 = vpack.c.b16 %v2398, %v2390
        %v2607 = vpack.c.b16 %v2399, %v2391
        %v2608 = vpack.c.b16 %v2400, %v2392
        %v2609 = vpack.c.b16 %v2409, %v2401
        %v2610 = vpack.c.b16 %v2410, %v2402
        %v2611 = vpack.c.b16 %v2411, %v2403
        %v2612 = vpack.c.b16 %v2412, %v2404
        %v2613 = vpack.c.b16 %v2413, %v2405
        %v2614 = vpack.c.b16 %v2414, %v2406
        %v2615 = vpack.c.b16 %v2415, %v2407
        %v2616 = vpack.c.b16 %v2416, %v2408
        %v2617 = vpack.c.b16 %v2425, %v2417
        %v2618 = vpack.c.b16 %v2426, %v2418
        %v2619 = vpack.c.b16 %v2427, %v2419
        %v2620 = vpack.c.b16 %v2428, %v2420
        %v2621 = vpack.c.b16 %v2429, %v2421
        %v2622 = vpack.c.b16 %v2430, %v2422
        %v2623 = vpack.c.b16 %v2431, %v2423
        %v2624 = vpack.c.b16 %v2432, %v2424
        %v2625 = vpack.c.b16 %v2441, %v2433
        %v2626 = vpack.c.b16 %v2442, %v2434
        %v2627 = vpack.c.b16 %v2443, %v2435
        %v2628 = vpack.c.b16 %v2444, %v2436
        %v2629 = vpack.c.b16 %v2445, %v2437
        %v2630 = vpack.c.b16 %v2446, %v2438
        %v2631 = vpack.c.b16 %v2447, %v2439
        %v2632 = vpack.c.b16 %v2448, %v2440
        %v2633 = vpack.c.b16 %v2457, %v2449
        %v2634 = vpack.c.b16 %v2458, %v2450
        %v2635 = vpack.c.b16 %v2459, %v2451
        %v2636 = vpack.c.b16 %v2460, %v2452
        %v2637 = vpack.c.b16 %v2461, %v2453
        %v2638 = vpack.c.b16 %v2462, %v2454
        %v2639 = vpack.c.b16 %v2463, %v2455
        %v2640 = vpack.c.b16 %v2464, %v2456
        %v2641 = vpack.c.b16 %v2473, %v2465
        %v2642 = vpack.c.b16 %v2474, %v2466
        %v2643 = vpack.c.b16 %v2475, %v2467
        %v2644 = vpack.c.b16 %v2476, %v2468
        %v2645 = vpack.c.b16 %v2477, %v2469
        %v2646 = vpack.c.b16 %v2478, %v2470
        %v2647 = vpack.c.b16 %v2479, %v2471
        %v2648 = vpack.c.b16 %v2480, %v2472
        %v2649 = vpack.c.b16 %v2489, %v2481
        %v2650 = vpack.c.b16 %v2490, %v2482
        %v2651 = vpack.c.b16 %v2491, %v2483
        %v2652 = vpack.c.b16 %v2492, %v2484
        %v2653 = vpack.c.b16 %v2493, %v2485
        %v2654 = vpack.c.b16 %v2494, %v2486
        %v2655 = vpack.c.b16 %v2495, %v2487
        %v2656 = vpack.c.b16 %v2496, %v2488
        %v2657 = vpack.c.b16 %v2505, %v2497
        %v2658 = vpack.c.b16 %v2506, %v2498
        %v2659 = vpack.c.b16 %v2507, %v2499
        %v2660 = vpack.c.b16 %v2508, %v2500
        %v2661 = vpack.c.b16 %v2509, %v2501
        %v2662 = vpack.c.b16 %v2510, %v2502
        %v2663 = vpack.c.b16 %v2511, %v2503
        %v2664 = vpack.c.b16 %v2512, %v2504
        %v2665 = vpack.c.b16 %v2521, %v2513
        %v2666 = vpack.c.b16 %v2522, %v2514
        %v2667 = vpack.c.b16 %v2523, %v2515
        %v2668 = vpack.c.b16 %v2524, %v2516
        %v2669 = vpack.c.b16 %v2525, %v2517
        %v2670 = vpack.c.b16 %v2526, %v2518
        %v2671 = vpack.c.b16 %v2527, %v2519
        %v2672 = vpack.c.b16 %v2528, %v2520
        %v2673 = vpack.c.b16 %v2537, %v2529
        %v2674 = vpack.c.b16 %v2538, %v2530
        %v2675 = vpack.c.b16 %v2539, %v2531
        %v2676 = vpack.c.b16 %v2540, %v2532
        %v2677 = vpack.c.b16 %v2541, %v2533
        %v2678 = vpack.c.b16 %v2542, %v2534
        %v2679 = vpack.c.b16 %v2543, %v2535
        %v2680 = vpack.c.b16 %v2544, %v2536
        %v2681 = vpack.c.b16 %v2553, %v2545
        %v2682 = vpack.c.b16 %v2554, %v2546
        %v2683 = vpack.c.b16 %v2555, %v2547
        %v2684 = vpack.c.b16 %v2556, %v2548
        %v2685 = vpack.c.b16 %v2557, %v2549
        %v2686 = vpack.c.b16 %v2558, %v2550
        %v2687 = vpack.c.b16 %v2559, %v2551
        %v2688 = vpack.c.b16 %v2560, %v2552
        %2817 = vmatprep.subr.bf16.mxu0 %v2618
        %2818 = vmatpush1.bf16.msra.mxu0 %v2617
        %2819 = vmatprep.subr.bf16.mxu0 %v2610
        %2820 = vmatpush1.bf16.msra.mxu0 %v2609
        %2821 = vmatprep.subr.bf16.mxu0 %v2602
        %2822 = vmatpush1.bf16.msra.mxu0 %v2601
        %2823 = vmatprep.subr.bf16.mxu0 %v2594
        %2824 = vmatpush1.bf16.msra.mxu0 %v2593
        %2825 = vmatprep.subr.bf16.mxu0 %v2586
        %2826 = vmatpush1.bf16.msra.mxu0 %v2585
        %2827 = vmatprep.subr.bf16.mxu0 %v2578
        %2828 = vmatpush1.bf16.msra.mxu0 %v2577
        %2829 = vmatprep.subr.bf16.mxu0 %v2570
        %2830 = vmatpush1.bf16.msra.mxu0 %v2569
        %2831 = vmatprep.subr.bf16.mxu0 %v2562
        %2832 = vmatpush1.bf16.msra.mxu0 %v2561
        %2833 = vmatprep.subr.bf16.mxu0 %v2682
        %2834 = vmatpush2.bf16.msra.mxu0 %v2681
        %2835 = vmatprep.subr.bf16.mxu0 %v2674
        %2836 = vmatpush2.bf16.msra.mxu0 %v2673
        %2837 = vmatprep.subr.bf16.mxu0 %v2666
        %2838 = vmatpush2.bf16.msra.mxu0 %v2665
        %2839 = vmatprep.subr.bf16.mxu0 %v2658
        %2840 = vmatpush2.bf16.msra.mxu0 %v2657
        %2841 = vmatprep.subr.bf16.mxu0 %v2650
        %2842 = vmatpush2.bf16.msra.mxu0 %v2649
        %2843 = vmatprep.subr.bf16.mxu0 %v2642
        %2844 = vmatpush2.bf16.msra.mxu0 %v2641
        %2845 = vmatprep.subr.bf16.mxu0 %v2634
        %2846 = vmatpush2.bf16.msra.mxu0 %v2633
        %2847 = vmatprep.subr.bf16.mxu0 %v2626
        %2848 = vmatpush2.bf16.msra.mxu0 %v2625
        %2849 = vmatprep.mubr.bf16.mxu0 %v2048
        %2850 = vmatmul.mubr.bf16.gmra.mxu0 %v2047
        %v2851 = vpop.f32.mrf.mxu0
        %v2852 = vadd.f32 0.0, %v2851
        %v2853 = vpop.f32.mrf.mxu0
        %v2854 = vadd.f32 0.0, %v2853
        %v2855 = vpop.f32.mrf.mxu0
        %v2856 = vpop.f32.mrf.mxu0
        %2857 = vdwg.mxu0
        %2858 = vmatprep.subr.bf16.mxu0 %v2620
        %2859 = vmatpush1.bf16.msra.mxu0 %v2619
        %2860 = vmatprep.subr.bf16.mxu0 %v2612
        %2861 = vmatpush1.bf16.msra.mxu0 %v2611
        %2862 = vmatprep.subr.bf16.mxu0 %v2604
        %2863 = vmatpush1.bf16.msra.mxu0 %v2603
        %2864 = vmatprep.subr.bf16.mxu0 %v2596
        %2865 = vmatpush1.bf16.msra.mxu0 %v2595
        %2866 = vmatprep.subr.bf16.mxu0 %v2588
        %2867 = vmatpush1.bf16.msra.mxu0 %v2587
        %2868 = vmatprep.subr.bf16.mxu0 %v2580
        %2869 = vmatpush1.bf16.msra.mxu0 %v2579
        %2870 = vmatprep.subr.bf16.mxu0 %v2572
        %2871 = vmatpush1.bf16.msra.mxu0 %v2571
        %2872 = vmatprep.subr.bf16.mxu0 %v2564
        %2873 = vmatpush1.bf16.msra.mxu0 %v2563
        %2874 = vmatprep.subr.bf16.mxu0 %v2684
        %2875 = vmatpush2.bf16.msra.mxu0 %v2683
        %2876 = vmatprep.subr.bf16.mxu0 %v2676
        %2877 = vmatpush2.bf16.msra.mxu0 %v2675
        %2878 = vmatprep.subr.bf16.mxu0 %v2668
        %2879 = vmatpush2.bf16.msra.mxu0 %v2667
        %2880 = vmatprep.subr.bf16.mxu0 %v2660
        %2881 = vmatpush2.bf16.msra.mxu0 %v2659
        %2882 = vmatprep.subr.bf16.mxu0 %v2652
        %2883 = vmatpush2.bf16.msra.mxu0 %v2651
        %2884 = vmatprep.subr.bf16.mxu0 %v2644
        %2885 = vmatpush2.bf16.msra.mxu0 %v2643
        %2886 = vmatprep.subr.bf16.mxu0 %v2636
        %2887 = vmatpush2.bf16.msra.mxu0 %v2635
        %2888 = vmatprep.subr.bf16.mxu0 %v2628
        %2889 = vmatpush2.bf16.msra.mxu0 %v2627
        %2890 = vmatprep.mubr.bf16.mxu0 %v2048
        %2891 = vmatmul.mubr.bf16.gmra.mxu0 %v2047
        %v2892 = vpop.f32.mrf.mxu0
        %v2893 = vadd.f32 0.0, %v2892
        %v2894 = vpop.f32.mrf.mxu0
        %v2895 = vadd.f32 0.0, %v2894
        %v2896 = vpop.f32.mrf.mxu0
        %v2897 = vpop.f32.mrf.mxu0
        %2898 = vdwg.mxu0
        %2899 = vmatprep.subr.bf16.mxu0 %v2622
        %2900 = vmatpush1.bf16.msra.mxu0 %v2621
        %2901 = vmatprep.subr.bf16.mxu0 %v2614
        %2902 = vmatpush1.bf16.msra.mxu0 %v2613
        %2903 = vmatprep.subr.bf16.mxu0 %v2606
        %2904 = vmatpush1.bf16.msra.mxu0 %v2605
        %2905 = vmatprep.subr.bf16.mxu0 %v2598
        %2906 = vmatpush1.bf16.msra.mxu0 %v2597
        %2907 = vmatprep.subr.bf16.mxu0 %v2590
        %2908 = vmatpush1.bf16.msra.mxu0 %v2589
        %2909 = vmatprep.subr.bf16.mxu0 %v2582
        %2910 = vmatpush1.bf16.msra.mxu0 %v2581
        %2911 = vmatprep.subr.bf16.mxu0 %v2574
        %2912 = vmatpush1.bf16.msra.mxu0 %v2573
        %2913 = vmatprep.subr.bf16.mxu0 %v2566
        %2914 = vmatpush1.bf16.msra.mxu0 %v2565
        %2915 = vmatprep.subr.bf16.mxu0 %v2686
        %2916 = vmatpush2.bf16.msra.mxu0 %v2685
        %2917 = vmatprep.subr.bf16.mxu0 %v2678
        %2918 = vmatpush2.bf16.msra.mxu0 %v2677
        %2919 = vmatprep.subr.bf16.mxu0 %v2670
        %2920 = vmatpush2.bf16.msra.mxu0 %v2669
        %2921 = vmatprep.subr.bf16.mxu0 %v2662
        %2922 = vmatpush2.bf16.msra.mxu0 %v2661
        %2923 = vmatprep.subr.bf16.mxu0 %v2654
        %2924 = vmatpush2.bf16.msra.mxu0 %v2653
        %2925 = vmatprep.subr.bf16.mxu0 %v2646
        %2926 = vmatpush2.bf16.msra.mxu0 %v2645
        %2927 = vmatprep.subr.bf16.mxu0 %v2638
        %2928 = vmatpush2.bf16.msra.mxu0 %v2637
        %2929 = vmatprep.subr.bf16.mxu0 %v2630
        %2930 = vmatpush2.bf16.msra.mxu0 %v2629
        %2931 = vmatprep.mubr.bf16.mxu0 %v2048
        %2932 = vmatmul.mubr.bf16.gmra.mxu0 %v2047
        %v2933 = vpop.f32.mrf.mxu0
        %v2934 = vadd.f32 0.0, %v2933
        %v2935 = vpop.f32.mrf.mxu0
        %v2936 = vadd.f32 0.0, %v2935
        %v2937 = vpop.f32.mrf.mxu0
        %v2938 = vpop.f32.mrf.mxu0
        %2939 = vdwg.mxu0
        %2940 = vmatprep.subr.bf16.mxu0 %v2624
        %2941 = vmatpush1.bf16.msra.mxu0 %v2623
        %2942 = vmatprep.subr.bf16.mxu0 %v2616
        %2943 = vmatpush1.bf16.msra.mxu0 %v2615
        %2944 = vmatprep.subr.bf16.mxu0 %v2608
        %2945 = vmatpush1.bf16.msra.mxu0 %v2607
        %2946 = vmatprep.subr.bf16.mxu0 %v2600
        %2947 = vmatpush1.bf16.msra.mxu0 %v2599
        %2948 = vmatprep.subr.bf16.mxu0 %v2592
        %2949 = vmatpush1.bf16.msra.mxu0 %v2591
        %2950 = vmatprep.subr.bf16.mxu0 %v2584
        %2951 = vmatpush1.bf16.msra.mxu0 %v2583
        %2952 = vmatprep.subr.bf16.mxu0 %v2576
        %2953 = vmatpush1.bf16.msra.mxu0 %v2575
        %2954 = vmatprep.subr.bf16.mxu0 %v2568
        %2955 = vmatpush1.bf16.msra.mxu0 %v2567
        %2956 = vmatprep.subr.bf16.mxu0 %v2688
        %2957 = vmatpush2.bf16.msra.mxu0 %v2687
        %2958 = vmatprep.subr.bf16.mxu0 %v2680
        %2959 = vmatpush2.bf16.msra.mxu0 %v2679
        %2960 = vmatprep.subr.bf16.mxu0 %v2672
        %2961 = vmatpush2.bf16.msra.mxu0 %v2671
        %2962 = vmatprep.subr.bf16.mxu0 %v2664
        %2963 = vmatpush2.bf16.msra.mxu0 %v2663
        %2964 = vmatprep.subr.bf16.mxu0 %v2656
        %2965 = vmatpush2.bf16.msra.mxu0 %v2655
        %2966 = vmatprep.subr.bf16.mxu0 %v2648
        %2967 = vmatpush2.bf16.msra.mxu0 %v2647
        %2968 = vmatprep.subr.bf16.mxu0 %v2640
        %2969 = vmatpush2.bf16.msra.mxu0 %v2639
        %2970 = vmatprep.subr.bf16.mxu0 %v2632
        %2971 = vmatpush2.bf16.msra.mxu0 %v2631
        %2972 = vmatprep.mubr.bf16.mxu0 %v2048
        %2973 = vmatmul.mubr.bf16.gmra.mxu0 %v2047
        %v2974 = vpop.f32.mrf.mxu0
        %v2975 = vadd.f32 0.0, %v2974
        %v2976 = vpop.f32.mrf.mxu0
        %v2977 = vadd.f32 0.0, %v2976
        %v2978 = vpop.f32.mrf.mxu0
        %v2979 = vpop.f32.mrf.mxu0
        %2980 = vdwg.mxu0
        %v2985 = vcombine.low %v2852, %v2854
        %v2986 = vcombine.low %v2893, %v2895
        %v2989 = vadd.f32 %v2037, %v2985
        %v2990 = vadd.f32 %v2038, %v2986
        %v2991 = vxor.u32 %v2989, 2147483648
        %v2992 = vmul.f32 %v2991, 1.442695
        %v2993 = vpow.pop %v2992
        %v2994 = vadd.f32 %v2993, 1.0
        %v2995 = vrcp.pop %v2994
        %v2996 = vmul.f32 1.0, %v2995
        %v2998 = vrot.slane %v2989, 4
        %v3000 = vxor.u32 %v2998, 2147483648
        %v3001 = vmul.f32 %v3000, 1.442695
        %v3002 = vpow.pop %v3001
        %v3003 = vadd.f32 %v3002, 1.0
        %v3004 = vrcp.pop %v3003
        %v3005 = vmul.f32 1.0, %v3004
        %v3006 = vtanh.pop %v2990
        %v3008 = vrot.slane %v2990, 4
        %v3010 = vxor.u32 %v3008, 2147483648
        %v3011 = vmul.f32 %v3010, 1.442695
        %v3012 = vpow.pop %v3011
        %v3013 = vadd.f32 %v3012, 1.0
        %v3014 = vrcp.pop %v3013
        %v3015 = vmul.f32 1.0, %v3014
        %v3016 = vmul.f32 %v3005, %v2043
        %v3017 = vmul.f32 %v2996, %v3006
        %v3018 = vadd.f32 %v3016, %v3017
        %v3019 = vtanh.pop %v3018
        %v3020 = vmul.f32 %v3015, %v3019
        %v3025 = vcombine.low %v2934, %v2936
        %v3026 = vcombine.low %v2975, %v2977
        %v3029 = vadd.f32 %v2040, %v3025
        %v3030 = vadd.f32 %v2041, %v3026
        %v3031 = vxor.u32 %v3029, 2147483648
        %v3032 = vmul.f32 %v3031, 1.442695
        %v3033 = vpow.pop %v3032
        %v3034 = vadd.f32 %v3033, 1.0
        %v3035 = vrcp.pop %v3034
        %v3036 = vmul.f32 1.0, %v3035
        %v3038 = vrot.slane %v3029, 4
        %v3040 = vxor.u32 %v3038, 2147483648
        %v3041 = vmul.f32 %v3040, 1.442695
        %v3042 = vpow.pop %v3041
        %v3043 = vadd.f32 %v3042, 1.0
        %v3044 = vrcp.pop %v3043
        %v3045 = vmul.f32 1.0, %v3044
        %v3046 = vtanh.pop %v3030
        %v3048 = vrot.slane %v3030, 4
        %v3050 = vxor.u32 %v3048, 2147483648
        %v3051 = vmul.f32 %v3050, 1.442695
        %v3052 = vpow.pop %v3051
        %v3053 = vadd.f32 %v3052, 1.0
        %v3054 = vrcp.pop %v3053
        %v3055 = vmul.f32 1.0, %v3054
        %v3057 = vrot.slane %v2043, 4
        %v3059 = vmul.f32 %v3045, %v3057
        %v3060 = vmul.f32 %v3036, %v3046
        %v3061 = vadd.f32 %v3059, %v3060
        %v3062 = vtanh.pop %v3061
        %v3063 = vmul.f32 %v3055, %v3062
        %v3064 = vstv %s2034
        %vm3065 = vcmp.gt.s32.totalorder %v975, %v3064
        %v3066 = vstv %s2035
        %vm3067 = vcmp.gt.s32.totalorder %v975, %v3066
        %v3068 = vsel %vm3065, 1, 0
        %3069 = vset.pattern.permute.xlu0 0
        %3070 = vperm.xlu0 %3069, %v3068
        %v3071 = vpop.permute.xlu0 %3070
        %vm3072 = vcmp.eq.s32.totalorder %v3071, 1
        %v3073 = vsel %vm3072, %v3020, %v2042
        %3074 = vst [vmem:[#allocation3] sm:$0xf] %v3073
        %v3075 = vsel %vm3067, 1, 0
        %3076 = vset.pattern.permute.xlu0 0
        %3077 = vperm.xlu0 %3076, %v3075
        %v3078 = vpop.permute.xlu0 %3077
        %vm3079 = vcmp.eq.s32.totalorder %v3078, 1
        %v3080 = vsel %vm3079, %v3063, %v2045
        %3081 = vst [vmem:[#allocation3 + $0x4] sm:$0xf] %v3080
        %v3082 = vsel %vm3072, %v3018, %v2043
        %3083 = vst [vmem:[#allocation4] sm:$0xf] %v3082
        %v3084 = vcombine.high %v2043, %v2043
        %v3086 = vsel %vm3079, %v3061, %v3084
        %3087 = vst [vmem:[#allocation4 + $0x4] sm:$0xf] %v3086
        %v3088 = vsel %vm3072, %v3020, 0.0
        %s3089 = scalar_lea.vmem %s414, 4
        %3090 = vst [vmem:[%s3089] sm:$0xf] %v3088
        %v3091 = vsel %vm3079, %v3063, 0.0
        %s3092 = scalar_lea.vmem %s424, 8
        %3093 = vst [vmem:[%s3092] sm:$0xf] %v3091
        %s3094 = sadd.s32 %s976, 2
        %s3095 = ssub.s32 5, %s976
        %v3096 = vld [vmem:[%s2039] sm:$0xff]
        %v3097 = vld [vmem:[%s2039 + $0x8] sm:$0xff]
        %v3098 = vld [vmem:[%s2036 + $0x10] sm:$0xff]
        %v3099 = vld [vmem:[%s2036 + $0x18] sm:$0xff]
        %v3100 = vld [vmem:[#allocation3] sm:$0xff]
        %v3101 = vld [vmem:[#allocation4] sm:$0xff]
        %v3103 = vcombine.high %v3100, %v3100
        %v3105 = vpack.c.bf16 %v3100, %v3100
        %v3106 = vpack.c.bf16 %v3103, %v3103
        %v3107 = vld [vmem:[#allocation7] sm:$0xff]
        %v3108 = vld [vmem:[#allocation7 + $0x8] sm:$0xff]
        %v3109 = vld [vmem:[#allocation7 + $0x10] sm:$0xff]
        %v3110 = vld [vmem:[#allocation7 + $0x18] sm:$0xff]
        %v3111 = vld [vmem:[#allocation7 + $0x20] sm:$0xff]
        %v3112 = vld [vmem:[#allocation7 + $0x28] sm:$0xff]
        %v3113 = vld [vmem:[#allocation7 + $0x30] sm:$0xff]
        %v3114 = vld [vmem:[#allocation7 + $0x38] sm:$0xff]
        %v3115 = vld [vmem:[#allocation7 + $0x40] sm:$0xff]
        %v3116 = vld [vmem:[#allocation7 + $0x48] sm:$0xff]
        %v3117 = vld [vmem:[#allocation7 + $0x50] sm:$0xff]
        %v3118 = vld [vmem:[#allocation7 + $0x58] sm:$0xff]
        %v3119 = vld [vmem:[#allocation7 + $0x60] sm:$0xff]
        %v3120 = vld [vmem:[#allocation7 + $0x68] sm:$0xff]
        %v3121 = vld [vmem:[#allocation7 + $0x70] sm:$0xff]
        %v3122 = vld [vmem:[#allocation7 + $0x78] sm:$0xff]
        %v3123 = vld [vmem:[#allocation7 + $0x80] sm:$0xff]
        %v3124 = vld [vmem:[#allocation7 + $0x88] sm:$0xff]
        %v3125 = vld [vmem:[#allocation7 + $0x90] sm:$0xff]
        %v3126 = vld [vmem:[#allocation7 + $0x98] sm:$0xff]
        %v3127 = vld [vmem:[#allocation7 + $0xa0] sm:$0xff]
        %v3128 = vld [vmem:[#allocation7 + $0xa8] sm:$0xff]
        %v3129 = vld [vmem:[#allocation7 + $0xb0] sm:$0xff]
        %v3130 = vld [vmem:[#allocation7 + $0xb8] sm:$0xff]
        %v3131 = vld [vmem:[#allocation7 + $0xc0] sm:$0xff]
        %v3132 = vld [vmem:[#allocation7 + $0xc8] sm:$0xff]
        %v3133 = vld [vmem:[#allocation7 + $0xd0] sm:$0xff]
        %v3134 = vld [vmem:[#allocation7 + $0xd8] sm:$0xff]
        %v3135 = vld [vmem:[#allocation7 + $0xe0] sm:$0xff]
        %v3136 = vld [vmem:[#allocation7 + $0xe8] sm:$0xff]
        %v3137 = vld [vmem:[#allocation7 + $0xf0] sm:$0xff]
        %v3138 = vld [vmem:[#allocation7 + $0xf8] sm:$0xff]
        %v3139 = vld [vmem:[#allocation7 + $0x100] sm:$0xff]
        %v3140 = vld [vmem:[#allocation7 + $0x108] sm:$0xff]
        %v3141 = vld [vmem:[#allocation7 + $0x110] sm:$0xff]
        %v3142 = vld [vmem:[#allocation7 + $0x118] sm:$0xff]
        %v3143 = vld [vmem:[#allocation7 + $0x120] sm:$0xff]
        %v3144 = vld [vmem:[#allocation7 + $0x128] sm:$0xff]
        %v3145 = vld [vmem:[#allocation7 + $0x130] sm:$0xff]
        %v3146 = vld [vmem:[#allocation7 + $0x138] sm:$0xff]
        %v3147 = vld [vmem:[#allocation7 + $0x140] sm:$0xff]
        %v3148 = vld [vmem:[#allocation7 + $0x148] sm:$0xff]
        %v3149 = vld [vmem:[#allocation7 + $0x150] sm:$0xff]
        %v3150 = vld [vmem:[#allocation7 + $0x158] sm:$0xff]
        %v3151 = vld [vmem:[#allocation7 + $0x160] sm:$0xff]
        %v3152 = vld [vmem:[#allocation7 + $0x168] sm:$0xff]
        %v3153 = vld [vmem:[#allocation7 + $0x170] sm:$0xff]
        %v3154 = vld [vmem:[#allocation7 + $0x178] sm:$0xff]
        %v3155 = vld [vmem:[#allocation7 + $0x180] sm:$0xff]
        %v3156 = vld [vmem:[#allocation7 + $0x188] sm:$0xff]
        %v3157 = vld [vmem:[#allocation7 + $0x190] sm:$0xff]
        %v3158 = vld [vmem:[#allocation7 + $0x198] sm:$0xff]
        %v3159 = vld [vmem:[#allocation7 + $0x1a0] sm:$0xff]
        %v3160 = vld [vmem:[#allocation7 + $0x1a8] sm:$0xff]
        %v3161 = vld [vmem:[#allocation7 + $0x1b0] sm:$0xff]
        %v3162 = vld [vmem:[#allocation7 + $0x1b8] sm:$0xff]
        %v3163 = vld [vmem:[#allocation7 + $0x1c0] sm:$0xff]
        %v3164 = vld [vmem:[#allocation7 + $0x1c8] sm:$0xff]
        %v3165 = vld [vmem:[#allocation7 + $0x1d0] sm:$0xff]
        %v3166 = vld [vmem:[#allocation7 + $0x1d8] sm:$0xff]
        %v3167 = vld [vmem:[#allocation7 + $0x1e0] sm:$0xff]
        %v3168 = vld [vmem:[#allocation7 + $0x1e8] sm:$0xff]
        %v3169 = vld [vmem:[#allocation7 + $0x1f0] sm:$0xff]
        %v3170 = vld [vmem:[#allocation7 + $0x1f8] sm:$0xff]
        %v3171 = vld [vmem:[#allocation7 + $0x200] sm:$0xff]
        %v3172 = vld [vmem:[#allocation7 + $0x208] sm:$0xff]
        %v3173 = vld [vmem:[#allocation7 + $0x210] sm:$0xff]
        %v3174 = vld [vmem:[#allocation7 + $0x218] sm:$0xff]
        %v3175 = vld [vmem:[#allocation7 + $0x220] sm:$0xff]
        %v3176 = vld [vmem:[#allocation7 + $0x228] sm:$0xff]
        %v3177 = vld [vmem:[#allocation7 + $0x230] sm:$0xff]
        %v3178 = vld [vmem:[#allocation7 + $0x238] sm:$0xff]
        %v3179 = vld [vmem:[#allocation7 + $0x240] sm:$0xff]
        %v3180 = vld [vmem:[#allocation7 + $0x248] sm:$0xff]
        %v3181 = vld [vmem:[#allocation7 + $0x250] sm:$0xff]
        %v3182 = vld [vmem:[#allocation7 + $0x258] sm:$0xff]
        %v3183 = vld [vmem:[#allocation7 + $0x260] sm:$0xff]
        %v3184 = vld [vmem:[#allocation7 + $0x268] sm:$0xff]
        %v3185 = vld [vmem:[#allocation7 + $0x270] sm:$0xff]
        %v3186 = vld [vmem:[#allocation7 + $0x278] sm:$0xff]
        %v3187 = vld [vmem:[#allocation7 + $0x280] sm:$0xff]
        %v3188 = vld [vmem:[#allocation7 + $0x288] sm:$0xff]
        %v3189 = vld [vmem:[#allocation7 + $0x290] sm:$0xff]
        %v3190 = vld [vmem:[#allocation7 + $0x298] sm:$0xff]
        %v3191 = vld [vmem:[#allocation7 + $0x2a0] sm:$0xff]
        %v3192 = vld [vmem:[#allocation7 + $0x2a8] sm:$0xff]
        %v3193 = vld [vmem:[#allocation7 + $0x2b0] sm:$0xff]
        %v3194 = vld [vmem:[#allocation7 + $0x2b8] sm:$0xff]
        %v3195 = vld [vmem:[#allocation7 + $0x2c0] sm:$0xff]
        %v3196 = vld [vmem:[#allocation7 + $0x2c8] sm:$0xff]
        %v3197 = vld [vmem:[#allocation7 + $0x2d0] sm:$0xff]
        %v3198 = vld [vmem:[#allocation7 + $0x2d8] sm:$0xff]
        %v3199 = vld [vmem:[#allocation7 + $0x2e0] sm:$0xff]
        %v3200 = vld [vmem:[#allocation7 + $0x2e8] sm:$0xff]
        %v3201 = vld [vmem:[#allocation7 + $0x2f0] sm:$0xff]
        %v3202 = vld [vmem:[#allocation7 + $0x2f8] sm:$0xff]
        %v3203 = vld [vmem:[#allocation7 + $0x300] sm:$0xff]
        %v3204 = vld [vmem:[#allocation7 + $0x308] sm:$0xff]
        %v3205 = vld [vmem:[#allocation7 + $0x310] sm:$0xff]
        %v3206 = vld [vmem:[#allocation7 + $0x318] sm:$0xff]
        %v3207 = vld [vmem:[#allocation7 + $0x320] sm:$0xff]
        %v3208 = vld [vmem:[#allocation7 + $0x328] sm:$0xff]
        %v3209 = vld [vmem:[#allocation7 + $0x330] sm:$0xff]
        %v3210 = vld [vmem:[#allocation7 + $0x338] sm:$0xff]
        %v3211 = vld [vmem:[#allocation7 + $0x340] sm:$0xff]
        %v3212 = vld [vmem:[#allocation7 + $0x348] sm:$0xff]
        %v3213 = vld [vmem:[#allocation7 + $0x350] sm:$0xff]
        %v3214 = vld [vmem:[#allocation7 + $0x358] sm:$0xff]
        %v3215 = vld [vmem:[#allocation7 + $0x360] sm:$0xff]
        %v3216 = vld [vmem:[#allocation7 + $0x368] sm:$0xff]
        %v3217 = vld [vmem:[#allocation7 + $0x370] sm:$0xff]
        %v3218 = vld [vmem:[#allocation7 + $0x378] sm:$0xff]
        %v3219 = vld [vmem:[#allocation7 + $0x380] sm:$0xff]
        %v3220 = vld [vmem:[#allocation7 + $0x388] sm:$0xff]
        %v3221 = vld [vmem:[#allocation7 + $0x390] sm:$0xff]
        %v3222 = vld [vmem:[#allocation7 + $0x398] sm:$0xff]
        %v3223 = vld [vmem:[#allocation7 + $0x3a0] sm:$0xff]
        %v3224 = vld [vmem:[#allocation7 + $0x3a8] sm:$0xff]
        %v3225 = vld [vmem:[#allocation7 + $0x3b0] sm:$0xff]
        %v3226 = vld [vmem:[#allocation7 + $0x3b8] sm:$0xff]
        %v3227 = vld [vmem:[#allocation7 + $0x3c0] sm:$0xff]
        %v3228 = vld [vmem:[#allocation7 + $0x3c8] sm:$0xff]
        %v3229 = vld [vmem:[#allocation7 + $0x3d0] sm:$0xff]
        %v3230 = vld [vmem:[#allocation7 + $0x3d8] sm:$0xff]
        %v3231 = vld [vmem:[#allocation7 + $0x3e0] sm:$0xff]
        %v3232 = vld [vmem:[#allocation7 + $0x3e8] sm:$0xff]
        %v3233 = vld [vmem:[#allocation7 + $0x3f0] sm:$0xff]
        %v3234 = vld [vmem:[#allocation7 + $0x3f8] sm:$0xff]
        %v3363 = vunpack.c.l.b16 %v3107
        %v3364 = vunpack.c.h.b16 %v3107
        %v3365 = vunpack.c.l.b16 %v3108
        %v3366 = vunpack.c.h.b16 %v3108
        %v3367 = vunpack.c.l.b16 %v3109
        %v3368 = vunpack.c.h.b16 %v3109
        %v3369 = vunpack.c.l.b16 %v3110
        %v3370 = vunpack.c.h.b16 %v3110
        %v3371 = vunpack.c.l.b16 %v3111
        %v3372 = vunpack.c.h.b16 %v3111
        %v3373 = vunpack.c.l.b16 %v3112
        %v3374 = vunpack.c.h.b16 %v3112
        %v3375 = vunpack.c.l.b16 %v3113
        %v3376 = vunpack.c.h.b16 %v3113
        %v3377 = vunpack.c.l.b16 %v3114
        %v3378 = vunpack.c.h.b16 %v3114
        %v3379 = vunpack.c.l.b16 %v3115
        %v3380 = vunpack.c.h.b16 %v3115
        %v3381 = vunpack.c.l.b16 %v3116
        %v3382 = vunpack.c.h.b16 %v3116
        %v3383 = vunpack.c.l.b16 %v3117
        %v3384 = vunpack.c.h.b16 %v3117
        %v3385 = vunpack.c.l.b16 %v3118
        %v3386 = vunpack.c.h.b16 %v3118
        %v3387 = vunpack.c.l.b16 %v3119
        %v3388 = vunpack.c.h.b16 %v3119
        %v3389 = vunpack.c.l.b16 %v3120
        %v3390 = vunpack.c.h.b16 %v3120
        %v3391 = vunpack.c.l.b16 %v3121
        %v3392 = vunpack.c.h.b16 %v3121
        %v3393 = vunpack.c.l.b16 %v3122
        %v3394 = vunpack.c.h.b16 %v3122
        %v3395 = vunpack.c.l.b16 %v3123
        %v3396 = vunpack.c.h.b16 %v3123
        %v3397 = vunpack.c.l.b16 %v3124
        %v3398 = vunpack.c.h.b16 %v3124
        %v3399 = vunpack.c.l.b16 %v3125
        %v3400 = vunpack.c.h.b16 %v3125
        %v3401 = vunpack.c.l.b16 %v3126
        %v3402 = vunpack.c.h.b16 %v3126
        %v3403 = vunpack.c.l.b16 %v3127
        %v3404 = vunpack.c.h.b16 %v3127
        %v3405 = vunpack.c.l.b16 %v3128
        %v3406 = vunpack.c.h.b16 %v3128
        %v3407 = vunpack.c.l.b16 %v3129
        %v3408 = vunpack.c.h.b16 %v3129
        %v3409 = vunpack.c.l.b16 %v3130
        %v3410 = vunpack.c.h.b16 %v3130
        %v3411 = vunpack.c.l.b16 %v3131
        %v3412 = vunpack.c.h.b16 %v3131
        %v3413 = vunpack.c.l.b16 %v3132
        %v3414 = vunpack.c.h.b16 %v3132
        %v3415 = vunpack.c.l.b16 %v3133
        %v3416 = vunpack.c.h.b16 %v3133
        %v3417 = vunpack.c.l.b16 %v3134
        %v3418 = vunpack.c.h.b16 %v3134
        %v3419 = vunpack.c.l.b16 %v3135
        %v3420 = vunpack.c.h.b16 %v3135
        %v3421 = vunpack.c.l.b16 %v3136
        %v3422 = vunpack.c.h.b16 %v3136
        %v3423 = vunpack.c.l.b16 %v3137
        %v3424 = vunpack.c.h.b16 %v3137
        %v3425 = vunpack.c.l.b16 %v3138
        %v3426 = vunpack.c.h.b16 %v3138
        %v3427 = vunpack.c.l.b16 %v3139
        %v3428 = vunpack.c.h.b16 %v3139
        %v3429 = vunpack.c.l.b16 %v3140
        %v3430 = vunpack.c.h.b16 %v3140
        %v3431 = vunpack.c.l.b16 %v3141
        %v3432 = vunpack.c.h.b16 %v3141
        %v3433 = vunpack.c.l.b16 %v3142
        %v3434 = vunpack.c.h.b16 %v3142
        %v3435 = vunpack.c.l.b16 %v3143
        %v3436 = vunpack.c.h.b16 %v3143
        %v3437 = vunpack.c.l.b16 %v3144
        %v3438 = vunpack.c.h.b16 %v3144
        %v3439 = vunpack.c.l.b16 %v3145
        %v3440 = vunpack.c.h.b16 %v3145
        %v3441 = vunpack.c.l.b16 %v3146
        %v3442 = vunpack.c.h.b16 %v3146
        %v3443 = vunpack.c.l.b16 %v3147
        %v3444 = vunpack.c.h.b16 %v3147
        %v3445 = vunpack.c.l.b16 %v3148
        %v3446 = vunpack.c.h.b16 %v3148
        %v3447 = vunpack.c.l.b16 %v3149
        %v3448 = vunpack.c.h.b16 %v3149
        %v3449 = vunpack.c.l.b16 %v3150
        %v3450 = vunpack.c.h.b16 %v3150
        %v3451 = vunpack.c.l.b16 %v3151
        %v3452 = vunpack.c.h.b16 %v3151
        %v3453 = vunpack.c.l.b16 %v3152
        %v3454 = vunpack.c.h.b16 %v3152
        %v3455 = vunpack.c.l.b16 %v3153
        %v3456 = vunpack.c.h.b16 %v3153
        %v3457 = vunpack.c.l.b16 %v3154
        %v3458 = vunpack.c.h.b16 %v3154
        %v3459 = vunpack.c.l.b16 %v3155
        %v3460 = vunpack.c.h.b16 %v3155
        %v3461 = vunpack.c.l.b16 %v3156
        %v3462 = vunpack.c.h.b16 %v3156
        %v3463 = vunpack.c.l.b16 %v3157
        %v3464 = vunpack.c.h.b16 %v3157
        %v3465 = vunpack.c.l.b16 %v3158
        %v3466 = vunpack.c.h.b16 %v3158
        %v3467 = vunpack.c.l.b16 %v3159
        %v3468 = vunpack.c.h.b16 %v3159
        %v3469 = vunpack.c.l.b16 %v3160
        %v3470 = vunpack.c.h.b16 %v3160
        %v3471 = vunpack.c.l.b16 %v3161
        %v3472 = vunpack.c.h.b16 %v3161
        %v3473 = vunpack.c.l.b16 %v3162
        %v3474 = vunpack.c.h.b16 %v3162
        %v3475 = vunpack.c.l.b16 %v3163
        %v3476 = vunpack.c.h.b16 %v3163
        %v3477 = vunpack.c.l.b16 %v3164
        %v3478 = vunpack.c.h.b16 %v3164
        %v3479 = vunpack.c.l.b16 %v3165
        %v3480 = vunpack.c.h.b16 %v3165
        %v3481 = vunpack.c.l.b16 %v3166
        %v3482 = vunpack.c.h.b16 %v3166
        %v3483 = vunpack.c.l.b16 %v3167
        %v3484 = vunpack.c.h.b16 %v3167
        %v3485 = vunpack.c.l.b16 %v3168
        %v3486 = vunpack.c.h.b16 %v3168
        %v3487 = vunpack.c.l.b16 %v3169
        %v3488 = vunpack.c.h.b16 %v3169
        %v3489 = vunpack.c.l.b16 %v3170
        %v3490 = vunpack.c.h.b16 %v3170
        %v3491 = vunpack.c.l.b16 %v3171
        %v3492 = vunpack.c.h.b16 %v3171
        %v3493 = vunpack.c.l.b16 %v3172
        %v3494 = vunpack.c.h.b16 %v3172
        %v3495 = vunpack.c.l.b16 %v3173
        %v3496 = vunpack.c.h.b16 %v3173
        %v3497 = vunpack.c.l.b16 %v3174
        %v3498 = vunpack.c.h.b16 %v3174
        %v3499 = vunpack.c.l.b16 %v3175
        %v3500 = vunpack.c.h.b16 %v3175
        %v3501 = vunpack.c.l.b16 %v3176
        %v3502 = vunpack.c.h.b16 %v3176
        %v3503 = vunpack.c.l.b16 %v3177
        %v3504 = vunpack.c.h.b16 %v3177
        %v3505 = vunpack.c.l.b16 %v3178
        %v3506 = vunpack.c.h.b16 %v3178
        %v3507 = vunpack.c.l.b16 %v3179
        %v3508 = vunpack.c.h.b16 %v3179
        %v3509 = vunpack.c.l.b16 %v3180
        %v3510 = vunpack.c.h.b16 %v3180
        %v3511 = vunpack.c.l.b16 %v3181
        %v3512 = vunpack.c.h.b16 %v3181
        %v3513 = vunpack.c.l.b16 %v3182
        %v3514 = vunpack.c.h.b16 %v3182
        %v3515 = vunpack.c.l.b16 %v3183
        %v3516 = vunpack.c.h.b16 %v3183
        %v3517 = vunpack.c.l.b16 %v3184
        %v3518 = vunpack.c.h.b16 %v3184
        %v3519 = vunpack.c.l.b16 %v3185
        %v3520 = vunpack.c.h.b16 %v3185
        %v3521 = vunpack.c.l.b16 %v3186
        %v3522 = vunpack.c.h.b16 %v3186
        %v3523 = vunpack.c.l.b16 %v3187
        %v3524 = vunpack.c.h.b16 %v3187
        %v3525 = vunpack.c.l.b16 %v3188
        %v3526 = vunpack.c.h.b16 %v3188
        %v3527 = vunpack.c.l.b16 %v3189
        %v3528 = vunpack.c.h.b16 %v3189
        %v3529 = vunpack.c.l.b16 %v3190
        %v3530 = vunpack.c.h.b16 %v3190
        %v3531 = vunpack.c.l.b16 %v3191
        %v3532 = vunpack.c.h.b16 %v3191
        %v3533 = vunpack.c.l.b16 %v3192
        %v3534 = vunpack.c.h.b16 %v3192
        %v3535 = vunpack.c.l.b16 %v3193
        %v3536 = vunpack.c.h.b16 %v3193
        %v3537 = vunpack.c.l.b16 %v3194
        %v3538 = vunpack.c.h.b16 %v3194
        %v3539 = vunpack.c.l.b16 %v3195
        %v3540 = vunpack.c.h.b16 %v3195
        %v3541 = vunpack.c.l.b16 %v3196
        %v3542 = vunpack.c.h.b16 %v3196
        %v3543 = vunpack.c.l.b16 %v3197
        %v3544 = vunpack.c.h.b16 %v3197
        %v3545 = vunpack.c.l.b16 %v3198
        %v3546 = vunpack.c.h.b16 %v3198
        %v3547 = vunpack.c.l.b16 %v3199
        %v3548 = vunpack.c.h.b16 %v3199
        %v3549 = vunpack.c.l.b16 %v3200
        %v3550 = vunpack.c.h.b16 %v3200
        %v3551 = vunpack.c.l.b16 %v3201
        %v3552 = vunpack.c.h.b16 %v3201
        %v3553 = vunpack.c.l.b16 %v3202
        %v3554 = vunpack.c.h.b16 %v3202
        %v3555 = vunpack.c.l.b16 %v3203
        %v3556 = vunpack.c.h.b16 %v3203
        %v3557 = vunpack.c.l.b16 %v3204
        %v3558 = vunpack.c.h.b16 %v3204
        %v3559 = vunpack.c.l.b16 %v3205
        %v3560 = vunpack.c.h.b16 %v3205
        %v3561 = vunpack.c.l.b16 %v3206
        %v3562 = vunpack.c.h.b16 %v3206
        %v3563 = vunpack.c.l.b16 %v3207
        %v3564 = vunpack.c.h.b16 %v3207
        %v3565 = vunpack.c.l.b16 %v3208
        %v3566 = vunpack.c.h.b16 %v3208
        %v3567 = vunpack.c.l.b16 %v3209
        %v3568 = vunpack.c.h.b16 %v3209
        %v3569 = vunpack.c.l.b16 %v3210
        %v3570 = vunpack.c.h.b16 %v3210
        %v3571 = vunpack.c.l.b16 %v3211
        %v3572 = vunpack.c.h.b16 %v3211
        %v3573 = vunpack.c.l.b16 %v3212
        %v3574 = vunpack.c.h.b16 %v3212
        %v3575 = vunpack.c.l.b16 %v3213
        %v3576 = vunpack.c.h.b16 %v3213
        %v3577 = vunpack.c.l.b16 %v3214
        %v3578 = vunpack.c.h.b16 %v3214
        %v3579 = vunpack.c.l.b16 %v3215
        %v3580 = vunpack.c.h.b16 %v3215
        %v3581 = vunpack.c.l.b16 %v3216
        %v3582 = vunpack.c.h.b16 %v3216
        %v3583 = vunpack.c.l.b16 %v3217
        %v3584 = vunpack.c.h.b16 %v3217
        %v3585 = vunpack.c.l.b16 %v3218
        %v3586 = vunpack.c.h.b16 %v3218
        %v3587 = vunpack.c.l.b16 %v3219
        %v3588 = vunpack.c.h.b16 %v3219
        %v3589 = vunpack.c.l.b16 %v3220
        %v3590 = vunpack.c.h.b16 %v3220
        %v3591 = vunpack.c.l.b16 %v3221
        %v3592 = vunpack.c.h.b16 %v3221
        %v3593 = vunpack.c.l.b16 %v3222
        %v3594 = vunpack.c.h.b16 %v3222
        %v3595 = vunpack.c.l.b16 %v3223
        %v3596 = vunpack.c.h.b16 %v3223
        %v3597 = vunpack.c.l.b16 %v3224
        %v3598 = vunpack.c.h.b16 %v3224
        %v3599 = vunpack.c.l.b16 %v3225
        %v3600 = vunpack.c.h.b16 %v3225
        %v3601 = vunpack.c.l.b16 %v3226
        %v3602 = vunpack.c.h.b16 %v3226
        %v3603 = vunpack.c.l.b16 %v3227
        %v3604 = vunpack.c.h.b16 %v3227
        %v3605 = vunpack.c.l.b16 %v3228
        %v3606 = vunpack.c.h.b16 %v3228
        %v3607 = vunpack.c.l.b16 %v3229
        %v3608 = vunpack.c.h.b16 %v3229
        %v3609 = vunpack.c.l.b16 %v3230
        %v3610 = vunpack.c.h.b16 %v3230
        %v3611 = vunpack.c.l.b16 %v3231
        %v3612 = vunpack.c.h.b16 %v3231
        %v3613 = vunpack.c.l.b16 %v3232
        %v3614 = vunpack.c.h.b16 %v3232
        %v3615 = vunpack.c.l.b16 %v3233
        %v3616 = vunpack.c.h.b16 %v3233
        %v3617 = vunpack.c.l.b16 %v3234
        %v3618 = vunpack.c.h.b16 %v3234
        %v3619 = vpack.c.b16 %v3371, %v3363
        %v3620 = vpack.c.b16 %v3372, %v3364
        %v3621 = vpack.c.b16 %v3373, %v3365
        %v3622 = vpack.c.b16 %v3374, %v3366
        %v3623 = vpack.c.b16 %v3375, %v3367
        %v3624 = vpack.c.b16 %v3376, %v3368
        %v3625 = vpack.c.b16 %v3377, %v3369
        %v3626 = vpack.c.b16 %v3378, %v3370
        %v3627 = vpack.c.b16 %v3387, %v3379
        %v3628 = vpack.c.b16 %v3388, %v3380
        %v3629 = vpack.c.b16 %v3389, %v3381
        %v3630 = vpack.c.b16 %v3390, %v3382
        %v3631 = vpack.c.b16 %v3391, %v3383
        %v3632 = vpack.c.b16 %v3392, %v3384
        %v3633 = vpack.c.b16 %v3393, %v3385
        %v3634 = vpack.c.b16 %v3394, %v3386
        %v3635 = vpack.c.b16 %v3403, %v3395
        %v3636 = vpack.c.b16 %v3404, %v3396
        %v3637 = vpack.c.b16 %v3405, %v3397
        %v3638 = vpack.c.b16 %v3406, %v3398
        %v3639 = vpack.c.b16 %v3407, %v3399
        %v3640 = vpack.c.b16 %v3408, %v3400
        %v3641 = vpack.c.b16 %v3409, %v3401
        %v3642 = vpack.c.b16 %v3410, %v3402
        %v3643 = vpack.c.b16 %v3419, %v3411
        %v3644 = vpack.c.b16 %v3420, %v3412
        %v3645 = vpack.c.b16 %v3421, %v3413
        %v3646 = vpack.c.b16 %v3422, %v3414
        %v3647 = vpack.c.b16 %v3423, %v3415
        %v3648 = vpack.c.b16 %v3424, %v3416
        %v3649 = vpack.c.b16 %v3425, %v3417
        %v3650 = vpack.c.b16 %v3426, %v3418
        %v3651 = vpack.c.b16 %v3435, %v3427
        %v3652 = vpack.c.b16 %v3436, %v3428
        %v3653 = vpack.c.b16 %v3437, %v3429
        %v3654 = vpack.c.b16 %v3438, %v3430
        %v3655 = vpack.c.b16 %v3439, %v3431
        %v3656 = vpack.c.b16 %v3440, %v3432
        %v3657 = vpack.c.b16 %v3441, %v3433
        %v3658 = vpack.c.b16 %v3442, %v3434
        %v3659 = vpack.c.b16 %v3451, %v3443
        %v3660 = vpack.c.b16 %v3452, %v3444
        %v3661 = vpack.c.b16 %v3453, %v3445
        %v3662 = vpack.c.b16 %v3454, %v3446
        %v3663 = vpack.c.b16 %v3455, %v3447
        %v3664 = vpack.c.b16 %v3456, %v3448
        %v3665 = vpack.c.b16 %v3457, %v3449
        %v3666 = vpack.c.b16 %v3458, %v3450
        %v3667 = vpack.c.b16 %v3467, %v3459
        %v3668 = vpack.c.b16 %v3468, %v3460
        %v3669 = vpack.c.b16 %v3469, %v3461
        %v3670 = vpack.c.b16 %v3470, %v3462
        %v3671 = vpack.c.b16 %v3471, %v3463
        %v3672 = vpack.c.b16 %v3472, %v3464
        %v3673 = vpack.c.b16 %v3473, %v3465
        %v3674 = vpack.c.b16 %v3474, %v3466
        %v3675 = vpack.c.b16 %v3483, %v3475
        %v3676 = vpack.c.b16 %v3484, %v3476
        %v3677 = vpack.c.b16 %v3485, %v3477
        %v3678 = vpack.c.b16 %v3486, %v3478
        %v3679 = vpack.c.b16 %v3487, %v3479
        %v3680 = vpack.c.b16 %v3488, %v3480
        %v3681 = vpack.c.b16 %v3489, %v3481
        %v3682 = vpack.c.b16 %v3490, %v3482
        %v3683 = vpack.c.b16 %v3499, %v3491
        %v3684 = vpack.c.b16 %v3500, %v3492
        %v3685 = vpack.c.b16 %v3501, %v3493
        %v3686 = vpack.c.b16 %v3502, %v3494
        %v3687 = vpack.c.b16 %v3503, %v3495
        %v3688 = vpack.c.b16 %v3504, %v3496
        %v3689 = vpack.c.b16 %v3505, %v3497
        %v3690 = vpack.c.b16 %v3506, %v3498
        %v3691 = vpack.c.b16 %v3515, %v3507
        %v3692 = vpack.c.b16 %v3516, %v3508
        %v3693 = vpack.c.b16 %v3517, %v3509
        %v3694 = vpack.c.b16 %v3518, %v3510
        %v3695 = vpack.c.b16 %v3519, %v3511
        %v3696 = vpack.c.b16 %v3520, %v3512
        %v3697 = vpack.c.b16 %v3521, %v3513
        %v3698 = vpack.c.b16 %v3522, %v3514
        %v3699 = vpack.c.b16 %v3531, %v3523
        %v3700 = vpack.c.b16 %v3532, %v3524
        %v3701 = vpack.c.b16 %v3533, %v3525
        %v3702 = vpack.c.b16 %v3534, %v3526
        %v3703 = vpack.c.b16 %v3535, %v3527
        %v3704 = vpack.c.b16 %v3536, %v3528
        %v3705 = vpack.c.b16 %v3537, %v3529
        %v3706 = vpack.c.b16 %v3538, %v3530
        %v3707 = vpack.c.b16 %v3547, %v3539
        %v3708 = vpack.c.b16 %v3548, %v3540
        %v3709 = vpack.c.b16 %v3549, %v3541
        %v3710 = vpack.c.b16 %v3550, %v3542
        %v3711 = vpack.c.b16 %v3551, %v3543
        %v3712 = vpack.c.b16 %v3552, %v3544
        %v3713 = vpack.c.b16 %v3553, %v3545
        %v3714 = vpack.c.b16 %v3554, %v3546
        %v3715 = vpack.c.b16 %v3563, %v3555
        %v3716 = vpack.c.b16 %v3564, %v3556
        %v3717 = vpack.c.b16 %v3565, %v3557
        %v3718 = vpack.c.b16 %v3566, %v3558
        %v3719 = vpack.c.b16 %v3567, %v3559
        %v3720 = vpack.c.b16 %v3568, %v3560
        %v3721 = vpack.c.b16 %v3569, %v3561
        %v3722 = vpack.c.b16 %v3570, %v3562
        %v3723 = vpack.c.b16 %v3579, %v3571
        %v3724 = vpack.c.b16 %v3580, %v3572
        %v3725 = vpack.c.b16 %v3581, %v3573
        %v3726 = vpack.c.b16 %v3582, %v3574
        %v3727 = vpack.c.b16 %v3583, %v3575
        %v3728 = vpack.c.b16 %v3584, %v3576
        %v3729 = vpack.c.b16 %v3585, %v3577
        %v3730 = vpack.c.b16 %v3586, %v3578
        %v3731 = vpack.c.b16 %v3595, %v3587
        %v3732 = vpack.c.b16 %v3596, %v3588
        %v3733 = vpack.c.b16 %v3597, %v3589
        %v3734 = vpack.c.b16 %v3598, %v3590
        %v3735 = vpack.c.b16 %v3599, %v3591
        %v3736 = vpack.c.b16 %v3600, %v3592
        %v3737 = vpack.c.b16 %v3601, %v3593
        %v3738 = vpack.c.b16 %v3602, %v3594
        %v3739 = vpack.c.b16 %v3611, %v3603
        %v3740 = vpack.c.b16 %v3612, %v3604
        %v3741 = vpack.c.b16 %v3613, %v3605
        %v3742 = vpack.c.b16 %v3614, %v3606
        %v3743 = vpack.c.b16 %v3615, %v3607
        %v3744 = vpack.c.b16 %v3616, %v3608
        %v3745 = vpack.c.b16 %v3617, %v3609
        %v3746 = vpack.c.b16 %v3618, %v3610
        %3875 = vmatprep.subr.bf16.mxu0 %v3676
        %3876 = vmatpush1.bf16.msra.mxu0 %v3675
        %3877 = vmatprep.subr.bf16.mxu0 %v3668
        %3878 = vmatpush1.bf16.msra.mxu0 %v3667
        %3879 = vmatprep.subr.bf16.mxu0 %v3660
        %3880 = vmatpush1.bf16.msra.mxu0 %v3659
        %3881 = vmatprep.subr.bf16.mxu0 %v3652
        %3882 = vmatpush1.bf16.msra.mxu0 %v3651
        %3883 = vmatprep.subr.bf16.mxu0 %v3644
        %3884 = vmatpush1.bf16.msra.mxu0 %v3643
        %3885 = vmatprep.subr.bf16.mxu0 %v3636
        %3886 = vmatpush1.bf16.msra.mxu0 %v3635
        %3887 = vmatprep.subr.bf16.mxu0 %v3628
        %3888 = vmatpush1.bf16.msra.mxu0 %v3627
        %3889 = vmatprep.subr.bf16.mxu0 %v3620
        %3890 = vmatpush1.bf16.msra.mxu0 %v3619
        %3891 = vmatprep.subr.bf16.mxu0 %v3740
        %3892 = vmatpush2.bf16.msra.mxu0 %v3739
        %3893 = vmatprep.subr.bf16.mxu0 %v3732
        %3894 = vmatpush2.bf16.msra.mxu0 %v3731
        %3895 = vmatprep.subr.bf16.mxu0 %v3724
        %3896 = vmatpush2.bf16.msra.mxu0 %v3723
        %3897 = vmatprep.subr.bf16.mxu0 %v3716
        %3898 = vmatpush2.bf16.msra.mxu0 %v3715
        %3899 = vmatprep.subr.bf16.mxu0 %v3708
        %3900 = vmatpush2.bf16.msra.mxu0 %v3707
        %3901 = vmatprep.subr.bf16.mxu0 %v3700
        %3902 = vmatpush2.bf16.msra.mxu0 %v3699
        %3903 = vmatprep.subr.bf16.mxu0 %v3692
        %3904 = vmatpush2.bf16.msra.mxu0 %v3691
        %3905 = vmatprep.subr.bf16.mxu0 %v3684
        %3906 = vmatpush2.bf16.msra.mxu0 %v3683
        %3907 = vmatprep.mubr.bf16.mxu0 %v3106
        %3908 = vmatmul.mubr.bf16.gmra.mxu0 %v3105
        %v3909 = vpop.f32.mrf.mxu0
        %v3910 = vadd.f32 0.0, %v3909
        %v3911 = vpop.f32.mrf.mxu0
        %v3912 = vadd.f32 0.0, %v3911
        %v3913 = vpop.f32.mrf.mxu0
        %v3914 = vpop.f32.mrf.mxu0
        %3915 = vdwg.mxu0
        %3916 = vmatprep.subr.bf16.mxu0 %v3678
        %3917 = vmatpush1.bf16.msra.mxu0 %v3677
        %3918 = vmatprep.subr.bf16.mxu0 %v3670
        %3919 = vmatpush1.bf16.msra.mxu0 %v3669
        %3920 = vmatprep.subr.bf16.mxu0 %v3662
        %3921 = vmatpush1.bf16.msra.mxu0 %v3661
        %3922 = vmatprep.subr.bf16.mxu0 %v3654
        %3923 = vmatpush1.bf16.msra.mxu0 %v3653
        %3924 = vmatprep.subr.bf16.mxu0 %v3646
        %3925 = vmatpush1.bf16.msra.mxu0 %v3645
        %3926 = vmatprep.subr.bf16.mxu0 %v3638
        %3927 = vmatpush1.bf16.msra.mxu0 %v3637
        %3928 = vmatprep.subr.bf16.mxu0 %v3630
        %3929 = vmatpush1.bf16.msra.mxu0 %v3629
        %3930 = vmatprep.subr.bf16.mxu0 %v3622
        %3931 = vmatpush1.bf16.msra.mxu0 %v3621
        %3932 = vmatprep.subr.bf16.mxu0 %v3742
        %3933 = vmatpush2.bf16.msra.mxu0 %v3741
        %3934 = vmatprep.subr.bf16.mxu0 %v3734
        %3935 = vmatpush2.bf16.msra.mxu0 %v3733
        %3936 = vmatprep.subr.bf16.mxu0 %v3726
        %3937 = vmatpush2.bf16.msra.mxu0 %v3725
        %3938 = vmatprep.subr.bf16.mxu0 %v3718
        %3939 = vmatpush2.bf16.msra.mxu0 %v3717
        %3940 = vmatprep.subr.bf16.mxu0 %v3710
        %3941 = vmatpush2.bf16.msra.mxu0 %v3709
        %3942 = vmatprep.subr.bf16.mxu0 %v3702
        %3943 = vmatpush2.bf16.msra.mxu0 %v3701
        %3944 = vmatprep.subr.bf16.mxu0 %v3694
        %3945 = vmatpush2.bf16.msra.mxu0 %v3693
        %3946 = vmatprep.subr.bf16.mxu0 %v3686
        %3947 = vmatpush2.bf16.msra.mxu0 %v3685
        %3948 = vmatprep.mubr.bf16.mxu0 %v3106
        %3949 = vmatmul.mubr.bf16.gmra.mxu0 %v3105
        %v3950 = vpop.f32.mrf.mxu0
        %v3951 = vadd.f32 0.0, %v3950
        %v3952 = vpop.f32.mrf.mxu0
        %v3953 = vadd.f32 0.0, %v3952
        %v3954 = vpop.f32.mrf.mxu0
        %v3955 = vpop.f32.mrf.mxu0
        %3956 = vdwg.mxu0
        %3957 = vmatprep.subr.bf16.mxu0 %v3680
        %3958 = vmatpush1.bf16.msra.mxu0 %v3679
        %3959 = vmatprep.subr.bf16.mxu0 %v3672
        %3960 = vmatpush1.bf16.msra.mxu0 %v3671
        %3961 = vmatprep.subr.bf16.mxu0 %v3664
        %3962 = vmatpush1.bf16.msra.mxu0 %v3663
        %3963 = vmatprep.subr.bf16.mxu0 %v3656
        %3964 = vmatpush1.bf16.msra.mxu0 %v3655
        %3965 = vmatprep.subr.bf16.mxu0 %v3648
        %3966 = vmatpush1.bf16.msra.mxu0 %v3647
        %3967 = vmatprep.subr.bf16.mxu0 %v3640
        %3968 = vmatpush1.bf16.msra.mxu0 %v3639
        %3969 = vmatprep.subr.bf16.mxu0 %v3632
        %3970 = vmatpush1.bf16.msra.mxu0 %v3631
        %3971 = vmatprep.subr.bf16.mxu0 %v3624
        %3972 = vmatpush1.bf16.msra.mxu0 %v3623
        %3973 = vmatprep.subr.bf16.mxu0 %v3744
        %3974 = vmatpush2.bf16.msra.mxu0 %v3743
        %3975 = vmatprep.subr.bf16.mxu0 %v3736
        %3976 = vmatpush2.bf16.msra.mxu0 %v3735
        %3977 = vmatprep.subr.bf16.mxu0 %v3728
        %3978 = vmatpush2.bf16.msra.mxu0 %v3727
        %3979 = vmatprep.subr.bf16.mxu0 %v3720
        %3980 = vmatpush2.bf16.msra.mxu0 %v3719
        %3981 = vmatprep.subr.bf16.mxu0 %v3712
        %3982 = vmatpush2.bf16.msra.mxu0 %v3711
        %3983 = vmatprep.subr.bf16.mxu0 %v3704
        %3984 = vmatpush2.bf16.msra.mxu0 %v3703
        %3985 = vmatprep.subr.bf16.mxu0 %v3696
        %3986 = vmatpush2.bf16.msra.mxu0 %v3695
        %3987 = vmatprep.subr.bf16.mxu0 %v3688
        %3988 = vmatpush2.bf16.msra.mxu0 %v3687
        %3989 = vmatprep.mubr.bf16.mxu0 %v3106
        %3990 = vmatmul.mubr.bf16.gmra.mxu0 %v3105
        %v3991 = vpop.f32.mrf.mxu0
        %v3992 = vadd.f32 0.0, %v3991
        %v3993 = vpop.f32.mrf.mxu0
        %v3994 = vadd.f32 0.0, %v3993
        %v3995 = vpop.f32.mrf.mxu0
        %v3996 = vpop.f32.mrf.mxu0
        %3997 = vdwg.mxu0
        %3998 = vmatprep.subr.bf16.mxu0 %v3682
        %3999 = vmatpush1.bf16.msra.mxu0 %v3681
        %4000 = vmatprep.subr.bf16.mxu0 %v3674
        %4001 = vmatpush1.bf16.msra.mxu0 %v3673
        %4002 = vmatprep.subr.bf16.mxu0 %v3666
        %4003 = vmatpush1.bf16.msra.mxu0 %v3665
        %4004 = vmatprep.subr.bf16.mxu0 %v3658
        %4005 = vmatpush1.bf16.msra.mxu0 %v3657
        %4006 = vmatprep.subr.bf16.mxu0 %v3650
        %4007 = vmatpush1.bf16.msra.mxu0 %v3649
        %4008 = vmatprep.subr.bf16.mxu0 %v3642
        %4009 = vmatpush1.bf16.msra.mxu0 %v3641
        %4010 = vmatprep.subr.bf16.mxu0 %v3634
        %4011 = vmatpush1.bf16.msra.mxu0 %v3633
        %4012 = vmatprep.subr.bf16.mxu0 %v3626
        %4013 = vmatpush1.bf16.msra.mxu0 %v3625
        %4014 = vmatprep.subr.bf16.mxu0 %v3746
        %4015 = vmatpush2.bf16.msra.mxu0 %v3745
        %4016 = vmatprep.subr.bf16.mxu0 %v3738
        %4017 = vmatpush2.bf16.msra.mxu0 %v3737
        %4018 = vmatprep.subr.bf16.mxu0 %v3730
        %4019 = vmatpush2.bf16.msra.mxu0 %v3729
        %4020 = vmatprep.subr.bf16.mxu0 %v3722
        %4021 = vmatpush2.bf16.msra.mxu0 %v3721
        %4022 = vmatprep.subr.bf16.mxu0 %v3714
        %4023 = vmatpush2.bf16.msra.mxu0 %v3713
        %4024 = vmatprep.subr.bf16.mxu0 %v3706
        %4025 = vmatpush2.bf16.msra.mxu0 %v3705
        %4026 = vmatprep.subr.bf16.mxu0 %v3698
        %4027 = vmatpush2.bf16.msra.mxu0 %v3697
        %4028 = vmatprep.subr.bf16.mxu0 %v3690
        %4029 = vmatpush2.bf16.msra.mxu0 %v3689
        %4030 = vmatprep.mubr.bf16.mxu0 %v3106
        %4031 = vmatmul.mubr.bf16.gmra.mxu0 %v3105
        %v4032 = vpop.f32.mrf.mxu0
        %v4033 = vadd.f32 0.0, %v4032
        %v4034 = vpop.f32.mrf.mxu0
        %v4035 = vadd.f32 0.0, %v4034
        %v4036 = vpop.f32.mrf.mxu0
        %v4037 = vpop.f32.mrf.mxu0
        %4038 = vdwg.mxu0
        %v4043 = vcombine.low %v3910, %v3912
        %v4044 = vcombine.low %v3951, %v3953
        %v4047 = vadd.f32 %v3096, %v4043
        %v4048 = vadd.f32 %v3097, %v4044
        %v4049 = vxor.u32 %v4047, 2147483648
        %v4050 = vmul.f32 %v4049, 1.442695
        %v4051 = vpow.pop %v4050
        %v4052 = vadd.f32 %v4051, 1.0
        %v4053 = vrcp.pop %v4052
        %v4054 = vmul.f32 1.0, %v4053
        %v4056 = vrot.slane %v4047, 4
        %v4058 = vxor.u32 %v4056, 2147483648
        %v4059 = vmul.f32 %v4058, 1.442695
        %v4060 = vpow.pop %v4059
        %v4061 = vadd.f32 %v4060, 1.0
        %v4062 = vrcp.pop %v4061
        %v4063 = vmul.f32 1.0, %v4062
        %v4064 = vtanh.pop %v4048
        %v4066 = vrot.slane %v4048, 4
        %v4068 = vxor.u32 %v4066, 2147483648
        %v4069 = vmul.f32 %v4068, 1.442695
        %v4070 = vpow.pop %v4069
        %v4071 = vadd.f32 %v4070, 1.0
        %v4072 = vrcp.pop %v4071
        %v4073 = vmul.f32 1.0, %v4072
        %v4074 = vmul.f32 %v4063, %v3101
        %v4075 = vmul.f32 %v4054, %v4064
        %v4076 = vadd.f32 %v4074, %v4075
        %v4077 = vtanh.pop %v4076
        %v4078 = vmul.f32 %v4073, %v4077
        %v4083 = vcombine.low %v3992, %v3994
        %v4084 = vcombine.low %v4033, %v4035
        %v4087 = vadd.f32 %v3098, %v4083
        %v4088 = vadd.f32 %v3099, %v4084
        %v4089 = vxor.u32 %v4087, 2147483648
        %v4090 = vmul.f32 %v4089, 1.442695
        %v4091 = vpow.pop %v4090
        %v4092 = vadd.f32 %v4091, 1.0
        %v4093 = vrcp.pop %v4092
        %v4094 = vmul.f32 1.0, %v4093
        %v4096 = vrot.slane %v4087, 4
        %v4098 = vxor.u32 %v4096, 2147483648
        %v4099 = vmul.f32 %v4098, 1.442695
        %v4100 = vpow.pop %v4099
        %v4101 = vadd.f32 %v4100, 1.0
        %v4102 = vrcp.pop %v4101
        %v4103 = vmul.f32 1.0, %v4102
        %v4104 = vtanh.pop %v4088
        %v4106 = vrot.slane %v4088, 4
        %v4108 = vxor.u32 %v4106, 2147483648
        %v4109 = vmul.f32 %v4108, 1.442695
        %v4110 = vpow.pop %v4109
        %v4111 = vadd.f32 %v4110, 1.0
        %v4112 = vrcp.pop %v4111
        %v4113 = vmul.f32 1.0, %v4112
        %v4115 = vrot.slane %v3101, 4
        %v4117 = vmul.f32 %v4103, %v4115
        %v4118 = vmul.f32 %v4094, %v4104
        %v4119 = vadd.f32 %v4117, %v4118
        %v4120 = vtanh.pop %v4119
        %v4121 = vmul.f32 %v4113, %v4120
        %v4122 = vstv %s3094
        %vm4123 = vcmp.gt.s32.totalorder %v975, %v4122
        %v4124 = vstv %s3095
        %vm4125 = vcmp.gt.s32.totalorder %v975, %v4124
        %v4126 = vsel %vm4123, 1, 0
        %4127 = vset.pattern.permute.xlu0 0
        %4128 = vperm.xlu0 %4127, %v4126
        %v4129 = vpop.permute.xlu0 %4128
        %vm4130 = vcmp.eq.s32.totalorder %v4129, 1
        %v4131 = vsel %vm4130, %v4078, %v3100
        %4132 = vst [vmem:[#allocation3] sm:$0xf] %v4131
        %v4133 = vsel %vm4125, 1, 0
        %4134 = vset.pattern.permute.xlu0 0
        %4135 = vperm.xlu0 %4134, %v4133
        %v4136 = vpop.permute.xlu0 %4135
        %vm4137 = vcmp.eq.s32.totalorder %v4136, 1
        %v4138 = vsel %vm4137, %v4121, %v3103
        %4139 = vst [vmem:[#allocation3 + $0x4] sm:$0xf] %v4138
        %v4140 = vsel %vm4130, %v4076, %v3101
        %4141 = vst [vmem:[#allocation4] sm:$0xf] %v4140
        %v4142 = vcombine.high %v3101, %v3101
        %v4144 = vsel %vm4137, %v4119, %v4142
        %4145 = vst [vmem:[#allocation4 + $0x4] sm:$0xf] %v4144
        %v4146 = vsel %vm4130, %v4078, 0.0
        %s4147 = scalar_lea.vmem %s414, 8
        %4148 = vst [vmem:[%s4147] sm:$0xf] %v4146
        %v4149 = vsel %vm4137, %v4121, 0.0
        %s4150 = scalar_lea.vmem %s424, 4
        %4151 = vst [vmem:[%s4150] sm:$0xf] %v4149
        %s4152 = sadd.s32 %s976, 3
        %s4153 = ssub.s32 4, %s976
        %v4154 = vld [vmem:[%s980] sm:$0xff]
        %v4155 = vld [vmem:[%s980 + $0x8] sm:$0xff]
        %v4156 = vld [vmem:[#allocation2 + $0x10] sm:$0xff]
        %v4157 = vld [vmem:[#allocation2 + $0x18] sm:$0xff]
        %v4158 = vld [vmem:[#allocation3] sm:$0xff]
        %v4159 = vld [vmem:[#allocation4] sm:$0xff]
        %v4161 = vcombine.high %v4158, %v4158
        %v4163 = vpack.c.bf16 %v4158, %v4158
        %v4164 = vpack.c.bf16 %v4161, %v4161
        %v4165 = vld [vmem:[#allocation7] sm:$0xff]
        %v4166 = vld [vmem:[#allocation7 + $0x8] sm:$0xff]
        %v4167 = vld [vmem:[#allocation7 + $0x10] sm:$0xff]
        %v4168 = vld [vmem:[#allocation7 + $0x18] sm:$0xff]
        %v4169 = vld [vmem:[#allocation7 + $0x20] sm:$0xff]
        %v4170 = vld [vmem:[#allocation7 + $0x28] sm:$0xff]
        %v4171 = vld [vmem:[#allocation7 + $0x30] sm:$0xff]
        %v4172 = vld [vmem:[#allocation7 + $0x38] sm:$0xff]
        %v4173 = vld [vmem:[#allocation7 + $0x40] sm:$0xff]
        %v4174 = vld [vmem:[#allocation7 + $0x48] sm:$0xff]
        %v4175 = vld [vmem:[#allocation7 + $0x50] sm:$0xff]
        %v4176 = vld [vmem:[#allocation7 + $0x58] sm:$0xff]
        %v4177 = vld [vmem:[#allocation7 + $0x60] sm:$0xff]
        %v4178 = vld [vmem:[#allocation7 + $0x68] sm:$0xff]
        %v4179 = vld [vmem:[#allocation7 + $0x70] sm:$0xff]
        %v4180 = vld [vmem:[#allocation7 + $0x78] sm:$0xff]
        %v4181 = vld [vmem:[#allocation7 + $0x80] sm:$0xff]
        %v4182 = vld [vmem:[#allocation7 + $0x88] sm:$0xff]
        %v4183 = vld [vmem:[#allocation7 + $0x90] sm:$0xff]
        %v4184 = vld [vmem:[#allocation7 + $0x98] sm:$0xff]
        %v4185 = vld [vmem:[#allocation7 + $0xa0] sm:$0xff]
        %v4186 = vld [vmem:[#allocation7 + $0xa8] sm:$0xff]
        %v4187 = vld [vmem:[#allocation7 + $0xb0] sm:$0xff]
        %v4188 = vld [vmem:[#allocation7 + $0xb8] sm:$0xff]
        %v4189 = vld [vmem:[#allocation7 + $0xc0] sm:$0xff]
        %v4190 = vld [vmem:[#allocation7 + $0xc8] sm:$0xff]
        %v4191 = vld [vmem:[#allocation7 + $0xd0] sm:$0xff]
        %v4192 = vld [vmem:[#allocation7 + $0xd8] sm:$0xff]
        %v4193 = vld [vmem:[#allocation7 + $0xe0] sm:$0xff]
        %v4194 = vld [vmem:[#allocation7 + $0xe8] sm:$0xff]
        %v4195 = vld [vmem:[#allocation7 + $0xf0] sm:$0xff]
        %v4196 = vld [vmem:[#allocation7 + $0xf8] sm:$0xff]
        %v4197 = vld [vmem:[#allocation7 + $0x100] sm:$0xff]
        %v4198 = vld [vmem:[#allocation7 + $0x108] sm:$0xff]
        %v4199 = vld [vmem:[#allocation7 + $0x110] sm:$0xff]
        %v4200 = vld [vmem:[#allocation7 + $0x118] sm:$0xff]
        %v4201 = vld [vmem:[#allocation7 + $0x120] sm:$0xff]
        %v4202 = vld [vmem:[#allocation7 + $0x128] sm:$0xff]
        %v4203 = vld [vmem:[#allocation7 + $0x130] sm:$0xff]
        %v4204 = vld [vmem:[#allocation7 + $0x138] sm:$0xff]
        %v4205 = vld [vmem:[#allocation7 + $0x140] sm:$0xff]
        %v4206 = vld [vmem:[#allocation7 + $0x148] sm:$0xff]
        %v4207 = vld [vmem:[#allocation7 + $0x150] sm:$0xff]
        %v4208 = vld [vmem:[#allocation7 + $0x158] sm:$0xff]
        %v4209 = vld [vmem:[#allocation7 + $0x160] sm:$0xff]
        %v4210 = vld [vmem:[#allocation7 + $0x168] sm:$0xff]
        %v4211 = vld [vmem:[#allocation7 + $0x170] sm:$0xff]
        %v4212 = vld [vmem:[#allocation7 + $0x178] sm:$0xff]
        %v4213 = vld [vmem:[#allocation7 + $0x180] sm:$0xff]
        %v4214 = vld [vmem:[#allocation7 + $0x188] sm:$0xff]
        %v4215 = vld [vmem:[#allocation7 + $0x190] sm:$0xff]
        %v4216 = vld [vmem:[#allocation7 + $0x198] sm:$0xff]
        %v4217 = vld [vmem:[#allocation7 + $0x1a0] sm:$0xff]
        %v4218 = vld [vmem:[#allocation7 + $0x1a8] sm:$0xff]
        %v4219 = vld [vmem:[#allocation7 + $0x1b0] sm:$0xff]
        %v4220 = vld [vmem:[#allocation7 + $0x1b8] sm:$0xff]
        %v4221 = vld [vmem:[#allocation7 + $0x1c0] sm:$0xff]
        %v4222 = vld [vmem:[#allocation7 + $0x1c8] sm:$0xff]
        %v4223 = vld [vmem:[#allocation7 + $0x1d0] sm:$0xff]
        %v4224 = vld [vmem:[#allocation7 + $0x1d8] sm:$0xff]
        %v4225 = vld [vmem:[#allocation7 + $0x1e0] sm:$0xff]
        %v4226 = vld [vmem:[#allocation7 + $0x1e8] sm:$0xff]
        %v4227 = vld [vmem:[#allocation7 + $0x1f0] sm:$0xff]
        %v4228 = vld [vmem:[#allocation7 + $0x1f8] sm:$0xff]
        %v4229 = vld [vmem:[#allocation7 + $0x200] sm:$0xff]
        %v4230 = vld [vmem:[#allocation7 + $0x208] sm:$0xff]
        %v4231 = vld [vmem:[#allocation7 + $0x210] sm:$0xff]
        %v4232 = vld [vmem:[#allocation7 + $0x218] sm:$0xff]
        %v4233 = vld [vmem:[#allocation7 + $0x220] sm:$0xff]
        %v4234 = vld [vmem:[#allocation7 + $0x228] sm:$0xff]
        %v4235 = vld [vmem:[#allocation7 + $0x230] sm:$0xff]
        %v4236 = vld [vmem:[#allocation7 + $0x238] sm:$0xff]
        %v4237 = vld [vmem:[#allocation7 + $0x240] sm:$0xff]
        %v4238 = vld [vmem:[#allocation7 + $0x248] sm:$0xff]
        %v4239 = vld [vmem:[#allocation7 + $0x250] sm:$0xff]
        %v4240 = vld [vmem:[#allocation7 + $0x258] sm:$0xff]
        %v4241 = vld [vmem:[#allocation7 + $0x260] sm:$0xff]
        %v4242 = vld [vmem:[#allocation7 + $0x268] sm:$0xff]
        %v4243 = vld [vmem:[#allocation7 + $0x270] sm:$0xff]
        %v4244 = vld [vmem:[#allocation7 + $0x278] sm:$0xff]
        %v4245 = vld [vmem:[#allocation7 + $0x280] sm:$0xff]
        %v4246 = vld [vmem:[#allocation7 + $0x288] sm:$0xff]
        %v4247 = vld [vmem:[#allocation7 + $0x290] sm:$0xff]
        %v4248 = vld [vmem:[#allocation7 + $0x298] sm:$0xff]
        %v4249 = vld [vmem:[#allocation7 + $0x2a0] sm:$0xff]
        %v4250 = vld [vmem:[#allocation7 + $0x2a8] sm:$0xff]
        %v4251 = vld [vmem:[#allocation7 + $0x2b0] sm:$0xff]
        %v4252 = vld [vmem:[#allocation7 + $0x2b8] sm:$0xff]
        %v4253 = vld [vmem:[#allocation7 + $0x2c0] sm:$0xff]
        %v4254 = vld [vmem:[#allocation7 + $0x2c8] sm:$0xff]
        %v4255 = vld [vmem:[#allocation7 + $0x2d0] sm:$0xff]
        %v4256 = vld [vmem:[#allocation7 + $0x2d8] sm:$0xff]
        %v4257 = vld [vmem:[#allocation7 + $0x2e0] sm:$0xff]
        %v4258 = vld [vmem:[#allocation7 + $0x2e8] sm:$0xff]
        %v4259 = vld [vmem:[#allocation7 + $0x2f0] sm:$0xff]
        %v4260 = vld [vmem:[#allocation7 + $0x2f8] sm:$0xff]
        %v4261 = vld [vmem:[#allocation7 + $0x300] sm:$0xff]
        %v4262 = vld [vmem:[#allocation7 + $0x308] sm:$0xff]
        %v4263 = vld [vmem:[#allocation7 + $0x310] sm:$0xff]
        %v4264 = vld [vmem:[#allocation7 + $0x318] sm:$0xff]
        %v4265 = vld [vmem:[#allocation7 + $0x320] sm:$0xff]
        %v4266 = vld [vmem:[#allocation7 + $0x328] sm:$0xff]
        %v4267 = vld [vmem:[#allocation7 + $0x330] sm:$0xff]
        %v4268 = vld [vmem:[#allocation7 + $0x338] sm:$0xff]
        %v4269 = vld [vmem:[#allocation7 + $0x340] sm:$0xff]
        %v4270 = vld [vmem:[#allocation7 + $0x348] sm:$0xff]
        %v4271 = vld [vmem:[#allocation7 + $0x350] sm:$0xff]
        %v4272 = vld [vmem:[#allocation7 + $0x358] sm:$0xff]
        %v4273 = vld [vmem:[#allocation7 + $0x360] sm:$0xff]
        %v4274 = vld [vmem:[#allocation7 + $0x368] sm:$0xff]
        %v4275 = vld [vmem:[#allocation7 + $0x370] sm:$0xff]
        %v4276 = vld [vmem:[#allocation7 + $0x378] sm:$0xff]
        %v4277 = vld [vmem:[#allocation7 + $0x380] sm:$0xff]
        %v4278 = vld [vmem:[#allocation7 + $0x388] sm:$0xff]
        %v4279 = vld [vmem:[#allocation7 + $0x390] sm:$0xff]
        %v4280 = vld [vmem:[#allocation7 + $0x398] sm:$0xff]
        %v4281 = vld [vmem:[#allocation7 + $0x3a0] sm:$0xff]
        %v4282 = vld [vmem:[#allocation7 + $0x3a8] sm:$0xff]
        %v4283 = vld [vmem:[#allocation7 + $0x3b0] sm:$0xff]
        %v4284 = vld [vmem:[#allocation7 + $0x3b8] sm:$0xff]
        %v4285 = vld [vmem:[#allocation7 + $0x3c0] sm:$0xff]
        %v4286 = vld [vmem:[#allocation7 + $0x3c8] sm:$0xff]
        %v4287 = vld [vmem:[#allocation7 + $0x3d0] sm:$0xff]
        %v4288 = vld [vmem:[#allocation7 + $0x3d8] sm:$0xff]
        %v4289 = vld [vmem:[#allocation7 + $0x3e0] sm:$0xff]
        %v4290 = vld [vmem:[#allocation7 + $0x3e8] sm:$0xff]
        %v4291 = vld [vmem:[#allocation7 + $0x3f0] sm:$0xff]
        %v4292 = vld [vmem:[#allocation7 + $0x3f8] sm:$0xff]
        %v4421 = vunpack.c.l.b16 %v4165
        %v4422 = vunpack.c.h.b16 %v4165
        %v4423 = vunpack.c.l.b16 %v4166
        %v4424 = vunpack.c.h.b16 %v4166
        %v4425 = vunpack.c.l.b16 %v4167
        %v4426 = vunpack.c.h.b16 %v4167
        %v4427 = vunpack.c.l.b16 %v4168
        %v4428 = vunpack.c.h.b16 %v4168
        %v4429 = vunpack.c.l.b16 %v4169
        %v4430 = vunpack.c.h.b16 %v4169
        %v4431 = vunpack.c.l.b16 %v4170
        %v4432 = vunpack.c.h.b16 %v4170
        %v4433 = vunpack.c.l.b16 %v4171
        %v4434 = vunpack.c.h.b16 %v4171
        %v4435 = vunpack.c.l.b16 %v4172
        %v4436 = vunpack.c.h.b16 %v4172
        %v4437 = vunpack.c.l.b16 %v4173
        %v4438 = vunpack.c.h.b16 %v4173
        %v4439 = vunpack.c.l.b16 %v4174
        %v4440 = vunpack.c.h.b16 %v4174
        %v4441 = vunpack.c.l.b16 %v4175
        %v4442 = vunpack.c.h.b16 %v4175
        %v4443 = vunpack.c.l.b16 %v4176
        %v4444 = vunpack.c.h.b16 %v4176
        %v4445 = vunpack.c.l.b16 %v4177
        %v4446 = vunpack.c.h.b16 %v4177
        %v4447 = vunpack.c.l.b16 %v4178
        %v4448 = vunpack.c.h.b16 %v4178
        %v4449 = vunpack.c.l.b16 %v4179
        %v4450 = vunpack.c.h.b16 %v4179
        %v4451 = vunpack.c.l.b16 %v4180
        %v4452 = vunpack.c.h.b16 %v4180
        %v4453 = vunpack.c.l.b16 %v4181
        %v4454 = vunpack.c.h.b16 %v4181
        %v4455 = vunpack.c.l.b16 %v4182
        %v4456 = vunpack.c.h.b16 %v4182
        %v4457 = vunpack.c.l.b16 %v4183
        %v4458 = vunpack.c.h.b16 %v4183
        %v4459 = vunpack.c.l.b16 %v4184
        %v4460 = vunpack.c.h.b16 %v4184
        %v4461 = vunpack.c.l.b16 %v4185
        %v4462 = vunpack.c.h.b16 %v4185
        %v4463 = vunpack.c.l.b16 %v4186
        %v4464 = vunpack.c.h.b16 %v4186
        %v4465 = vunpack.c.l.b16 %v4187
        %v4466 = vunpack.c.h.b16 %v4187
        %v4467 = vunpack.c.l.b16 %v4188
        %v4468 = vunpack.c.h.b16 %v4188
        %v4469 = vunpack.c.l.b16 %v4189
        %v4470 = vunpack.c.h.b16 %v4189
        %v4471 = vunpack.c.l.b16 %v4190
        %v4472 = vunpack.c.h.b16 %v4190
        %v4473 = vunpack.c.l.b16 %v4191
        %v4474 = vunpack.c.h.b16 %v4191
        %v4475 = vunpack.c.l.b16 %v4192
        %v4476 = vunpack.c.h.b16 %v4192
        %v4477 = vunpack.c.l.b16 %v4193
        %v4478 = vunpack.c.h.b16 %v4193
        %v4479 = vunpack.c.l.b16 %v4194
        %v4480 = vunpack.c.h.b16 %v4194
        %v4481 = vunpack.c.l.b16 %v4195
        %v4482 = vunpack.c.h.b16 %v4195
        %v4483 = vunpack.c.l.b16 %v4196
        %v4484 = vunpack.c.h.b16 %v4196
        %v4485 = vunpack.c.l.b16 %v4197
        %v4486 = vunpack.c.h.b16 %v4197
        %v4487 = vunpack.c.l.b16 %v4198
        %v4488 = vunpack.c.h.b16 %v4198
        %v4489 = vunpack.c.l.b16 %v4199
        %v4490 = vunpack.c.h.b16 %v4199
        %v4491 = vunpack.c.l.b16 %v4200
        %v4492 = vunpack.c.h.b16 %v4200
        %v4493 = vunpack.c.l.b16 %v4201
        %v4494 = vunpack.c.h.b16 %v4201
        %v4495 = vunpack.c.l.b16 %v4202
        %v4496 = vunpack.c.h.b16 %v4202
        %v4497 = vunpack.c.l.b16 %v4203
        %v4498 = vunpack.c.h.b16 %v4203
        %v4499 = vunpack.c.l.b16 %v4204
        %v4500 = vunpack.c.h.b16 %v4204
        %v4501 = vunpack.c.l.b16 %v4205
        %v4502 = vunpack.c.h.b16 %v4205
        %v4503 = vunpack.c.l.b16 %v4206
        %v4504 = vunpack.c.h.b16 %v4206
        %v4505 = vunpack.c.l.b16 %v4207
        %v4506 = vunpack.c.h.b16 %v4207
        %v4507 = vunpack.c.l.b16 %v4208
        %v4508 = vunpack.c.h.b16 %v4208
        %v4509 = vunpack.c.l.b16 %v4209
        %v4510 = vunpack.c.h.b16 %v4209
        %v4511 = vunpack.c.l.b16 %v4210
        %v4512 = vunpack.c.h.b16 %v4210
        %v4513 = vunpack.c.l.b16 %v4211
        %v4514 = vunpack.c.h.b16 %v4211
        %v4515 = vunpack.c.l.b16 %v4212
        %v4516 = vunpack.c.h.b16 %v4212
        %v4517 = vunpack.c.l.b16 %v4213
        %v4518 = vunpack.c.h.b16 %v4213
        %v4519 = vunpack.c.l.b16 %v4214
        %v4520 = vunpack.c.h.b16 %v4214
        %v4521 = vunpack.c.l.b16 %v4215
        %v4522 = vunpack.c.h.b16 %v4215
        %v4523 = vunpack.c.l.b16 %v4216
        %v4524 = vunpack.c.h.b16 %v4216
        %v4525 = vunpack.c.l.b16 %v4217
        %v4526 = vunpack.c.h.b16 %v4217
        %v4527 = vunpack.c.l.b16 %v4218
        %v4528 = vunpack.c.h.b16 %v4218
        %v4529 = vunpack.c.l.b16 %v4219
        %v4530 = vunpack.c.h.b16 %v4219
        %v4531 = vunpack.c.l.b16 %v4220
        %v4532 = vunpack.c.h.b16 %v4220
        %v4533 = vunpack.c.l.b16 %v4221
        %v4534 = vunpack.c.h.b16 %v4221
        %v4535 = vunpack.c.l.b16 %v4222
        %v4536 = vunpack.c.h.b16 %v4222
        %v4537 = vunpack.c.l.b16 %v4223
        %v4538 = vunpack.c.h.b16 %v4223
        %v4539 = vunpack.c.l.b16 %v4224
        %v4540 = vunpack.c.h.b16 %v4224
        %v4541 = vunpack.c.l.b16 %v4225
        %v4542 = vunpack.c.h.b16 %v4225
        %v4543 = vunpack.c.l.b16 %v4226
        %v4544 = vunpack.c.h.b16 %v4226
        %v4545 = vunpack.c.l.b16 %v4227
        %v4546 = vunpack.c.h.b16 %v4227
        %v4547 = vunpack.c.l.b16 %v4228
        %v4548 = vunpack.c.h.b16 %v4228
        %v4549 = vunpack.c.l.b16 %v4229
        %v4550 = vunpack.c.h.b16 %v4229
        %v4551 = vunpack.c.l.b16 %v4230
        %v4552 = vunpack.c.h.b16 %v4230
        %v4553 = vunpack.c.l.b16 %v4231
        %v4554 = vunpack.c.h.b16 %v4231
        %v4555 = vunpack.c.l.b16 %v4232
        %v4556 = vunpack.c.h.b16 %v4232
        %v4557 = vunpack.c.l.b16 %v4233
        %v4558 = vunpack.c.h.b16 %v4233
        %v4559 = vunpack.c.l.b16 %v4234
        %v4560 = vunpack.c.h.b16 %v4234
        %v4561 = vunpack.c.l.b16 %v4235
        %v4562 = vunpack.c.h.b16 %v4235
        %v4563 = vunpack.c.l.b16 %v4236
        %v4564 = vunpack.c.h.b16 %v4236
        %v4565 = vunpack.c.l.b16 %v4237
        %v4566 = vunpack.c.h.b16 %v4237
        %v4567 = vunpack.c.l.b16 %v4238
        %v4568 = vunpack.c.h.b16 %v4238
        %v4569 = vunpack.c.l.b16 %v4239
        %v4570 = vunpack.c.h.b16 %v4239
        %v4571 = vunpack.c.l.b16 %v4240
        %v4572 = vunpack.c.h.b16 %v4240
        %v4573 = vunpack.c.l.b16 %v4241
        %v4574 = vunpack.c.h.b16 %v4241
        %v4575 = vunpack.c.l.b16 %v4242
        %v4576 = vunpack.c.h.b16 %v4242
        %v4577 = vunpack.c.l.b16 %v4243
        %v4578 = vunpack.c.h.b16 %v4243
        %v4579 = vunpack.c.l.b16 %v4244
        %v4580 = vunpack.c.h.b16 %v4244
        %v4581 = vunpack.c.l.b16 %v4245
        %v4582 = vunpack.c.h.b16 %v4245
        %v4583 = vunpack.c.l.b16 %v4246
        %v4584 = vunpack.c.h.b16 %v4246
        %v4585 = vunpack.c.l.b16 %v4247
        %v4586 = vunpack.c.h.b16 %v4247
        %v4587 = vunpack.c.l.b16 %v4248
        %v4588 = vunpack.c.h.b16 %v4248
        %v4589 = vunpack.c.l.b16 %v4249
        %v4590 = vunpack.c.h.b16 %v4249
        %v4591 = vunpack.c.l.b16 %v4250
        %v4592 = vunpack.c.h.b16 %v4250
        %v4593 = vunpack.c.l.b16 %v4251
        %v4594 = vunpack.c.h.b16 %v4251
        %v4595 = vunpack.c.l.b16 %v4252
        %v4596 = vunpack.c.h.b16 %v4252
        %v4597 = vunpack.c.l.b16 %v4253
        %v4598 = vunpack.c.h.b16 %v4253
        %v4599 = vunpack.c.l.b16 %v4254
        %v4600 = vunpack.c.h.b16 %v4254
        %v4601 = vunpack.c.l.b16 %v4255
        %v4602 = vunpack.c.h.b16 %v4255
        %v4603 = vunpack.c.l.b16 %v4256
        %v4604 = vunpack.c.h.b16 %v4256
        %v4605 = vunpack.c.l.b16 %v4257
        %v4606 = vunpack.c.h.b16 %v4257
        %v4607 = vunpack.c.l.b16 %v4258
        %v4608 = vunpack.c.h.b16 %v4258
        %v4609 = vunpack.c.l.b16 %v4259
        %v4610 = vunpack.c.h.b16 %v4259
        %v4611 = vunpack.c.l.b16 %v4260
        %v4612 = vunpack.c.h.b16 %v4260
        %v4613 = vunpack.c.l.b16 %v4261
        %v4614 = vunpack.c.h.b16 %v4261
        %v4615 = vunpack.c.l.b16 %v4262
        %v4616 = vunpack.c.h.b16 %v4262
        %v4617 = vunpack.c.l.b16 %v4263
        %v4618 = vunpack.c.h.b16 %v4263
        %v4619 = vunpack.c.l.b16 %v4264
        %v4620 = vunpack.c.h.b16 %v4264
        %v4621 = vunpack.c.l.b16 %v4265
        %v4622 = vunpack.c.h.b16 %v4265
        %v4623 = vunpack.c.l.b16 %v4266
        %v4624 = vunpack.c.h.b16 %v4266
        %v4625 = vunpack.c.l.b16 %v4267
        %v4626 = vunpack.c.h.b16 %v4267
        %v4627 = vunpack.c.l.b16 %v4268
        %v4628 = vunpack.c.h.b16 %v4268
        %v4629 = vunpack.c.l.b16 %v4269
        %v4630 = vunpack.c.h.b16 %v4269
        %v4631 = vunpack.c.l.b16 %v4270
        %v4632 = vunpack.c.h.b16 %v4270
        %v4633 = vunpack.c.l.b16 %v4271
        %v4634 = vunpack.c.h.b16 %v4271
        %v4635 = vunpack.c.l.b16 %v4272
        %v4636 = vunpack.c.h.b16 %v4272
        %v4637 = vunpack.c.l.b16 %v4273
        %v4638 = vunpack.c.h.b16 %v4273
        %v4639 = vunpack.c.l.b16 %v4274
        %v4640 = vunpack.c.h.b16 %v4274
        %v4641 = vunpack.c.l.b16 %v4275
        %v4642 = vunpack.c.h.b16 %v4275
        %v4643 = vunpack.c.l.b16 %v4276
        %v4644 = vunpack.c.h.b16 %v4276
        %v4645 = vunpack.c.l.b16 %v4277
        %v4646 = vunpack.c.h.b16 %v4277
        %v4647 = vunpack.c.l.b16 %v4278
        %v4648 = vunpack.c.h.b16 %v4278
        %v4649 = vunpack.c.l.b16 %v4279
        %v4650 = vunpack.c.h.b16 %v4279
        %v4651 = vunpack.c.l.b16 %v4280
        %v4652 = vunpack.c.h.b16 %v4280
        %v4653 = vunpack.c.l.b16 %v4281
        %v4654 = vunpack.c.h.b16 %v4281
        %v4655 = vunpack.c.l.b16 %v4282
        %v4656 = vunpack.c.h.b16 %v4282
        %v4657 = vunpack.c.l.b16 %v4283
        %v4658 = vunpack.c.h.b16 %v4283
        %v4659 = vunpack.c.l.b16 %v4284
        %v4660 = vunpack.c.h.b16 %v4284
        %v4661 = vunpack.c.l.b16 %v4285
        %v4662 = vunpack.c.h.b16 %v4285
        %v4663 = vunpack.c.l.b16 %v4286
        %v4664 = vunpack.c.h.b16 %v4286
        %v4665 = vunpack.c.l.b16 %v4287
        %v4666 = vunpack.c.h.b16 %v4287
        %v4667 = vunpack.c.l.b16 %v4288
        %v4668 = vunpack.c.h.b16 %v4288
        %v4669 = vunpack.c.l.b16 %v4289
        %v4670 = vunpack.c.h.b16 %v4289
        %v4671 = vunpack.c.l.b16 %v4290
        %v4672 = vunpack.c.h.b16 %v4290
        %v4673 = vunpack.c.l.b16 %v4291
        %v4674 = vunpack.c.h.b16 %v4291
        %v4675 = vunpack.c.l.b16 %v4292
        %v4676 = vunpack.c.h.b16 %v4292
        %v4677 = vpack.c.b16 %v4429, %v4421
        %v4678 = vpack.c.b16 %v4430, %v4422
        %v4679 = vpack.c.b16 %v4431, %v4423
        %v4680 = vpack.c.b16 %v4432, %v4424
        %v4681 = vpack.c.b16 %v4433, %v4425
        %v4682 = vpack.c.b16 %v4434, %v4426
        %v4683 = vpack.c.b16 %v4435, %v4427
        %v4684 = vpack.c.b16 %v4436, %v4428
        %v4685 = vpack.c.b16 %v4445, %v4437
        %v4686 = vpack.c.b16 %v4446, %v4438
        %v4687 = vpack.c.b16 %v4447, %v4439
        %v4688 = vpack.c.b16 %v4448, %v4440
        %v4689 = vpack.c.b16 %v4449, %v4441
        %v4690 = vpack.c.b16 %v4450, %v4442
        %v4691 = vpack.c.b16 %v4451, %v4443
        %v4692 = vpack.c.b16 %v4452, %v4444
        %v4693 = vpack.c.b16 %v4461, %v4453
        %v4694 = vpack.c.b16 %v4462, %v4454
        %v4695 = vpack.c.b16 %v4463, %v4455
        %v4696 = vpack.c.b16 %v4464, %v4456
        %v4697 = vpack.c.b16 %v4465, %v4457
        %v4698 = vpack.c.b16 %v4466, %v4458
        %v4699 = vpack.c.b16 %v4467, %v4459
        %v4700 = vpack.c.b16 %v4468, %v4460
        %v4701 = vpack.c.b16 %v4477, %v4469
        %v4702 = vpack.c.b16 %v4478, %v4470
        %v4703 = vpack.c.b16 %v4479, %v4471
        %v4704 = vpack.c.b16 %v4480, %v4472
        %v4705 = vpack.c.b16 %v4481, %v4473
        %v4706 = vpack.c.b16 %v4482, %v4474
        %v4707 = vpack.c.b16 %v4483, %v4475
        %v4708 = vpack.c.b16 %v4484, %v4476
        %v4709 = vpack.c.b16 %v4493, %v4485
        %v4710 = vpack.c.b16 %v4494, %v4486
        %v4711 = vpack.c.b16 %v4495, %v4487
        %v4712 = vpack.c.b16 %v4496, %v4488
        %v4713 = vpack.c.b16 %v4497, %v4489
        %v4714 = vpack.c.b16 %v4498, %v4490
        %v4715 = vpack.c.b16 %v4499, %v4491
        %v4716 = vpack.c.b16 %v4500, %v4492
        %v4717 = vpack.c.b16 %v4509, %v4501
        %v4718 = vpack.c.b16 %v4510, %v4502
        %v4719 = vpack.c.b16 %v4511, %v4503
        %v4720 = vpack.c.b16 %v4512, %v4504
        %v4721 = vpack.c.b16 %v4513, %v4505
        %v4722 = vpack.c.b16 %v4514, %v4506
        %v4723 = vpack.c.b16 %v4515, %v4507
        %v4724 = vpack.c.b16 %v4516, %v4508
        %v4725 = vpack.c.b16 %v4525, %v4517
        %v4726 = vpack.c.b16 %v4526, %v4518
        %v4727 = vpack.c.b16 %v4527, %v4519
        %v4728 = vpack.c.b16 %v4528, %v4520
        %v4729 = vpack.c.b16 %v4529, %v4521
        %v4730 = vpack.c.b16 %v4530, %v4522
        %v4731 = vpack.c.b16 %v4531, %v4523
        %v4732 = vpack.c.b16 %v4532, %v4524
        %v4733 = vpack.c.b16 %v4541, %v4533
        %v4734 = vpack.c.b16 %v4542, %v4534
        %v4735 = vpack.c.b16 %v4543, %v4535
        %v4736 = vpack.c.b16 %v4544, %v4536
        %v4737 = vpack.c.b16 %v4545, %v4537
        %v4738 = vpack.c.b16 %v4546, %v4538
        %v4739 = vpack.c.b16 %v4547, %v4539
        %v4740 = vpack.c.b16 %v4548, %v4540
        %v4741 = vpack.c.b16 %v4557, %v4549
        %v4742 = vpack.c.b16 %v4558, %v4550
        %v4743 = vpack.c.b16 %v4559, %v4551
        %v4744 = vpack.c.b16 %v4560, %v4552
        %v4745 = vpack.c.b16 %v4561, %v4553
        %v4746 = vpack.c.b16 %v4562, %v4554
        %v4747 = vpack.c.b16 %v4563, %v4555
        %v4748 = vpack.c.b16 %v4564, %v4556
        %v4749 = vpack.c.b16 %v4573, %v4565
        %v4750 = vpack.c.b16 %v4574, %v4566
        %v4751 = vpack.c.b16 %v4575, %v4567
        %v4752 = vpack.c.b16 %v4576, %v4568
        %v4753 = vpack.c.b16 %v4577, %v4569
        %v4754 = vpack.c.b16 %v4578, %v4570
        %v4755 = vpack.c.b16 %v4579, %v4571
        %v4756 = vpack.c.b16 %v4580, %v4572
        %v4757 = vpack.c.b16 %v4589, %v4581
        %v4758 = vpack.c.b16 %v4590, %v4582
        %v4759 = vpack.c.b16 %v4591, %v4583
        %v4760 = vpack.c.b16 %v4592, %v4584
        %v4761 = vpack.c.b16 %v4593, %v4585
        %v4762 = vpack.c.b16 %v4594, %v4586
        %v4763 = vpack.c.b16 %v4595, %v4587
        %v4764 = vpack.c.b16 %v4596, %v4588
        %v4765 = vpack.c.b16 %v4605, %v4597
        %v4766 = vpack.c.b16 %v4606, %v4598
        %v4767 = vpack.c.b16 %v4607, %v4599
        %v4768 = vpack.c.b16 %v4608, %v4600
        %v4769 = vpack.c.b16 %v4609, %v4601
        %v4770 = vpack.c.b16 %v4610, %v4602
        %v4771 = vpack.c.b16 %v4611, %v4603
        %v4772 = vpack.c.b16 %v4612, %v4604
        %v4773 = vpack.c.b16 %v4621, %v4613
        %v4774 = vpack.c.b16 %v4622, %v4614
        %v4775 = vpack.c.b16 %v4623, %v4615
        %v4776 = vpack.c.b16 %v4624, %v4616
        %v4777 = vpack.c.b16 %v4625, %v4617
        %v4778 = vpack.c.b16 %v4626, %v4618
        %v4779 = vpack.c.b16 %v4627, %v4619
        %v4780 = vpack.c.b16 %v4628, %v4620
        %v4781 = vpack.c.b16 %v4637, %v4629
        %v4782 = vpack.c.b16 %v4638, %v4630
        %v4783 = vpack.c.b16 %v4639, %v4631
        %v4784 = vpack.c.b16 %v4640, %v4632
        %v4785 = vpack.c.b16 %v4641, %v4633
        %v4786 = vpack.c.b16 %v4642, %v4634
        %v4787 = vpack.c.b16 %v4643, %v4635
        %v4788 = vpack.c.b16 %v4644, %v4636
        %v4789 = vpack.c.b16 %v4653, %v4645
        %v4790 = vpack.c.b16 %v4654, %v4646
        %v4791 = vpack.c.b16 %v4655, %v4647
        %v4792 = vpack.c.b16 %v4656, %v4648
        %v4793 = vpack.c.b16 %v4657, %v4649
        %v4794 = vpack.c.b16 %v4658, %v4650
        %v4795 = vpack.c.b16 %v4659, %v4651
        %v4796 = vpack.c.b16 %v4660, %v4652
        %v4797 = vpack.c.b16 %v4669, %v4661
        %v4798 = vpack.c.b16 %v4670, %v4662
        %v4799 = vpack.c.b16 %v4671, %v4663
        %v4800 = vpack.c.b16 %v4672, %v4664
        %v4801 = vpack.c.b16 %v4673, %v4665
        %v4802 = vpack.c.b16 %v4674, %v4666
        %v4803 = vpack.c.b16 %v4675, %v4667
        %v4804 = vpack.c.b16 %v4676, %v4668
        %4933 = vmatprep.subr.bf16.mxu0 %v4734
        %4934 = vmatpush1.bf16.msra.mxu0 %v4733
        %4935 = vmatprep.subr.bf16.mxu0 %v4726
        %4936 = vmatpush1.bf16.msra.mxu0 %v4725
        %4937 = vmatprep.subr.bf16.mxu0 %v4718
        %4938 = vmatpush1.bf16.msra.mxu0 %v4717
        %4939 = vmatprep.subr.bf16.mxu0 %v4710
        %4940 = vmatpush1.bf16.msra.mxu0 %v4709
        %4941 = vmatprep.subr.bf16.mxu0 %v4702
        %4942 = vmatpush1.bf16.msra.mxu0 %v4701
        %4943 = vmatprep.subr.bf16.mxu0 %v4694
        %4944 = vmatpush1.bf16.msra.mxu0 %v4693
        %4945 = vmatprep.subr.bf16.mxu0 %v4686
        %4946 = vmatpush1.bf16.msra.mxu0 %v4685
        %4947 = vmatprep.subr.bf16.mxu0 %v4678
        %4948 = vmatpush1.bf16.msra.mxu0 %v4677
        %4949 = vmatprep.subr.bf16.mxu0 %v4798
        %4950 = vmatpush2.bf16.msra.mxu0 %v4797
        %4951 = vmatprep.subr.bf16.mxu0 %v4790
        %4952 = vmatpush2.bf16.msra.mxu0 %v4789
        %4953 = vmatprep.subr.bf16.mxu0 %v4782
        %4954 = vmatpush2.bf16.msra.mxu0 %v4781
        %4955 = vmatprep.subr.bf16.mxu0 %v4774
        %4956 = vmatpush2.bf16.msra.mxu0 %v4773
        %4957 = vmatprep.subr.bf16.mxu0 %v4766
        %4958 = vmatpush2.bf16.msra.mxu0 %v4765
        %4959 = vmatprep.subr.bf16.mxu0 %v4758
        %4960 = vmatpush2.bf16.msra.mxu0 %v4757
        %4961 = vmatprep.subr.bf16.mxu0 %v4750
        %4962 = vmatpush2.bf16.msra.mxu0 %v4749
        %4963 = vmatprep.subr.bf16.mxu0 %v4742
        %4964 = vmatpush2.bf16.msra.mxu0 %v4741
        %4965 = vmatprep.mubr.bf16.mxu0 %v4164
        %4966 = vmatmul.mubr.bf16.gmra.mxu0 %v4163
        %v4967 = vpop.f32.mrf.mxu0
        %v4968 = vadd.f32 0.0, %v4967
        %v4969 = vpop.f32.mrf.mxu0
        %v4970 = vadd.f32 0.0, %v4969
        %v4971 = vpop.f32.mrf.mxu0
        %v4972 = vpop.f32.mrf.mxu0
        %4973 = vdwg.mxu0
        %4974 = vmatprep.subr.bf16.mxu0 %v4736
        %4975 = vmatpush1.bf16.msra.mxu0 %v4735
        %4976 = vmatprep.subr.bf16.mxu0 %v4728
        %4977 = vmatpush1.bf16.msra.mxu0 %v4727
        %4978 = vmatprep.subr.bf16.mxu0 %v4720
        %4979 = vmatpush1.bf16.msra.mxu0 %v4719
        %4980 = vmatprep.subr.bf16.mxu0 %v4712
        %4981 = vmatpush1.bf16.msra.mxu0 %v4711
        %4982 = vmatprep.subr.bf16.mxu0 %v4704
        %4983 = vmatpush1.bf16.msra.mxu0 %v4703
        %4984 = vmatprep.subr.bf16.mxu0 %v4696
        %4985 = vmatpush1.bf16.msra.mxu0 %v4695
        %4986 = vmatprep.subr.bf16.mxu0 %v4688
        %4987 = vmatpush1.bf16.msra.mxu0 %v4687
        %4988 = vmatprep.subr.bf16.mxu0 %v4680
        %4989 = vmatpush1.bf16.msra.mxu0 %v4679
        %4990 = vmatprep.subr.bf16.mxu0 %v4800
        %4991 = vmatpush2.bf16.msra.mxu0 %v4799
        %4992 = vmatprep.subr.bf16.mxu0 %v4792
        %4993 = vmatpush2.bf16.msra.mxu0 %v4791
        %4994 = vmatprep.subr.bf16.mxu0 %v4784
        %4995 = vmatpush2.bf16.msra.mxu0 %v4783
        %4996 = vmatprep.subr.bf16.mxu0 %v4776
        %4997 = vmatpush2.bf16.msra.mxu0 %v4775
        %4998 = vmatprep.subr.bf16.mxu0 %v4768
        %4999 = vmatpush2.bf16.msra.mxu0 %v4767
        %5000 = vmatprep.subr.bf16.mxu0 %v4760
        %5001 = vmatpush2.bf16.msra.mxu0 %v4759
        %5002 = vmatprep.subr.bf16.mxu0 %v4752
        %5003 = vmatpush2.bf16.msra.mxu0 %v4751
        %5004 = vmatprep.subr.bf16.mxu0 %v4744
        %5005 = vmatpush2.bf16.msra.mxu0 %v4743
        %5006 = vmatprep.mubr.bf16.mxu0 %v4164
        %5007 = vmatmul.mubr.bf16.gmra.mxu0 %v4163
        %v5008 = vpop.f32.mrf.mxu0
        %v5009 = vadd.f32 0.0, %v5008
        %v5010 = vpop.f32.mrf.mxu0
        %v5011 = vadd.f32 0.0, %v5010
        %v5012 = vpop.f32.mrf.mxu0
        %v5013 = vpop.f32.mrf.mxu0
        %5014 = vdwg.mxu0
        %5015 = vmatprep.subr.bf16.mxu0 %v4738
        %5016 = vmatpush1.bf16.msra.mxu0 %v4737
        %5017 = vmatprep.subr.bf16.mxu0 %v4730
        %5018 = vmatpush1.bf16.msra.mxu0 %v4729
        %5019 = vmatprep.subr.bf16.mxu0 %v4722
        %5020 = vmatpush1.bf16.msra.mxu0 %v4721
        %5021 = vmatprep.subr.bf16.mxu0 %v4714
        %5022 = vmatpush1.bf16.msra.mxu0 %v4713
        %5023 = vmatprep.subr.bf16.mxu0 %v4706
        %5024 = vmatpush1.bf16.msra.mxu0 %v4705
        %5025 = vmatprep.subr.bf16.mxu0 %v4698
        %5026 = vmatpush1.bf16.msra.mxu0 %v4697
        %5027 = vmatprep.subr.bf16.mxu0 %v4690
        %5028 = vmatpush1.bf16.msra.mxu0 %v4689
        %5029 = vmatprep.subr.bf16.mxu0 %v4682
        %5030 = vmatpush1.bf16.msra.mxu0 %v4681
        %5031 = vmatprep.subr.bf16.mxu0 %v4802
        %5032 = vmatpush2.bf16.msra.mxu0 %v4801
        %5033 = vmatprep.subr.bf16.mxu0 %v4794
        %5034 = vmatpush2.bf16.msra.mxu0 %v4793
        %5035 = vmatprep.subr.bf16.mxu0 %v4786
        %5036 = vmatpush2.bf16.msra.mxu0 %v4785
        %5037 = vmatprep.subr.bf16.mxu0 %v4778
        %5038 = vmatpush2.bf16.msra.mxu0 %v4777
        %5039 = vmatprep.subr.bf16.mxu0 %v4770
        %5040 = vmatpush2.bf16.msra.mxu0 %v4769
        %5041 = vmatprep.subr.bf16.mxu0 %v4762
        %5042 = vmatpush2.bf16.msra.mxu0 %v4761
        %5043 = vmatprep.subr.bf16.mxu0 %v4754
        %5044 = vmatpush2.bf16.msra.mxu0 %v4753
        %5045 = vmatprep.subr.bf16.mxu0 %v4746
        %5046 = vmatpush2.bf16.msra.mxu0 %v4745
        %5047 = vmatprep.mubr.bf16.mxu0 %v4164
        %5048 = vmatmul.mubr.bf16.gmra.mxu0 %v4163
        %v5049 = vpop.f32.mrf.mxu0
        %v5050 = vadd.f32 0.0, %v5049
        %v5051 = vpop.f32.mrf.mxu0
        %v5052 = vadd.f32 0.0, %v5051
        %v5053 = vpop.f32.mrf.mxu0
        %v5054 = vpop.f32.mrf.mxu0
        %5055 = vdwg.mxu0
        %5056 = vmatprep.subr.bf16.mxu0 %v4740
        %5057 = vmatpush1.bf16.msra.mxu0 %v4739
        %5058 = vmatprep.subr.bf16.mxu0 %v4732
        %5059 = vmatpush1.bf16.msra.mxu0 %v4731
        %5060 = vmatprep.subr.bf16.mxu0 %v4724
        %5061 = vmatpush1.bf16.msra.mxu0 %v4723
        %5062 = vmatprep.subr.bf16.mxu0 %v4716
        %5063 = vmatpush1.bf16.msra.mxu0 %v4715
        %5064 = vmatprep.subr.bf16.mxu0 %v4708
        %5065 = vmatpush1.bf16.msra.mxu0 %v4707
        %5066 = vmatprep.subr.bf16.mxu0 %v4700
        %5067 = vmatpush1.bf16.msra.mxu0 %v4699
        %5068 = vmatprep.subr.bf16.mxu0 %v4692
        %5069 = vmatpush1.bf16.msra.mxu0 %v4691
        %5070 = vmatprep.subr.bf16.mxu0 %v4684
        %5071 = vmatpush1.bf16.msra.mxu0 %v4683
        %5072 = vmatprep.subr.bf16.mxu0 %v4804
        %5073 = vmatpush2.bf16.msra.mxu0 %v4803
        %5074 = vmatprep.subr.bf16.mxu0 %v4796
        %5075 = vmatpush2.bf16.msra.mxu0 %v4795
        %5076 = vmatprep.subr.bf16.mxu0 %v4788
        %5077 = vmatpush2.bf16.msra.mxu0 %v4787
        %5078 = vmatprep.subr.bf16.mxu0 %v4780
        %5079 = vmatpush2.bf16.msra.mxu0 %v4779
        %5080 = vmatprep.subr.bf16.mxu0 %v4772
        %5081 = vmatpush2.bf16.msra.mxu0 %v4771
        %5082 = vmatprep.subr.bf16.mxu0 %v4764
        %5083 = vmatpush2.bf16.msra.mxu0 %v4763
        %5084 = vmatprep.subr.bf16.mxu0 %v4756
        %5085 = vmatpush2.bf16.msra.mxu0 %v4755
        %5086 = vmatprep.subr.bf16.mxu0 %v4748
        %5087 = vmatpush2.bf16.msra.mxu0 %v4747
        %5088 = vmatprep.mubr.bf16.mxu0 %v4164
        %5089 = vmatmul.mubr.bf16.gmra.mxu0 %v4163
        %v5090 = vpop.f32.mrf.mxu0
        %v5091 = vadd.f32 0.0, %v5090
        %v5092 = vpop.f32.mrf.mxu0
        %v5093 = vadd.f32 0.0, %v5092
        %v5094 = vpop.f32.mrf.mxu0
        %v5095 = vpop.f32.mrf.mxu0
        %5096 = vdwg.mxu0
        %v5101 = vcombine.low %v4968, %v4970
        %v5102 = vcombine.low %v5009, %v5011
        %v5105 = vadd.f32 %v4154, %v5101
        %v5106 = vadd.f32 %v4155, %v5102
        %v5107 = vxor.u32 %v5105, 2147483648
        %v5108 = vmul.f32 %v5107, 1.442695
        %v5109 = vpow.pop %v5108
        %v5110 = vadd.f32 %v5109, 1.0
        %v5111 = vrcp.pop %v5110
        %v5112 = vmul.f32 1.0, %v5111
        %v5114 = vrot.slane %v5105, 4
        %v5116 = vxor.u32 %v5114, 2147483648
        %v5117 = vmul.f32 %v5116, 1.442695
        %v5118 = vpow.pop %v5117
        %v5119 = vadd.f32 %v5118, 1.0
        %v5120 = vrcp.pop %v5119
        %v5121 = vmul.f32 1.0, %v5120
        %v5122 = vtanh.pop %v5106
        %v5124 = vrot.slane %v5106, 4
        %v5126 = vxor.u32 %v5124, 2147483648
        %v5127 = vmul.f32 %v5126, 1.442695
        %v5128 = vpow.pop %v5127
        %v5129 = vadd.f32 %v5128, 1.0
        %v5130 = vrcp.pop %v5129
        %v5131 = vmul.f32 1.0, %v5130
        %v5132 = vmul.f32 %v5121, %v4159
        %v5133 = vmul.f32 %v5112, %v5122
        %v5134 = vadd.f32 %v5132, %v5133
        %v5135 = vtanh.pop %v5134
        %v5136 = vmul.f32 %v5131, %v5135
        %v5141 = vcombine.low %v5050, %v5052
        %v5142 = vcombine.low %v5091, %v5093
        %v5145 = vadd.f32 %v4156, %v5141
        %v5146 = vadd.f32 %v4157, %v5142
        %v5147 = vxor.u32 %v5145, 2147483648
        %v5148 = vmul.f32 %v5147, 1.442695
        %v5149 = vpow.pop %v5148
        %v5150 = vadd.f32 %v5149, 1.0
        %v5151 = vrcp.pop %v5150
        %v5152 = vmul.f32 1.0, %v5151
        %v5154 = vrot.slane %v5145, 4
        %v5156 = vxor.u32 %v5154, 2147483648
        %v5157 = vmul.f32 %v5156, 1.442695
        %v5158 = vpow.pop %v5157
        %v5159 = vadd.f32 %v5158, 1.0
        %v5160 = vrcp.pop %v5159
        %v5161 = vmul.f32 1.0, %v5160
        %v5162 = vtanh.pop %v5146
        %v5164 = vrot.slane %v5146, 4
        %v5166 = vxor.u32 %v5164, 2147483648
        %v5167 = vmul.f32 %v5166, 1.442695
        %v5168 = vpow.pop %v5167
        %v5169 = vadd.f32 %v5168, 1.0
        %v5170 = vrcp.pop %v5169
        %v5171 = vmul.f32 1.0, %v5170
        %v5173 = vrot.slane %v4159, 4
        %v5175 = vmul.f32 %v5161, %v5173
        %v5176 = vmul.f32 %v5152, %v5162
        %v5177 = vadd.f32 %v5175, %v5176
        %v5178 = vtanh.pop %v5177
        %v5179 = vmul.f32 %v5171, %v5178
        %v5180 = vstv %s4152
        %vm5181 = vcmp.gt.s32.totalorder %v975, %v5180
        %v5182 = vstv %s4153
        %vm5183 = vcmp.gt.s32.totalorder %v975, %v5182
        %v5184 = vsel %vm5181, 1, 0
        %5185 = vset.pattern.permute.xlu0 0
        %5186 = vperm.xlu0 %5185, %v5184
        %v5187 = vpop.permute.xlu0 %5186
        %vm5188 = vcmp.eq.s32.totalorder %v5187, 1
        %v5189 = vsel %vm5188, %v5136, %v4158
        %5190 = vst [vmem:[#allocation3] sm:$0xf] %v5189
        %v5191 = vsel %vm5183, 1, 0
        %5192 = vset.pattern.permute.xlu0 0
        %5193 = vperm.xlu0 %5192, %v5191
        %v5194 = vpop.permute.xlu0 %5193
        %vm5195 = vcmp.eq.s32.totalorder %v5194, 1
        %v5196 = vsel %vm5195, %v5179, %v4161
        %5197 = vst [vmem:[#allocation3 + $0x4] sm:$0xf] %v5196
        %v5198 = vsel %vm5188, %v5134, %v4159
        %5199 = vst [vmem:[#allocation4] sm:$0xf] %v5198
        %v5200 = vcombine.high %v4159, %v4159
        %v5202 = vsel %vm5195, %v5177, %v5200
        %5203 = vst [vmem:[#allocation4 + $0x4] sm:$0xf] %v5202
        %v5204 = vsel %vm5188, %v5136, 0.0
        %s5205 = scalar_lea.vmem %s414, 12
        %5206 = vst [vmem:[%s5205] sm:$0xf] %v5204
        %v5207 = vsel %vm5195, %v5179, 0.0
        %5208 = vst [vmem:[%s424] sm:$0xf] %v5207
        %s5209 = smul.u32 4, %s26
        %p5210 = scmp.lt.s32.totalorder %s5209, 7
        %s5211 = scalar_select %p5210, %s5209, 7
        %p5212 = scmp.lt.s32.totalorder %s25, 0
        %s5213 = scalar_select %p5212, %s25, 0
        %s5214 = sadd.s32 %s5213, %s5211
        %s5215 = smul.addr %s5214, 4
        %s5216 = scalar_lea.vmem %s6, %s5215
        %s5217 = ssub.s32 1, %s26
        %s5218 = smul.u32 4, %s5217
        %p5219 = scmp.lt.s32.totalorder %s5218, 7
        %s5220 = scalar_select %p5219, %s5218, 7
        %p5221 = scmp.lt.s32.totalorder %s25, 0
        %s5222 = scalar_select %p5221, %s25, 0
        %s5223 = sadd.s32 %s5222, %s5220
        %s5224 = smul.addr %s5223, 4
        %s5225 = scalar_lea.vmem %s7, %s5224
        // Predicated region
        $region57: #{bidirec_lstm_forward.2} parent=43 // pred_check
          %p5226 = pneg %p200
        $region58: #{bidirec_lstm_forward.2} parent=43 // pred_check_branch
          %5228 = sbr.rel (%p5226) target = $region60
        $region59: #{bidirec_lstm_forward.2} parent=43 // pred_region
          %s5229 = smul.u32 4, %s26
        $region60: #{bidirec_lstm_forward.2} parent=43 // pred_fallthru
          _
        // Predicated region
        $region61: #{bidirec_lstm_forward.2} parent=43 // pred_check
          %p5230 = pneg %p230
        $region62: #{bidirec_lstm_forward.2} parent=43 // pred_check_branch
          %5232 = sbr.rel (%p5230) target = $region64
        $region63: #{bidirec_lstm_forward.2} parent=43 // pred_region
          %s5233 = ssub.s32 1, %s26
          %s5234 = smul.u32 4, %s5233
        $region64: #{bidirec_lstm_forward.2} parent=43 // pred_fallthru
          _
      $region44: #{bidirec_lstm_forward.2} parent=5 // pred_fallthru
        _
      %p5235 = scmp.le.s32.totalorder 2, %s16
      // Predicated region
      $region65: #{bidirec_lstm_forward.2} parent=5 // pred_check
        %p5236 = pneg %p5235
      $region66: #{bidirec_lstm_forward.2} parent=5 // pred_check_branch
        %5238 = sbr.rel (%p5236) target = $region68
      $region67: #{bidirec_lstm_forward.2} parent=5 // pred_region
        %s5239 = ssub.s32 %s16, 2
        // Predicated region
        $region69: #{bidirec_lstm_forward.2} parent=67 // pred_check
          %p5240 = pneg %p206
        $region70: #{bidirec_lstm_forward.2} parent=67 // pred_check_branch
          %5242 = sbr.rel (%p5240) target = $region72
        $region71: #{bidirec_lstm_forward.2} parent=67 // pred_region
          %s5243 = smul.u32 4, %s28
          %p5244 = scmp.lt.s32.totalorder %s5243, 7
          %s5245 = scalar_select %p5244, %s5243, 7
          %p5246 = scmp.lt.s32.totalorder %s27, 0
          %s5247 = scalar_select %p5246, %s27, 0
          %s5248 = sadd.s32 %s5247, %s5245
          %s5249 = smul.addr %s5248, 4
          %s5250 = scalar_lea.vmem %s6, %s5249
        $region72: #{bidirec_lstm_forward.2} parent=67 // pred_fallthru
          _
        // Predicated region
        $region73: #{bidirec_lstm_forward.2} parent=67 // pred_check
          %p5251 = pneg %p236
        $region74: #{bidirec_lstm_forward.2} parent=67 // pred_check_branch
          %5253 = sbr.rel (%p5251) target = $region76
        $region75: #{bidirec_lstm_forward.2} parent=67 // pred_region
          %s5254 = ssub.s32 1, %s28
          %s5255 = smul.u32 4, %s5254
          %p5256 = scmp.lt.s32.totalorder %s5255, 7
          %s5257 = scalar_select %p5256, %s5255, 7
          %p5258 = scmp.lt.s32.totalorder %s27, 0
          %s5259 = scalar_select %p5258, %s27, 0
          %s5260 = sadd.s32 %s5259, %s5257
          %s5261 = smul.addr %s5260, 4
          %s5262 = scalar_lea.vmem %s7, %s5261
        $region76: #{bidirec_lstm_forward.2} parent=67 // pred_fallthru
          _
      $region68: #{bidirec_lstm_forward.2} parent=5 // pred_fallthru
        _
    $region6: #{bidirec_lstm_forward.2} parent=1 // loop_footer
      %s20 = sadd.s32 1, %s16
    $region7: #{bidirec_lstm_forward.2} parent=1 // loop_footer_branch
      %15 = sbr.rel target = $region3
    $region8: #{bidirec_lstm_forward.2} parent=1 // loop_exit
      _
    %5263 = vsyncpa [#allocation6], 1
    %s5264 = scalar_lea.sflag [#allocation6], 1
    %5265 = vsyncpa %s5264, 1
    %5266 = vsyncpa [#allocation8], 1

</llo_original>
